<compile_context>
chip_gen: v6e
topology: v6e:2x2x1
jax: 0.10.0
libtpu: 0.0.40
codegen_flags: <defaults>
</compile_context>

<pallas_src>
import jax
import jax.numpy as jnp
from jax.experimental import pallas as pl
from jax.experimental.pallas import tpu as pltpu


def mlp_kernel(x_ref,
               w1_ref, b1_ref,
               w2_ref, b2_ref,
               w3_ref, b3_ref,
               w4_ref, b4_ref,
               o_ref):
    # In-kernel f32 -> bf16 cast of the activation tile (hidden under fc1 MXU work).
    x = x_ref[...].astype(jnp.bfloat16)
    h = jnp.dot(x, w1_ref[...], preferred_element_type=jnp.float32) + b1_ref[...]
    h = jnp.maximum(h.astype(jnp.bfloat16), 0)
    h = jnp.dot(h, w2_ref[...], preferred_element_type=jnp.float32) + b2_ref[...]
    h = jnp.maximum(h.astype(jnp.bfloat16), 0)
    h = jnp.dot(h, w3_ref[...], preferred_element_type=jnp.float32) + b3_ref[...]
    h = jnp.maximum(h.astype(jnp.bfloat16), 0)
    out = jnp.dot(h, w4_ref[...], preferred_element_type=jnp.float32) + b4_ref[...]
    o_ref[...] = out.astype(o_ref.dtype)


def _round_up(n, m):
    return ((n + m - 1) // m) * m


def _vmem_limit_bytes():
    # Stay comfortably below physical VMEM: ~48 MiB on v7x (64 MiB part),
    # up to 96 MiB on v5e/v6e (128 MiB parts).
    try:
        cap = int(pltpu.get_tpu_info().vmem_capacity_bytes)
    except Exception:  # trace-time query unavailable -> assume smallest part (v7x)
        cap = 64 << 20
    return min(96 << 20, (cap * 3) // 4)


def init_params(key):
    """f32 init mimicking PyTorch nn.Linear default (uniform +/- 1/sqrt(fan_in))."""
    dims = [(2048, 1024), (1024, 256), (256, 128), (128, 30)]
    params = {}
    keys = jax.random.split(key, 2 * len(dims))
    for idx, (fan_in, fan_out) in enumerate(dims):
        bound = 1.0 / jnp.sqrt(jnp.float32(fan_in))
        w = jax.random.uniform(keys[2 * idx], (fan_in, fan_out),
                               minval=-bound, maxval=bound, dtype=jnp.float32)
        b = jax.random.uniform(keys[2 * idx + 1], (1, fan_out),
                               minval=-bound, maxval=bound, dtype=jnp.float32)
        params[f"w{idx + 1}"] = w
        params[f"b{idx + 1}"] = b
    return params


def prepare_params(params_f32, *, out_pad=128):
    """Cast weights to bf16 (biases stay f32) and pad fc4 to a lane-dense 128 cols."""
    d_out = params_f32["w4"].shape[1]
    p = {}
    for i in range(1, 5):
        w = params_f32[f"w{i}"]
        b = params_f32[f"b{i}"]
        if i == 4:
            w = jnp.pad(w, ((0, 0), (0, out_pad - d_out)))
            b = jnp.pad(b, ((0, 0), (0, out_pad - d_out)))
        p[f"w{i}"] = w.astype(jnp.bfloat16)
        p[f"b{i}"] = b.astype(jnp.float32)
    p["d_out"] = int(d_out)
    return p


def mlp_forward(x, params, *, batch_tile=1024):
    """x: [B, 2048] float32. params: output of prepare_params(). Returns [B, 30] f32."""
    B, d_in = x.shape
    assert d_in == 2048
    d_out = params["d_out"]
    d_out_pad = params["w4"].shape[1]

    # Tile the batch; clamp so the grid has >= 2 steps whenever B > 8 so both
    # v7x TensorCores get work (and per-step overhead is amortized on all gens).
    tile = max(8, min(_round_up(batch_tile, 8), _round_up(pl.cdiv(B, 2), 8)))
    b_pad = _round_up(B, tile)
    if b_pad != B:
        # TODO(synk): ragged batches take one extra HBM pad pass; a masked last-tile
        # store would avoid it, but ragged B is not the common case here.
        x = jnp.pad(x, ((0, b_pad - B), (0, 0)))

    weights = (params["w1"], params["b1"], params["w2"], params["b2"],
               params["w3"], params["b3"], params["w4"], params["b4"])

    def full(shape):
        # Constant block index -> weights/biases stay resident in VMEM across the grid.
        return pl.BlockSpec(shape, lambda i: (0, 0))

    in_specs = [pl.BlockSpec((tile, d_in), lambda i: (i, 0))]
    in_specs += [full(w.shape) for w in weights]
    out_specs = pl.BlockSpec((tile, d_out_pad), lambda i: (i, 0))

    flops = 2 * b_pad * (2048 * 1024 + 1024 * 256 + 256 * 128 + 128 * d_out_pad)
    bytes_accessed = (b_pad * d_in * 4                       # x (f32)
                      + sum(int(w.size) * w.dtype.itemsize for w in weights)
                      + b_pad * d_out_pad * 2)               # out (bf16)

    out = pl.pallas_call(
        mlp_kernel,
        out_shape=jax.ShapeDtypeStruct((b_pad, d_out_pad), jnp.bfloat16),
        grid_spec=pltpu.PrefetchScalarGridSpec(
            num_scalar_prefetch=0,
            grid=(b_pad // tile,),
            in_specs=in_specs,
            out_specs=out_specs,
        ),
        compiler_params=pltpu.CompilerParams(
            dimension_semantics=("parallel",),   # batch tiles are independent
            vmem_limit_bytes=_vmem_limit_bytes(),
        ),
        cost_estimate=pl.CostEstimate(
            flops=flops, transcendentals=0, bytes_accessed=bytes_accessed),
    )(x, *weights)

    # Slice away batch padding and the zero fc4 columns; cast back to f32 for parity
    # with the PyTorch module's output dtype (tiny [B,30] op).
    return out[:B, :d_out].astype(jnp.float32)


def reference_forward_bf16(x, p):
    """Pure-JAX mirror of the kernel math (bf16 matmul inputs, f32 accumulation)."""
    h = x.astype(jnp.bfloat16)
    for i in range(1, 4):
        h = jnp.dot(h, p[f"w{i}"], preferred_element_type=jnp.float32) + p[f"b{i}"]
        h = jnp.maximum(h.astype(jnp.bfloat16), 0)
    out = jnp.dot(h, p["w4"], preferred_element_type=jnp.float32) + p["b4"]
    out = out.astype(jnp.bfloat16)
    return out[:, :p["d_out"]].astype(jnp.float32)


def reference_forward_f32(x, params_f32):
    h = jnp.maximum(x @ params_f32["w1"] + params_f32["b1"], 0.0)
    h = jnp.maximum(h @ params_f32["w2"] + params_f32["b2"], 0.0)
    h = jnp.maximum(h @ params_f32["w3"] + params_f32["b3"], 0.0)
    return h @ params_f32["w4"] + params_f32["b4"]


if __name__ == "__main__":
    key = jax.random.PRNGKey(0)
    k_params, k_x = jax.random.split(key)
    params_f32 = init_params(k_params)
    params = prepare_params(params_f32)

    B = 64  # small test batch
    x = jax.random.normal(k_x, (B, 2048), dtype=jnp.float32)

    # Default path (tile clamps to 32 -> grid of 2) and a smaller-tile path (grid of 8).
    out = jax.block_until_ready(mlp_forward(x, params))
    out_tiled = jax.block_until_ready(mlp_forward(x, params, batch_tile=8))

    ref_bf16 = reference_forward_bf16(x, params)
    ref_f32 = reference_forward_f32(x, params_f32)

    assert out.shape == (B, 30)
    assert out_tiled.shape == (B, 30)
    # Check against a reference using identical bf16 casts (should be near-exact).
    assert jnp.allclose(out, ref_bf16, atol=2e-2, rtol=2e-2), "mismatch vs bf16 reference"
    assert jnp.allclose(out_tiled, ref_bf16, atol=2e-2, rtol=2e-2), "tiled mismatch vs bf16 reference"
    # Loose sanity check against the full-f32 PyTorch-equivalent forward.
    # NOTE: bf16 activations/weights are an intentional approximation of f32 parity.
    assert jnp.allclose(out, ref_f32, atol=1e-1, rtol=1e-1), "mismatch vs f32 reference"

    print("KERNEL_OK")
</pallas_src>

<mosaic_0001>
module attributes {stable_mosaic.version = 11 : i64} {
  func.func @mlp_kernel(%arg0: i32, %arg1: memref<32x2048xf32, #tpu.memory_space<vmem>>, %arg2: memref<2048x1024xbf16, #tpu.memory_space<vmem>>, %arg3: memref<1x1024xf32, #tpu.memory_space<vmem>>, %arg4: memref<1024x256xbf16, #tpu.memory_space<vmem>>, %arg5: memref<1x256xf32, #tpu.memory_space<vmem>>, %arg6: memref<256x128xbf16, #tpu.memory_space<vmem>>, %arg7: memref<1x128xf32, #tpu.memory_space<vmem>>, %arg8: memref<128x128xbf16, #tpu.memory_space<vmem>>, %arg9: memref<1x128xf32, #tpu.memory_space<vmem>>, %arg10: memref<32x128xbf16, #tpu.memory_space<vmem>>) attributes {dimension_semantics = [#tpu.dimension_semantics<parallel>], iteration_bounds = array<i64: 2>, scalar_prefetch = 0 : i64, scratch_operands = 0 : i64, tpu.core_type = #tpu.core_type<tc>, window_params = [{transform_indices = @transform_0, window_bounds = array<i64: 32, 2048>}, {pipeline_mode = #tpu.pipeline_mode<synchronous>, transform_indices = @transform_1, window_bounds = array<i64: 2048, 1024>}, {pipeline_mode = #tpu.pipeline_mode<synchronous>, transform_indices = @transform_2, window_bounds = array<i64: 1, 1024>}, {pipeline_mode = #tpu.pipeline_mode<synchronous>, transform_indices = @transform_3, window_bounds = array<i64: 1024, 256>}, {pipeline_mode = #tpu.pipeline_mode<synchronous>, transform_indices = @transform_4, window_bounds = array<i64: 1, 256>}, {pipeline_mode = #tpu.pipeline_mode<synchronous>, transform_indices = @transform_5, window_bounds = array<i64: 256, 128>}, {pipeline_mode = #tpu.pipeline_mode<synchronous>, transform_indices = @transform_6, window_bounds = array<i64: 1, 128>}, {pipeline_mode = #tpu.pipeline_mode<synchronous>, transform_indices = @transform_7, window_bounds = array<i64: 128, 128>}, {pipeline_mode = #tpu.pipeline_mode<synchronous>, transform_indices = @transform_8, window_bounds = array<i64: 1, 128>}, {transform_indices = @transform_9, window_bounds = array<i64: 32, 128>}]} {
    %c0 = arith.constant 0 : index
    %c0_0 = arith.constant 0 : index
    %0 = vector.load %arg1[%c0, %c0_0] : memref<32x2048xf32, #tpu.memory_space<vmem>>, vector<32x2048xf32>
    %1 = arith.truncf %0 : vector<32x2048xf32> to vector<32x2048xbf16>
    %c0_1 = arith.constant 0 : index
    %c0_2 = arith.constant 0 : index
    %2 = vector.load %arg2[%c0_1, %c0_2] : memref<2048x1024xbf16, #tpu.memory_space<vmem>>, vector<2048x1024xbf16>
    %cst = arith.constant dense<0.000000e+00> : vector<32x1024xf32>
    %3 = tpu.matmul %1, %2, %cst {dimension_numbers = #tpu.dot_dimension_numbers<[1], [0], [0], [1], [0, 0, 1, 1], [], []>} : vector<32x2048xbf16>, vector<2048x1024xbf16>, vector<32x1024xf32> -> vector<32x1024xf32>
    %c0_3 = arith.constant 0 : index
    %c0_4 = arith.constant 0 : index
    %4 = vector.load %arg3[%c0_3, %c0_4] : memref<1x1024xf32, #tpu.memory_space<vmem>>, vector<1x1024xf32>
    %5 = vector.broadcast %4 : vector<1x1024xf32> to vector<32x1024xf32>
    %6 = arith.addf %3, %5 : vector<32x1024xf32>
    %7 = arith.truncf %6 : vector<32x1024xf32> to vector<32x1024xbf16>
    %cst_5 = arith.constant 0.000000e+00 : bf16
    %8 = vector.broadcast %cst_5 : bf16 to vector<32x1024xbf16>
    %9 = arith.maximumf %7, %8 : vector<32x1024xbf16>
    %c0_6 = arith.constant 0 : index
    %c0_7 = arith.constant 0 : index
    %10 = vector.load %arg4[%c0_6, %c0_7] : memref<1024x256xbf16, #tpu.memory_space<vmem>>, vector<1024x256xbf16>
    %cst_8 = arith.constant dense<0.000000e+00> : vector<32x256xf32>
    %11 = tpu.matmul %9, %10, %cst_8 {dimension_numbers = #tpu.dot_dimension_numbers<[1], [0], [0], [1], [0, 0, 1, 1], [], []>} : vector<32x1024xbf16>, vector<1024x256xbf16>, vector<32x256xf32> -> vector<32x256xf32>
    %c0_9 = arith.constant 0 : index
    %c0_10 = arith.constant 0 : index
    %12 = vector.load %arg5[%c0_9, %c0_10] : memref<1x256xf32, #tpu.memory_space<vmem>>, vector<1x256xf32>
    %13 = vector.broadcast %12 : vector<1x256xf32> to vector<32x256xf32>
    %14 = arith.addf %11, %13 : vector<32x256xf32>
    %15 = arith.truncf %14 : vector<32x256xf32> to vector<32x256xbf16>
    %cst_11 = arith.constant 0.000000e+00 : bf16
    %16 = vector.broadcast %cst_11 : bf16 to vector<32x256xbf16>
    %17 = arith.maximumf %15, %16 : vector<32x256xbf16>
    %c0_12 = arith.constant 0 : index
    %c0_13 = arith.constant 0 : index
    %18 = vector.load %arg6[%c0_12, %c0_13] : memref<256x128xbf16, #tpu.memory_space<vmem>>, vector<256x128xbf16>
    %cst_14 = arith.constant dense<0.000000e+00> : vector<32x128xf32>
    %19 = tpu.matmul %17, %18, %cst_14 {dimension_numbers = #tpu.dot_dimension_numbers<[1], [0], [0], [1], [0, 0, 1, 1], [], []>} : vector<32x256xbf16>, vector<256x128xbf16>, vector<32x128xf32> -> vector<32x128xf32>
    %c0_15 = arith.constant 0 : index
    %c0_16 = arith.constant 0 : index
    %20 = vector.load %arg7[%c0_15, %c0_16] : memref<1x128xf32, #tpu.memory_space<vmem>>, vector<1x128xf32>
    %21 = vector.broadcast %20 : vector<1x128xf32> to vector<32x128xf32>
    %22 = arith.addf %19, %21 : vector<32x128xf32>
    %23 = arith.truncf %22 : vector<32x128xf32> to vector<32x128xbf16>
    %cst_17 = arith.constant 0.000000e+00 : bf16
    %24 = vector.broadcast %cst_17 : bf16 to vector<32x128xbf16>
    %25 = arith.maximumf %23, %24 : vector<32x128xbf16>
    %c0_18 = arith.constant 0 : index
    %c0_19 = arith.constant 0 : index
    %26 = vector.load %arg8[%c0_18, %c0_19] : memref<128x128xbf16, #tpu.memory_space<vmem>>, vector<128x128xbf16>
    %cst_20 = arith.constant dense<0.000000e+00> : vector<32x128xf32>
    %27 = tpu.matmul %25, %26, %cst_20 {dimension_numbers = #tpu.dot_dimension_numbers<[1], [0], [0], [1], [0, 0, 1, 1], [], []>} : vector<32x128xbf16>, vector<128x128xbf16>, vector<32x128xf32> -> vector<32x128xf32>
    %c0_21 = arith.constant 0 : index
    %c0_22 = arith.constant 0 : index
    %28 = vector.load %arg9[%c0_21, %c0_22] : memref<1x128xf32, #tpu.memory_space<vmem>>, vector<1x128xf32>
    %29 = vector.broadcast %28 : vector<1x128xf32> to vector<32x128xf32>
    %30 = arith.addf %27, %29 : vector<32x128xf32>
    %31 = arith.truncf %30 : vector<32x128xf32> to vector<32x128xbf16>
    %c0_23 = arith.constant 0 : index
    %c0_24 = arith.constant 0 : index
    %32 = vector.load %arg10[%c0_23, %c0_24] : memref<32x128xbf16, #tpu.memory_space<vmem>>, vector<32x128xbf16>
    tpu.vector_store %arg10[%c0_23, %c0_24], %31 {strides = array<i32>} : memref<32x128xbf16, #tpu.memory_space<vmem>>, vector<32x128xbf16>,
    return
  }
  func.func @transform_0(%arg0: i32) -> (i32, i32) {
    %c0_i32 = arith.constant 0 : i32
    %c0_i32_0 = arith.constant 0 : i32
    return %arg0, %c0_i32 : i32, i32
  }
  func.func @transform_1(%arg0: i32) -> (i32, i32) {
    %c0_i32 = arith.constant 0 : i32
    %c0_i32_0 = arith.constant 0 : i32
    %c0_i32_1 = arith.constant 0 : i32
    return %c0_i32, %c0_i32_0 : i32, i32
  }
  func.func @transform_2(%arg0: i32) -> (i32, i32) {
    %c0_i32 = arith.constant 0 : i32
    %c0_i32_0 = arith.constant 0 : i32
    %c0_i32_1 = arith.constant 0 : i32
    return %c0_i32, %c0_i32_0 : i32, i32
  }
  func.func @transform_3(%arg0: i32) -> (i32, i32) {
    %c0_i32 = arith.constant 0 : i32
    %c0_i32_0 = arith.constant 0 : i32
    %c0_i32_1 = arith.constant 0 : i32
    return %c0_i32, %c0_i32_0 : i32, i32
  }
  func.func @transform_4(%arg0: i32) -> (i32, i32) {
    %c0_i32 = arith.constant 0 : i32
    %c0_i32_0 = arith.constant 0 : i32
    %c0_i32_1 = arith.constant 0 : i32
    return %c0_i32, %c0_i32_0 : i32, i32
  }
  func.func @transform_5(%arg0: i32) -> (i32, i32) {
    %c0_i32 = arith.constant 0 : i32
    %c0_i32_0 = arith.constant 0 : i32
    %c0_i32_1 = arith.constant 0 : i32
    return %c0_i32, %c0_i32_0 : i32, i32
  }
  func.func @transform_6(%arg0: i32) -> (i32, i32) {
    %c0_i32 = arith.constant 0 : i32
    %c0_i32_0 = arith.constant 0 : i32
    %c0_i32_1 = arith.constant 0 : i32
    return %c0_i32, %c0_i32_0 : i32, i32
  }
  func.func @transform_7(%arg0: i32) -> (i32, i32) {
    %c0_i32 = arith.constant 0 : i32
    %c0_i32_0 = arith.constant 0 : i32
    %c0_i32_1 = arith.constant 0 : i32
    return %c0_i32, %c0_i32_0 : i32, i32
  }
  func.func @transform_8(%arg0: i32) -> (i32, i32) {
    %c0_i32 = arith.constant 0 : i32
    %c0_i32_0 = arith.constant 0 : i32
    %c0_i32_1 = arith.constant 0 : i32
    return %c0_i32, %c0_i32_0 : i32, i32
  }
  func.func @transform_9(%arg0: i32) -> (i32, i32) {
    %c0_i32 = arith.constant 0 : i32
    %c0_i32_0 = arith.constant 0 : i32
    return %arg0, %c0_i32 : i32, i32
  }
}

</mosaic_0001>

<llo_original>
// kernel: tpu_custom_call.1
$region0: #{tpu_custom_call.1}
  #allocation0 [shape = 'u32[]', space=smem, size = 0x4, offset = 0x4, fixed_abs, tag = 'smem constant byte address 0x4 - core index']
  #allocation1 [shape = 'u32[144,128]{1,0:T(1,128)}', space=vmem, size = 0x12000, scoped, tag = 'internal scratch']
  %s0 = inlined_call_operand.hbm [shape: f32[64,2048], index: 0, kind: input, shape index: {}]
  %s1 = inlined_call_operand.hbm [shape: bf16[2048,1024], index: 1, kind: input, shape index: {}]
  %s2 = inlined_call_operand.hbm [shape: f32[1,1024], index: 2, kind: input, shape index: {}]
  %s3 = inlined_call_operand.hbm [shape: bf16[1024,256], index: 3, kind: input, shape index: {}]
  %s4 = inlined_call_operand.hbm [shape: f32[1,256], index: 4, kind: input, shape index: {}]
  %s5 = inlined_call_operand.hbm [shape: bf16[256,128], index: 5, kind: input, shape index: {}]
  %s6 = inlined_call_operand.hbm [shape: f32[1,128], index: 6, kind: input, shape index: {}]
  %s7 = inlined_call_operand.hbm [shape: bf16[128,128], index: 7, kind: input, shape index: {}]
  %s8 = inlined_call_operand.hbm [shape: f32[1,128], index: 8, kind: input, shape index: {}]
  %s9 = inlined_call_operand.hbm [shape: bf16[64,128], index: 9, kind: output, shape index: {}]
  %s10 = sld [smem:[#allocation0]]
  $region105: #{tpu_custom_call.1} parent=0
    _
  %s12 = ssub.s32 1, %s10
  %s13 = scalar_select 0, %s12, %s10
  $region1: #{tpu_custom_call.1} parent=0
    #allocation2 [shape = 'u8[524288]{0}', space=vmem, size = 0x80000, scoped, tag = 'input window, operand 0']
    #allocation3 [shape = 's32[2]{0}', space=sflag, size = 0x8, scoped, tag = 'scoped memory for tpu_custom_call.1']
    #allocation4 [shape = 's32[2]{0}', space=sflag, size = 0x8, scoped, tag = 'scoped memory for tpu_custom_call.1']
    #allocation5 [shape = 'u8[4194304]{0}', space=vmem, size = 0x400000, scoped, tag = 'input window, operand 1, single buffered']
    #allocation6 [shape = 's32[1]{0}', space=sflag, size = 0x4, scoped, tag = 'scoped memory for tpu_custom_call.1']
    #allocation7 [shape = 'u8[4096]{0}', space=vmem, size = 0x1000, scoped, tag = 'input window, operand 2, single buffered']
    #allocation8 [shape = 'u8[524288]{0}', space=vmem, size = 0x80000, scoped, tag = 'input window, operand 3, single buffered']
    #allocation9 [shape = 's32[1]{0}', space=sflag, size = 0x4, scoped, tag = 'scoped memory for tpu_custom_call.1']
    #allocation10 [shape = 'u8[1024]{0}', space=vmem, size = 0x400, scoped, tag = 'input window, operand 4, single buffered']
    #allocation11 [shape = 'u8[65536]{0}', space=vmem, size = 0x10000, scoped, tag = 'input window, operand 5, single buffered']
    #allocation12 [shape = 's32[1]{0}', space=sflag, size = 0x4, scoped, tag = 'scoped memory for tpu_custom_call.1']
    #allocation13 [shape = 'u8[512]{0}', space=vmem, size = 0x400, scoped, tag = 'input window, operand 6, single buffered']
    #allocation14 [shape = 'u8[32768]{0}', space=vmem, size = 0x8000, scoped, tag = 'input window, operand 7, single buffered']
    #allocation15 [shape = 's32[1]{0}', space=sflag, size = 0x4, scoped, tag = 'scoped memory for tpu_custom_call.1']
    #allocation16 [shape = 'u8[512]{0}', space=vmem, size = 0x400, scoped, tag = 'input window, operand 8, single buffered']
    #allocation17 [shape = 'u8[16384]{0}', space=vmem, size = 0x4000, scoped, tag = 'output window, operand 0']
    %14 = vsyncpa [#allocation3], 0
    %s15 = scalar_lea.sflag [#allocation3], 1
    %16 = vsyncpa %s15, 0
    %17 = vsyncpa [#allocation6], 0
    %18 = vsyncpa [#allocation9], 0
    %19 = vsyncpa [#allocation12], 0
    %20 = vsyncpa [#allocation15], 0
    %21 = vsyncpa [#allocation4], 0
    %s22 = scalar_lea.sflag [#allocation4], 1
    %23 = vsyncpa %s22, 0
    loop: start=0, step=1, limit=4
    $region2: #{tpu_custom_call.1} parent=1 // loop_pre_header
      _
    $region3: #{tpu_custom_call.1} parent=1 // loop_header
      %s25 = sphi 0, %s29
      %p26 = scmp.ge.s32.totalorder %s25, 4
      %s35 = sphi 0, %s37
      %s38 = sphi 0, %s35
      %s39 = sphi 0, %s38
      %s55 = sphi 0, %s39
      %s59 = sphi 0, %s59
      %s61 = sphi 0, %s59
      %s62 = sphi 0, %s61
      %s76 = sphi 0, %s62
      %s80 = sphi 0, %s80
      %s82 = sphi 0, %s80
      %s83 = sphi 0, %s82
      %s97 = sphi 0, %s83
      %s101 = sphi 0, %s101
      %s103 = sphi 0, %s101
      %s104 = sphi 0, %s103
      %s118 = sphi 0, %s104
      %s122 = sphi 0, %s122
      %s124 = sphi 0, %s122
      %s125 = sphi 0, %s124
      %s139 = sphi 0, %s125
      %s143 = sphi 0, %s143
      %s145 = sphi 0, %s143
      %s146 = sphi 0, %s145
      %s160 = sphi 0, %s146
      %s164 = sphi 0, %s164
      %s166 = sphi 0, %s164
      %s167 = sphi 0, %s166
      %s181 = sphi 0, %s167
      %s185 = sphi 0, %s185
      %s187 = sphi 0, %s185
      %s188 = sphi 0, %s187
      %s202 = sphi 0, %s188
      %s206 = sphi 0, %s206
      %s208 = sphi 0, %s206
      %s209 = sphi 0, %s208
      %s223 = sphi 0, %s209
      %s229 = sphi 0, %s231
      %s232 = sphi 0, %s229
      %s233 = sphi 0, %s232
      %s249 = sphi 0, %s233
    $region4: #{tpu_custom_call.1} parent=1 // loop_header_branch
      %28 = sbr.rel (%p26) target = $region8
    $region5: #{tpu_custom_call.1} parent=1 // loop_body
      %s30 = ssub.s32 %s25, 1
      %s31 = ssub.s32 %s25, 2
      %s32 = sadd.s32 %s25, 1
      %s33 = ssub.s32 %s25, %s32
      %p34 = scmp.eq.s32.totalorder %s33, 0
      %s36 = sadd.s32 %s35, 1
      %s37 = scalar_select %p34, %s35, %s36
      %p40 = pneg %p34
      %p41 = scmp.eq.s32.totalorder %s25, 1
      %p42 = por %p40, %p41
      %p43 = scmp.ne.s32.totalorder %s35, %s38
      %p44 = scmp.eq.s32.totalorder %s25, 0
      %p45 = por %p43, %p44
      %p46 = scmp.ne.s32.totalorder %s35, %s38
      %p47 = scmp.eq.s32.totalorder %s30, 1
      %p48 = por %p46, %p47
      %p49 = scmp.ne.s32.totalorder %s38, %s39
      %p50 = scmp.eq.s32.totalorder %s30, 0
      %p51 = por %p49, %p50
      %p52 = scmp.ne.s32.totalorder %s38, %s39
      %p53 = scmp.eq.s32.totalorder %s31, 1
      %p54 = por %p52, %p53
      %p56 = scmp.ne.s32.totalorder %s39, %s55
      %p57 = scmp.eq.s32.totalorder %s31, 0
      %p58 = por %p56, %p57
      %s60 = sadd.s32 %s59, 1
      %p63 = scmp.eq.s32.totalorder %s25, 1
      %p64 = scmp.ne.s32.totalorder %s59, %s61
      %p65 = scmp.eq.s32.totalorder %s25, 0
      %p66 = por %p64, %p65
      %p67 = scmp.ne.s32.totalorder %s59, %s61
      %p68 = scmp.eq.s32.totalorder %s30, 1
      %p69 = por %p67, %p68
      %p70 = scmp.ne.s32.totalorder %s61, %s62
      %p71 = scmp.eq.s32.totalorder %s30, 0
      %p72 = por %p70, %p71
      %p73 = scmp.ne.s32.totalorder %s61, %s62
      %p74 = scmp.eq.s32.totalorder %s31, 1
      %p75 = por %p73, %p74
      %p77 = scmp.ne.s32.totalorder %s62, %s76
      %p78 = scmp.eq.s32.totalorder %s31, 0
      %p79 = por %p77, %p78
      %s81 = sadd.s32 %s80, 1
      %p84 = scmp.eq.s32.totalorder %s25, 1
      %p85 = scmp.ne.s32.totalorder %s80, %s82
      %p86 = scmp.eq.s32.totalorder %s25, 0
      %p87 = por %p85, %p86
      %p88 = scmp.ne.s32.totalorder %s80, %s82
      %p89 = scmp.eq.s32.totalorder %s30, 1
      %p90 = por %p88, %p89
      %p91 = scmp.ne.s32.totalorder %s82, %s83
      %p92 = scmp.eq.s32.totalorder %s30, 0
      %p93 = por %p91, %p92
      %p94 = scmp.ne.s32.totalorder %s82, %s83
      %p95 = scmp.eq.s32.totalorder %s31, 1
      %p96 = por %p94, %p95
      %p98 = scmp.ne.s32.totalorder %s83, %s97
      %p99 = scmp.eq.s32.totalorder %s31, 0
      %p100 = por %p98, %p99
      %s102 = sadd.s32 %s101, 1
      %p105 = scmp.eq.s32.totalorder %s25, 1
      %p106 = scmp.ne.s32.totalorder %s101, %s103
      %p107 = scmp.eq.s32.totalorder %s25, 0
      %p108 = por %p106, %p107
      %p109 = scmp.ne.s32.totalorder %s101, %s103
      %p110 = scmp.eq.s32.totalorder %s30, 1
      %p111 = por %p109, %p110
      %p112 = scmp.ne.s32.totalorder %s103, %s104
      %p113 = scmp.eq.s32.totalorder %s30, 0
      %p114 = por %p112, %p113
      %p115 = scmp.ne.s32.totalorder %s103, %s104
      %p116 = scmp.eq.s32.totalorder %s31, 1
      %p117 = por %p115, %p116
      %p119 = scmp.ne.s32.totalorder %s104, %s118
      %p120 = scmp.eq.s32.totalorder %s31, 0
      %p121 = por %p119, %p120
      %s123 = sadd.s32 %s122, 1
      %p126 = scmp.eq.s32.totalorder %s25, 1
      %p127 = scmp.ne.s32.totalorder %s122, %s124
      %p128 = scmp.eq.s32.totalorder %s25, 0
      %p129 = por %p127, %p128
      %p130 = scmp.ne.s32.totalorder %s122, %s124
      %p131 = scmp.eq.s32.totalorder %s30, 1
      %p132 = por %p130, %p131
      %p133 = scmp.ne.s32.totalorder %s124, %s125
      %p134 = scmp.eq.s32.totalorder %s30, 0
      %p135 = por %p133, %p134
      %p136 = scmp.ne.s32.totalorder %s124, %s125
      %p137 = scmp.eq.s32.totalorder %s31, 1
      %p138 = por %p136, %p137
      %p140 = scmp.ne.s32.totalorder %s125, %s139
      %p141 = scmp.eq.s32.totalorder %s31, 0
      %p142 = por %p140, %p141
      %s144 = sadd.s32 %s143, 1
      %p147 = scmp.eq.s32.totalorder %s25, 1
      %p148 = scmp.ne.s32.totalorder %s143, %s145
      %p149 = scmp.eq.s32.totalorder %s25, 0
      %p150 = por %p148, %p149
      %p151 = scmp.ne.s32.totalorder %s143, %s145
      %p152 = scmp.eq.s32.totalorder %s30, 1
      %p153 = por %p151, %p152
      %p154 = scmp.ne.s32.totalorder %s145, %s146
      %p155 = scmp.eq.s32.totalorder %s30, 0
      %p156 = por %p154, %p155
      %p157 = scmp.ne.s32.totalorder %s145, %s146
      %p158 = scmp.eq.s32.totalorder %s31, 1
      %p159 = por %p157, %p158
      %p161 = scmp.ne.s32.totalorder %s146, %s160
      %p162 = scmp.eq.s32.totalorder %s31, 0
      %p163 = por %p161, %p162
      %s165 = sadd.s32 %s164, 1
      %p168 = scmp.eq.s32.totalorder %s25, 1
      %p169 = scmp.ne.s32.totalorder %s164, %s166
      %p170 = scmp.eq.s32.totalorder %s25, 0
      %p171 = por %p169, %p170
      %p172 = scmp.ne.s32.totalorder %s164, %s166
      %p173 = scmp.eq.s32.totalorder %s30, 1
      %p174 = por %p172, %p173
      %p175 = scmp.ne.s32.totalorder %s166, %s167
      %p176 = scmp.eq.s32.totalorder %s30, 0
      %p177 = por %p175, %p176
      %p178 = scmp.ne.s32.totalorder %s166, %s167
      %p179 = scmp.eq.s32.totalorder %s31, 1
      %p180 = por %p178, %p179
      %p182 = scmp.ne.s32.totalorder %s167, %s181
      %p183 = scmp.eq.s32.totalorder %s31, 0
      %p184 = por %p182, %p183
      %s186 = sadd.s32 %s185, 1
      %p189 = scmp.eq.s32.totalorder %s25, 1
      %p190 = scmp.ne.s32.totalorder %s185, %s187
      %p191 = scmp.eq.s32.totalorder %s25, 0
      %p192 = por %p190, %p191
      %p193 = scmp.ne.s32.totalorder %s185, %s187
      %p194 = scmp.eq.s32.totalorder %s30, 1
      %p195 = por %p193, %p194
      %p196 = scmp.ne.s32.totalorder %s187, %s188
      %p197 = scmp.eq.s32.totalorder %s30, 0
      %p198 = por %p196, %p197
      %p199 = scmp.ne.s32.totalorder %s187, %s188
      %p200 = scmp.eq.s32.totalorder %s31, 1
      %p201 = por %p199, %p200
      %p203 = scmp.ne.s32.totalorder %s188, %s202
      %p204 = scmp.eq.s32.totalorder %s31, 0
      %p205 = por %p203, %p204
      %s207 = sadd.s32 %s206, 1
      %p210 = scmp.eq.s32.totalorder %s25, 1
      %p211 = scmp.ne.s32.totalorder %s206, %s208
      %p212 = scmp.eq.s32.totalorder %s25, 0
      %p213 = por %p211, %p212
      %p214 = scmp.ne.s32.totalorder %s206, %s208
      %p215 = scmp.eq.s32.totalorder %s30, 1
      %p216 = por %p214, %p215
      %p217 = scmp.ne.s32.totalorder %s208, %s209
      %p218 = scmp.eq.s32.totalorder %s30, 0
      %p219 = por %p217, %p218
      %p220 = scmp.ne.s32.totalorder %s208, %s209
      %p221 = scmp.eq.s32.totalorder %s31, 1
      %p222 = por %p220, %p221
      %p224 = scmp.ne.s32.totalorder %s209, %s223
      %p225 = scmp.eq.s32.totalorder %s31, 0
      %p226 = por %p224, %p225
      %s227 = ssub.s32 %s25, %s32
      %p228 = scmp.eq.s32.totalorder %s227, 0
      %s230 = sadd.s32 %s229, 1
      %s231 = scalar_select %p228, %s229, %s230
      %p234 = pneg %p228
      %p235 = scmp.eq.s32.totalorder %s25, 1
      %p236 = por %p234, %p235
      %p237 = scmp.ne.s32.totalorder %s229, %s232
      %p238 = scmp.eq.s32.totalorder %s25, 0
      %p239 = por %p237, %p238
      %p240 = scmp.ne.s32.totalorder %s229, %s232
      %p241 = scmp.eq.s32.totalorder %s30, 1
      %p242 = por %p240, %p241
      %p243 = scmp.ne.s32.totalorder %s232, %s233
      %p244 = scmp.eq.s32.totalorder %s30, 0
      %p245 = por %p243, %p244
      %p246 = scmp.ne.s32.totalorder %s232, %s233
      %p247 = scmp.eq.s32.totalorder %s31, 1
      %p248 = por %p246, %p247
      %p250 = scmp.ne.s32.totalorder %s233, %s249
      %p251 = scmp.eq.s32.totalorder %s31, 0
      %p252 = por %p250, %p251
      %p253 = scmp.le.s32.totalorder 1, %s25
      %p254 = scmp.lt.s32.totalorder %s25, 3
      %p255 = pnand %p253, %p254
      %p256 = pneg %p255
      // Predicated region
      $region9: #{tpu_custom_call.1} parent=5 // pred_check
        _
      $region10: #{tpu_custom_call.1} parent=5 // pred_check_branch
        %258 = sbr.rel (%p255) target = $region12
      $region11: #{tpu_custom_call.1} parent=5 // pred_region
        %s259 = ssub.s32 %s25, 1
        // Predicated region
        $region13: #{tpu_custom_call.1} parent=11 // pred_check
          %p260 = pneg %p72
        $region14: #{tpu_custom_call.1} parent=11 // pred_check_branch
          %262 = sbr.rel (%p260) target = $region16
        $region15: #{tpu_custom_call.1} parent=11 // pred_region
          %s264 = ssub.s32 131072, 131072
          %265 = vsyncadd [#allocation6], %s264
          %s266 = sshll.u32 [#allocation5], 4
          %s267 = int_to_ptr.vmem [resolvable:$true] %s266
          %272 = dma.hbm_to_vmem [thread:$0]  %s1, 131072, %s267, [#allocation6], 512, 512, 32
        $region16: #{tpu_custom_call.1} parent=11 // pred_fallthru
          _
        // Predicated region
        $region17: #{tpu_custom_call.1} parent=11 // pred_check
          %p273 = pneg %p93
        $region18: #{tpu_custom_call.1} parent=11 // pred_check_branch
          %275 = sbr.rel (%p273) target = $region20
        $region19: #{tpu_custom_call.1} parent=11 // pred_region
          %s277 = ssub.s32 128, 128
          %278 = vsyncadd [#allocation6], %s277
          %s280 = sshll.u32 [#allocation7], 4
          %s281 = int_to_ptr.vmem [resolvable:$true] %s280
          %283 = dma.hbm_to_vmem [thread:$0]  %s2, 128, %s281, [#allocation6]
        $region20: #{tpu_custom_call.1} parent=11 // pred_fallthru
          _
        // Predicated region
        $region21: #{tpu_custom_call.1} parent=11 // pred_check
          %p284 = pneg %p114
        $region22: #{tpu_custom_call.1} parent=11 // pred_check_branch
          %286 = sbr.rel (%p284) target = $region24
        $region23: #{tpu_custom_call.1} parent=11 // pred_region
          %s288 = ssub.s32 16384, 16384
          %289 = vsyncadd [#allocation9], %s288
          %s290 = sshll.u32 [#allocation8], 4
          %s291 = int_to_ptr.vmem [resolvable:$true] %s290
          %296 = dma.hbm_to_vmem [thread:$0]  %s3, 16384, %s291, [#allocation9], 128, 128, 8
        $region24: #{tpu_custom_call.1} parent=11 // pred_fallthru
          _
        // Predicated region
        $region25: #{tpu_custom_call.1} parent=11 // pred_check
          %p297 = pneg %p135
        $region26: #{tpu_custom_call.1} parent=11 // pred_check_branch
          %299 = sbr.rel (%p297) target = $region28
        $region27: #{tpu_custom_call.1} parent=11 // pred_region
          %s301 = ssub.s32 32, 32
          %302 = vsyncadd [#allocation9], %s301
          %s304 = sshll.u32 [#allocation10], 4
          %s305 = int_to_ptr.vmem [resolvable:$true] %s304
          %307 = dma.hbm_to_vmem [thread:$0]  %s4, 32, %s305, [#allocation9]
        $region28: #{tpu_custom_call.1} parent=11 // pred_fallthru
          _
        // Predicated region
        $region29: #{tpu_custom_call.1} parent=11 // pred_check
          %p308 = pneg %p156
        $region30: #{tpu_custom_call.1} parent=11 // pred_check_branch
          %310 = sbr.rel (%p308) target = $region32
        $region31: #{tpu_custom_call.1} parent=11 // pred_region
          %s312 = ssub.s32 2048, 2048
          %313 = vsyncadd [#allocation12], %s312
          %s314 = sshll.u32 [#allocation11], 4
          %s315 = int_to_ptr.vmem [resolvable:$true] %s314
          %320 = dma.hbm_to_vmem [thread:$0]  %s5, 2048, %s315, [#allocation12], 64, 64, 4
        $region32: #{tpu_custom_call.1} parent=11 // pred_fallthru
          _
        // Predicated region
        $region33: #{tpu_custom_call.1} parent=11 // pred_check
          %p321 = pneg %p177
        $region34: #{tpu_custom_call.1} parent=11 // pred_check_branch
          %323 = sbr.rel (%p321) target = $region36
        $region35: #{tpu_custom_call.1} parent=11 // pred_region
          %s325 = ssub.s32 16, 16
          %326 = vsyncadd [#allocation12], %s325
          %s328 = sshll.u32 [#allocation13], 4
          %s329 = int_to_ptr.vmem [resolvable:$true] %s328
          %331 = dma.hbm_to_vmem [thread:$0]  %s6, 16, %s329, [#allocation12]
        $region36: #{tpu_custom_call.1} parent=11 // pred_fallthru
          _
        // Predicated region
        $region37: #{tpu_custom_call.1} parent=11 // pred_check
          %p332 = pneg %p198
        $region38: #{tpu_custom_call.1} parent=11 // pred_check_branch
          %334 = sbr.rel (%p332) target = $region40
        $region39: #{tpu_custom_call.1} parent=11 // pred_region
          %s336 = ssub.s32 1024, 1024
          %337 = vsyncadd [#allocation15], %s336
          %s338 = sshll.u32 [#allocation14], 4
          %s339 = int_to_ptr.vmem [resolvable:$true] %s338
          %344 = dma.hbm_to_vmem [thread:$0]  %s7, 1024, %s339, [#allocation15], 64, 64, 4
        $region40: #{tpu_custom_call.1} parent=11 // pred_fallthru
          _
        // Predicated region
        $region41: #{tpu_custom_call.1} parent=11 // pred_check
          %p345 = pneg %p219
        $region42: #{tpu_custom_call.1} parent=11 // pred_check_branch
          %347 = sbr.rel (%p345) target = $region44
        $region43: #{tpu_custom_call.1} parent=11 // pred_region
          %s349 = ssub.s32 16, 16
          %350 = vsyncadd [#allocation15], %s349
          %s352 = sshll.u32 [#allocation16], 4
          %s353 = int_to_ptr.vmem [resolvable:$true] %s352
          %355 = dma.hbm_to_vmem [thread:$0]  %s8, 16, %s353, [#allocation15]
        $region44: #{tpu_custom_call.1} parent=11 // pred_fallthru
          _
      $region12: #{tpu_custom_call.1} parent=5 // pred_fallthru
        _
      %p356 = scmp.lt.s32.totalorder %s25, 2
      // Predicated region
      $region45: #{tpu_custom_call.1} parent=5 // pred_check
        %p357 = pneg %p356
      $region46: #{tpu_custom_call.1} parent=5 // pred_check_branch
        %359 = sbr.rel (%p357) target = $region48
      $region47: #{tpu_custom_call.1} parent=5 // pred_region
        // Predicated region
        $region49: #{tpu_custom_call.1} parent=47 // pred_check
          %p360 = pneg %p45
        $region50: #{tpu_custom_call.1} parent=47 // pred_check_branch
          %362 = sbr.rel (%p360) target = $region52
        $region51: #{tpu_custom_call.1} parent=47 // pred_region
          %s363 = sand.u32 %s35, 1
          %s364 = scalar_lea.sflag [#allocation3], %s363
          %s365 = sand.u32 %s35, 1
          %s366 = smul.addr %s365, 512
          %s367 = scalar_lea.vmem [#allocation2], %s366
          %s368 = smul.u32 4, %s25
          %s370 = ssub.s32 8192, 8192
          %371 = vsyncadd %s364, %s370
          %s372 = smul.addr %s368, 16
          %s373 = smul.addr %s372, 128
          %s374 = scalar_lea.hbm %s0, %s373
          %s375 = sshll.u32 %s367, 4
          %s376 = int_to_ptr.vmem [resolvable:$true] %s375
          %381 = dma.hbm_to_vmem [thread:$0]  %s374, 8192, %s376, %s364, 2048, 2048, 128
        $region52: #{tpu_custom_call.1} parent=47 // pred_fallthru
          _
      $region48: #{tpu_custom_call.1} parent=5 // pred_fallthru
        _
      %p382 = scmp.le.s32.totalorder 1, %s25
      %p383 = scmp.lt.s32.totalorder %s25, 3
      %p384 = pnand %p382, %p383
      %p385 = pneg %p384
      // Predicated region
      $region53: #{tpu_custom_call.1} parent=5 // pred_check
        _
      $region54: #{tpu_custom_call.1} parent=5 // pred_check_branch
        %387 = sbr.rel (%p384) target = $region56
      $region55: #{tpu_custom_call.1} parent=5 // pred_region
        %s388 = ssub.s32 %s25, 1
        %s389 = sand.u32 %s38, 1
        %s390 = scalar_lea.sflag [#allocation3], %s389
        %s391 = sand.u32 %s38, 1
        %s392 = smul.addr %s391, 512
        %s393 = scalar_lea.vmem [#allocation2], %s392
        // Predicated region
        $region57: #{tpu_custom_call.1} parent=55 // pred_check
          %p394 = pneg %p51
        $region58: #{tpu_custom_call.1} parent=55 // pred_check_branch
          %396 = sbr.rel (%p394) target = $region60
        $region59: #{tpu_custom_call.1} parent=55 // pred_region
          %397 = dma.done %s390, 8192
        $region60: #{tpu_custom_call.1} parent=55 // pred_fallthru
          _
        // Predicated region
        $region61: #{tpu_custom_call.1} parent=55 // pred_check
          %p398 = pneg %p72
        $region62: #{tpu_custom_call.1} parent=55 // pred_check_branch
          %400 = sbr.rel (%p398) target = $region64
        $region63: #{tpu_custom_call.1} parent=55 // pred_region
          %401 = dma.done [#allocation6], 131072
        $region64: #{tpu_custom_call.1} parent=55 // pred_fallthru
          _
        // Predicated region
        $region65: #{tpu_custom_call.1} parent=55 // pred_check
          %p402 = pneg %p93
        $region66: #{tpu_custom_call.1} parent=55 // pred_check_branch
          %404 = sbr.rel (%p402) target = $region68
        $region67: #{tpu_custom_call.1} parent=55 // pred_region
          %405 = dma.done [#allocation6], 128
        $region68: #{tpu_custom_call.1} parent=55 // pred_fallthru
          _
        // Predicated region
        $region69: #{tpu_custom_call.1} parent=55 // pred_check
          %p406 = pneg %p114
        $region70: #{tpu_custom_call.1} parent=55 // pred_check_branch
          %408 = sbr.rel (%p406) target = $region72
        $region71: #{tpu_custom_call.1} parent=55 // pred_region
          %409 = dma.done [#allocation9], 16384
        $region72: #{tpu_custom_call.1} parent=55 // pred_fallthru
          _
        // Predicated region
        $region73: #{tpu_custom_call.1} parent=55 // pred_check
          %p410 = pneg %p135
        $region74: #{tpu_custom_call.1} parent=55 // pred_check_branch
          %412 = sbr.rel (%p410) target = $region76
        $region75: #{tpu_custom_call.1} parent=55 // pred_region
          %413 = dma.done [#allocation9], 32
        $region76: #{tpu_custom_call.1} parent=55 // pred_fallthru
          _
        // Predicated region
        $region77: #{tpu_custom_call.1} parent=55 // pred_check
          %p414 = pneg %p156
        $region78: #{tpu_custom_call.1} parent=55 // pred_check_branch
          %416 = sbr.rel (%p414) target = $region80
        $region79: #{tpu_custom_call.1} parent=55 // pred_region
          %417 = dma.done [#allocation12], 2048
        $region80: #{tpu_custom_call.1} parent=55 // pred_fallthru
          _
        // Predicated region
        $region81: #{tpu_custom_call.1} parent=55 // pred_check
          %p418 = pneg %p177
        $region82: #{tpu_custom_call.1} parent=55 // pred_check_branch
          %420 = sbr.rel (%p418) target = $region84
        $region83: #{tpu_custom_call.1} parent=55 // pred_region
          %421 = dma.done [#allocation12], 16
        $region84: #{tpu_custom_call.1} parent=55 // pred_fallthru
          _
        // Predicated region
        $region85: #{tpu_custom_call.1} parent=55 // pred_check
          %p422 = pneg %p198
        $region86: #{tpu_custom_call.1} parent=55 // pred_check_branch
          %424 = sbr.rel (%p422) target = $region88
        $region87: #{tpu_custom_call.1} parent=55 // pred_region
          %425 = dma.done [#allocation15], 1024
        $region88: #{tpu_custom_call.1} parent=55 // pred_fallthru
          _
        // Predicated region
        $region89: #{tpu_custom_call.1} parent=55 // pred_check
          %p426 = pneg %p219
        $region90: #{tpu_custom_call.1} parent=55 // pred_check_branch
          %428 = sbr.rel (%p426) target = $region92
        $region91: #{tpu_custom_call.1} parent=55 // pred_region
          %429 = dma.done [#allocation15], 16
        $region92: #{tpu_custom_call.1} parent=55 // pred_fallthru
          _
        %s430 = sand.u32 %s38, 1
        %s431 = scalar_lea.sflag [#allocation3], %s430
        %s432 = sand.u32 %s38, 1
        %s433 = smul.addr %s432, 512
        %s434 = scalar_lea.vmem [#allocation2], %s433
        %p435 = pneg %p51
        %p436 = pneg %p48
        %p437 = pneg %p72
        %p438 = pneg %p69
        %p439 = pneg %p93
        %p440 = pneg %p90
        %p441 = pneg %p114
        %p442 = pneg %p111
        %p443 = pneg %p135
        %p444 = pneg %p132
        %p445 = pneg %p156
        %p446 = pneg %p153
        %p447 = pneg %p177
        %p448 = pneg %p174
        %p449 = pneg %p198
        %p450 = pneg %p195
        %p451 = pneg %p219
        %p452 = pneg %p216
        %p453 = pneg %p245
        %p454 = pneg %p242
        %s455 = sand.u32 %s232, 1
        %s456 = scalar_lea.sflag [#allocation4], %s455
        %s457 = sand.u32 %s232, 1
        %s458 = smul.addr %s457, 16
        %s459 = scalar_lea.vmem [#allocation17], %s458
        %s460 = smul.u32 4, %s30
        %s461 = smul.u32 4, %s30
        %v463 = vld [vmem:[%s393] sm:$0xff]
        %v464 = vld [vmem:[%s393 + $0x8] sm:$0xff]
        %v465 = vld [vmem:[%s393 + $0x10] sm:$0xff]
        %v466 = vld [vmem:[%s393 + $0x18] sm:$0xff]
        %v467 = vld [vmem:[%s393 + $0x20] sm:$0xff]
        %v468 = vld [vmem:[%s393 + $0x28] sm:$0xff]
        %v469 = vld [vmem:[%s393 + $0x30] sm:$0xff]
        %v470 = vld [vmem:[%s393 + $0x38] sm:$0xff]
        %v471 = vld [vmem:[%s393 + $0x40] sm:$0xff]
        %v472 = vld [vmem:[%s393 + $0x48] sm:$0xff]
        %v473 = vld [vmem:[%s393 + $0x50] sm:$0xff]
        %v474 = vld [vmem:[%s393 + $0x58] sm:$0xff]
        %v475 = vld [vmem:[%s393 + $0x60] sm:$0xff]
        %v476 = vld [vmem:[%s393 + $0x68] sm:$0xff]
        %v477 = vld [vmem:[%s393 + $0x70] sm:$0xff]
        %v478 = vld [vmem:[%s393 + $0x78] sm:$0xff]
        %v479 = vld [vmem:[%s393 + $0x80] sm:$0xff]
        %v480 = vld [vmem:[%s393 + $0x88] sm:$0xff]
        %v481 = vld [vmem:[%s393 + $0x90] sm:$0xff]
        %v482 = vld [vmem:[%s393 + $0x98] sm:$0xff]
        %v483 = vld [vmem:[%s393 + $0xa0] sm:$0xff]
        %v484 = vld [vmem:[%s393 + $0xa8] sm:$0xff]
        %v485 = vld [vmem:[%s393 + $0xb0] sm:$0xff]
        %v486 = vld [vmem:[%s393 + $0xb8] sm:$0xff]
        %v487 = vld [vmem:[%s393 + $0xc0] sm:$0xff]
        %v488 = vld [vmem:[%s393 + $0xc8] sm:$0xff]
        %v489 = vld [vmem:[%s393 + $0xd0] sm:$0xff]
        %v490 = vld [vmem:[%s393 + $0xd8] sm:$0xff]
        %v491 = vld [vmem:[%s393 + $0xe0] sm:$0xff]
        %v492 = vld [vmem:[%s393 + $0xe8] sm:$0xff]
        %v493 = vld [vmem:[%s393 + $0xf0] sm:$0xff]
        %v494 = vld [vmem:[%s393 + $0xf8] sm:$0xff]
        %v495 = vld [vmem:[%s393 + $0x100] sm:$0xff]
        %v496 = vld [vmem:[%s393 + $0x108] sm:$0xff]
        %v497 = vld [vmem:[%s393 + $0x110] sm:$0xff]
        %v498 = vld [vmem:[%s393 + $0x118] sm:$0xff]
        %v499 = vld [vmem:[%s393 + $0x120] sm:$0xff]
        %v500 = vld [vmem:[%s393 + $0x128] sm:$0xff]
        %v501 = vld [vmem:[%s393 + $0x130] sm:$0xff]
        %v502 = vld [vmem:[%s393 + $0x138] sm:$0xff]
        %v503 = vld [vmem:[%s393 + $0x140] sm:$0xff]
        %v504 = vld [vmem:[%s393 + $0x148] sm:$0xff]
        %v505 = vld [vmem:[%s393 + $0x150] sm:$0xff]
        %v506 = vld [vmem:[%s393 + $0x158] sm:$0xff]
        %v507 = vld [vmem:[%s393 + $0x160] sm:$0xff]
        %v508 = vld [vmem:[%s393 + $0x168] sm:$0xff]
        %v509 = vld [vmem:[%s393 + $0x170] sm:$0xff]
        %v510 = vld [vmem:[%s393 + $0x178] sm:$0xff]
        %v511 = vld [vmem:[%s393 + $0x180] sm:$0xff]
        %v512 = vld [vmem:[%s393 + $0x188] sm:$0xff]
        %v513 = vld [vmem:[%s393 + $0x190] sm:$0xff]
        %v514 = vld [vmem:[%s393 + $0x198] sm:$0xff]
        %v515 = vld [vmem:[%s393 + $0x1a0] sm:$0xff]
        %v516 = vld [vmem:[%s393 + $0x1a8] sm:$0xff]
        %v517 = vld [vmem:[%s393 + $0x1b0] sm:$0xff]
        %v518 = vld [vmem:[%s393 + $0x1b8] sm:$0xff]
        %v519 = vld [vmem:[%s393 + $0x1c0] sm:$0xff]
        %v520 = vld [vmem:[%s393 + $0x1c8] sm:$0xff]
        %v521 = vld [vmem:[%s393 + $0x1d0] sm:$0xff]
        %v522 = vld [vmem:[%s393 + $0x1d8] sm:$0xff]
        %v523 = vld [vmem:[%s393 + $0x1e0] sm:$0xff]
        %v524 = vld [vmem:[%s393 + $0x1e8] sm:$0xff]
        %v525 = vld [vmem:[%s393 + $0x1f0] sm:$0xff]
        %v526 = vld [vmem:[%s393 + $0x1f8] sm:$0xff]
        %v527 = vpack.c.bf16 %v479, %v463
        %v528 = vpack.c.bf16 %v480, %v464
        %v529 = vpack.c.bf16 %v481, %v465
        %v530 = vpack.c.bf16 %v482, %v466
        %v531 = vpack.c.bf16 %v483, %v467
        %v532 = vpack.c.bf16 %v484, %v468
        %v533 = vpack.c.bf16 %v485, %v469
        %v534 = vpack.c.bf16 %v486, %v470
        %v535 = vpack.c.bf16 %v487, %v471
        %v536 = vpack.c.bf16 %v488, %v472
        %v537 = vpack.c.bf16 %v489, %v473
        %v538 = vpack.c.bf16 %v490, %v474
        %v539 = vpack.c.bf16 %v491, %v475
        %v540 = vpack.c.bf16 %v492, %v476
        %v541 = vpack.c.bf16 %v493, %v477
        %v542 = vpack.c.bf16 %v494, %v478
        %v543 = vpack.c.bf16 %v511, %v495
        %v544 = vpack.c.bf16 %v512, %v496
        %v545 = vpack.c.bf16 %v513, %v497
        %v546 = vpack.c.bf16 %v514, %v498
        %v547 = vpack.c.bf16 %v515, %v499
        %v548 = vpack.c.bf16 %v516, %v500
        %v549 = vpack.c.bf16 %v517, %v501
        %v550 = vpack.c.bf16 %v518, %v502
        %v551 = vpack.c.bf16 %v519, %v503
        %v552 = vpack.c.bf16 %v520, %v504
        %v553 = vpack.c.bf16 %v521, %v505
        %v554 = vpack.c.bf16 %v522, %v506
        %v555 = vpack.c.bf16 %v523, %v507
        %v556 = vpack.c.bf16 %v524, %v508
        %v557 = vpack.c.bf16 %v525, %v509
        %v558 = vpack.c.bf16 %v526, %v510
        %v559 = vld [vmem:[#allocation5] sm:$0xff]
        %v560 = vld [vmem:[#allocation5 + $0x8] sm:$0xff]
        %v561 = vld [vmem:[#allocation5 + $0x10] sm:$0xff]
        %v562 = vld [vmem:[#allocation5 + $0x18] sm:$0xff]
        %v563 = vld [vmem:[#allocation5 + $0x20] sm:$0xff]
        %v564 = vld [vmem:[#allocation5 + $0x28] sm:$0xff]
        %v565 = vld [vmem:[#allocation5 + $0x30] sm:$0xff]
        %v566 = vld [vmem:[#allocation5 + $0x38] sm:$0xff]
        %v567 = vld [vmem:[#allocation5 + $0x40] sm:$0xff]
        %v568 = vld [vmem:[#allocation5 + $0x48] sm:$0xff]
        %v569 = vld [vmem:[#allocation5 + $0x50] sm:$0xff]
        %v570 = vld [vmem:[#allocation5 + $0x58] sm:$0xff]
        %v571 = vld [vmem:[#allocation5 + $0x60] sm:$0xff]
        %v572 = vld [vmem:[#allocation5 + $0x68] sm:$0xff]
        %v573 = vld [vmem:[#allocation5 + $0x70] sm:$0xff]
        %v574 = vld [vmem:[#allocation5 + $0x78] sm:$0xff]
        %v575 = vld [vmem:[#allocation5 + $0x80] sm:$0xff]
        %v576 = vld [vmem:[#allocation5 + $0x88] sm:$0xff]
        %v577 = vld [vmem:[#allocation5 + $0x90] sm:$0xff]
        %v578 = vld [vmem:[#allocation5 + $0x98] sm:$0xff]
        %v579 = vld [vmem:[#allocation5 + $0xa0] sm:$0xff]
        %v580 = vld [vmem:[#allocation5 + $0xa8] sm:$0xff]
        %v581 = vld [vmem:[#allocation5 + $0xb0] sm:$0xff]
        %v582 = vld [vmem:[#allocation5 + $0xb8] sm:$0xff]
        %v583 = vld [vmem:[#allocation5 + $0xc0] sm:$0xff]
        %v584 = vld [vmem:[#allocation5 + $0xc8] sm:$0xff]
        %v585 = vld [vmem:[#allocation5 + $0xd0] sm:$0xff]
        %v586 = vld [vmem:[#allocation5 + $0xd8] sm:$0xff]
        %v587 = vld [vmem:[#allocation5 + $0xe0] sm:$0xff]
        %v588 = vld [vmem:[#allocation5 + $0xe8] sm:$0xff]
        %v589 = vld [vmem:[#allocation5 + $0xf0] sm:$0xff]
        %v590 = vld [vmem:[#allocation5 + $0xf8] sm:$0xff]
        %v591 = vld [vmem:[#allocation5 + $0x100] sm:$0xff]
        %v592 = vld [vmem:[#allocation5 + $0x108] sm:$0xff]
        %v593 = vld [vmem:[#allocation5 + $0x110] sm:$0xff]
        %v594 = vld [vmem:[#allocation5 + $0x118] sm:$0xff]
        %v595 = vld [vmem:[#allocation5 + $0x120] sm:$0xff]
        %v596 = vld [vmem:[#allocation5 + $0x128] sm:$0xff]
        %v597 = vld [vmem:[#allocation5 + $0x130] sm:$0xff]
        %v598 = vld [vmem:[#allocation5 + $0x138] sm:$0xff]
        %v599 = vld [vmem:[#allocation5 + $0x140] sm:$0xff]
        %v600 = vld [vmem:[#allocation5 + $0x148] sm:$0xff]
        %v601 = vld [vmem:[#allocation5 + $0x150] sm:$0xff]
        %v602 = vld [vmem:[#allocation5 + $0x158] sm:$0xff]
        %v603 = vld [vmem:[#allocation5 + $0x160] sm:$0xff]
        %v604 = vld [vmem:[#allocation5 + $0x168] sm:$0xff]
        %v605 = vld [vmem:[#allocation5 + $0x170] sm:$0xff]
        %v606 = vld [vmem:[#allocation5 + $0x178] sm:$0xff]
        %v607 = vld [vmem:[#allocation5 + $0x180] sm:$0xff]
        %v608 = vld [vmem:[#allocation5 + $0x188] sm:$0xff]
        %v609 = vld [vmem:[#allocation5 + $0x190] sm:$0xff]
        %v610 = vld [vmem:[#allocation5 + $0x198] sm:$0xff]
        %v611 = vld [vmem:[#allocation5 + $0x1a0] sm:$0xff]
        %v612 = vld [vmem:[#allocation5 + $0x1a8] sm:$0xff]
        %v613 = vld [vmem:[#allocation5 + $0x1b0] sm:$0xff]
        %v614 = vld [vmem:[#allocation5 + $0x1b8] sm:$0xff]
        %v615 = vld [vmem:[#allocation5 + $0x1c0] sm:$0xff]
        %v616 = vld [vmem:[#allocation5 + $0x1c8] sm:$0xff]
        %v617 = vld [vmem:[#allocation5 + $0x1d0] sm:$0xff]
        %v618 = vld [vmem:[#allocation5 + $0x1d8] sm:$0xff]
        %v619 = vld [vmem:[#allocation5 + $0x1e0] sm:$0xff]
        %v620 = vld [vmem:[#allocation5 + $0x1e8] sm:$0xff]
        %v621 = vld [vmem:[#allocation5 + $0x1f0] sm:$0xff]
        %v622 = vld [vmem:[#allocation5 + $0x1f8] sm:$0xff]
        %v623 = vld [vmem:[#allocation5 + $0x200] sm:$0xff]
        %v624 = vld [vmem:[#allocation5 + $0x208] sm:$0xff]
        %v625 = vld [vmem:[#allocation5 + $0x210] sm:$0xff]
        %v626 = vld [vmem:[#allocation5 + $0x218] sm:$0xff]
        %v627 = vld [vmem:[#allocation5 + $0x220] sm:$0xff]
        %v628 = vld [vmem:[#allocation5 + $0x228] sm:$0xff]
        %v629 = vld [vmem:[#allocation5 + $0x230] sm:$0xff]
        %v630 = vld [vmem:[#allocation5 + $0x238] sm:$0xff]
        %v631 = vld [vmem:[#allocation5 + $0x240] sm:$0xff]
        %v632 = vld [vmem:[#allocation5 + $0x248] sm:$0xff]
        %v633 = vld [vmem:[#allocation5 + $0x250] sm:$0xff]
        %v634 = vld [vmem:[#allocation5 + $0x258] sm:$0xff]
        %v635 = vld [vmem:[#allocation5 + $0x260] sm:$0xff]
        %v636 = vld [vmem:[#allocation5 + $0x268] sm:$0xff]
        %v637 = vld [vmem:[#allocation5 + $0x270] sm:$0xff]
        %v638 = vld [vmem:[#allocation5 + $0x278] sm:$0xff]
        %v639 = vld [vmem:[#allocation5 + $0x280] sm:$0xff]
        %v640 = vld [vmem:[#allocation5 + $0x288] sm:$0xff]
        %v641 = vld [vmem:[#allocation5 + $0x290] sm:$0xff]
        %v642 = vld [vmem:[#allocation5 + $0x298] sm:$0xff]
        %v643 = vld [vmem:[#allocation5 + $0x2a0] sm:$0xff]
        %v644 = vld [vmem:[#allocation5 + $0x2a8] sm:$0xff]
        %v645 = vld [vmem:[#allocation5 + $0x2b0] sm:$0xff]
        %v646 = vld [vmem:[#allocation5 + $0x2b8] sm:$0xff]
        %v647 = vld [vmem:[#allocation5 + $0x2c0] sm:$0xff]
        %v648 = vld [vmem:[#allocation5 + $0x2c8] sm:$0xff]
        %v649 = vld [vmem:[#allocation5 + $0x2d0] sm:$0xff]
        %v650 = vld [vmem:[#allocation5 + $0x2d8] sm:$0xff]
        %v651 = vld [vmem:[#allocation5 + $0x2e0] sm:$0xff]
        %v652 = vld [vmem:[#allocation5 + $0x2e8] sm:$0xff]
        %v653 = vld [vmem:[#allocation5 + $0x2f0] sm:$0xff]
        %v654 = vld [vmem:[#allocation5 + $0x2f8] sm:$0xff]
        %v655 = vld [vmem:[#allocation5 + $0x300] sm:$0xff]
        %v656 = vld [vmem:[#allocation5 + $0x308] sm:$0xff]
        %v657 = vld [vmem:[#allocation5 + $0x310] sm:$0xff]
        %v658 = vld [vmem:[#allocation5 + $0x318] sm:$0xff]
        %v659 = vld [vmem:[#allocation5 + $0x320] sm:$0xff]
        %v660 = vld [vmem:[#allocation5 + $0x328] sm:$0xff]
        %v661 = vld [vmem:[#allocation5 + $0x330] sm:$0xff]
        %v662 = vld [vmem:[#allocation5 + $0x338] sm:$0xff]
        %v663 = vld [vmem:[#allocation5 + $0x340] sm:$0xff]
        %v664 = vld [vmem:[#allocation5 + $0x348] sm:$0xff]
        %v665 = vld [vmem:[#allocation5 + $0x350] sm:$0xff]
        %v666 = vld [vmem:[#allocation5 + $0x358] sm:$0xff]
        %v667 = vld [vmem:[#allocation5 + $0x360] sm:$0xff]
        %v668 = vld [vmem:[#allocation5 + $0x368] sm:$0xff]
        %v669 = vld [vmem:[#allocation5 + $0x370] sm:$0xff]
        %v670 = vld [vmem:[#allocation5 + $0x378] sm:$0xff]
        %v671 = vld [vmem:[#allocation5 + $0x380] sm:$0xff]
        %v672 = vld [vmem:[#allocation5 + $0x388] sm:$0xff]
        %v673 = vld [vmem:[#allocation5 + $0x390] sm:$0xff]
        %v674 = vld [vmem:[#allocation5 + $0x398] sm:$0xff]
        %v675 = vld [vmem:[#allocation5 + $0x3a0] sm:$0xff]
        %v676 = vld [vmem:[#allocation5 + $0x3a8] sm:$0xff]
        %v677 = vld [vmem:[#allocation5 + $0x3b0] sm:$0xff]
        %v678 = vld [vmem:[#allocation5 + $0x3b8] sm:$0xff]
        %v679 = vld [vmem:[#allocation5 + $0x3c0] sm:$0xff]
        %v680 = vld [vmem:[#allocation5 + $0x3c8] sm:$0xff]
        %v681 = vld [vmem:[#allocation5 + $0x3d0] sm:$0xff]
        %v682 = vld [vmem:[#allocation5 + $0x3d8] sm:$0xff]
        %v683 = vld [vmem:[#allocation5 + $0x3e0] sm:$0xff]
        %v684 = vld [vmem:[#allocation5 + $0x3e8] sm:$0xff]
        %v685 = vld [vmem:[#allocation5 + $0x3f0] sm:$0xff]
        %v686 = vld [vmem:[#allocation5 + $0x3f8] sm:$0xff]
        %v687 = vld [vmem:[#allocation5 + $0x400] sm:$0xff]
        %v688 = vld [vmem:[#allocation5 + $0x408] sm:$0xff]
        %v689 = vld [vmem:[#allocation5 + $0x410] sm:$0xff]
        %v690 = vld [vmem:[#allocation5 + $0x418] sm:$0xff]
        %v691 = vld [vmem:[#allocation5 + $0x420] sm:$0xff]
        %v692 = vld [vmem:[#allocation5 + $0x428] sm:$0xff]
        %v693 = vld [vmem:[#allocation5 + $0x430] sm:$0xff]
        %v694 = vld [vmem:[#allocation5 + $0x438] sm:$0xff]
        %v695 = vld [vmem:[#allocation5 + $0x440] sm:$0xff]
        %v696 = vld [vmem:[#allocation5 + $0x448] sm:$0xff]
        %v697 = vld [vmem:[#allocation5 + $0x450] sm:$0xff]
        %v698 = vld [vmem:[#allocation5 + $0x458] sm:$0xff]
        %v699 = vld [vmem:[#allocation5 + $0x460] sm:$0xff]
        %v700 = vld [vmem:[#allocation5 + $0x468] sm:$0xff]
        %v701 = vld [vmem:[#allocation5 + $0x470] sm:$0xff]
        %v702 = vld [vmem:[#allocation5 + $0x478] sm:$0xff]
        %v703 = vld [vmem:[#allocation5 + $0x480] sm:$0xff]
        %v704 = vld [vmem:[#allocation5 + $0x488] sm:$0xff]
        %v705 = vld [vmem:[#allocation5 + $0x490] sm:$0xff]
        %v706 = vld [vmem:[#allocation5 + $0x498] sm:$0xff]
        %v707 = vld [vmem:[#allocation5 + $0x4a0] sm:$0xff]
        %v708 = vld [vmem:[#allocation5 + $0x4a8] sm:$0xff]
        %v709 = vld [vmem:[#allocation5 + $0x4b0] sm:$0xff]
        %v710 = vld [vmem:[#allocation5 + $0x4b8] sm:$0xff]
        %v711 = vld [vmem:[#allocation5 + $0x4c0] sm:$0xff]
        %v712 = vld [vmem:[#allocation5 + $0x4c8] sm:$0xff]
        %v713 = vld [vmem:[#allocation5 + $0x4d0] sm:$0xff]
        %v714 = vld [vmem:[#allocation5 + $0x4d8] sm:$0xff]
        %v715 = vld [vmem:[#allocation5 + $0x4e0] sm:$0xff]
        %v716 = vld [vmem:[#allocation5 + $0x4e8] sm:$0xff]
        %v717 = vld [vmem:[#allocation5 + $0x4f0] sm:$0xff]
        %v718 = vld [vmem:[#allocation5 + $0x4f8] sm:$0xff]
        %v719 = vld [vmem:[#allocation5 + $0x500] sm:$0xff]
        %v720 = vld [vmem:[#allocation5 + $0x508] sm:$0xff]
        %v721 = vld [vmem:[#allocation5 + $0x510] sm:$0xff]
        %v722 = vld [vmem:[#allocation5 + $0x518] sm:$0xff]
        %v723 = vld [vmem:[#allocation5 + $0x520] sm:$0xff]
        %v724 = vld [vmem:[#allocation5 + $0x528] sm:$0xff]
        %v725 = vld [vmem:[#allocation5 + $0x530] sm:$0xff]
        %v726 = vld [vmem:[#allocation5 + $0x538] sm:$0xff]
        %v727 = vld [vmem:[#allocation5 + $0x540] sm:$0xff]
        %v728 = vld [vmem:[#allocation5 + $0x548] sm:$0xff]
        %v729 = vld [vmem:[#allocation5 + $0x550] sm:$0xff]
        %v730 = vld [vmem:[#allocation5 + $0x558] sm:$0xff]
        %v731 = vld [vmem:[#allocation5 + $0x560] sm:$0xff]
        %v732 = vld [vmem:[#allocation5 + $0x568] sm:$0xff]
        %v733 = vld [vmem:[#allocation5 + $0x570] sm:$0xff]
        %v734 = vld [vmem:[#allocation5 + $0x578] sm:$0xff]
        %v735 = vld [vmem:[#allocation5 + $0x580] sm:$0xff]
        %v736 = vld [vmem:[#allocation5 + $0x588] sm:$0xff]
        %v737 = vld [vmem:[#allocation5 + $0x590] sm:$0xff]
        %v738 = vld [vmem:[#allocation5 + $0x598] sm:$0xff]
        %v739 = vld [vmem:[#allocation5 + $0x5a0] sm:$0xff]
        %v740 = vld [vmem:[#allocation5 + $0x5a8] sm:$0xff]
        %v741 = vld [vmem:[#allocation5 + $0x5b0] sm:$0xff]
        %v742 = vld [vmem:[#allocation5 + $0x5b8] sm:$0xff]
        %v743 = vld [vmem:[#allocation5 + $0x5c0] sm:$0xff]
        %v744 = vld [vmem:[#allocation5 + $0x5c8] sm:$0xff]
        %v745 = vld [vmem:[#allocation5 + $0x5d0] sm:$0xff]
        %v746 = vld [vmem:[#allocation5 + $0x5d8] sm:$0xff]
        %v747 = vld [vmem:[#allocation5 + $0x5e0] sm:$0xff]
        %v748 = vld [vmem:[#allocation5 + $0x5e8] sm:$0xff]
        %v749 = vld [vmem:[#allocation5 + $0x5f0] sm:$0xff]
        %v750 = vld [vmem:[#allocation5 + $0x5f8] sm:$0xff]
        %v751 = vld [vmem:[#allocation5 + $0x600] sm:$0xff]
        %v752 = vld [vmem:[#allocation5 + $0x608] sm:$0xff]
        %v753 = vld [vmem:[#allocation5 + $0x610] sm:$0xff]
        %v754 = vld [vmem:[#allocation5 + $0x618] sm:$0xff]
        %v755 = vld [vmem:[#allocation5 + $0x620] sm:$0xff]
        %v756 = vld [vmem:[#allocation5 + $0x628] sm:$0xff]
        %v757 = vld [vmem:[#allocation5 + $0x630] sm:$0xff]
        %v758 = vld [vmem:[#allocation5 + $0x638] sm:$0xff]
        %v759 = vld [vmem:[#allocation5 + $0x640] sm:$0xff]
        %v760 = vld [vmem:[#allocation5 + $0x648] sm:$0xff]
        %v761 = vld [vmem:[#allocation5 + $0x650] sm:$0xff]
        %v762 = vld [vmem:[#allocation5 + $0x658] sm:$0xff]
        %v763 = vld [vmem:[#allocation5 + $0x660] sm:$0xff]
        %v764 = vld [vmem:[#allocation5 + $0x668] sm:$0xff]
        %v765 = vld [vmem:[#allocation5 + $0x670] sm:$0xff]
        %v766 = vld [vmem:[#allocation5 + $0x678] sm:$0xff]
        %v767 = vld [vmem:[#allocation5 + $0x680] sm:$0xff]
        %v768 = vld [vmem:[#allocation5 + $0x688] sm:$0xff]
        %v769 = vld [vmem:[#allocation5 + $0x690] sm:$0xff]
        %v770 = vld [vmem:[#allocation5 + $0x698] sm:$0xff]
        %v771 = vld [vmem:[#allocation5 + $0x6a0] sm:$0xff]
        %v772 = vld [vmem:[#allocation5 + $0x6a8] sm:$0xff]
        %v773 = vld [vmem:[#allocation5 + $0x6b0] sm:$0xff]
        %v774 = vld [vmem:[#allocation5 + $0x6b8] sm:$0xff]
        %v775 = vld [vmem:[#allocation5 + $0x6c0] sm:$0xff]
        %v776 = vld [vmem:[#allocation5 + $0x6c8] sm:$0xff]
        %v777 = vld [vmem:[#allocation5 + $0x6d0] sm:$0xff]
        %v778 = vld [vmem:[#allocation5 + $0x6d8] sm:$0xff]
        %v779 = vld [vmem:[#allocation5 + $0x6e0] sm:$0xff]
        %v780 = vld [vmem:[#allocation5 + $0x6e8] sm:$0xff]
        %v781 = vld [vmem:[#allocation5 + $0x6f0] sm:$0xff]
        %v782 = vld [vmem:[#allocation5 + $0x6f8] sm:$0xff]
        %v783 = vld [vmem:[#allocation5 + $0x700] sm:$0xff]
        %v784 = vld [vmem:[#allocation5 + $0x708] sm:$0xff]
        %v785 = vld [vmem:[#allocation5 + $0x710] sm:$0xff]
        %v786 = vld [vmem:[#allocation5 + $0x718] sm:$0xff]
        %v787 = vld [vmem:[#allocation5 + $0x720] sm:$0xff]
        %v788 = vld [vmem:[#allocation5 + $0x728] sm:$0xff]
        %v789 = vld [vmem:[#allocation5 + $0x730] sm:$0xff]
        %v790 = vld [vmem:[#allocation5 + $0x738] sm:$0xff]
        %v791 = vld [vmem:[#allocation5 + $0x740] sm:$0xff]
        %v792 = vld [vmem:[#allocation5 + $0x748] sm:$0xff]
        %v793 = vld [vmem:[#allocation5 + $0x750] sm:$0xff]
        %v794 = vld [vmem:[#allocation5 + $0x758] sm:$0xff]
        %v795 = vld [vmem:[#allocation5 + $0x760] sm:$0xff]
        %v796 = vld [vmem:[#allocation5 + $0x768] sm:$0xff]
        %v797 = vld [vmem:[#allocation5 + $0x770] sm:$0xff]
        %v798 = vld [vmem:[#allocation5 + $0x778] sm:$0xff]
        %v799 = vld [vmem:[#allocation5 + $0x780] sm:$0xff]
        %v800 = vld [vmem:[#allocation5 + $0x788] sm:$0xff]
        %v801 = vld [vmem:[#allocation5 + $0x790] sm:$0xff]
        %v802 = vld [vmem:[#allocation5 + $0x798] sm:$0xff]
        %v803 = vld [vmem:[#allocation5 + $0x7a0] sm:$0xff]
        %v804 = vld [vmem:[#allocation5 + $0x7a8] sm:$0xff]
        %v805 = vld [vmem:[#allocation5 + $0x7b0] sm:$0xff]
        %v806 = vld [vmem:[#allocation5 + $0x7b8] sm:$0xff]
        %v807 = vld [vmem:[#allocation5 + $0x7c0] sm:$0xff]
        %v808 = vld [vmem:[#allocation5 + $0x7c8] sm:$0xff]
        %v809 = vld [vmem:[#allocation5 + $0x7d0] sm:$0xff]
        %v810 = vld [vmem:[#allocation5 + $0x7d8] sm:$0xff]
        %v811 = vld [vmem:[#allocation5 + $0x7e0] sm:$0xff]
        %v812 = vld [vmem:[#allocation5 + $0x7e8] sm:$0xff]
        %v813 = vld [vmem:[#allocation5 + $0x7f0] sm:$0xff]
        %v814 = vld [vmem:[#allocation5 + $0x7f8] sm:$0xff]
        %v815 = vld [vmem:[#allocation5 + $0x800] sm:$0xff]
        %v816 = vld [vmem:[#allocation5 + $0x808] sm:$0xff]
        %v817 = vld [vmem:[#allocation5 + $0x810] sm:$0xff]
        %v818 = vld [vmem:[#allocation5 + $0x818] sm:$0xff]
        %v819 = vld [vmem:[#allocation5 + $0x820] sm:$0xff]
        %v820 = vld [vmem:[#allocation5 + $0x828] sm:$0xff]
        %v821 = vld [vmem:[#allocation5 + $0x830] sm:$0xff]
        %v822 = vld [vmem:[#allocation5 + $0x838] sm:$0xff]
        %v823 = vld [vmem:[#allocation5 + $0x840] sm:$0xff]
        %v824 = vld [vmem:[#allocation5 + $0x848] sm:$0xff]
        %v825 = vld [vmem:[#allocation5 + $0x850] sm:$0xff]
        %v826 = vld [vmem:[#allocation5 + $0x858] sm:$0xff]
        %v827 = vld [vmem:[#allocation5 + $0x860] sm:$0xff]
        %v828 = vld [vmem:[#allocation5 + $0x868] sm:$0xff]
        %v829 = vld [vmem:[#allocation5 + $0x870] sm:$0xff]
        %v830 = vld [vmem:[#allocation5 + $0x878] sm:$0xff]
        %v831 = vld [vmem:[#allocation5 + $0x880] sm:$0xff]
        %v832 = vld [vmem:[#allocation5 + $0x888] sm:$0xff]
        %v833 = vld [vmem:[#allocation5 + $0x890] sm:$0xff]
        %v834 = vld [vmem:[#allocation5 + $0x898] sm:$0xff]
        %v835 = vld [vmem:[#allocation5 + $0x8a0] sm:$0xff]
        %v836 = vld [vmem:[#allocation5 + $0x8a8] sm:$0xff]
        %v837 = vld [vmem:[#allocation5 + $0x8b0] sm:$0xff]
        %v838 = vld [vmem:[#allocation5 + $0x8b8] sm:$0xff]
        %v839 = vld [vmem:[#allocation5 + $0x8c0] sm:$0xff]
        %v840 = vld [vmem:[#allocation5 + $0x8c8] sm:$0xff]
        %v841 = vld [vmem:[#allocation5 + $0x8d0] sm:$0xff]
        %v842 = vld [vmem:[#allocation5 + $0x8d8] sm:$0xff]
        %v843 = vld [vmem:[#allocation5 + $0x8e0] sm:$0xff]
        %v844 = vld [vmem:[#allocation5 + $0x8e8] sm:$0xff]
        %v845 = vld [vmem:[#allocation5 + $0x8f0] sm:$0xff]
        %v846 = vld [vmem:[#allocation5 + $0x8f8] sm:$0xff]
        %v847 = vld [vmem:[#allocation5 + $0x900] sm:$0xff]
        %v848 = vld [vmem:[#allocation5 + $0x908] sm:$0xff]
        %v849 = vld [vmem:[#allocation5 + $0x910] sm:$0xff]
        %v850 = vld [vmem:[#allocation5 + $0x918] sm:$0xff]
        %v851 = vld [vmem:[#allocation5 + $0x920] sm:$0xff]
        %v852 = vld [vmem:[#allocation5 + $0x928] sm:$0xff]
        %v853 = vld [vmem:[#allocation5 + $0x930] sm:$0xff]
        %v854 = vld [vmem:[#allocation5 + $0x938] sm:$0xff]
        %v855 = vld [vmem:[#allocation5 + $0x940] sm:$0xff]
        %v856 = vld [vmem:[#allocation5 + $0x948] sm:$0xff]
        %v857 = vld [vmem:[#allocation5 + $0x950] sm:$0xff]
        %v858 = vld [vmem:[#allocation5 + $0x958] sm:$0xff]
        %v859 = vld [vmem:[#allocation5 + $0x960] sm:$0xff]
        %v860 = vld [vmem:[#allocation5 + $0x968] sm:$0xff]
        %v861 = vld [vmem:[#allocation5 + $0x970] sm:$0xff]
        %v862 = vld [vmem:[#allocation5 + $0x978] sm:$0xff]
        %v863 = vld [vmem:[#allocation5 + $0x980] sm:$0xff]
        %v864 = vld [vmem:[#allocation5 + $0x988] sm:$0xff]
        %v865 = vld [vmem:[#allocation5 + $0x990] sm:$0xff]
        %v866 = vld [vmem:[#allocation5 + $0x998] sm:$0xff]
        %v867 = vld [vmem:[#allocation5 + $0x9a0] sm:$0xff]
        %v868 = vld [vmem:[#allocation5 + $0x9a8] sm:$0xff]
        %v869 = vld [vmem:[#allocation5 + $0x9b0] sm:$0xff]
        %v870 = vld [vmem:[#allocation5 + $0x9b8] sm:$0xff]
        %v871 = vld [vmem:[#allocation5 + $0x9c0] sm:$0xff]
        %v872 = vld [vmem:[#allocation5 + $0x9c8] sm:$0xff]
        %v873 = vld [vmem:[#allocation5 + $0x9d0] sm:$0xff]
        %v874 = vld [vmem:[#allocation5 + $0x9d8] sm:$0xff]
        %v875 = vld [vmem:[#allocation5 + $0x9e0] sm:$0xff]
        %v876 = vld [vmem:[#allocation5 + $0x9e8] sm:$0xff]
        %v877 = vld [vmem:[#allocation5 + $0x9f0] sm:$0xff]
        %v878 = vld [vmem:[#allocation5 + $0x9f8] sm:$0xff]
        %v879 = vld [vmem:[#allocation5 + $0xa00] sm:$0xff]
        %v880 = vld [vmem:[#allocation5 + $0xa08] sm:$0xff]
        %v881 = vld [vmem:[#allocation5 + $0xa10] sm:$0xff]
        %v882 = vld [vmem:[#allocation5 + $0xa18] sm:$0xff]
        %v883 = vld [vmem:[#allocation5 + $0xa20] sm:$0xff]
        %v884 = vld [vmem:[#allocation5 + $0xa28] sm:$0xff]
        %v885 = vld [vmem:[#allocation5 + $0xa30] sm:$0xff]
        %v886 = vld [vmem:[#allocation5 + $0xa38] sm:$0xff]
        %v887 = vld [vmem:[#allocation5 + $0xa40] sm:$0xff]
        %v888 = vld [vmem:[#allocation5 + $0xa48] sm:$0xff]
        %v889 = vld [vmem:[#allocation5 + $0xa50] sm:$0xff]
        %v890 = vld [vmem:[#allocation5 + $0xa58] sm:$0xff]
        %v891 = vld [vmem:[#allocation5 + $0xa60] sm:$0xff]
        %v892 = vld [vmem:[#allocation5 + $0xa68] sm:$0xff]
        %v893 = vld [vmem:[#allocation5 + $0xa70] sm:$0xff]
        %v894 = vld [vmem:[#allocation5 + $0xa78] sm:$0xff]
        %v895 = vld [vmem:[#allocation5 + $0xa80] sm:$0xff]
        %v896 = vld [vmem:[#allocation5 + $0xa88] sm:$0xff]
        %v897 = vld [vmem:[#allocation5 + $0xa90] sm:$0xff]
        %v898 = vld [vmem:[#allocation5 + $0xa98] sm:$0xff]
        %v899 = vld [vmem:[#allocation5 + $0xaa0] sm:$0xff]
        %v900 = vld [vmem:[#allocation5 + $0xaa8] sm:$0xff]
        %v901 = vld [vmem:[#allocation5 + $0xab0] sm:$0xff]
        %v902 = vld [vmem:[#allocation5 + $0xab8] sm:$0xff]
        %v903 = vld [vmem:[#allocation5 + $0xac0] sm:$0xff]
        %v904 = vld [vmem:[#allocation5 + $0xac8] sm:$0xff]
        %v905 = vld [vmem:[#allocation5 + $0xad0] sm:$0xff]
        %v906 = vld [vmem:[#allocation5 + $0xad8] sm:$0xff]
        %v907 = vld [vmem:[#allocation5 + $0xae0] sm:$0xff]
        %v908 = vld [vmem:[#allocation5 + $0xae8] sm:$0xff]
        %v909 = vld [vmem:[#allocation5 + $0xaf0] sm:$0xff]
        %v910 = vld [vmem:[#allocation5 + $0xaf8] sm:$0xff]
        %v911 = vld [vmem:[#allocation5 + $0xb00] sm:$0xff]
        %v912 = vld [vmem:[#allocation5 + $0xb08] sm:$0xff]
        %v913 = vld [vmem:[#allocation5 + $0xb10] sm:$0xff]
        %v914 = vld [vmem:[#allocation5 + $0xb18] sm:$0xff]
        %v915 = vld [vmem:[#allocation5 + $0xb20] sm:$0xff]
        %v916 = vld [vmem:[#allocation5 + $0xb28] sm:$0xff]
        %v917 = vld [vmem:[#allocation5 + $0xb30] sm:$0xff]
        %v918 = vld [vmem:[#allocation5 + $0xb38] sm:$0xff]
        %v919 = vld [vmem:[#allocation5 + $0xb40] sm:$0xff]
        %v920 = vld [vmem:[#allocation5 + $0xb48] sm:$0xff]
        %v921 = vld [vmem:[#allocation5 + $0xb50] sm:$0xff]
        %v922 = vld [vmem:[#allocation5 + $0xb58] sm:$0xff]
        %v923 = vld [vmem:[#allocation5 + $0xb60] sm:$0xff]
        %v924 = vld [vmem:[#allocation5 + $0xb68] sm:$0xff]
        %v925 = vld [vmem:[#allocation5 + $0xb70] sm:$0xff]
        %v926 = vld [vmem:[#allocation5 + $0xb78] sm:$0xff]
        %v927 = vld [vmem:[#allocation5 + $0xb80] sm:$0xff]
        %v928 = vld [vmem:[#allocation5 + $0xb88] sm:$0xff]
        %v929 = vld [vmem:[#allocation5 + $0xb90] sm:$0xff]
        %v930 = vld [vmem:[#allocation5 + $0xb98] sm:$0xff]
        %v931 = vld [vmem:[#allocation5 + $0xba0] sm:$0xff]
        %v932 = vld [vmem:[#allocation5 + $0xba8] sm:$0xff]
        %v933 = vld [vmem:[#allocation5 + $0xbb0] sm:$0xff]
        %v934 = vld [vmem:[#allocation5 + $0xbb8] sm:$0xff]
        %v935 = vld [vmem:[#allocation5 + $0xbc0] sm:$0xff]
        %v936 = vld [vmem:[#allocation5 + $0xbc8] sm:$0xff]
        %v937 = vld [vmem:[#allocation5 + $0xbd0] sm:$0xff]
        %v938 = vld [vmem:[#allocation5 + $0xbd8] sm:$0xff]
        %v939 = vld [vmem:[#allocation5 + $0xbe0] sm:$0xff]
        %v940 = vld [vmem:[#allocation5 + $0xbe8] sm:$0xff]
        %v941 = vld [vmem:[#allocation5 + $0xbf0] sm:$0xff]
        %v942 = vld [vmem:[#allocation5 + $0xbf8] sm:$0xff]
        %v943 = vld [vmem:[#allocation5 + $0xc00] sm:$0xff]
        %v944 = vld [vmem:[#allocation5 + $0xc08] sm:$0xff]
        %v945 = vld [vmem:[#allocation5 + $0xc10] sm:$0xff]
        %v946 = vld [vmem:[#allocation5 + $0xc18] sm:$0xff]
        %v947 = vld [vmem:[#allocation5 + $0xc20] sm:$0xff]
        %v948 = vld [vmem:[#allocation5 + $0xc28] sm:$0xff]
        %v949 = vld [vmem:[#allocation5 + $0xc30] sm:$0xff]
        %v950 = vld [vmem:[#allocation5 + $0xc38] sm:$0xff]
        %v951 = vld [vmem:[#allocation5 + $0xc40] sm:$0xff]
        %v952 = vld [vmem:[#allocation5 + $0xc48] sm:$0xff]
        %v953 = vld [vmem:[#allocation5 + $0xc50] sm:$0xff]
        %v954 = vld [vmem:[#allocation5 + $0xc58] sm:$0xff]
        %v955 = vld [vmem:[#allocation5 + $0xc60] sm:$0xff]
        %v956 = vld [vmem:[#allocation5 + $0xc68] sm:$0xff]
        %v957 = vld [vmem:[#allocation5 + $0xc70] sm:$0xff]
        %v958 = vld [vmem:[#allocation5 + $0xc78] sm:$0xff]
        %v959 = vld [vmem:[#allocation5 + $0xc80] sm:$0xff]
        %v960 = vld [vmem:[#allocation5 + $0xc88] sm:$0xff]
        %v961 = vld [vmem:[#allocation5 + $0xc90] sm:$0xff]
        %v962 = vld [vmem:[#allocation5 + $0xc98] sm:$0xff]
        %v963 = vld [vmem:[#allocation5 + $0xca0] sm:$0xff]
        %v964 = vld [vmem:[#allocation5 + $0xca8] sm:$0xff]
        %v965 = vld [vmem:[#allocation5 + $0xcb0] sm:$0xff]
        %v966 = vld [vmem:[#allocation5 + $0xcb8] sm:$0xff]
        %v967 = vld [vmem:[#allocation5 + $0xcc0] sm:$0xff]
        %v968 = vld [vmem:[#allocation5 + $0xcc8] sm:$0xff]
        %v969 = vld [vmem:[#allocation5 + $0xcd0] sm:$0xff]
        %v970 = vld [vmem:[#allocation5 + $0xcd8] sm:$0xff]
        %v971 = vld [vmem:[#allocation5 + $0xce0] sm:$0xff]
        %v972 = vld [vmem:[#allocation5 + $0xce8] sm:$0xff]
        %v973 = vld [vmem:[#allocation5 + $0xcf0] sm:$0xff]
        %v974 = vld [vmem:[#allocation5 + $0xcf8] sm:$0xff]
        %v975 = vld [vmem:[#allocation5 + $0xd00] sm:$0xff]
        %v976 = vld [vmem:[#allocation5 + $0xd08] sm:$0xff]
        %v977 = vld [vmem:[#allocation5 + $0xd10] sm:$0xff]
        %v978 = vld [vmem:[#allocation5 + $0xd18] sm:$0xff]
        %v979 = vld [vmem:[#allocation5 + $0xd20] sm:$0xff]
        %v980 = vld [vmem:[#allocation5 + $0xd28] sm:$0xff]
        %v981 = vld [vmem:[#allocation5 + $0xd30] sm:$0xff]
        %v982 = vld [vmem:[#allocation5 + $0xd38] sm:$0xff]
        %v983 = vld [vmem:[#allocation5 + $0xd40] sm:$0xff]
        %v984 = vld [vmem:[#allocation5 + $0xd48] sm:$0xff]
        %v985 = vld [vmem:[#allocation5 + $0xd50] sm:$0xff]
        %v986 = vld [vmem:[#allocation5 + $0xd58] sm:$0xff]
        %v987 = vld [vmem:[#allocation5 + $0xd60] sm:$0xff]
        %v988 = vld [vmem:[#allocation5 + $0xd68] sm:$0xff]
        %v989 = vld [vmem:[#allocation5 + $0xd70] sm:$0xff]
        %v990 = vld [vmem:[#allocation5 + $0xd78] sm:$0xff]
        %v991 = vld [vmem:[#allocation5 + $0xd80] sm:$0xff]
        %v992 = vld [vmem:[#allocation5 + $0xd88] sm:$0xff]
        %v993 = vld [vmem:[#allocation5 + $0xd90] sm:$0xff]
        %v994 = vld [vmem:[#allocation5 + $0xd98] sm:$0xff]
        %v995 = vld [vmem:[#allocation5 + $0xda0] sm:$0xff]
        %v996 = vld [vmem:[#allocation5 + $0xda8] sm:$0xff]
        %v997 = vld [vmem:[#allocation5 + $0xdb0] sm:$0xff]
        %v998 = vld [vmem:[#allocation5 + $0xdb8] sm:$0xff]
        %v999 = vld [vmem:[#allocation5 + $0xdc0] sm:$0xff]
        %v1000 = vld [vmem:[#allocation5 + $0xdc8] sm:$0xff]
        %v1001 = vld [vmem:[#allocation5 + $0xdd0] sm:$0xff]
        %v1002 = vld [vmem:[#allocation5 + $0xdd8] sm:$0xff]
        %v1003 = vld [vmem:[#allocation5 + $0xde0] sm:$0xff]
        %v1004 = vld [vmem:[#allocation5 + $0xde8] sm:$0xff]
        %v1005 = vld [vmem:[#allocation5 + $0xdf0] sm:$0xff]
        %v1006 = vld [vmem:[#allocation5 + $0xdf8] sm:$0xff]
        %v1007 = vld [vmem:[#allocation5 + $0xe00] sm:$0xff]
        %v1008 = vld [vmem:[#allocation5 + $0xe08] sm:$0xff]
        %v1009 = vld [vmem:[#allocation5 + $0xe10] sm:$0xff]
        %v1010 = vld [vmem:[#allocation5 + $0xe18] sm:$0xff]
        %v1011 = vld [vmem:[#allocation5 + $0xe20] sm:$0xff]
        %v1012 = vld [vmem:[#allocation5 + $0xe28] sm:$0xff]
        %v1013 = vld [vmem:[#allocation5 + $0xe30] sm:$0xff]
        %v1014 = vld [vmem:[#allocation5 + $0xe38] sm:$0xff]
        %v1015 = vld [vmem:[#allocation5 + $0xe40] sm:$0xff]
        %v1016 = vld [vmem:[#allocation5 + $0xe48] sm:$0xff]
        %v1017 = vld [vmem:[#allocation5 + $0xe50] sm:$0xff]
        %v1018 = vld [vmem:[#allocation5 + $0xe58] sm:$0xff]
        %v1019 = vld [vmem:[#allocation5 + $0xe60] sm:$0xff]
        %v1020 = vld [vmem:[#allocation5 + $0xe68] sm:$0xff]
        %v1021 = vld [vmem:[#allocation5 + $0xe70] sm:$0xff]
        %v1022 = vld [vmem:[#allocation5 + $0xe78] sm:$0xff]
        %v1023 = vld [vmem:[#allocation5 + $0xe80] sm:$0xff]
        %v1024 = vld [vmem:[#allocation5 + $0xe88] sm:$0xff]
        %v1025 = vld [vmem:[#allocation5 + $0xe90] sm:$0xff]
        %v1026 = vld [vmem:[#allocation5 + $0xe98] sm:$0xff]
        %v1027 = vld [vmem:[#allocation5 + $0xea0] sm:$0xff]
        %v1028 = vld [vmem:[#allocation5 + $0xea8] sm:$0xff]
        %v1029 = vld [vmem:[#allocation5 + $0xeb0] sm:$0xff]
        %v1030 = vld [vmem:[#allocation5 + $0xeb8] sm:$0xff]
        %v1031 = vld [vmem:[#allocation5 + $0xec0] sm:$0xff]
        %v1032 = vld [vmem:[#allocation5 + $0xec8] sm:$0xff]
        %v1033 = vld [vmem:[#allocation5 + $0xed0] sm:$0xff]
        %v1034 = vld [vmem:[#allocation5 + $0xed8] sm:$0xff]
        %v1035 = vld [vmem:[#allocation5 + $0xee0] sm:$0xff]
        %v1036 = vld [vmem:[#allocation5 + $0xee8] sm:$0xff]
        %v1037 = vld [vmem:[#allocation5 + $0xef0] sm:$0xff]
        %v1038 = vld [vmem:[#allocation5 + $0xef8] sm:$0xff]
        %v1039 = vld [vmem:[#allocation5 + $0xf00] sm:$0xff]
        %v1040 = vld [vmem:[#allocation5 + $0xf08] sm:$0xff]
        %v1041 = vld [vmem:[#allocation5 + $0xf10] sm:$0xff]
        %v1042 = vld [vmem:[#allocation5 + $0xf18] sm:$0xff]
        %v1043 = vld [vmem:[#allocation5 + $0xf20] sm:$0xff]
        %v1044 = vld [vmem:[#allocation5 + $0xf28] sm:$0xff]
        %v1045 = vld [vmem:[#allocation5 + $0xf30] sm:$0xff]
        %v1046 = vld [vmem:[#allocation5 + $0xf38] sm:$0xff]
        %v1047 = vld [vmem:[#allocation5 + $0xf40] sm:$0xff]
        %v1048 = vld [vmem:[#allocation5 + $0xf48] sm:$0xff]
        %v1049 = vld [vmem:[#allocation5 + $0xf50] sm:$0xff]
        %v1050 = vld [vmem:[#allocation5 + $0xf58] sm:$0xff]
        %v1051 = vld [vmem:[#allocation5 + $0xf60] sm:$0xff]
        %v1052 = vld [vmem:[#allocation5 + $0xf68] sm:$0xff]
        %v1053 = vld [vmem:[#allocation5 + $0xf70] sm:$0xff]
        %v1054 = vld [vmem:[#allocation5 + $0xf78] sm:$0xff]
        %v1055 = vld [vmem:[#allocation5 + $0xf80] sm:$0xff]
        %v1056 = vld [vmem:[#allocation5 + $0xf88] sm:$0xff]
        %v1057 = vld [vmem:[#allocation5 + $0xf90] sm:$0xff]
        %v1058 = vld [vmem:[#allocation5 + $0xf98] sm:$0xff]
        %v1059 = vld [vmem:[#allocation5 + $0xfa0] sm:$0xff]
        %v1060 = vld [vmem:[#allocation5 + $0xfa8] sm:$0xff]
        %v1061 = vld [vmem:[#allocation5 + $0xfb0] sm:$0xff]
        %v1062 = vld [vmem:[#allocation5 + $0xfb8] sm:$0xff]
        %v1063 = vld [vmem:[#allocation5 + $0xfc0] sm:$0xff]
        %v1064 = vld [vmem:[#allocation5 + $0xfc8] sm:$0xff]
        %v1065 = vld [vmem:[#allocation5 + $0xfd0] sm:$0xff]
        %v1066 = vld [vmem:[#allocation5 + $0xfd8] sm:$0xff]
        %v1067 = vld [vmem:[#allocation5 + $0xfe0] sm:$0xff]
        %v1068 = vld [vmem:[#allocation5 + $0xfe8] sm:$0xff]
        %v1069 = vld [vmem:[#allocation5 + $0xff0] sm:$0xff]
        %v1070 = vld [vmem:[#allocation5 + $0xff8] sm:$0xff]
        %v1071 = vld [vmem:[#allocation5 + $0x1000] sm:$0xff]
        %v1072 = vld [vmem:[#allocation5 + $0x1008] sm:$0xff]
        %v1073 = vld [vmem:[#allocation5 + $0x1010] sm:$0xff]
        %v1074 = vld [vmem:[#allocation5 + $0x1018] sm:$0xff]
        %v1075 = vld [vmem:[#allocation5 + $0x1020] sm:$0xff]
        %v1076 = vld [vmem:[#allocation5 + $0x1028] sm:$0xff]
        %v1077 = vld [vmem:[#allocation5 + $0x1030] sm:$0xff]
        %v1078 = vld [vmem:[#allocation5 + $0x1038] sm:$0xff]
        %v1079 = vld [vmem:[#allocation5 + $0x1040] sm:$0xff]
        %v1080 = vld [vmem:[#allocation5 + $0x1048] sm:$0xff]
        %v1081 = vld [vmem:[#allocation5 + $0x1050] sm:$0xff]
        %v1082 = vld [vmem:[#allocation5 + $0x1058] sm:$0xff]
        %v1083 = vld [vmem:[#allocation5 + $0x1060] sm:$0xff]
        %v1084 = vld [vmem:[#allocation5 + $0x1068] sm:$0xff]
        %v1085 = vld [vmem:[#allocation5 + $0x1070] sm:$0xff]
        %v1086 = vld [vmem:[#allocation5 + $0x1078] sm:$0xff]
        %v1087 = vld [vmem:[#allocation5 + $0x1080] sm:$0xff]
        %v1088 = vld [vmem:[#allocation5 + $0x1088] sm:$0xff]
        %v1089 = vld [vmem:[#allocation5 + $0x1090] sm:$0xff]
        %v1090 = vld [vmem:[#allocation5 + $0x1098] sm:$0xff]
        %v1091 = vld [vmem:[#allocation5 + $0x10a0] sm:$0xff]
        %v1092 = vld [vmem:[#allocation5 + $0x10a8] sm:$0xff]
        %v1093 = vld [vmem:[#allocation5 + $0x10b0] sm:$0xff]
        %v1094 = vld [vmem:[#allocation5 + $0x10b8] sm:$0xff]
        %v1095 = vld [vmem:[#allocation5 + $0x10c0] sm:$0xff]
        %v1096 = vld [vmem:[#allocation5 + $0x10c8] sm:$0xff]
        %v1097 = vld [vmem:[#allocation5 + $0x10d0] sm:$0xff]
        %v1098 = vld [vmem:[#allocation5 + $0x10d8] sm:$0xff]
        %v1099 = vld [vmem:[#allocation5 + $0x10e0] sm:$0xff]
        %v1100 = vld [vmem:[#allocation5 + $0x10e8] sm:$0xff]
        %v1101 = vld [vmem:[#allocation5 + $0x10f0] sm:$0xff]
        %v1102 = vld [vmem:[#allocation5 + $0x10f8] sm:$0xff]
        %v1103 = vld [vmem:[#allocation5 + $0x1100] sm:$0xff]
        %v1104 = vld [vmem:[#allocation5 + $0x1108] sm:$0xff]
        %v1105 = vld [vmem:[#allocation5 + $0x1110] sm:$0xff]
        %v1106 = vld [vmem:[#allocation5 + $0x1118] sm:$0xff]
        %v1107 = vld [vmem:[#allocation5 + $0x1120] sm:$0xff]
        %v1108 = vld [vmem:[#allocation5 + $0x1128] sm:$0xff]
        %v1109 = vld [vmem:[#allocation5 + $0x1130] sm:$0xff]
        %v1110 = vld [vmem:[#allocation5 + $0x1138] sm:$0xff]
        %v1111 = vld [vmem:[#allocation5 + $0x1140] sm:$0xff]
        %v1112 = vld [vmem:[#allocation5 + $0x1148] sm:$0xff]
        %v1113 = vld [vmem:[#allocation5 + $0x1150] sm:$0xff]
        %v1114 = vld [vmem:[#allocation5 + $0x1158] sm:$0xff]
        %v1115 = vld [vmem:[#allocation5 + $0x1160] sm:$0xff]
        %v1116 = vld [vmem:[#allocation5 + $0x1168] sm:$0xff]
        %v1117 = vld [vmem:[#allocation5 + $0x1170] sm:$0xff]
        %v1118 = vld [vmem:[#allocation5 + $0x1178] sm:$0xff]
        %v1119 = vld [vmem:[#allocation5 + $0x1180] sm:$0xff]
        %v1120 = vld [vmem:[#allocation5 + $0x1188] sm:$0xff]
        %v1121 = vld [vmem:[#allocation5 + $0x1190] sm:$0xff]
        %v1122 = vld [vmem:[#allocation5 + $0x1198] sm:$0xff]
        %v1123 = vld [vmem:[#allocation5 + $0x11a0] sm:$0xff]
        %v1124 = vld [vmem:[#allocation5 + $0x11a8] sm:$0xff]
        %v1125 = vld [vmem:[#allocation5 + $0x11b0] sm:$0xff]
        %v1126 = vld [vmem:[#allocation5 + $0x11b8] sm:$0xff]
        %v1127 = vld [vmem:[#allocation5 + $0x11c0] sm:$0xff]
        %v1128 = vld [vmem:[#allocation5 + $0x11c8] sm:$0xff]
        %v1129 = vld [vmem:[#allocation5 + $0x11d0] sm:$0xff]
        %v1130 = vld [vmem:[#allocation5 + $0x11d8] sm:$0xff]
        %v1131 = vld [vmem:[#allocation5 + $0x11e0] sm:$0xff]
        %v1132 = vld [vmem:[#allocation5 + $0x11e8] sm:$0xff]
        %v1133 = vld [vmem:[#allocation5 + $0x11f0] sm:$0xff]
        %v1134 = vld [vmem:[#allocation5 + $0x11f8] sm:$0xff]
        %v1135 = vld [vmem:[#allocation5 + $0x1200] sm:$0xff]
        %v1136 = vld [vmem:[#allocation5 + $0x1208] sm:$0xff]
        %v1137 = vld [vmem:[#allocation5 + $0x1210] sm:$0xff]
        %v1138 = vld [vmem:[#allocation5 + $0x1218] sm:$0xff]
        %v1139 = vld [vmem:[#allocation5 + $0x1220] sm:$0xff]
        %v1140 = vld [vmem:[#allocation5 + $0x1228] sm:$0xff]
        %v1141 = vld [vmem:[#allocation5 + $0x1230] sm:$0xff]
        %v1142 = vld [vmem:[#allocation5 + $0x1238] sm:$0xff]
        %v1143 = vld [vmem:[#allocation5 + $0x1240] sm:$0xff]
        %v1144 = vld [vmem:[#allocation5 + $0x1248] sm:$0xff]
        %v1145 = vld [vmem:[#allocation5 + $0x1250] sm:$0xff]
        %v1146 = vld [vmem:[#allocation5 + $0x1258] sm:$0xff]
        %v1147 = vld [vmem:[#allocation5 + $0x1260] sm:$0xff]
        %v1148 = vld [vmem:[#allocation5 + $0x1268] sm:$0xff]
        %v1149 = vld [vmem:[#allocation5 + $0x1270] sm:$0xff]
        %v1150 = vld [vmem:[#allocation5 + $0x1278] sm:$0xff]
        %v1151 = vld [vmem:[#allocation5 + $0x1280] sm:$0xff]
        %v1152 = vld [vmem:[#allocation5 + $0x1288] sm:$0xff]
        %v1153 = vld [vmem:[#allocation5 + $0x1290] sm:$0xff]
        %v1154 = vld [vmem:[#allocation5 + $0x1298] sm:$0xff]
        %v1155 = vld [vmem:[#allocation5 + $0x12a0] sm:$0xff]
        %v1156 = vld [vmem:[#allocation5 + $0x12a8] sm:$0xff]
        %v1157 = vld [vmem:[#allocation5 + $0x12b0] sm:$0xff]
        %v1158 = vld [vmem:[#allocation5 + $0x12b8] sm:$0xff]
        %v1159 = vld [vmem:[#allocation5 + $0x12c0] sm:$0xff]
        %v1160 = vld [vmem:[#allocation5 + $0x12c8] sm:$0xff]
        %v1161 = vld [vmem:[#allocation5 + $0x12d0] sm:$0xff]
        %v1162 = vld [vmem:[#allocation5 + $0x12d8] sm:$0xff]
        %v1163 = vld [vmem:[#allocation5 + $0x12e0] sm:$0xff]
        %v1164 = vld [vmem:[#allocation5 + $0x12e8] sm:$0xff]
        %v1165 = vld [vmem:[#allocation5 + $0x12f0] sm:$0xff]
        %v1166 = vld [vmem:[#allocation5 + $0x12f8] sm:$0xff]
        %v1167 = vld [vmem:[#allocation5 + $0x1300] sm:$0xff]
        %v1168 = vld [vmem:[#allocation5 + $0x1308] sm:$0xff]
        %v1169 = vld [vmem:[#allocation5 + $0x1310] sm:$0xff]
        %v1170 = vld [vmem:[#allocation5 + $0x1318] sm:$0xff]
        %v1171 = vld [vmem:[#allocation5 + $0x1320] sm:$0xff]
        %v1172 = vld [vmem:[#allocation5 + $0x1328] sm:$0xff]
        %v1173 = vld [vmem:[#allocation5 + $0x1330] sm:$0xff]
        %v1174 = vld [vmem:[#allocation5 + $0x1338] sm:$0xff]
        %v1175 = vld [vmem:[#allocation5 + $0x1340] sm:$0xff]
        %v1176 = vld [vmem:[#allocation5 + $0x1348] sm:$0xff]
        %v1177 = vld [vmem:[#allocation5 + $0x1350] sm:$0xff]
        %v1178 = vld [vmem:[#allocation5 + $0x1358] sm:$0xff]
        %v1179 = vld [vmem:[#allocation5 + $0x1360] sm:$0xff]
        %v1180 = vld [vmem:[#allocation5 + $0x1368] sm:$0xff]
        %v1181 = vld [vmem:[#allocation5 + $0x1370] sm:$0xff]
        %v1182 = vld [vmem:[#allocation5 + $0x1378] sm:$0xff]
        %v1183 = vld [vmem:[#allocation5 + $0x1380] sm:$0xff]
        %v1184 = vld [vmem:[#allocation5 + $0x1388] sm:$0xff]
        %v1185 = vld [vmem:[#allocation5 + $0x1390] sm:$0xff]
        %v1186 = vld [vmem:[#allocation5 + $0x1398] sm:$0xff]
        %v1187 = vld [vmem:[#allocation5 + $0x13a0] sm:$0xff]
        %v1188 = vld [vmem:[#allocation5 + $0x13a8] sm:$0xff]
        %v1189 = vld [vmem:[#allocation5 + $0x13b0] sm:$0xff]
        %v1190 = vld [vmem:[#allocation5 + $0x13b8] sm:$0xff]
        %v1191 = vld [vmem:[#allocation5 + $0x13c0] sm:$0xff]
        %v1192 = vld [vmem:[#allocation5 + $0x13c8] sm:$0xff]
        %v1193 = vld [vmem:[#allocation5 + $0x13d0] sm:$0xff]
        %v1194 = vld [vmem:[#allocation5 + $0x13d8] sm:$0xff]
        %v1195 = vld [vmem:[#allocation5 + $0x13e0] sm:$0xff]
        %v1196 = vld [vmem:[#allocation5 + $0x13e8] sm:$0xff]
        %v1197 = vld [vmem:[#allocation5 + $0x13f0] sm:$0xff]
        %v1198 = vld [vmem:[#allocation5 + $0x13f8] sm:$0xff]
        %v1199 = vld [vmem:[#allocation5 + $0x1400] sm:$0xff]
        %v1200 = vld [vmem:[#allocation5 + $0x1408] sm:$0xff]
        %v1201 = vld [vmem:[#allocation5 + $0x1410] sm:$0xff]
        %v1202 = vld [vmem:[#allocation5 + $0x1418] sm:$0xff]
        %v1203 = vld [vmem:[#allocation5 + $0x1420] sm:$0xff]
        %v1204 = vld [vmem:[#allocation5 + $0x1428] sm:$0xff]
        %v1205 = vld [vmem:[#allocation5 + $0x1430] sm:$0xff]
        %v1206 = vld [vmem:[#allocation5 + $0x1438] sm:$0xff]
        %v1207 = vld [vmem:[#allocation5 + $0x1440] sm:$0xff]
        %v1208 = vld [vmem:[#allocation5 + $0x1448] sm:$0xff]
        %v1209 = vld [vmem:[#allocation5 + $0x1450] sm:$0xff]
        %v1210 = vld [vmem:[#allocation5 + $0x1458] sm:$0xff]
        %v1211 = vld [vmem:[#allocation5 + $0x1460] sm:$0xff]
        %v1212 = vld [vmem:[#allocation5 + $0x1468] sm:$0xff]
        %v1213 = vld [vmem:[#allocation5 + $0x1470] sm:$0xff]
        %v1214 = vld [vmem:[#allocation5 + $0x1478] sm:$0xff]
        %v1215 = vld [vmem:[#allocation5 + $0x1480] sm:$0xff]
        %v1216 = vld [vmem:[#allocation5 + $0x1488] sm:$0xff]
        %v1217 = vld [vmem:[#allocation5 + $0x1490] sm:$0xff]
        %v1218 = vld [vmem:[#allocation5 + $0x1498] sm:$0xff]
        %v1219 = vld [vmem:[#allocation5 + $0x14a0] sm:$0xff]
        %v1220 = vld [vmem:[#allocation5 + $0x14a8] sm:$0xff]
        %v1221 = vld [vmem:[#allocation5 + $0x14b0] sm:$0xff]
        %v1222 = vld [vmem:[#allocation5 + $0x14b8] sm:$0xff]
        %v1223 = vld [vmem:[#allocation5 + $0x14c0] sm:$0xff]
        %v1224 = vld [vmem:[#allocation5 + $0x14c8] sm:$0xff]
        %v1225 = vld [vmem:[#allocation5 + $0x14d0] sm:$0xff]
        %v1226 = vld [vmem:[#allocation5 + $0x14d8] sm:$0xff]
        %v1227 = vld [vmem:[#allocation5 + $0x14e0] sm:$0xff]
        %v1228 = vld [vmem:[#allocation5 + $0x14e8] sm:$0xff]
        %v1229 = vld [vmem:[#allocation5 + $0x14f0] sm:$0xff]
        %v1230 = vld [vmem:[#allocation5 + $0x14f8] sm:$0xff]
        %v1231 = vld [vmem:[#allocation5 + $0x1500] sm:$0xff]
        %v1232 = vld [vmem:[#allocation5 + $0x1508] sm:$0xff]
        %v1233 = vld [vmem:[#allocation5 + $0x1510] sm:$0xff]
        %v1234 = vld [vmem:[#allocation5 + $0x1518] sm:$0xff]
        %v1235 = vld [vmem:[#allocation5 + $0x1520] sm:$0xff]
        %v1236 = vld [vmem:[#allocation5 + $0x1528] sm:$0xff]
        %v1237 = vld [vmem:[#allocation5 + $0x1530] sm:$0xff]
        %v1238 = vld [vmem:[#allocation5 + $0x1538] sm:$0xff]
        %v1239 = vld [vmem:[#allocation5 + $0x1540] sm:$0xff]
        %v1240 = vld [vmem:[#allocation5 + $0x1548] sm:$0xff]
        %v1241 = vld [vmem:[#allocation5 + $0x1550] sm:$0xff]
        %v1242 = vld [vmem:[#allocation5 + $0x1558] sm:$0xff]
        %v1243 = vld [vmem:[#allocation5 + $0x1560] sm:$0xff]
        %v1244 = vld [vmem:[#allocation5 + $0x1568] sm:$0xff]
        %v1245 = vld [vmem:[#allocation5 + $0x1570] sm:$0xff]
        %v1246 = vld [vmem:[#allocation5 + $0x1578] sm:$0xff]
        %v1247 = vld [vmem:[#allocation5 + $0x1580] sm:$0xff]
        %v1248 = vld [vmem:[#allocation5 + $0x1588] sm:$0xff]
        %v1249 = vld [vmem:[#allocation5 + $0x1590] sm:$0xff]
        %v1250 = vld [vmem:[#allocation5 + $0x1598] sm:$0xff]
        %v1251 = vld [vmem:[#allocation5 + $0x15a0] sm:$0xff]
        %v1252 = vld [vmem:[#allocation5 + $0x15a8] sm:$0xff]
        %v1253 = vld [vmem:[#allocation5 + $0x15b0] sm:$0xff]
        %v1254 = vld [vmem:[#allocation5 + $0x15b8] sm:$0xff]
        %v1255 = vld [vmem:[#allocation5 + $0x15c0] sm:$0xff]
        %v1256 = vld [vmem:[#allocation5 + $0x15c8] sm:$0xff]
        %v1257 = vld [vmem:[#allocation5 + $0x15d0] sm:$0xff]
        %v1258 = vld [vmem:[#allocation5 + $0x15d8] sm:$0xff]
        %v1259 = vld [vmem:[#allocation5 + $0x15e0] sm:$0xff]
        %v1260 = vld [vmem:[#allocation5 + $0x15e8] sm:$0xff]
        %v1261 = vld [vmem:[#allocation5 + $0x15f0] sm:$0xff]
        %v1262 = vld [vmem:[#allocation5 + $0x15f8] sm:$0xff]
        %v1263 = vld [vmem:[#allocation5 + $0x1600] sm:$0xff]
        %v1264 = vld [vmem:[#allocation5 + $0x1608] sm:$0xff]
        %v1265 = vld [vmem:[#allocation5 + $0x1610] sm:$0xff]
        %v1266 = vld [vmem:[#allocation5 + $0x1618] sm:$0xff]
        %v1267 = vld [vmem:[#allocation5 + $0x1620] sm:$0xff]
        %v1268 = vld [vmem:[#allocation5 + $0x1628] sm:$0xff]
        %v1269 = vld [vmem:[#allocation5 + $0x1630] sm:$0xff]
        %v1270 = vld [vmem:[#allocation5 + $0x1638] sm:$0xff]
        %v1271 = vld [vmem:[#allocation5 + $0x1640] sm:$0xff]
        %v1272 = vld [vmem:[#allocation5 + $0x1648] sm:$0xff]
        %v1273 = vld [vmem:[#allocation5 + $0x1650] sm:$0xff]
        %v1274 = vld [vmem:[#allocation5 + $0x1658] sm:$0xff]
        %v1275 = vld [vmem:[#allocation5 + $0x1660] sm:$0xff]
        %v1276 = vld [vmem:[#allocation5 + $0x1668] sm:$0xff]
        %v1277 = vld [vmem:[#allocation5 + $0x1670] sm:$0xff]
        %v1278 = vld [vmem:[#allocation5 + $0x1678] sm:$0xff]
        %v1279 = vld [vmem:[#allocation5 + $0x1680] sm:$0xff]
        %v1280 = vld [vmem:[#allocation5 + $0x1688] sm:$0xff]
        %v1281 = vld [vmem:[#allocation5 + $0x1690] sm:$0xff]
        %v1282 = vld [vmem:[#allocation5 + $0x1698] sm:$0xff]
        %v1283 = vld [vmem:[#allocation5 + $0x16a0] sm:$0xff]
        %v1284 = vld [vmem:[#allocation5 + $0x16a8] sm:$0xff]
        %v1285 = vld [vmem:[#allocation5 + $0x16b0] sm:$0xff]
        %v1286 = vld [vmem:[#allocation5 + $0x16b8] sm:$0xff]
        %v1287 = vld [vmem:[#allocation5 + $0x16c0] sm:$0xff]
        %v1288 = vld [vmem:[#allocation5 + $0x16c8] sm:$0xff]
        %v1289 = vld [vmem:[#allocation5 + $0x16d0] sm:$0xff]
        %v1290 = vld [vmem:[#allocation5 + $0x16d8] sm:$0xff]
        %v1291 = vld [vmem:[#allocation5 + $0x16e0] sm:$0xff]
        %v1292 = vld [vmem:[#allocation5 + $0x16e8] sm:$0xff]
        %v1293 = vld [vmem:[#allocation5 + $0x16f0] sm:$0xff]
        %v1294 = vld [vmem:[#allocation5 + $0x16f8] sm:$0xff]
        %v1295 = vld [vmem:[#allocation5 + $0x1700] sm:$0xff]
        %v1296 = vld [vmem:[#allocation5 + $0x1708] sm:$0xff]
        %v1297 = vld [vmem:[#allocation5 + $0x1710] sm:$0xff]
        %v1298 = vld [vmem:[#allocation5 + $0x1718] sm:$0xff]
        %v1299 = vld [vmem:[#allocation5 + $0x1720] sm:$0xff]
        %v1300 = vld [vmem:[#allocation5 + $0x1728] sm:$0xff]
        %v1301 = vld [vmem:[#allocation5 + $0x1730] sm:$0xff]
        %v1302 = vld [vmem:[#allocation5 + $0x1738] sm:$0xff]
        %v1303 = vld [vmem:[#allocation5 + $0x1740] sm:$0xff]
        %v1304 = vld [vmem:[#allocation5 + $0x1748] sm:$0xff]
        %v1305 = vld [vmem:[#allocation5 + $0x1750] sm:$0xff]
        %v1306 = vld [vmem:[#allocation5 + $0x1758] sm:$0xff]
        %v1307 = vld [vmem:[#allocation5 + $0x1760] sm:$0xff]
        %v1308 = vld [vmem:[#allocation5 + $0x1768] sm:$0xff]
        %v1309 = vld [vmem:[#allocation5 + $0x1770] sm:$0xff]
        %v1310 = vld [vmem:[#allocation5 + $0x1778] sm:$0xff]
        %v1311 = vld [vmem:[#allocation5 + $0x1780] sm:$0xff]
        %v1312 = vld [vmem:[#allocation5 + $0x1788] sm:$0xff]
        %v1313 = vld [vmem:[#allocation5 + $0x1790] sm:$0xff]
        %v1314 = vld [vmem:[#allocation5 + $0x1798] sm:$0xff]
        %v1315 = vld [vmem:[#allocation5 + $0x17a0] sm:$0xff]
        %v1316 = vld [vmem:[#allocation5 + $0x17a8] sm:$0xff]
        %v1317 = vld [vmem:[#allocation5 + $0x17b0] sm:$0xff]
        %v1318 = vld [vmem:[#allocation5 + $0x17b8] sm:$0xff]
        %v1319 = vld [vmem:[#allocation5 + $0x17c0] sm:$0xff]
        %v1320 = vld [vmem:[#allocation5 + $0x17c8] sm:$0xff]
        %v1321 = vld [vmem:[#allocation5 + $0x17d0] sm:$0xff]
        %v1322 = vld [vmem:[#allocation5 + $0x17d8] sm:$0xff]
        %v1323 = vld [vmem:[#allocation5 + $0x17e0] sm:$0xff]
        %v1324 = vld [vmem:[#allocation5 + $0x17e8] sm:$0xff]
        %v1325 = vld [vmem:[#allocation5 + $0x17f0] sm:$0xff]
        %v1326 = vld [vmem:[#allocation5 + $0x17f8] sm:$0xff]
        %v1327 = vld [vmem:[#allocation5 + $0x1800] sm:$0xff]
        %v1328 = vld [vmem:[#allocation5 + $0x1808] sm:$0xff]
        %v1329 = vld [vmem:[#allocation5 + $0x1810] sm:$0xff]
        %v1330 = vld [vmem:[#allocation5 + $0x1818] sm:$0xff]
        %v1331 = vld [vmem:[#allocation5 + $0x1820] sm:$0xff]
        %v1332 = vld [vmem:[#allocation5 + $0x1828] sm:$0xff]
        %v1333 = vld [vmem:[#allocation5 + $0x1830] sm:$0xff]
        %v1334 = vld [vmem:[#allocation5 + $0x1838] sm:$0xff]
        %v1335 = vld [vmem:[#allocation5 + $0x1840] sm:$0xff]
        %v1336 = vld [vmem:[#allocation5 + $0x1848] sm:$0xff]
        %v1337 = vld [vmem:[#allocation5 + $0x1850] sm:$0xff]
        %v1338 = vld [vmem:[#allocation5 + $0x1858] sm:$0xff]
        %v1339 = vld [vmem:[#allocation5 + $0x1860] sm:$0xff]
        %v1340 = vld [vmem:[#allocation5 + $0x1868] sm:$0xff]
        %v1341 = vld [vmem:[#allocation5 + $0x1870] sm:$0xff]
        %v1342 = vld [vmem:[#allocation5 + $0x1878] sm:$0xff]
        %v1343 = vld [vmem:[#allocation5 + $0x1880] sm:$0xff]
        %v1344 = vld [vmem:[#allocation5 + $0x1888] sm:$0xff]
        %v1345 = vld [vmem:[#allocation5 + $0x1890] sm:$0xff]
        %v1346 = vld [vmem:[#allocation5 + $0x1898] sm:$0xff]
        %v1347 = vld [vmem:[#allocation5 + $0x18a0] sm:$0xff]
        %v1348 = vld [vmem:[#allocation5 + $0x18a8] sm:$0xff]
        %v1349 = vld [vmem:[#allocation5 + $0x18b0] sm:$0xff]
        %v1350 = vld [vmem:[#allocation5 + $0x18b8] sm:$0xff]
        %v1351 = vld [vmem:[#allocation5 + $0x18c0] sm:$0xff]
        %v1352 = vld [vmem:[#allocation5 + $0x18c8] sm:$0xff]
        %v1353 = vld [vmem:[#allocation5 + $0x18d0] sm:$0xff]
        %v1354 = vld [vmem:[#allocation5 + $0x18d8] sm:$0xff]
        %v1355 = vld [vmem:[#allocation5 + $0x18e0] sm:$0xff]
        %v1356 = vld [vmem:[#allocation5 + $0x18e8] sm:$0xff]
        %v1357 = vld [vmem:[#allocation5 + $0x18f0] sm:$0xff]
        %v1358 = vld [vmem:[#allocation5 + $0x18f8] sm:$0xff]
        %v1359 = vld [vmem:[#allocation5 + $0x1900] sm:$0xff]
        %v1360 = vld [vmem:[#allocation5 + $0x1908] sm:$0xff]
        %v1361 = vld [vmem:[#allocation5 + $0x1910] sm:$0xff]
        %v1362 = vld [vmem:[#allocation5 + $0x1918] sm:$0xff]
        %v1363 = vld [vmem:[#allocation5 + $0x1920] sm:$0xff]
        %v1364 = vld [vmem:[#allocation5 + $0x1928] sm:$0xff]
        %v1365 = vld [vmem:[#allocation5 + $0x1930] sm:$0xff]
        %v1366 = vld [vmem:[#allocation5 + $0x1938] sm:$0xff]
        %v1367 = vld [vmem:[#allocation5 + $0x1940] sm:$0xff]
        %v1368 = vld [vmem:[#allocation5 + $0x1948] sm:$0xff]
        %v1369 = vld [vmem:[#allocation5 + $0x1950] sm:$0xff]
        %v1370 = vld [vmem:[#allocation5 + $0x1958] sm:$0xff]
        %v1371 = vld [vmem:[#allocation5 + $0x1960] sm:$0xff]
        %v1372 = vld [vmem:[#allocation5 + $0x1968] sm:$0xff]
        %v1373 = vld [vmem:[#allocation5 + $0x1970] sm:$0xff]
        %v1374 = vld [vmem:[#allocation5 + $0x1978] sm:$0xff]
        %v1375 = vld [vmem:[#allocation5 + $0x1980] sm:$0xff]
        %v1376 = vld [vmem:[#allocation5 + $0x1988] sm:$0xff]
        %v1377 = vld [vmem:[#allocation5 + $0x1990] sm:$0xff]
        %v1378 = vld [vmem:[#allocation5 + $0x1998] sm:$0xff]
        %v1379 = vld [vmem:[#allocation5 + $0x19a0] sm:$0xff]
        %v1380 = vld [vmem:[#allocation5 + $0x19a8] sm:$0xff]
        %v1381 = vld [vmem:[#allocation5 + $0x19b0] sm:$0xff]
        %v1382 = vld [vmem:[#allocation5 + $0x19b8] sm:$0xff]
        %v1383 = vld [vmem:[#allocation5 + $0x19c0] sm:$0xff]
        %v1384 = vld [vmem:[#allocation5 + $0x19c8] sm:$0xff]
        %v1385 = vld [vmem:[#allocation5 + $0x19d0] sm:$0xff]
        %v1386 = vld [vmem:[#allocation5 + $0x19d8] sm:$0xff]
        %v1387 = vld [vmem:[#allocation5 + $0x19e0] sm:$0xff]
        %v1388 = vld [vmem:[#allocation5 + $0x19e8] sm:$0xff]
        %v1389 = vld [vmem:[#allocation5 + $0x19f0] sm:$0xff]
        %v1390 = vld [vmem:[#allocation5 + $0x19f8] sm:$0xff]
        %v1391 = vld [vmem:[#allocation5 + $0x1a00] sm:$0xff]
        %v1392 = vld [vmem:[#allocation5 + $0x1a08] sm:$0xff]
        %v1393 = vld [vmem:[#allocation5 + $0x1a10] sm:$0xff]
        %v1394 = vld [vmem:[#allocation5 + $0x1a18] sm:$0xff]
        %v1395 = vld [vmem:[#allocation5 + $0x1a20] sm:$0xff]
        %v1396 = vld [vmem:[#allocation5 + $0x1a28] sm:$0xff]
        %v1397 = vld [vmem:[#allocation5 + $0x1a30] sm:$0xff]
        %v1398 = vld [vmem:[#allocation5 + $0x1a38] sm:$0xff]
        %v1399 = vld [vmem:[#allocation5 + $0x1a40] sm:$0xff]
        %v1400 = vld [vmem:[#allocation5 + $0x1a48] sm:$0xff]
        %v1401 = vld [vmem:[#allocation5 + $0x1a50] sm:$0xff]
        %v1402 = vld [vmem:[#allocation5 + $0x1a58] sm:$0xff]
        %v1403 = vld [vmem:[#allocation5 + $0x1a60] sm:$0xff]
        %v1404 = vld [vmem:[#allocation5 + $0x1a68] sm:$0xff]
        %v1405 = vld [vmem:[#allocation5 + $0x1a70] sm:$0xff]
        %v1406 = vld [vmem:[#allocation5 + $0x1a78] sm:$0xff]
        %v1407 = vld [vmem:[#allocation5 + $0x1a80] sm:$0xff]
        %v1408 = vld [vmem:[#allocation5 + $0x1a88] sm:$0xff]
        %v1409 = vld [vmem:[#allocation5 + $0x1a90] sm:$0xff]
        %v1410 = vld [vmem:[#allocation5 + $0x1a98] sm:$0xff]
        %v1411 = vld [vmem:[#allocation5 + $0x1aa0] sm:$0xff]
        %v1412 = vld [vmem:[#allocation5 + $0x1aa8] sm:$0xff]
        %v1413 = vld [vmem:[#allocation5 + $0x1ab0] sm:$0xff]
        %v1414 = vld [vmem:[#allocation5 + $0x1ab8] sm:$0xff]
        %v1415 = vld [vmem:[#allocation5 + $0x1ac0] sm:$0xff]
        %v1416 = vld [vmem:[#allocation5 + $0x1ac8] sm:$0xff]
        %v1417 = vld [vmem:[#allocation5 + $0x1ad0] sm:$0xff]
        %v1418 = vld [vmem:[#allocation5 + $0x1ad8] sm:$0xff]
        %v1419 = vld [vmem:[#allocation5 + $0x1ae0] sm:$0xff]
        %v1420 = vld [vmem:[#allocation5 + $0x1ae8] sm:$0xff]
        %v1421 = vld [vmem:[#allocation5 + $0x1af0] sm:$0xff]
        %v1422 = vld [vmem:[#allocation5 + $0x1af8] sm:$0xff]
        %v1423 = vld [vmem:[#allocation5 + $0x1b00] sm:$0xff]
        %v1424 = vld [vmem:[#allocation5 + $0x1b08] sm:$0xff]
        %v1425 = vld [vmem:[#allocation5 + $0x1b10] sm:$0xff]
        %v1426 = vld [vmem:[#allocation5 + $0x1b18] sm:$0xff]
        %v1427 = vld [vmem:[#allocation5 + $0x1b20] sm:$0xff]
        %v1428 = vld [vmem:[#allocation5 + $0x1b28] sm:$0xff]
        %v1429 = vld [vmem:[#allocation5 + $0x1b30] sm:$0xff]
        %v1430 = vld [vmem:[#allocation5 + $0x1b38] sm:$0xff]
        %v1431 = vld [vmem:[#allocation5 + $0x1b40] sm:$0xff]
        %v1432 = vld [vmem:[#allocation5 + $0x1b48] sm:$0xff]
        %v1433 = vld [vmem:[#allocation5 + $0x1b50] sm:$0xff]
        %v1434 = vld [vmem:[#allocation5 + $0x1b58] sm:$0xff]
        %v1435 = vld [vmem:[#allocation5 + $0x1b60] sm:$0xff]
        %v1436 = vld [vmem:[#allocation5 + $0x1b68] sm:$0xff]
        %v1437 = vld [vmem:[#allocation5 + $0x1b70] sm:$0xff]
        %v1438 = vld [vmem:[#allocation5 + $0x1b78] sm:$0xff]
        %v1439 = vld [vmem:[#allocation5 + $0x1b80] sm:$0xff]
        %v1440 = vld [vmem:[#allocation5 + $0x1b88] sm:$0xff]
        %v1441 = vld [vmem:[#allocation5 + $0x1b90] sm:$0xff]
        %v1442 = vld [vmem:[#allocation5 + $0x1b98] sm:$0xff]
        %v1443 = vld [vmem:[#allocation5 + $0x1ba0] sm:$0xff]
        %v1444 = vld [vmem:[#allocation5 + $0x1ba8] sm:$0xff]
        %v1445 = vld [vmem:[#allocation5 + $0x1bb0] sm:$0xff]
        %v1446 = vld [vmem:[#allocation5 + $0x1bb8] sm:$0xff]
        %v1447 = vld [vmem:[#allocation5 + $0x1bc0] sm:$0xff]
        %v1448 = vld [vmem:[#allocation5 + $0x1bc8] sm:$0xff]
        %v1449 = vld [vmem:[#allocation5 + $0x1bd0] sm:$0xff]
        %v1450 = vld [vmem:[#allocation5 + $0x1bd8] sm:$0xff]
        %v1451 = vld [vmem:[#allocation5 + $0x1be0] sm:$0xff]
        %v1452 = vld [vmem:[#allocation5 + $0x1be8] sm:$0xff]
        %v1453 = vld [vmem:[#allocation5 + $0x1bf0] sm:$0xff]
        %v1454 = vld [vmem:[#allocation5 + $0x1bf8] sm:$0xff]
        %v1455 = vld [vmem:[#allocation5 + $0x1c00] sm:$0xff]
        %v1456 = vld [vmem:[#allocation5 + $0x1c08] sm:$0xff]
        %v1457 = vld [vmem:[#allocation5 + $0x1c10] sm:$0xff]
        %v1458 = vld [vmem:[#allocation5 + $0x1c18] sm:$0xff]
        %v1459 = vld [vmem:[#allocation5 + $0x1c20] sm:$0xff]
        %v1460 = vld [vmem:[#allocation5 + $0x1c28] sm:$0xff]
        %v1461 = vld [vmem:[#allocation5 + $0x1c30] sm:$0xff]
        %v1462 = vld [vmem:[#allocation5 + $0x1c38] sm:$0xff]
        %v1463 = vld [vmem:[#allocation5 + $0x1c40] sm:$0xff]
        %v1464 = vld [vmem:[#allocation5 + $0x1c48] sm:$0xff]
        %v1465 = vld [vmem:[#allocation5 + $0x1c50] sm:$0xff]
        %v1466 = vld [vmem:[#allocation5 + $0x1c58] sm:$0xff]
        %v1467 = vld [vmem:[#allocation5 + $0x1c60] sm:$0xff]
        %v1468 = vld [vmem:[#allocation5 + $0x1c68] sm:$0xff]
        %v1469 = vld [vmem:[#allocation5 + $0x1c70] sm:$0xff]
        %v1470 = vld [vmem:[#allocation5 + $0x1c78] sm:$0xff]
        %v1471 = vld [vmem:[#allocation5 + $0x1c80] sm:$0xff]
        %v1472 = vld [vmem:[#allocation5 + $0x1c88] sm:$0xff]
        %v1473 = vld [vmem:[#allocation5 + $0x1c90] sm:$0xff]
        %v1474 = vld [vmem:[#allocation5 + $0x1c98] sm:$0xff]
        %v1475 = vld [vmem:[#allocation5 + $0x1ca0] sm:$0xff]
        %v1476 = vld [vmem:[#allocation5 + $0x1ca8] sm:$0xff]
        %v1477 = vld [vmem:[#allocation5 + $0x1cb0] sm:$0xff]
        %v1478 = vld [vmem:[#allocation5 + $0x1cb8] sm:$0xff]
        %v1479 = vld [vmem:[#allocation5 + $0x1cc0] sm:$0xff]
        %v1480 = vld [vmem:[#allocation5 + $0x1cc8] sm:$0xff]
        %v1481 = vld [vmem:[#allocation5 + $0x1cd0] sm:$0xff]
        %v1482 = vld [vmem:[#allocation5 + $0x1cd8] sm:$0xff]
        %v1483 = vld [vmem:[#allocation5 + $0x1ce0] sm:$0xff]
        %v1484 = vld [vmem:[#allocation5 + $0x1ce8] sm:$0xff]
        %v1485 = vld [vmem:[#allocation5 + $0x1cf0] sm:$0xff]
        %v1486 = vld [vmem:[#allocation5 + $0x1cf8] sm:$0xff]
        %v1487 = vld [vmem:[#allocation5 + $0x1d00] sm:$0xff]
        %v1488 = vld [vmem:[#allocation5 + $0x1d08] sm:$0xff]
        %v1489 = vld [vmem:[#allocation5 + $0x1d10] sm:$0xff]
        %v1490 = vld [vmem:[#allocation5 + $0x1d18] sm:$0xff]
        %v1491 = vld [vmem:[#allocation5 + $0x1d20] sm:$0xff]
        %v1492 = vld [vmem:[#allocation5 + $0x1d28] sm:$0xff]
        %v1493 = vld [vmem:[#allocation5 + $0x1d30] sm:$0xff]
        %v1494 = vld [vmem:[#allocation5 + $0x1d38] sm:$0xff]
        %v1495 = vld [vmem:[#allocation5 + $0x1d40] sm:$0xff]
        %v1496 = vld [vmem:[#allocation5 + $0x1d48] sm:$0xff]
        %v1497 = vld [vmem:[#allocation5 + $0x1d50] sm:$0xff]
        %v1498 = vld [vmem:[#allocation5 + $0x1d58] sm:$0xff]
        %v1499 = vld [vmem:[#allocation5 + $0x1d60] sm:$0xff]
        %v1500 = vld [vmem:[#allocation5 + $0x1d68] sm:$0xff]
        %v1501 = vld [vmem:[#allocation5 + $0x1d70] sm:$0xff]
        %v1502 = vld [vmem:[#allocation5 + $0x1d78] sm:$0xff]
        %v1503 = vld [vmem:[#allocation5 + $0x1d80] sm:$0xff]
        %v1504 = vld [vmem:[#allocation5 + $0x1d88] sm:$0xff]
        %v1505 = vld [vmem:[#allocation5 + $0x1d90] sm:$0xff]
        %v1506 = vld [vmem:[#allocation5 + $0x1d98] sm:$0xff]
        %v1507 = vld [vmem:[#allocation5 + $0x1da0] sm:$0xff]
        %v1508 = vld [vmem:[#allocation5 + $0x1da8] sm:$0xff]
        %v1509 = vld [vmem:[#allocation5 + $0x1db0] sm:$0xff]
        %v1510 = vld [vmem:[#allocation5 + $0x1db8] sm:$0xff]
        %v1511 = vld [vmem:[#allocation5 + $0x1dc0] sm:$0xff]
        %v1512 = vld [vmem:[#allocation5 + $0x1dc8] sm:$0xff]
        %v1513 = vld [vmem:[#allocation5 + $0x1dd0] sm:$0xff]
        %v1514 = vld [vmem:[#allocation5 + $0x1dd8] sm:$0xff]
        %v1515 = vld [vmem:[#allocation5 + $0x1de0] sm:$0xff]
        %v1516 = vld [vmem:[#allocation5 + $0x1de8] sm:$0xff]
        %v1517 = vld [vmem:[#allocation5 + $0x1df0] sm:$0xff]
        %v1518 = vld [vmem:[#allocation5 + $0x1df8] sm:$0xff]
        %v1519 = vld [vmem:[#allocation5 + $0x1e00] sm:$0xff]
        %v1520 = vld [vmem:[#allocation5 + $0x1e08] sm:$0xff]
        %v1521 = vld [vmem:[#allocation5 + $0x1e10] sm:$0xff]
        %v1522 = vld [vmem:[#allocation5 + $0x1e18] sm:$0xff]
        %v1523 = vld [vmem:[#allocation5 + $0x1e20] sm:$0xff]
        %v1524 = vld [vmem:[#allocation5 + $0x1e28] sm:$0xff]
        %v1525 = vld [vmem:[#allocation5 + $0x1e30] sm:$0xff]
        %v1526 = vld [vmem:[#allocation5 + $0x1e38] sm:$0xff]
        %v1527 = vld [vmem:[#allocation5 + $0x1e40] sm:$0xff]
        %v1528 = vld [vmem:[#allocation5 + $0x1e48] sm:$0xff]
        %v1529 = vld [vmem:[#allocation5 + $0x1e50] sm:$0xff]
        %v1530 = vld [vmem:[#allocation5 + $0x1e58] sm:$0xff]
        %v1531 = vld [vmem:[#allocation5 + $0x1e60] sm:$0xff]
        %v1532 = vld [vmem:[#allocation5 + $0x1e68] sm:$0xff]
        %v1533 = vld [vmem:[#allocation5 + $0x1e70] sm:$0xff]
        %v1534 = vld [vmem:[#allocation5 + $0x1e78] sm:$0xff]
        %v1535 = vld [vmem:[#allocation5 + $0x1e80] sm:$0xff]
        %v1536 = vld [vmem:[#allocation5 + $0x1e88] sm:$0xff]
        %v1537 = vld [vmem:[#allocation5 + $0x1e90] sm:$0xff]
        %v1538 = vld [vmem:[#allocation5 + $0x1e98] sm:$0xff]
        %v1539 = vld [vmem:[#allocation5 + $0x1ea0] sm:$0xff]
        %v1540 = vld [vmem:[#allocation5 + $0x1ea8] sm:$0xff]
        %v1541 = vld [vmem:[#allocation5 + $0x1eb0] sm:$0xff]
        %v1542 = vld [vmem:[#allocation5 + $0x1eb8] sm:$0xff]
        %v1543 = vld [vmem:[#allocation5 + $0x1ec0] sm:$0xff]
        %v1544 = vld [vmem:[#allocation5 + $0x1ec8] sm:$0xff]
        %v1545 = vld [vmem:[#allocation5 + $0x1ed0] sm:$0xff]
        %v1546 = vld [vmem:[#allocation5 + $0x1ed8] sm:$0xff]
        %v1547 = vld [vmem:[#allocation5 + $0x1ee0] sm:$0xff]
        %v1548 = vld [vmem:[#allocation5 + $0x1ee8] sm:$0xff]
        %v1549 = vld [vmem:[#allocation5 + $0x1ef0] sm:$0xff]
        %v1550 = vld [vmem:[#allocation5 + $0x1ef8] sm:$0xff]
        %v1551 = vld [vmem:[#allocation5 + $0x1f00] sm:$0xff]
        %v1552 = vld [vmem:[#allocation5 + $0x1f08] sm:$0xff]
        %v1553 = vld [vmem:[#allocation5 + $0x1f10] sm:$0xff]
        %v1554 = vld [vmem:[#allocation5 + $0x1f18] sm:$0xff]
        %v1555 = vld [vmem:[#allocation5 + $0x1f20] sm:$0xff]
        %v1556 = vld [vmem:[#allocation5 + $0x1f28] sm:$0xff]
        %v1557 = vld [vmem:[#allocation5 + $0x1f30] sm:$0xff]
        %v1558 = vld [vmem:[#allocation5 + $0x1f38] sm:$0xff]
        %v1559 = vld [vmem:[#allocation5 + $0x1f40] sm:$0xff]
        %v1560 = vld [vmem:[#allocation5 + $0x1f48] sm:$0xff]
        %v1561 = vld [vmem:[#allocation5 + $0x1f50] sm:$0xff]
        %v1562 = vld [vmem:[#allocation5 + $0x1f58] sm:$0xff]
        %v1563 = vld [vmem:[#allocation5 + $0x1f60] sm:$0xff]
        %v1564 = vld [vmem:[#allocation5 + $0x1f68] sm:$0xff]
        %v1565 = vld [vmem:[#allocation5 + $0x1f70] sm:$0xff]
        %v1566 = vld [vmem:[#allocation5 + $0x1f78] sm:$0xff]
        %v1567 = vld [vmem:[#allocation5 + $0x1f80] sm:$0xff]
        %v1568 = vld [vmem:[#allocation5 + $0x1f88] sm:$0xff]
        %v1569 = vld [vmem:[#allocation5 + $0x1f90] sm:$0xff]
        %v1570 = vld [vmem:[#allocation5 + $0x1f98] sm:$0xff]
        %v1571 = vld [vmem:[#allocation5 + $0x1fa0] sm:$0xff]
        %v1572 = vld [vmem:[#allocation5 + $0x1fa8] sm:$0xff]
        %v1573 = vld [vmem:[#allocation5 + $0x1fb0] sm:$0xff]
        %v1574 = vld [vmem:[#allocation5 + $0x1fb8] sm:$0xff]
        %v1575 = vld [vmem:[#allocation5 + $0x1fc0] sm:$0xff]
        %v1576 = vld [vmem:[#allocation5 + $0x1fc8] sm:$0xff]
        %v1577 = vld [vmem:[#allocation5 + $0x1fd0] sm:$0xff]
        %v1578 = vld [vmem:[#allocation5 + $0x1fd8] sm:$0xff]
        %v1579 = vld [vmem:[#allocation5 + $0x1fe0] sm:$0xff]
        %v1580 = vld [vmem:[#allocation5 + $0x1fe8] sm:$0xff]
        %v1581 = vld [vmem:[#allocation5 + $0x1ff0] sm:$0xff]
        %v1582 = vld [vmem:[#allocation5 + $0x1ff8] sm:$0xff]
        %v1583 = vld [vmem:[#allocation7] sm:$0xff]
        %v1585 = vlaneseq
        %v1586 = vshrl.u32 %v1585, 7
        %v1587 = vsub.s32 0, %v1586
        %v1588 = vrot.slane %v1583, %v1587
        %v1589 = vlaneseq
        %v1590 = vshrl.u32 %v1589, 7
        %v1591 = vsub.s32 1, %v1590
        %v1592 = vrot.slane %v1583, %v1591
        %v1593 = vlaneseq
        %v1594 = vshrl.u32 %v1593, 7
        %v1595 = vsub.s32 2, %v1594
        %v1596 = vrot.slane %v1583, %v1595
        %v1597 = vlaneseq
        %v1598 = vshrl.u32 %v1597, 7
        %v1599 = vsub.s32 3, %v1598
        %v1600 = vrot.slane %v1583, %v1599
        %v1601 = vlaneseq
        %v1602 = vshrl.u32 %v1601, 7
        %v1603 = vsub.s32 4, %v1602
        %v1604 = vrot.slane %v1583, %v1603
        %v1605 = vlaneseq
        %v1606 = vshrl.u32 %v1605, 7
        %v1607 = vsub.s32 5, %v1606
        %v1608 = vrot.slane %v1583, %v1607
        %v1609 = vlaneseq
        %v1610 = vshrl.u32 %v1609, 7
        %v1611 = vsub.s32 6, %v1610
        %v1612 = vrot.slane %v1583, %v1611
        %v1613 = vlaneseq
        %v1614 = vshrl.u32 %v1613, 7
        %v1615 = vsub.s32 7, %v1614
        %v1616 = vrot.slane %v1583, %v1615
        %v2649 = vunpack.c.l.b16 %v559
        %v2650 = vunpack.c.h.b16 %v559
        %v2651 = vunpack.c.l.b16 %v560
        %v2652 = vunpack.c.h.b16 %v560
        %v2653 = vunpack.c.l.b16 %v561
        %v2654 = vunpack.c.h.b16 %v561
        %v2655 = vunpack.c.l.b16 %v562
        %v2656 = vunpack.c.h.b16 %v562
        %v2657 = vunpack.c.l.b16 %v563
        %v2658 = vunpack.c.h.b16 %v563
        %v2659 = vunpack.c.l.b16 %v564
        %v2660 = vunpack.c.h.b16 %v564
        %v2661 = vunpack.c.l.b16 %v565
        %v2662 = vunpack.c.h.b16 %v565
        %v2663 = vunpack.c.l.b16 %v566
        %v2664 = vunpack.c.h.b16 %v566
        %v2665 = vunpack.c.l.b16 %v567
        %v2666 = vunpack.c.h.b16 %v567
        %v2667 = vunpack.c.l.b16 %v568
        %v2668 = vunpack.c.h.b16 %v568
        %v2669 = vunpack.c.l.b16 %v569
        %v2670 = vunpack.c.h.b16 %v569
        %v2671 = vunpack.c.l.b16 %v570
        %v2672 = vunpack.c.h.b16 %v570
        %v2673 = vunpack.c.l.b16 %v571
        %v2674 = vunpack.c.h.b16 %v571
        %v2675 = vunpack.c.l.b16 %v572
        %v2676 = vunpack.c.h.b16 %v572
        %v2677 = vunpack.c.l.b16 %v573
        %v2678 = vunpack.c.h.b16 %v573
        %v2679 = vunpack.c.l.b16 %v574
        %v2680 = vunpack.c.h.b16 %v574
        %v2681 = vunpack.c.l.b16 %v575
        %v2682 = vunpack.c.h.b16 %v575
        %v2683 = vunpack.c.l.b16 %v576
        %v2684 = vunpack.c.h.b16 %v576
        %v2685 = vunpack.c.l.b16 %v577
        %v2686 = vunpack.c.h.b16 %v577
        %v2687 = vunpack.c.l.b16 %v578
        %v2688 = vunpack.c.h.b16 %v578
        %v2689 = vunpack.c.l.b16 %v579
        %v2690 = vunpack.c.h.b16 %v579
        %v2691 = vunpack.c.l.b16 %v580
        %v2692 = vunpack.c.h.b16 %v580
        %v2693 = vunpack.c.l.b16 %v581
        %v2694 = vunpack.c.h.b16 %v581
        %v2695 = vunpack.c.l.b16 %v582
        %v2696 = vunpack.c.h.b16 %v582
        %v2697 = vunpack.c.l.b16 %v583
        %v2698 = vunpack.c.h.b16 %v583
        %v2699 = vunpack.c.l.b16 %v584
        %v2700 = vunpack.c.h.b16 %v584
        %v2701 = vunpack.c.l.b16 %v585
        %v2702 = vunpack.c.h.b16 %v585
        %v2703 = vunpack.c.l.b16 %v586
        %v2704 = vunpack.c.h.b16 %v586
        %v2705 = vunpack.c.l.b16 %v587
        %v2706 = vunpack.c.h.b16 %v587
        %v2707 = vunpack.c.l.b16 %v588
        %v2708 = vunpack.c.h.b16 %v588
        %v2709 = vunpack.c.l.b16 %v589
        %v2710 = vunpack.c.h.b16 %v589
        %v2711 = vunpack.c.l.b16 %v590
        %v2712 = vunpack.c.h.b16 %v590
        %v2713 = vunpack.c.l.b16 %v591
        %v2714 = vunpack.c.h.b16 %v591
        %v2715 = vunpack.c.l.b16 %v592
        %v2716 = vunpack.c.h.b16 %v592
        %v2717 = vunpack.c.l.b16 %v593
        %v2718 = vunpack.c.h.b16 %v593
        %v2719 = vunpack.c.l.b16 %v594
        %v2720 = vunpack.c.h.b16 %v594
        %v2721 = vunpack.c.l.b16 %v595
        %v2722 = vunpack.c.h.b16 %v595
        %v2723 = vunpack.c.l.b16 %v596
        %v2724 = vunpack.c.h.b16 %v596
        %v2725 = vunpack.c.l.b16 %v597
        %v2726 = vunpack.c.h.b16 %v597
        %v2727 = vunpack.c.l.b16 %v598
        %v2728 = vunpack.c.h.b16 %v598
        %v2729 = vunpack.c.l.b16 %v599
        %v2730 = vunpack.c.h.b16 %v599
        %v2731 = vunpack.c.l.b16 %v600
        %v2732 = vunpack.c.h.b16 %v600
        %v2733 = vunpack.c.l.b16 %v601
        %v2734 = vunpack.c.h.b16 %v601
        %v2735 = vunpack.c.l.b16 %v602
        %v2736 = vunpack.c.h.b16 %v602
        %v2737 = vunpack.c.l.b16 %v603
        %v2738 = vunpack.c.h.b16 %v603
        %v2739 = vunpack.c.l.b16 %v604
        %v2740 = vunpack.c.h.b16 %v604
        %v2741 = vunpack.c.l.b16 %v605
        %v2742 = vunpack.c.h.b16 %v605
        %v2743 = vunpack.c.l.b16 %v606
        %v2744 = vunpack.c.h.b16 %v606
        %v2745 = vunpack.c.l.b16 %v607
        %v2746 = vunpack.c.h.b16 %v607
        %v2747 = vunpack.c.l.b16 %v608
        %v2748 = vunpack.c.h.b16 %v608
        %v2749 = vunpack.c.l.b16 %v609
        %v2750 = vunpack.c.h.b16 %v609
        %v2751 = vunpack.c.l.b16 %v610
        %v2752 = vunpack.c.h.b16 %v610
        %v2753 = vunpack.c.l.b16 %v611
        %v2754 = vunpack.c.h.b16 %v611
        %v2755 = vunpack.c.l.b16 %v612
        %v2756 = vunpack.c.h.b16 %v612
        %v2757 = vunpack.c.l.b16 %v613
        %v2758 = vunpack.c.h.b16 %v613
        %v2759 = vunpack.c.l.b16 %v614
        %v2760 = vunpack.c.h.b16 %v614
        %v2761 = vunpack.c.l.b16 %v615
        %v2762 = vunpack.c.h.b16 %v615
        %v2763 = vunpack.c.l.b16 %v616
        %v2764 = vunpack.c.h.b16 %v616
        %v2765 = vunpack.c.l.b16 %v617
        %v2766 = vunpack.c.h.b16 %v617
        %v2767 = vunpack.c.l.b16 %v618
        %v2768 = vunpack.c.h.b16 %v618
        %v2769 = vunpack.c.l.b16 %v619
        %v2770 = vunpack.c.h.b16 %v619
        %v2771 = vunpack.c.l.b16 %v620
        %v2772 = vunpack.c.h.b16 %v620
        %v2773 = vunpack.c.l.b16 %v621
        %v2774 = vunpack.c.h.b16 %v621
        %v2775 = vunpack.c.l.b16 %v622
        %v2776 = vunpack.c.h.b16 %v622
        %v2777 = vunpack.c.l.b16 %v623
        %v2778 = vunpack.c.h.b16 %v623
        %v2779 = vunpack.c.l.b16 %v624
        %v2780 = vunpack.c.h.b16 %v624
        %v2781 = vunpack.c.l.b16 %v625
        %v2782 = vunpack.c.h.b16 %v625
        %v2783 = vunpack.c.l.b16 %v626
        %v2784 = vunpack.c.h.b16 %v626
        %v2785 = vunpack.c.l.b16 %v627
        %v2786 = vunpack.c.h.b16 %v627
        %v2787 = vunpack.c.l.b16 %v628
        %v2788 = vunpack.c.h.b16 %v628
        %v2789 = vunpack.c.l.b16 %v629
        %v2790 = vunpack.c.h.b16 %v629
        %v2791 = vunpack.c.l.b16 %v630
        %v2792 = vunpack.c.h.b16 %v630
        %v2793 = vunpack.c.l.b16 %v631
        %v2794 = vunpack.c.h.b16 %v631
        %v2795 = vunpack.c.l.b16 %v632
        %v2796 = vunpack.c.h.b16 %v632
        %v2797 = vunpack.c.l.b16 %v633
        %v2798 = vunpack.c.h.b16 %v633
        %v2799 = vunpack.c.l.b16 %v634
        %v2800 = vunpack.c.h.b16 %v634
        %v2801 = vunpack.c.l.b16 %v635
        %v2802 = vunpack.c.h.b16 %v635
        %v2803 = vunpack.c.l.b16 %v636
        %v2804 = vunpack.c.h.b16 %v636
        %v2805 = vunpack.c.l.b16 %v637
        %v2806 = vunpack.c.h.b16 %v637
        %v2807 = vunpack.c.l.b16 %v638
        %v2808 = vunpack.c.h.b16 %v638
        %v2809 = vunpack.c.l.b16 %v639
        %v2810 = vunpack.c.h.b16 %v639
        %v2811 = vunpack.c.l.b16 %v640
        %v2812 = vunpack.c.h.b16 %v640
        %v2813 = vunpack.c.l.b16 %v641
        %v2814 = vunpack.c.h.b16 %v641
        %v2815 = vunpack.c.l.b16 %v642
        %v2816 = vunpack.c.h.b16 %v642
        %v2817 = vunpack.c.l.b16 %v643
        %v2818 = vunpack.c.h.b16 %v643
        %v2819 = vunpack.c.l.b16 %v644
        %v2820 = vunpack.c.h.b16 %v644
        %v2821 = vunpack.c.l.b16 %v645
        %v2822 = vunpack.c.h.b16 %v645
        %v2823 = vunpack.c.l.b16 %v646
        %v2824 = vunpack.c.h.b16 %v646
        %v2825 = vunpack.c.l.b16 %v647
        %v2826 = vunpack.c.h.b16 %v647
        %v2827 = vunpack.c.l.b16 %v648
        %v2828 = vunpack.c.h.b16 %v648
        %v2829 = vunpack.c.l.b16 %v649
        %v2830 = vunpack.c.h.b16 %v649
        %v2831 = vunpack.c.l.b16 %v650
        %v2832 = vunpack.c.h.b16 %v650
        %v2833 = vunpack.c.l.b16 %v651
        %v2834 = vunpack.c.h.b16 %v651
        %v2835 = vunpack.c.l.b16 %v652
        %v2836 = vunpack.c.h.b16 %v652
        %v2837 = vunpack.c.l.b16 %v653
        %v2838 = vunpack.c.h.b16 %v653
        %v2839 = vunpack.c.l.b16 %v654
        %v2840 = vunpack.c.h.b16 %v654
        %v2841 = vunpack.c.l.b16 %v655
        %v2842 = vunpack.c.h.b16 %v655
        %v2843 = vunpack.c.l.b16 %v656
        %v2844 = vunpack.c.h.b16 %v656
        %v2845 = vunpack.c.l.b16 %v657
        %v2846 = vunpack.c.h.b16 %v657
        %v2847 = vunpack.c.l.b16 %v658
        %v2848 = vunpack.c.h.b16 %v658
        %v2849 = vunpack.c.l.b16 %v659
        %v2850 = vunpack.c.h.b16 %v659
        %v2851 = vunpack.c.l.b16 %v660
        %v2852 = vunpack.c.h.b16 %v660
        %v2853 = vunpack.c.l.b16 %v661
        %v2854 = vunpack.c.h.b16 %v661
        %v2855 = vunpack.c.l.b16 %v662
        %v2856 = vunpack.c.h.b16 %v662
        %v2857 = vunpack.c.l.b16 %v663
        %v2858 = vunpack.c.h.b16 %v663
        %v2859 = vunpack.c.l.b16 %v664
        %v2860 = vunpack.c.h.b16 %v664
        %v2861 = vunpack.c.l.b16 %v665
        %v2862 = vunpack.c.h.b16 %v665
        %v2863 = vunpack.c.l.b16 %v666
        %v2864 = vunpack.c.h.b16 %v666
        %v2865 = vunpack.c.l.b16 %v667
        %v2866 = vunpack.c.h.b16 %v667
        %v2867 = vunpack.c.l.b16 %v668
        %v2868 = vunpack.c.h.b16 %v668
        %v2869 = vunpack.c.l.b16 %v669
        %v2870 = vunpack.c.h.b16 %v669
        %v2871 = vunpack.c.l.b16 %v670
        %v2872 = vunpack.c.h.b16 %v670
        %v2873 = vunpack.c.l.b16 %v671
        %v2874 = vunpack.c.h.b16 %v671
        %v2875 = vunpack.c.l.b16 %v672
        %v2876 = vunpack.c.h.b16 %v672
        %v2877 = vunpack.c.l.b16 %v673
        %v2878 = vunpack.c.h.b16 %v673
        %v2879 = vunpack.c.l.b16 %v674
        %v2880 = vunpack.c.h.b16 %v674
        %v2881 = vunpack.c.l.b16 %v675
        %v2882 = vunpack.c.h.b16 %v675
        %v2883 = vunpack.c.l.b16 %v676
        %v2884 = vunpack.c.h.b16 %v676
        %v2885 = vunpack.c.l.b16 %v677
        %v2886 = vunpack.c.h.b16 %v677
        %v2887 = vunpack.c.l.b16 %v678
        %v2888 = vunpack.c.h.b16 %v678
        %v2889 = vunpack.c.l.b16 %v679
        %v2890 = vunpack.c.h.b16 %v679
        %v2891 = vunpack.c.l.b16 %v680
        %v2892 = vunpack.c.h.b16 %v680
        %v2893 = vunpack.c.l.b16 %v681
        %v2894 = vunpack.c.h.b16 %v681
        %v2895 = vunpack.c.l.b16 %v682
        %v2896 = vunpack.c.h.b16 %v682
        %v2897 = vunpack.c.l.b16 %v683
        %v2898 = vunpack.c.h.b16 %v683
        %v2899 = vunpack.c.l.b16 %v684
        %v2900 = vunpack.c.h.b16 %v684
        %v2901 = vunpack.c.l.b16 %v685
        %v2902 = vunpack.c.h.b16 %v685
        %v2903 = vunpack.c.l.b16 %v686
        %v2904 = vunpack.c.h.b16 %v686
        %v2905 = vunpack.c.l.b16 %v687
        %v2906 = vunpack.c.h.b16 %v687
        %v2907 = vunpack.c.l.b16 %v688
        %v2908 = vunpack.c.h.b16 %v688
        %v2909 = vunpack.c.l.b16 %v689
        %v2910 = vunpack.c.h.b16 %v689
        %v2911 = vunpack.c.l.b16 %v690
        %v2912 = vunpack.c.h.b16 %v690
        %v2913 = vunpack.c.l.b16 %v691
        %v2914 = vunpack.c.h.b16 %v691
        %v2915 = vunpack.c.l.b16 %v692
        %v2916 = vunpack.c.h.b16 %v692
        %v2917 = vunpack.c.l.b16 %v693
        %v2918 = vunpack.c.h.b16 %v693
        %v2919 = vunpack.c.l.b16 %v694
        %v2920 = vunpack.c.h.b16 %v694
        %v2921 = vunpack.c.l.b16 %v695
        %v2922 = vunpack.c.h.b16 %v695
        %v2923 = vunpack.c.l.b16 %v696
        %v2924 = vunpack.c.h.b16 %v696
        %v2925 = vunpack.c.l.b16 %v697
        %v2926 = vunpack.c.h.b16 %v697
        %v2927 = vunpack.c.l.b16 %v698
        %v2928 = vunpack.c.h.b16 %v698
        %v2929 = vunpack.c.l.b16 %v699
        %v2930 = vunpack.c.h.b16 %v699
        %v2931 = vunpack.c.l.b16 %v700
        %v2932 = vunpack.c.h.b16 %v700
        %v2933 = vunpack.c.l.b16 %v701
        %v2934 = vunpack.c.h.b16 %v701
        %v2935 = vunpack.c.l.b16 %v702
        %v2936 = vunpack.c.h.b16 %v702
        %v2937 = vunpack.c.l.b16 %v703
        %v2938 = vunpack.c.h.b16 %v703
        %v2939 = vunpack.c.l.b16 %v704
        %v2940 = vunpack.c.h.b16 %v704
        %v2941 = vunpack.c.l.b16 %v705
        %v2942 = vunpack.c.h.b16 %v705
        %v2943 = vunpack.c.l.b16 %v706
        %v2944 = vunpack.c.h.b16 %v706
        %v2945 = vunpack.c.l.b16 %v707
        %v2946 = vunpack.c.h.b16 %v707
        %v2947 = vunpack.c.l.b16 %v708
        %v2948 = vunpack.c.h.b16 %v708
        %v2949 = vunpack.c.l.b16 %v709
        %v2950 = vunpack.c.h.b16 %v709
        %v2951 = vunpack.c.l.b16 %v710
        %v2952 = vunpack.c.h.b16 %v710
        %v2953 = vunpack.c.l.b16 %v711
        %v2954 = vunpack.c.h.b16 %v711
        %v2955 = vunpack.c.l.b16 %v712
        %v2956 = vunpack.c.h.b16 %v712
        %v2957 = vunpack.c.l.b16 %v713
        %v2958 = vunpack.c.h.b16 %v713
        %v2959 = vunpack.c.l.b16 %v714
        %v2960 = vunpack.c.h.b16 %v714
        %v2961 = vunpack.c.l.b16 %v715
        %v2962 = vunpack.c.h.b16 %v715
        %v2963 = vunpack.c.l.b16 %v716
        %v2964 = vunpack.c.h.b16 %v716
        %v2965 = vunpack.c.l.b16 %v717
        %v2966 = vunpack.c.h.b16 %v717
        %v2967 = vunpack.c.l.b16 %v718
        %v2968 = vunpack.c.h.b16 %v718
        %v2969 = vunpack.c.l.b16 %v719
        %v2970 = vunpack.c.h.b16 %v719
        %v2971 = vunpack.c.l.b16 %v720
        %v2972 = vunpack.c.h.b16 %v720
        %v2973 = vunpack.c.l.b16 %v721
        %v2974 = vunpack.c.h.b16 %v721
        %v2975 = vunpack.c.l.b16 %v722
        %v2976 = vunpack.c.h.b16 %v722
        %v2977 = vunpack.c.l.b16 %v723
        %v2978 = vunpack.c.h.b16 %v723
        %v2979 = vunpack.c.l.b16 %v724
        %v2980 = vunpack.c.h.b16 %v724
        %v2981 = vunpack.c.l.b16 %v725
        %v2982 = vunpack.c.h.b16 %v725
        %v2983 = vunpack.c.l.b16 %v726
        %v2984 = vunpack.c.h.b16 %v726
        %v2985 = vunpack.c.l.b16 %v727
        %v2986 = vunpack.c.h.b16 %v727
        %v2987 = vunpack.c.l.b16 %v728
        %v2988 = vunpack.c.h.b16 %v728
        %v2989 = vunpack.c.l.b16 %v729
        %v2990 = vunpack.c.h.b16 %v729
        %v2991 = vunpack.c.l.b16 %v730
        %v2992 = vunpack.c.h.b16 %v730
        %v2993 = vunpack.c.l.b16 %v731
        %v2994 = vunpack.c.h.b16 %v731
        %v2995 = vunpack.c.l.b16 %v732
        %v2996 = vunpack.c.h.b16 %v732
        %v2997 = vunpack.c.l.b16 %v733
        %v2998 = vunpack.c.h.b16 %v733
        %v2999 = vunpack.c.l.b16 %v734
        %v3000 = vunpack.c.h.b16 %v734
        %v3001 = vunpack.c.l.b16 %v735
        %v3002 = vunpack.c.h.b16 %v735
        %v3003 = vunpack.c.l.b16 %v736
        %v3004 = vunpack.c.h.b16 %v736
        %v3005 = vunpack.c.l.b16 %v737
        %v3006 = vunpack.c.h.b16 %v737
        %v3007 = vunpack.c.l.b16 %v738
        %v3008 = vunpack.c.h.b16 %v738
        %v3009 = vunpack.c.l.b16 %v739
        %v3010 = vunpack.c.h.b16 %v739
        %v3011 = vunpack.c.l.b16 %v740
        %v3012 = vunpack.c.h.b16 %v740
        %v3013 = vunpack.c.l.b16 %v741
        %v3014 = vunpack.c.h.b16 %v741
        %v3015 = vunpack.c.l.b16 %v742
        %v3016 = vunpack.c.h.b16 %v742
        %v3017 = vunpack.c.l.b16 %v743
        %v3018 = vunpack.c.h.b16 %v743
        %v3019 = vunpack.c.l.b16 %v744
        %v3020 = vunpack.c.h.b16 %v744
        %v3021 = vunpack.c.l.b16 %v745
        %v3022 = vunpack.c.h.b16 %v745
        %v3023 = vunpack.c.l.b16 %v746
        %v3024 = vunpack.c.h.b16 %v746
        %v3025 = vunpack.c.l.b16 %v747
        %v3026 = vunpack.c.h.b16 %v747
        %v3027 = vunpack.c.l.b16 %v748
        %v3028 = vunpack.c.h.b16 %v748
        %v3029 = vunpack.c.l.b16 %v749
        %v3030 = vunpack.c.h.b16 %v749
        %v3031 = vunpack.c.l.b16 %v750
        %v3032 = vunpack.c.h.b16 %v750
        %v3033 = vunpack.c.l.b16 %v751
        %v3034 = vunpack.c.h.b16 %v751
        %v3035 = vunpack.c.l.b16 %v752
        %v3036 = vunpack.c.h.b16 %v752
        %v3037 = vunpack.c.l.b16 %v753
        %v3038 = vunpack.c.h.b16 %v753
        %v3039 = vunpack.c.l.b16 %v754
        %v3040 = vunpack.c.h.b16 %v754
        %v3041 = vunpack.c.l.b16 %v755
        %v3042 = vunpack.c.h.b16 %v755
        %v3043 = vunpack.c.l.b16 %v756
        %v3044 = vunpack.c.h.b16 %v756
        %v3045 = vunpack.c.l.b16 %v757
        %v3046 = vunpack.c.h.b16 %v757
        %v3047 = vunpack.c.l.b16 %v758
        %v3048 = vunpack.c.h.b16 %v758
        %v3049 = vunpack.c.l.b16 %v759
        %v3050 = vunpack.c.h.b16 %v759
        %v3051 = vunpack.c.l.b16 %v760
        %v3052 = vunpack.c.h.b16 %v760
        %v3053 = vunpack.c.l.b16 %v761
        %v3054 = vunpack.c.h.b16 %v761
        %v3055 = vunpack.c.l.b16 %v762
        %v3056 = vunpack.c.h.b16 %v762
        %v3057 = vunpack.c.l.b16 %v763
        %v3058 = vunpack.c.h.b16 %v763
        %v3059 = vunpack.c.l.b16 %v764
        %v3060 = vunpack.c.h.b16 %v764
        %v3061 = vunpack.c.l.b16 %v765
        %v3062 = vunpack.c.h.b16 %v765
        %v3063 = vunpack.c.l.b16 %v766
        %v3064 = vunpack.c.h.b16 %v766
        %v3065 = vunpack.c.l.b16 %v767
        %v3066 = vunpack.c.h.b16 %v767
        %v3067 = vunpack.c.l.b16 %v768
        %v3068 = vunpack.c.h.b16 %v768
        %v3069 = vunpack.c.l.b16 %v769
        %v3070 = vunpack.c.h.b16 %v769
        %v3071 = vunpack.c.l.b16 %v770
        %v3072 = vunpack.c.h.b16 %v770
        %v3073 = vunpack.c.l.b16 %v771
        %v3074 = vunpack.c.h.b16 %v771
        %v3075 = vunpack.c.l.b16 %v772
        %v3076 = vunpack.c.h.b16 %v772
        %v3077 = vunpack.c.l.b16 %v773
        %v3078 = vunpack.c.h.b16 %v773
        %v3079 = vunpack.c.l.b16 %v774
        %v3080 = vunpack.c.h.b16 %v774
        %v3081 = vunpack.c.l.b16 %v775
        %v3082 = vunpack.c.h.b16 %v775
        %v3083 = vunpack.c.l.b16 %v776
        %v3084 = vunpack.c.h.b16 %v776
        %v3085 = vunpack.c.l.b16 %v777
        %v3086 = vunpack.c.h.b16 %v777
        %v3087 = vunpack.c.l.b16 %v778
        %v3088 = vunpack.c.h.b16 %v778
        %v3089 = vunpack.c.l.b16 %v779
        %v3090 = vunpack.c.h.b16 %v779
        %v3091 = vunpack.c.l.b16 %v780
        %v3092 = vunpack.c.h.b16 %v780
        %v3093 = vunpack.c.l.b16 %v781
        %v3094 = vunpack.c.h.b16 %v781
        %v3095 = vunpack.c.l.b16 %v782
        %v3096 = vunpack.c.h.b16 %v782
        %v3097 = vunpack.c.l.b16 %v783
        %v3098 = vunpack.c.h.b16 %v783
        %v3099 = vunpack.c.l.b16 %v784
        %v3100 = vunpack.c.h.b16 %v784
        %v3101 = vunpack.c.l.b16 %v785
        %v3102 = vunpack.c.h.b16 %v785
        %v3103 = vunpack.c.l.b16 %v786
        %v3104 = vunpack.c.h.b16 %v786
        %v3105 = vunpack.c.l.b16 %v787
        %v3106 = vunpack.c.h.b16 %v787
        %v3107 = vunpack.c.l.b16 %v788
        %v3108 = vunpack.c.h.b16 %v788
        %v3109 = vunpack.c.l.b16 %v789
        %v3110 = vunpack.c.h.b16 %v789
        %v3111 = vunpack.c.l.b16 %v790
        %v3112 = vunpack.c.h.b16 %v790
        %v3113 = vunpack.c.l.b16 %v791
        %v3114 = vunpack.c.h.b16 %v791
        %v3115 = vunpack.c.l.b16 %v792
        %v3116 = vunpack.c.h.b16 %v792
        %v3117 = vunpack.c.l.b16 %v793
        %v3118 = vunpack.c.h.b16 %v793
        %v3119 = vunpack.c.l.b16 %v794
        %v3120 = vunpack.c.h.b16 %v794
        %v3121 = vunpack.c.l.b16 %v795
        %v3122 = vunpack.c.h.b16 %v795
        %v3123 = vunpack.c.l.b16 %v796
        %v3124 = vunpack.c.h.b16 %v796
        %v3125 = vunpack.c.l.b16 %v797
        %v3126 = vunpack.c.h.b16 %v797
        %v3127 = vunpack.c.l.b16 %v798
        %v3128 = vunpack.c.h.b16 %v798
        %v3129 = vunpack.c.l.b16 %v799
        %v3130 = vunpack.c.h.b16 %v799
        %v3131 = vunpack.c.l.b16 %v800
        %v3132 = vunpack.c.h.b16 %v800
        %v3133 = vunpack.c.l.b16 %v801
        %v3134 = vunpack.c.h.b16 %v801
        %v3135 = vunpack.c.l.b16 %v802
        %v3136 = vunpack.c.h.b16 %v802
        %v3137 = vunpack.c.l.b16 %v803
        %v3138 = vunpack.c.h.b16 %v803
        %v3139 = vunpack.c.l.b16 %v804
        %v3140 = vunpack.c.h.b16 %v804
        %v3141 = vunpack.c.l.b16 %v805
        %v3142 = vunpack.c.h.b16 %v805
        %v3143 = vunpack.c.l.b16 %v806
        %v3144 = vunpack.c.h.b16 %v806
        %v3145 = vunpack.c.l.b16 %v807
        %v3146 = vunpack.c.h.b16 %v807
        %v3147 = vunpack.c.l.b16 %v808
        %v3148 = vunpack.c.h.b16 %v808
        %v3149 = vunpack.c.l.b16 %v809
        %v3150 = vunpack.c.h.b16 %v809
        %v3151 = vunpack.c.l.b16 %v810
        %v3152 = vunpack.c.h.b16 %v810
        %v3153 = vunpack.c.l.b16 %v811
        %v3154 = vunpack.c.h.b16 %v811
        %v3155 = vunpack.c.l.b16 %v812
        %v3156 = vunpack.c.h.b16 %v812
        %v3157 = vunpack.c.l.b16 %v813
        %v3158 = vunpack.c.h.b16 %v813
        %v3159 = vunpack.c.l.b16 %v814
        %v3160 = vunpack.c.h.b16 %v814
        %v3161 = vunpack.c.l.b16 %v815
        %v3162 = vunpack.c.h.b16 %v815
        %v3163 = vunpack.c.l.b16 %v816
        %v3164 = vunpack.c.h.b16 %v816
        %v3165 = vunpack.c.l.b16 %v817
        %v3166 = vunpack.c.h.b16 %v817
        %v3167 = vunpack.c.l.b16 %v818
        %v3168 = vunpack.c.h.b16 %v818
        %v3169 = vunpack.c.l.b16 %v819
        %v3170 = vunpack.c.h.b16 %v819
        %v3171 = vunpack.c.l.b16 %v820
        %v3172 = vunpack.c.h.b16 %v820
        %v3173 = vunpack.c.l.b16 %v821
        %v3174 = vunpack.c.h.b16 %v821
        %v3175 = vunpack.c.l.b16 %v822
        %v3176 = vunpack.c.h.b16 %v822
        %v3177 = vunpack.c.l.b16 %v823
        %v3178 = vunpack.c.h.b16 %v823
        %v3179 = vunpack.c.l.b16 %v824
        %v3180 = vunpack.c.h.b16 %v824
        %v3181 = vunpack.c.l.b16 %v825
        %v3182 = vunpack.c.h.b16 %v825
        %v3183 = vunpack.c.l.b16 %v826
        %v3184 = vunpack.c.h.b16 %v826
        %v3185 = vunpack.c.l.b16 %v827
        %v3186 = vunpack.c.h.b16 %v827
        %v3187 = vunpack.c.l.b16 %v828
        %v3188 = vunpack.c.h.b16 %v828
        %v3189 = vunpack.c.l.b16 %v829
        %v3190 = vunpack.c.h.b16 %v829
        %v3191 = vunpack.c.l.b16 %v830
        %v3192 = vunpack.c.h.b16 %v830
        %v3193 = vunpack.c.l.b16 %v831
        %v3194 = vunpack.c.h.b16 %v831
        %v3195 = vunpack.c.l.b16 %v832
        %v3196 = vunpack.c.h.b16 %v832
        %v3197 = vunpack.c.l.b16 %v833
        %v3198 = vunpack.c.h.b16 %v833
        %v3199 = vunpack.c.l.b16 %v834
        %v3200 = vunpack.c.h.b16 %v834
        %v3201 = vunpack.c.l.b16 %v835
        %v3202 = vunpack.c.h.b16 %v835
        %v3203 = vunpack.c.l.b16 %v836
        %v3204 = vunpack.c.h.b16 %v836
        %v3205 = vunpack.c.l.b16 %v837
        %v3206 = vunpack.c.h.b16 %v837
        %v3207 = vunpack.c.l.b16 %v838
        %v3208 = vunpack.c.h.b16 %v838
        %v3209 = vunpack.c.l.b16 %v839
        %v3210 = vunpack.c.h.b16 %v839
        %v3211 = vunpack.c.l.b16 %v840
        %v3212 = vunpack.c.h.b16 %v840
        %v3213 = vunpack.c.l.b16 %v841
        %v3214 = vunpack.c.h.b16 %v841
        %v3215 = vunpack.c.l.b16 %v842
        %v3216 = vunpack.c.h.b16 %v842
        %v3217 = vunpack.c.l.b16 %v843
        %v3218 = vunpack.c.h.b16 %v843
        %v3219 = vunpack.c.l.b16 %v844
        %v3220 = vunpack.c.h.b16 %v844
        %v3221 = vunpack.c.l.b16 %v845
        %v3222 = vunpack.c.h.b16 %v845
        %v3223 = vunpack.c.l.b16 %v846
        %v3224 = vunpack.c.h.b16 %v846
        %v3225 = vunpack.c.l.b16 %v847
        %v3226 = vunpack.c.h.b16 %v847
        %v3227 = vunpack.c.l.b16 %v848
        %v3228 = vunpack.c.h.b16 %v848
        %v3229 = vunpack.c.l.b16 %v849
        %v3230 = vunpack.c.h.b16 %v849
        %v3231 = vunpack.c.l.b16 %v850
        %v3232 = vunpack.c.h.b16 %v850
        %v3233 = vunpack.c.l.b16 %v851
        %v3234 = vunpack.c.h.b16 %v851
        %v3235 = vunpack.c.l.b16 %v852
        %v3236 = vunpack.c.h.b16 %v852
        %v3237 = vunpack.c.l.b16 %v853
        %v3238 = vunpack.c.h.b16 %v853
        %v3239 = vunpack.c.l.b16 %v854
        %v3240 = vunpack.c.h.b16 %v854
        %v3241 = vunpack.c.l.b16 %v855
        %v3242 = vunpack.c.h.b16 %v855
        %v3243 = vunpack.c.l.b16 %v856
        %v3244 = vunpack.c.h.b16 %v856
        %v3245 = vunpack.c.l.b16 %v857
        %v3246 = vunpack.c.h.b16 %v857
        %v3247 = vunpack.c.l.b16 %v858
        %v3248 = vunpack.c.h.b16 %v858
        %v3249 = vunpack.c.l.b16 %v859
        %v3250 = vunpack.c.h.b16 %v859
        %v3251 = vunpack.c.l.b16 %v860
        %v3252 = vunpack.c.h.b16 %v860
        %v3253 = vunpack.c.l.b16 %v861
        %v3254 = vunpack.c.h.b16 %v861
        %v3255 = vunpack.c.l.b16 %v862
        %v3256 = vunpack.c.h.b16 %v862
        %v3257 = vunpack.c.l.b16 %v863
        %v3258 = vunpack.c.h.b16 %v863
        %v3259 = vunpack.c.l.b16 %v864
        %v3260 = vunpack.c.h.b16 %v864
        %v3261 = vunpack.c.l.b16 %v865
        %v3262 = vunpack.c.h.b16 %v865
        %v3263 = vunpack.c.l.b16 %v866
        %v3264 = vunpack.c.h.b16 %v866
        %v3265 = vunpack.c.l.b16 %v867
        %v3266 = vunpack.c.h.b16 %v867
        %v3267 = vunpack.c.l.b16 %v868
        %v3268 = vunpack.c.h.b16 %v868
        %v3269 = vunpack.c.l.b16 %v869
        %v3270 = vunpack.c.h.b16 %v869
        %v3271 = vunpack.c.l.b16 %v870
        %v3272 = vunpack.c.h.b16 %v870
        %v3273 = vunpack.c.l.b16 %v871
        %v3274 = vunpack.c.h.b16 %v871
        %v3275 = vunpack.c.l.b16 %v872
        %v3276 = vunpack.c.h.b16 %v872
        %v3277 = vunpack.c.l.b16 %v873
        %v3278 = vunpack.c.h.b16 %v873
        %v3279 = vunpack.c.l.b16 %v874
        %v3280 = vunpack.c.h.b16 %v874
        %v3281 = vunpack.c.l.b16 %v875
        %v3282 = vunpack.c.h.b16 %v875
        %v3283 = vunpack.c.l.b16 %v876
        %v3284 = vunpack.c.h.b16 %v876
        %v3285 = vunpack.c.l.b16 %v877
        %v3286 = vunpack.c.h.b16 %v877
        %v3287 = vunpack.c.l.b16 %v878
        %v3288 = vunpack.c.h.b16 %v878
        %v3289 = vunpack.c.l.b16 %v879
        %v3290 = vunpack.c.h.b16 %v879
        %v3291 = vunpack.c.l.b16 %v880
        %v3292 = vunpack.c.h.b16 %v880
        %v3293 = vunpack.c.l.b16 %v881
        %v3294 = vunpack.c.h.b16 %v881
        %v3295 = vunpack.c.l.b16 %v882
        %v3296 = vunpack.c.h.b16 %v882
        %v3297 = vunpack.c.l.b16 %v883
        %v3298 = vunpack.c.h.b16 %v883
        %v3299 = vunpack.c.l.b16 %v884
        %v3300 = vunpack.c.h.b16 %v884
        %v3301 = vunpack.c.l.b16 %v885
        %v3302 = vunpack.c.h.b16 %v885
        %v3303 = vunpack.c.l.b16 %v886
        %v3304 = vunpack.c.h.b16 %v886
        %v3305 = vunpack.c.l.b16 %v887
        %v3306 = vunpack.c.h.b16 %v887
        %v3307 = vunpack.c.l.b16 %v888
        %v3308 = vunpack.c.h.b16 %v888
        %v3309 = vunpack.c.l.b16 %v889
        %v3310 = vunpack.c.h.b16 %v889
        %v3311 = vunpack.c.l.b16 %v890
        %v3312 = vunpack.c.h.b16 %v890
        %v3313 = vunpack.c.l.b16 %v891
        %v3314 = vunpack.c.h.b16 %v891
        %v3315 = vunpack.c.l.b16 %v892
        %v3316 = vunpack.c.h.b16 %v892
        %v3317 = vunpack.c.l.b16 %v893
        %v3318 = vunpack.c.h.b16 %v893
        %v3319 = vunpack.c.l.b16 %v894
        %v3320 = vunpack.c.h.b16 %v894
        %v3321 = vunpack.c.l.b16 %v895
        %v3322 = vunpack.c.h.b16 %v895
        %v3323 = vunpack.c.l.b16 %v896
        %v3324 = vunpack.c.h.b16 %v896
        %v3325 = vunpack.c.l.b16 %v897
        %v3326 = vunpack.c.h.b16 %v897
        %v3327 = vunpack.c.l.b16 %v898
        %v3328 = vunpack.c.h.b16 %v898
        %v3329 = vunpack.c.l.b16 %v899
        %v3330 = vunpack.c.h.b16 %v899
        %v3331 = vunpack.c.l.b16 %v900
        %v3332 = vunpack.c.h.b16 %v900
        %v3333 = vunpack.c.l.b16 %v901
        %v3334 = vunpack.c.h.b16 %v901
        %v3335 = vunpack.c.l.b16 %v902
        %v3336 = vunpack.c.h.b16 %v902
        %v3337 = vunpack.c.l.b16 %v903
        %v3338 = vunpack.c.h.b16 %v903
        %v3339 = vunpack.c.l.b16 %v904
        %v3340 = vunpack.c.h.b16 %v904
        %v3341 = vunpack.c.l.b16 %v905
        %v3342 = vunpack.c.h.b16 %v905
        %v3343 = vunpack.c.l.b16 %v906
        %v3344 = vunpack.c.h.b16 %v906
        %v3345 = vunpack.c.l.b16 %v907
        %v3346 = vunpack.c.h.b16 %v907
        %v3347 = vunpack.c.l.b16 %v908
        %v3348 = vunpack.c.h.b16 %v908
        %v3349 = vunpack.c.l.b16 %v909
        %v3350 = vunpack.c.h.b16 %v909
        %v3351 = vunpack.c.l.b16 %v910
        %v3352 = vunpack.c.h.b16 %v910
        %v3353 = vunpack.c.l.b16 %v911
        %v3354 = vunpack.c.h.b16 %v911
        %v3355 = vunpack.c.l.b16 %v912
        %v3356 = vunpack.c.h.b16 %v912
        %v3357 = vunpack.c.l.b16 %v913
        %v3358 = vunpack.c.h.b16 %v913
        %v3359 = vunpack.c.l.b16 %v914
        %v3360 = vunpack.c.h.b16 %v914
        %v3361 = vunpack.c.l.b16 %v915
        %v3362 = vunpack.c.h.b16 %v915
        %v3363 = vunpack.c.l.b16 %v916
        %v3364 = vunpack.c.h.b16 %v916
        %v3365 = vunpack.c.l.b16 %v917
        %v3366 = vunpack.c.h.b16 %v917
        %v3367 = vunpack.c.l.b16 %v918
        %v3368 = vunpack.c.h.b16 %v918
        %v3369 = vunpack.c.l.b16 %v919
        %v3370 = vunpack.c.h.b16 %v919
        %v3371 = vunpack.c.l.b16 %v920
        %v3372 = vunpack.c.h.b16 %v920
        %v3373 = vunpack.c.l.b16 %v921
        %v3374 = vunpack.c.h.b16 %v921
        %v3375 = vunpack.c.l.b16 %v922
        %v3376 = vunpack.c.h.b16 %v922
        %v3377 = vunpack.c.l.b16 %v923
        %v3378 = vunpack.c.h.b16 %v923
        %v3379 = vunpack.c.l.b16 %v924
        %v3380 = vunpack.c.h.b16 %v924
        %v3381 = vunpack.c.l.b16 %v925
        %v3382 = vunpack.c.h.b16 %v925
        %v3383 = vunpack.c.l.b16 %v926
        %v3384 = vunpack.c.h.b16 %v926
        %v3385 = vunpack.c.l.b16 %v927
        %v3386 = vunpack.c.h.b16 %v927
        %v3387 = vunpack.c.l.b16 %v928
        %v3388 = vunpack.c.h.b16 %v928
        %v3389 = vunpack.c.l.b16 %v929
        %v3390 = vunpack.c.h.b16 %v929
        %v3391 = vunpack.c.l.b16 %v930
        %v3392 = vunpack.c.h.b16 %v930
        %v3393 = vunpack.c.l.b16 %v931
        %v3394 = vunpack.c.h.b16 %v931
        %v3395 = vunpack.c.l.b16 %v932
        %v3396 = vunpack.c.h.b16 %v932
        %v3397 = vunpack.c.l.b16 %v933
        %v3398 = vunpack.c.h.b16 %v933
        %v3399 = vunpack.c.l.b16 %v934
        %v3400 = vunpack.c.h.b16 %v934
        %v3401 = vunpack.c.l.b16 %v935
        %v3402 = vunpack.c.h.b16 %v935
        %v3403 = vunpack.c.l.b16 %v936
        %v3404 = vunpack.c.h.b16 %v936
        %v3405 = vunpack.c.l.b16 %v937
        %v3406 = vunpack.c.h.b16 %v937
        %v3407 = vunpack.c.l.b16 %v938
        %v3408 = vunpack.c.h.b16 %v938
        %v3409 = vunpack.c.l.b16 %v939
        %v3410 = vunpack.c.h.b16 %v939
        %v3411 = vunpack.c.l.b16 %v940
        %v3412 = vunpack.c.h.b16 %v940
        %v3413 = vunpack.c.l.b16 %v941
        %v3414 = vunpack.c.h.b16 %v941
        %v3415 = vunpack.c.l.b16 %v942
        %v3416 = vunpack.c.h.b16 %v942
        %v3417 = vunpack.c.l.b16 %v943
        %v3418 = vunpack.c.h.b16 %v943
        %v3419 = vunpack.c.l.b16 %v944
        %v3420 = vunpack.c.h.b16 %v944
        %v3421 = vunpack.c.l.b16 %v945
        %v3422 = vunpack.c.h.b16 %v945
        %v3423 = vunpack.c.l.b16 %v946
        %v3424 = vunpack.c.h.b16 %v946
        %v3425 = vunpack.c.l.b16 %v947
        %v3426 = vunpack.c.h.b16 %v947
        %v3427 = vunpack.c.l.b16 %v948
        %v3428 = vunpack.c.h.b16 %v948
        %v3429 = vunpack.c.l.b16 %v949
        %v3430 = vunpack.c.h.b16 %v949
        %v3431 = vunpack.c.l.b16 %v950
        %v3432 = vunpack.c.h.b16 %v950
        %v3433 = vunpack.c.l.b16 %v951
        %v3434 = vunpack.c.h.b16 %v951
        %v3435 = vunpack.c.l.b16 %v952
        %v3436 = vunpack.c.h.b16 %v952
        %v3437 = vunpack.c.l.b16 %v953
        %v3438 = vunpack.c.h.b16 %v953
        %v3439 = vunpack.c.l.b16 %v954
        %v3440 = vunpack.c.h.b16 %v954
        %v3441 = vunpack.c.l.b16 %v955
        %v3442 = vunpack.c.h.b16 %v955
        %v3443 = vunpack.c.l.b16 %v956
        %v3444 = vunpack.c.h.b16 %v956
        %v3445 = vunpack.c.l.b16 %v957
        %v3446 = vunpack.c.h.b16 %v957
        %v3447 = vunpack.c.l.b16 %v958
        %v3448 = vunpack.c.h.b16 %v958
        %v3449 = vunpack.c.l.b16 %v959
        %v3450 = vunpack.c.h.b16 %v959
        %v3451 = vunpack.c.l.b16 %v960
        %v3452 = vunpack.c.h.b16 %v960
        %v3453 = vunpack.c.l.b16 %v961
        %v3454 = vunpack.c.h.b16 %v961
        %v3455 = vunpack.c.l.b16 %v962
        %v3456 = vunpack.c.h.b16 %v962
        %v3457 = vunpack.c.l.b16 %v963
        %v3458 = vunpack.c.h.b16 %v963
        %v3459 = vunpack.c.l.b16 %v964
        %v3460 = vunpack.c.h.b16 %v964
        %v3461 = vunpack.c.l.b16 %v965
        %v3462 = vunpack.c.h.b16 %v965
        %v3463 = vunpack.c.l.b16 %v966
        %v3464 = vunpack.c.h.b16 %v966
        %v3465 = vunpack.c.l.b16 %v967
        %v3466 = vunpack.c.h.b16 %v967
        %v3467 = vunpack.c.l.b16 %v968
        %v3468 = vunpack.c.h.b16 %v968
        %v3469 = vunpack.c.l.b16 %v969
        %v3470 = vunpack.c.h.b16 %v969
        %v3471 = vunpack.c.l.b16 %v970
        %v3472 = vunpack.c.h.b16 %v970
        %v3473 = vunpack.c.l.b16 %v971
        %v3474 = vunpack.c.h.b16 %v971
        %v3475 = vunpack.c.l.b16 %v972
        %v3476 = vunpack.c.h.b16 %v972
        %v3477 = vunpack.c.l.b16 %v973
        %v3478 = vunpack.c.h.b16 %v973
        %v3479 = vunpack.c.l.b16 %v974
        %v3480 = vunpack.c.h.b16 %v974
        %v3481 = vunpack.c.l.b16 %v975
        %v3482 = vunpack.c.h.b16 %v975
        %v3483 = vunpack.c.l.b16 %v976
        %v3484 = vunpack.c.h.b16 %v976
        %v3485 = vunpack.c.l.b16 %v977
        %v3486 = vunpack.c.h.b16 %v977
        %v3487 = vunpack.c.l.b16 %v978
        %v3488 = vunpack.c.h.b16 %v978
        %v3489 = vunpack.c.l.b16 %v979
        %v3490 = vunpack.c.h.b16 %v979
        %v3491 = vunpack.c.l.b16 %v980
        %v3492 = vunpack.c.h.b16 %v980
        %v3493 = vunpack.c.l.b16 %v981
        %v3494 = vunpack.c.h.b16 %v981
        %v3495 = vunpack.c.l.b16 %v982
        %v3496 = vunpack.c.h.b16 %v982
        %v3497 = vunpack.c.l.b16 %v983
        %v3498 = vunpack.c.h.b16 %v983
        %v3499 = vunpack.c.l.b16 %v984
        %v3500 = vunpack.c.h.b16 %v984
        %v3501 = vunpack.c.l.b16 %v985
        %v3502 = vunpack.c.h.b16 %v985
        %v3503 = vunpack.c.l.b16 %v986
        %v3504 = vunpack.c.h.b16 %v986
        %v3505 = vunpack.c.l.b16 %v987
        %v3506 = vunpack.c.h.b16 %v987
        %v3507 = vunpack.c.l.b16 %v988
        %v3508 = vunpack.c.h.b16 %v988
        %v3509 = vunpack.c.l.b16 %v989
        %v3510 = vunpack.c.h.b16 %v989
        %v3511 = vunpack.c.l.b16 %v990
        %v3512 = vunpack.c.h.b16 %v990
        %v3513 = vunpack.c.l.b16 %v991
        %v3514 = vunpack.c.h.b16 %v991
        %v3515 = vunpack.c.l.b16 %v992
        %v3516 = vunpack.c.h.b16 %v992
        %v3517 = vunpack.c.l.b16 %v993
        %v3518 = vunpack.c.h.b16 %v993
        %v3519 = vunpack.c.l.b16 %v994
        %v3520 = vunpack.c.h.b16 %v994
        %v3521 = vunpack.c.l.b16 %v995
        %v3522 = vunpack.c.h.b16 %v995
        %v3523 = vunpack.c.l.b16 %v996
        %v3524 = vunpack.c.h.b16 %v996
        %v3525 = vunpack.c.l.b16 %v997
        %v3526 = vunpack.c.h.b16 %v997
        %v3527 = vunpack.c.l.b16 %v998
        %v3528 = vunpack.c.h.b16 %v998
        %v3529 = vunpack.c.l.b16 %v999
        %v3530 = vunpack.c.h.b16 %v999
        %v3531 = vunpack.c.l.b16 %v1000
        %v3532 = vunpack.c.h.b16 %v1000
        %v3533 = vunpack.c.l.b16 %v1001
        %v3534 = vunpack.c.h.b16 %v1001
        %v3535 = vunpack.c.l.b16 %v1002
        %v3536 = vunpack.c.h.b16 %v1002
        %v3537 = vunpack.c.l.b16 %v1003
        %v3538 = vunpack.c.h.b16 %v1003
        %v3539 = vunpack.c.l.b16 %v1004
        %v3540 = vunpack.c.h.b16 %v1004
        %v3541 = vunpack.c.l.b16 %v1005
        %v3542 = vunpack.c.h.b16 %v1005
        %v3543 = vunpack.c.l.b16 %v1006
        %v3544 = vunpack.c.h.b16 %v1006
        %v3545 = vunpack.c.l.b16 %v1007
        %v3546 = vunpack.c.h.b16 %v1007
        %v3547 = vunpack.c.l.b16 %v1008
        %v3548 = vunpack.c.h.b16 %v1008
        %v3549 = vunpack.c.l.b16 %v1009
        %v3550 = vunpack.c.h.b16 %v1009
        %v3551 = vunpack.c.l.b16 %v1010
        %v3552 = vunpack.c.h.b16 %v1010
        %v3553 = vunpack.c.l.b16 %v1011
        %v3554 = vunpack.c.h.b16 %v1011
        %v3555 = vunpack.c.l.b16 %v1012
        %v3556 = vunpack.c.h.b16 %v1012
        %v3557 = vunpack.c.l.b16 %v1013
        %v3558 = vunpack.c.h.b16 %v1013
        %v3559 = vunpack.c.l.b16 %v1014
        %v3560 = vunpack.c.h.b16 %v1014
        %v3561 = vunpack.c.l.b16 %v1015
        %v3562 = vunpack.c.h.b16 %v1015
        %v3563 = vunpack.c.l.b16 %v1016
        %v3564 = vunpack.c.h.b16 %v1016
        %v3565 = vunpack.c.l.b16 %v1017
        %v3566 = vunpack.c.h.b16 %v1017
        %v3567 = vunpack.c.l.b16 %v1018
        %v3568 = vunpack.c.h.b16 %v1018
        %v3569 = vunpack.c.l.b16 %v1019
        %v3570 = vunpack.c.h.b16 %v1019
        %v3571 = vunpack.c.l.b16 %v1020
        %v3572 = vunpack.c.h.b16 %v1020
        %v3573 = vunpack.c.l.b16 %v1021
        %v3574 = vunpack.c.h.b16 %v1021
        %v3575 = vunpack.c.l.b16 %v1022
        %v3576 = vunpack.c.h.b16 %v1022
        %v3577 = vunpack.c.l.b16 %v1023
        %v3578 = vunpack.c.h.b16 %v1023
        %v3579 = vunpack.c.l.b16 %v1024
        %v3580 = vunpack.c.h.b16 %v1024
        %v3581 = vunpack.c.l.b16 %v1025
        %v3582 = vunpack.c.h.b16 %v1025
        %v3583 = vunpack.c.l.b16 %v1026
        %v3584 = vunpack.c.h.b16 %v1026
        %v3585 = vunpack.c.l.b16 %v1027
        %v3586 = vunpack.c.h.b16 %v1027
        %v3587 = vunpack.c.l.b16 %v1028
        %v3588 = vunpack.c.h.b16 %v1028
        %v3589 = vunpack.c.l.b16 %v1029
        %v3590 = vunpack.c.h.b16 %v1029
        %v3591 = vunpack.c.l.b16 %v1030
        %v3592 = vunpack.c.h.b16 %v1030
        %v3593 = vunpack.c.l.b16 %v1031
        %v3594 = vunpack.c.h.b16 %v1031
        %v3595 = vunpack.c.l.b16 %v1032
        %v3596 = vunpack.c.h.b16 %v1032
        %v3597 = vunpack.c.l.b16 %v1033
        %v3598 = vunpack.c.h.b16 %v1033
        %v3599 = vunpack.c.l.b16 %v1034
        %v3600 = vunpack.c.h.b16 %v1034
        %v3601 = vunpack.c.l.b16 %v1035
        %v3602 = vunpack.c.h.b16 %v1035
        %v3603 = vunpack.c.l.b16 %v1036
        %v3604 = vunpack.c.h.b16 %v1036
        %v3605 = vunpack.c.l.b16 %v1037
        %v3606 = vunpack.c.h.b16 %v1037
        %v3607 = vunpack.c.l.b16 %v1038
        %v3608 = vunpack.c.h.b16 %v1038
        %v3609 = vunpack.c.l.b16 %v1039
        %v3610 = vunpack.c.h.b16 %v1039
        %v3611 = vunpack.c.l.b16 %v1040
        %v3612 = vunpack.c.h.b16 %v1040
        %v3613 = vunpack.c.l.b16 %v1041
        %v3614 = vunpack.c.h.b16 %v1041
        %v3615 = vunpack.c.l.b16 %v1042
        %v3616 = vunpack.c.h.b16 %v1042
        %v3617 = vunpack.c.l.b16 %v1043
        %v3618 = vunpack.c.h.b16 %v1043
        %v3619 = vunpack.c.l.b16 %v1044
        %v3620 = vunpack.c.h.b16 %v1044
        %v3621 = vunpack.c.l.b16 %v1045
        %v3622 = vunpack.c.h.b16 %v1045
        %v3623 = vunpack.c.l.b16 %v1046
        %v3624 = vunpack.c.h.b16 %v1046
        %v3625 = vunpack.c.l.b16 %v1047
        %v3626 = vunpack.c.h.b16 %v1047
        %v3627 = vunpack.c.l.b16 %v1048
        %v3628 = vunpack.c.h.b16 %v1048
        %v3629 = vunpack.c.l.b16 %v1049
        %v3630 = vunpack.c.h.b16 %v1049
        %v3631 = vunpack.c.l.b16 %v1050
        %v3632 = vunpack.c.h.b16 %v1050
        %v3633 = vunpack.c.l.b16 %v1051
        %v3634 = vunpack.c.h.b16 %v1051
        %v3635 = vunpack.c.l.b16 %v1052
        %v3636 = vunpack.c.h.b16 %v1052
        %v3637 = vunpack.c.l.b16 %v1053
        %v3638 = vunpack.c.h.b16 %v1053
        %v3639 = vunpack.c.l.b16 %v1054
        %v3640 = vunpack.c.h.b16 %v1054
        %v3641 = vunpack.c.l.b16 %v1055
        %v3642 = vunpack.c.h.b16 %v1055
        %v3643 = vunpack.c.l.b16 %v1056
        %v3644 = vunpack.c.h.b16 %v1056
        %v3645 = vunpack.c.l.b16 %v1057
        %v3646 = vunpack.c.h.b16 %v1057
        %v3647 = vunpack.c.l.b16 %v1058
        %v3648 = vunpack.c.h.b16 %v1058
        %v3649 = vunpack.c.l.b16 %v1059
        %v3650 = vunpack.c.h.b16 %v1059
        %v3651 = vunpack.c.l.b16 %v1060
        %v3652 = vunpack.c.h.b16 %v1060
        %v3653 = vunpack.c.l.b16 %v1061
        %v3654 = vunpack.c.h.b16 %v1061
        %v3655 = vunpack.c.l.b16 %v1062
        %v3656 = vunpack.c.h.b16 %v1062
        %v3657 = vunpack.c.l.b16 %v1063
        %v3658 = vunpack.c.h.b16 %v1063
        %v3659 = vunpack.c.l.b16 %v1064
        %v3660 = vunpack.c.h.b16 %v1064
        %v3661 = vunpack.c.l.b16 %v1065
        %v3662 = vunpack.c.h.b16 %v1065
        %v3663 = vunpack.c.l.b16 %v1066
        %v3664 = vunpack.c.h.b16 %v1066
        %v3665 = vunpack.c.l.b16 %v1067
        %v3666 = vunpack.c.h.b16 %v1067
        %v3667 = vunpack.c.l.b16 %v1068
        %v3668 = vunpack.c.h.b16 %v1068
        %v3669 = vunpack.c.l.b16 %v1069
        %v3670 = vunpack.c.h.b16 %v1069
        %v3671 = vunpack.c.l.b16 %v1070
        %v3672 = vunpack.c.h.b16 %v1070
        %v3673 = vunpack.c.l.b16 %v1071
        %v3674 = vunpack.c.h.b16 %v1071
        %v3675 = vunpack.c.l.b16 %v1072
        %v3676 = vunpack.c.h.b16 %v1072
        %v3677 = vunpack.c.l.b16 %v1073
        %v3678 = vunpack.c.h.b16 %v1073
        %v3679 = vunpack.c.l.b16 %v1074
        %v3680 = vunpack.c.h.b16 %v1074
        %v3681 = vunpack.c.l.b16 %v1075
        %v3682 = vunpack.c.h.b16 %v1075
        %v3683 = vunpack.c.l.b16 %v1076
        %v3684 = vunpack.c.h.b16 %v1076
        %v3685 = vunpack.c.l.b16 %v1077
        %v3686 = vunpack.c.h.b16 %v1077
        %v3687 = vunpack.c.l.b16 %v1078
        %v3688 = vunpack.c.h.b16 %v1078
        %v3689 = vunpack.c.l.b16 %v1079
        %v3690 = vunpack.c.h.b16 %v1079
        %v3691 = vunpack.c.l.b16 %v1080
        %v3692 = vunpack.c.h.b16 %v1080
        %v3693 = vunpack.c.l.b16 %v1081
        %v3694 = vunpack.c.h.b16 %v1081
        %v3695 = vunpack.c.l.b16 %v1082
        %v3696 = vunpack.c.h.b16 %v1082
        %v3697 = vunpack.c.l.b16 %v1083
        %v3698 = vunpack.c.h.b16 %v1083
        %v3699 = vunpack.c.l.b16 %v1084
        %v3700 = vunpack.c.h.b16 %v1084
        %v3701 = vunpack.c.l.b16 %v1085
        %v3702 = vunpack.c.h.b16 %v1085
        %v3703 = vunpack.c.l.b16 %v1086
        %v3704 = vunpack.c.h.b16 %v1086
        %v3705 = vunpack.c.l.b16 %v1087
        %v3706 = vunpack.c.h.b16 %v1087
        %v3707 = vunpack.c.l.b16 %v1088
        %v3708 = vunpack.c.h.b16 %v1088
        %v3709 = vunpack.c.l.b16 %v1089
        %v3710 = vunpack.c.h.b16 %v1089
        %v3711 = vunpack.c.l.b16 %v1090
        %v3712 = vunpack.c.h.b16 %v1090
        %v3713 = vunpack.c.l.b16 %v1091
        %v3714 = vunpack.c.h.b16 %v1091
        %v3715 = vunpack.c.l.b16 %v1092
        %v3716 = vunpack.c.h.b16 %v1092
        %v3717 = vunpack.c.l.b16 %v1093
        %v3718 = vunpack.c.h.b16 %v1093
        %v3719 = vunpack.c.l.b16 %v1094
        %v3720 = vunpack.c.h.b16 %v1094
        %v3721 = vunpack.c.l.b16 %v1095
        %v3722 = vunpack.c.h.b16 %v1095
        %v3723 = vunpack.c.l.b16 %v1096
        %v3724 = vunpack.c.h.b16 %v1096
        %v3725 = vunpack.c.l.b16 %v1097
        %v3726 = vunpack.c.h.b16 %v1097
        %v3727 = vunpack.c.l.b16 %v1098
        %v3728 = vunpack.c.h.b16 %v1098
        %v3729 = vunpack.c.l.b16 %v1099
        %v3730 = vunpack.c.h.b16 %v1099
        %v3731 = vunpack.c.l.b16 %v1100
        %v3732 = vunpack.c.h.b16 %v1100
        %v3733 = vunpack.c.l.b16 %v1101
        %v3734 = vunpack.c.h.b16 %v1101
        %v3735 = vunpack.c.l.b16 %v1102
        %v3736 = vunpack.c.h.b16 %v1102
        %v3737 = vunpack.c.l.b16 %v1103
        %v3738 = vunpack.c.h.b16 %v1103
        %v3739 = vunpack.c.l.b16 %v1104
        %v3740 = vunpack.c.h.b16 %v1104
        %v3741 = vunpack.c.l.b16 %v1105
        %v3742 = vunpack.c.h.b16 %v1105
        %v3743 = vunpack.c.l.b16 %v1106
        %v3744 = vunpack.c.h.b16 %v1106
        %v3745 = vunpack.c.l.b16 %v1107
        %v3746 = vunpack.c.h.b16 %v1107
        %v3747 = vunpack.c.l.b16 %v1108
        %v3748 = vunpack.c.h.b16 %v1108
        %v3749 = vunpack.c.l.b16 %v1109
        %v3750 = vunpack.c.h.b16 %v1109
        %v3751 = vunpack.c.l.b16 %v1110
        %v3752 = vunpack.c.h.b16 %v1110
        %v3753 = vunpack.c.l.b16 %v1111
        %v3754 = vunpack.c.h.b16 %v1111
        %v3755 = vunpack.c.l.b16 %v1112
        %v3756 = vunpack.c.h.b16 %v1112
        %v3757 = vunpack.c.l.b16 %v1113
        %v3758 = vunpack.c.h.b16 %v1113
        %v3759 = vunpack.c.l.b16 %v1114
        %v3760 = vunpack.c.h.b16 %v1114
        %v3761 = vunpack.c.l.b16 %v1115
        %v3762 = vunpack.c.h.b16 %v1115
        %v3763 = vunpack.c.l.b16 %v1116
        %v3764 = vunpack.c.h.b16 %v1116
        %v3765 = vunpack.c.l.b16 %v1117
        %v3766 = vunpack.c.h.b16 %v1117
        %v3767 = vunpack.c.l.b16 %v1118
        %v3768 = vunpack.c.h.b16 %v1118
        %v3769 = vunpack.c.l.b16 %v1119
        %v3770 = vunpack.c.h.b16 %v1119
        %v3771 = vunpack.c.l.b16 %v1120
        %v3772 = vunpack.c.h.b16 %v1120
        %v3773 = vunpack.c.l.b16 %v1121
        %v3774 = vunpack.c.h.b16 %v1121
        %v3775 = vunpack.c.l.b16 %v1122
        %v3776 = vunpack.c.h.b16 %v1122
        %v3777 = vunpack.c.l.b16 %v1123
        %v3778 = vunpack.c.h.b16 %v1123
        %v3779 = vunpack.c.l.b16 %v1124
        %v3780 = vunpack.c.h.b16 %v1124
        %v3781 = vunpack.c.l.b16 %v1125
        %v3782 = vunpack.c.h.b16 %v1125
        %v3783 = vunpack.c.l.b16 %v1126
        %v3784 = vunpack.c.h.b16 %v1126
        %v3785 = vunpack.c.l.b16 %v1127
        %v3786 = vunpack.c.h.b16 %v1127
        %v3787 = vunpack.c.l.b16 %v1128
        %v3788 = vunpack.c.h.b16 %v1128
        %v3789 = vunpack.c.l.b16 %v1129
        %v3790 = vunpack.c.h.b16 %v1129
        %v3791 = vunpack.c.l.b16 %v1130
        %v3792 = vunpack.c.h.b16 %v1130
        %v3793 = vunpack.c.l.b16 %v1131
        %v3794 = vunpack.c.h.b16 %v1131
        %v3795 = vunpack.c.l.b16 %v1132
        %v3796 = vunpack.c.h.b16 %v1132
        %v3797 = vunpack.c.l.b16 %v1133
        %v3798 = vunpack.c.h.b16 %v1133
        %v3799 = vunpack.c.l.b16 %v1134
        %v3800 = vunpack.c.h.b16 %v1134
        %v3801 = vunpack.c.l.b16 %v1135
        %v3802 = vunpack.c.h.b16 %v1135
        %v3803 = vunpack.c.l.b16 %v1136
        %v3804 = vunpack.c.h.b16 %v1136
        %v3805 = vunpack.c.l.b16 %v1137
        %v3806 = vunpack.c.h.b16 %v1137
        %v3807 = vunpack.c.l.b16 %v1138
        %v3808 = vunpack.c.h.b16 %v1138
        %v3809 = vunpack.c.l.b16 %v1139
        %v3810 = vunpack.c.h.b16 %v1139
        %v3811 = vunpack.c.l.b16 %v1140
        %v3812 = vunpack.c.h.b16 %v1140
        %v3813 = vunpack.c.l.b16 %v1141
        %v3814 = vunpack.c.h.b16 %v1141
        %v3815 = vunpack.c.l.b16 %v1142
        %v3816 = vunpack.c.h.b16 %v1142
        %v3817 = vunpack.c.l.b16 %v1143
        %v3818 = vunpack.c.h.b16 %v1143
        %v3819 = vunpack.c.l.b16 %v1144
        %v3820 = vunpack.c.h.b16 %v1144
        %v3821 = vunpack.c.l.b16 %v1145
        %v3822 = vunpack.c.h.b16 %v1145
        %v3823 = vunpack.c.l.b16 %v1146
        %v3824 = vunpack.c.h.b16 %v1146
        %v3825 = vunpack.c.l.b16 %v1147
        %v3826 = vunpack.c.h.b16 %v1147
        %v3827 = vunpack.c.l.b16 %v1148
        %v3828 = vunpack.c.h.b16 %v1148
        %v3829 = vunpack.c.l.b16 %v1149
        %v3830 = vunpack.c.h.b16 %v1149
        %v3831 = vunpack.c.l.b16 %v1150
        %v3832 = vunpack.c.h.b16 %v1150
        %v3833 = vunpack.c.l.b16 %v1151
        %v3834 = vunpack.c.h.b16 %v1151
        %v3835 = vunpack.c.l.b16 %v1152
        %v3836 = vunpack.c.h.b16 %v1152
        %v3837 = vunpack.c.l.b16 %v1153
        %v3838 = vunpack.c.h.b16 %v1153
        %v3839 = vunpack.c.l.b16 %v1154
        %v3840 = vunpack.c.h.b16 %v1154
        %v3841 = vunpack.c.l.b16 %v1155
        %v3842 = vunpack.c.h.b16 %v1155
        %v3843 = vunpack.c.l.b16 %v1156
        %v3844 = vunpack.c.h.b16 %v1156
        %v3845 = vunpack.c.l.b16 %v1157
        %v3846 = vunpack.c.h.b16 %v1157
        %v3847 = vunpack.c.l.b16 %v1158
        %v3848 = vunpack.c.h.b16 %v1158
        %v3849 = vunpack.c.l.b16 %v1159
        %v3850 = vunpack.c.h.b16 %v1159
        %v3851 = vunpack.c.l.b16 %v1160
        %v3852 = vunpack.c.h.b16 %v1160
        %v3853 = vunpack.c.l.b16 %v1161
        %v3854 = vunpack.c.h.b16 %v1161
        %v3855 = vunpack.c.l.b16 %v1162
        %v3856 = vunpack.c.h.b16 %v1162
        %v3857 = vunpack.c.l.b16 %v1163
        %v3858 = vunpack.c.h.b16 %v1163
        %v3859 = vunpack.c.l.b16 %v1164
        %v3860 = vunpack.c.h.b16 %v1164
        %v3861 = vunpack.c.l.b16 %v1165
        %v3862 = vunpack.c.h.b16 %v1165
        %v3863 = vunpack.c.l.b16 %v1166
        %v3864 = vunpack.c.h.b16 %v1166
        %v3865 = vunpack.c.l.b16 %v1167
        %v3866 = vunpack.c.h.b16 %v1167
        %v3867 = vunpack.c.l.b16 %v1168
        %v3868 = vunpack.c.h.b16 %v1168
        %v3869 = vunpack.c.l.b16 %v1169
        %v3870 = vunpack.c.h.b16 %v1169
        %v3871 = vunpack.c.l.b16 %v1170
        %v3872 = vunpack.c.h.b16 %v1170
        %v3873 = vunpack.c.l.b16 %v1171
        %v3874 = vunpack.c.h.b16 %v1171
        %v3875 = vunpack.c.l.b16 %v1172
        %v3876 = vunpack.c.h.b16 %v1172
        %v3877 = vunpack.c.l.b16 %v1173
        %v3878 = vunpack.c.h.b16 %v1173
        %v3879 = vunpack.c.l.b16 %v1174
        %v3880 = vunpack.c.h.b16 %v1174
        %v3881 = vunpack.c.l.b16 %v1175
        %v3882 = vunpack.c.h.b16 %v1175
        %v3883 = vunpack.c.l.b16 %v1176
        %v3884 = vunpack.c.h.b16 %v1176
        %v3885 = vunpack.c.l.b16 %v1177
        %v3886 = vunpack.c.h.b16 %v1177
        %v3887 = vunpack.c.l.b16 %v1178
        %v3888 = vunpack.c.h.b16 %v1178
        %v3889 = vunpack.c.l.b16 %v1179
        %v3890 = vunpack.c.h.b16 %v1179
        %v3891 = vunpack.c.l.b16 %v1180
        %v3892 = vunpack.c.h.b16 %v1180
        %v3893 = vunpack.c.l.b16 %v1181
        %v3894 = vunpack.c.h.b16 %v1181
        %v3895 = vunpack.c.l.b16 %v1182
        %v3896 = vunpack.c.h.b16 %v1182
        %v3897 = vunpack.c.l.b16 %v1183
        %v3898 = vunpack.c.h.b16 %v1183
        %v3899 = vunpack.c.l.b16 %v1184
        %v3900 = vunpack.c.h.b16 %v1184
        %v3901 = vunpack.c.l.b16 %v1185
        %v3902 = vunpack.c.h.b16 %v1185
        %v3903 = vunpack.c.l.b16 %v1186
        %v3904 = vunpack.c.h.b16 %v1186
        %v3905 = vunpack.c.l.b16 %v1187
        %v3906 = vunpack.c.h.b16 %v1187
        %v3907 = vunpack.c.l.b16 %v1188
        %v3908 = vunpack.c.h.b16 %v1188
        %v3909 = vunpack.c.l.b16 %v1189
        %v3910 = vunpack.c.h.b16 %v1189
        %v3911 = vunpack.c.l.b16 %v1190
        %v3912 = vunpack.c.h.b16 %v1190
        %v3913 = vunpack.c.l.b16 %v1191
        %v3914 = vunpack.c.h.b16 %v1191
        %v3915 = vunpack.c.l.b16 %v1192
        %v3916 = vunpack.c.h.b16 %v1192
        %v3917 = vunpack.c.l.b16 %v1193
        %v3918 = vunpack.c.h.b16 %v1193
        %v3919 = vunpack.c.l.b16 %v1194
        %v3920 = vunpack.c.h.b16 %v1194
        %v3921 = vunpack.c.l.b16 %v1195
        %v3922 = vunpack.c.h.b16 %v1195
        %v3923 = vunpack.c.l.b16 %v1196
        %v3924 = vunpack.c.h.b16 %v1196
        %v3925 = vunpack.c.l.b16 %v1197
        %v3926 = vunpack.c.h.b16 %v1197
        %v3927 = vunpack.c.l.b16 %v1198
        %v3928 = vunpack.c.h.b16 %v1198
        %v3929 = vunpack.c.l.b16 %v1199
        %v3930 = vunpack.c.h.b16 %v1199
        %v3931 = vunpack.c.l.b16 %v1200
        %v3932 = vunpack.c.h.b16 %v1200
        %v3933 = vunpack.c.l.b16 %v1201
        %v3934 = vunpack.c.h.b16 %v1201
        %v3935 = vunpack.c.l.b16 %v1202
        %v3936 = vunpack.c.h.b16 %v1202
        %v3937 = vunpack.c.l.b16 %v1203
        %v3938 = vunpack.c.h.b16 %v1203
        %v3939 = vunpack.c.l.b16 %v1204
        %v3940 = vunpack.c.h.b16 %v1204
        %v3941 = vunpack.c.l.b16 %v1205
        %v3942 = vunpack.c.h.b16 %v1205
        %v3943 = vunpack.c.l.b16 %v1206
        %v3944 = vunpack.c.h.b16 %v1206
        %v3945 = vunpack.c.l.b16 %v1207
        %v3946 = vunpack.c.h.b16 %v1207
        %v3947 = vunpack.c.l.b16 %v1208
        %v3948 = vunpack.c.h.b16 %v1208
        %v3949 = vunpack.c.l.b16 %v1209
        %v3950 = vunpack.c.h.b16 %v1209
        %v3951 = vunpack.c.l.b16 %v1210
        %v3952 = vunpack.c.h.b16 %v1210
        %v3953 = vunpack.c.l.b16 %v1211
        %v3954 = vunpack.c.h.b16 %v1211
        %v3955 = vunpack.c.l.b16 %v1212
        %v3956 = vunpack.c.h.b16 %v1212
        %v3957 = vunpack.c.l.b16 %v1213
        %v3958 = vunpack.c.h.b16 %v1213
        %v3959 = vunpack.c.l.b16 %v1214
        %v3960 = vunpack.c.h.b16 %v1214
        %v3961 = vunpack.c.l.b16 %v1215
        %v3962 = vunpack.c.h.b16 %v1215
        %v3963 = vunpack.c.l.b16 %v1216
        %v3964 = vunpack.c.h.b16 %v1216
        %v3965 = vunpack.c.l.b16 %v1217
        %v3966 = vunpack.c.h.b16 %v1217
        %v3967 = vunpack.c.l.b16 %v1218
        %v3968 = vunpack.c.h.b16 %v1218
        %v3969 = vunpack.c.l.b16 %v1219
        %v3970 = vunpack.c.h.b16 %v1219
        %v3971 = vunpack.c.l.b16 %v1220
        %v3972 = vunpack.c.h.b16 %v1220
        %v3973 = vunpack.c.l.b16 %v1221
        %v3974 = vunpack.c.h.b16 %v1221
        %v3975 = vunpack.c.l.b16 %v1222
        %v3976 = vunpack.c.h.b16 %v1222
        %v3977 = vunpack.c.l.b16 %v1223
        %v3978 = vunpack.c.h.b16 %v1223
        %v3979 = vunpack.c.l.b16 %v1224
        %v3980 = vunpack.c.h.b16 %v1224
        %v3981 = vunpack.c.l.b16 %v1225
        %v3982 = vunpack.c.h.b16 %v1225
        %v3983 = vunpack.c.l.b16 %v1226
        %v3984 = vunpack.c.h.b16 %v1226
        %v3985 = vunpack.c.l.b16 %v1227
        %v3986 = vunpack.c.h.b16 %v1227
        %v3987 = vunpack.c.l.b16 %v1228
        %v3988 = vunpack.c.h.b16 %v1228
        %v3989 = vunpack.c.l.b16 %v1229
        %v3990 = vunpack.c.h.b16 %v1229
        %v3991 = vunpack.c.l.b16 %v1230
        %v3992 = vunpack.c.h.b16 %v1230
        %v3993 = vunpack.c.l.b16 %v1231
        %v3994 = vunpack.c.h.b16 %v1231
        %v3995 = vunpack.c.l.b16 %v1232
        %v3996 = vunpack.c.h.b16 %v1232
        %v3997 = vunpack.c.l.b16 %v1233
        %v3998 = vunpack.c.h.b16 %v1233
        %v3999 = vunpack.c.l.b16 %v1234
        %v4000 = vunpack.c.h.b16 %v1234
        %v4001 = vunpack.c.l.b16 %v1235
        %v4002 = vunpack.c.h.b16 %v1235
        %v4003 = vunpack.c.l.b16 %v1236
        %v4004 = vunpack.c.h.b16 %v1236
        %v4005 = vunpack.c.l.b16 %v1237
        %v4006 = vunpack.c.h.b16 %v1237
        %v4007 = vunpack.c.l.b16 %v1238
        %v4008 = vunpack.c.h.b16 %v1238
        %v4009 = vunpack.c.l.b16 %v1239
        %v4010 = vunpack.c.h.b16 %v1239
        %v4011 = vunpack.c.l.b16 %v1240
        %v4012 = vunpack.c.h.b16 %v1240
        %v4013 = vunpack.c.l.b16 %v1241
        %v4014 = vunpack.c.h.b16 %v1241
        %v4015 = vunpack.c.l.b16 %v1242
        %v4016 = vunpack.c.h.b16 %v1242
        %v4017 = vunpack.c.l.b16 %v1243
        %v4018 = vunpack.c.h.b16 %v1243
        %v4019 = vunpack.c.l.b16 %v1244
        %v4020 = vunpack.c.h.b16 %v1244
        %v4021 = vunpack.c.l.b16 %v1245
        %v4022 = vunpack.c.h.b16 %v1245
        %v4023 = vunpack.c.l.b16 %v1246
        %v4024 = vunpack.c.h.b16 %v1246
        %v4025 = vunpack.c.l.b16 %v1247
        %v4026 = vunpack.c.h.b16 %v1247
        %v4027 = vunpack.c.l.b16 %v1248
        %v4028 = vunpack.c.h.b16 %v1248
        %v4029 = vunpack.c.l.b16 %v1249
        %v4030 = vunpack.c.h.b16 %v1249
        %v4031 = vunpack.c.l.b16 %v1250
        %v4032 = vunpack.c.h.b16 %v1250
        %v4033 = vunpack.c.l.b16 %v1251
        %v4034 = vunpack.c.h.b16 %v1251
        %v4035 = vunpack.c.l.b16 %v1252
        %v4036 = vunpack.c.h.b16 %v1252
        %v4037 = vunpack.c.l.b16 %v1253
        %v4038 = vunpack.c.h.b16 %v1253
        %v4039 = vunpack.c.l.b16 %v1254
        %v4040 = vunpack.c.h.b16 %v1254
        %v4041 = vunpack.c.l.b16 %v1255
        %v4042 = vunpack.c.h.b16 %v1255
        %v4043 = vunpack.c.l.b16 %v1256
        %v4044 = vunpack.c.h.b16 %v1256
        %v4045 = vunpack.c.l.b16 %v1257
        %v4046 = vunpack.c.h.b16 %v1257
        %v4047 = vunpack.c.l.b16 %v1258
        %v4048 = vunpack.c.h.b16 %v1258
        %v4049 = vunpack.c.l.b16 %v1259
        %v4050 = vunpack.c.h.b16 %v1259
        %v4051 = vunpack.c.l.b16 %v1260
        %v4052 = vunpack.c.h.b16 %v1260
        %v4053 = vunpack.c.l.b16 %v1261
        %v4054 = vunpack.c.h.b16 %v1261
        %v4055 = vunpack.c.l.b16 %v1262
        %v4056 = vunpack.c.h.b16 %v1262
        %v4057 = vunpack.c.l.b16 %v1263
        %v4058 = vunpack.c.h.b16 %v1263
        %v4059 = vunpack.c.l.b16 %v1264
        %v4060 = vunpack.c.h.b16 %v1264
        %v4061 = vunpack.c.l.b16 %v1265
        %v4062 = vunpack.c.h.b16 %v1265
        %v4063 = vunpack.c.l.b16 %v1266
        %v4064 = vunpack.c.h.b16 %v1266
        %v4065 = vunpack.c.l.b16 %v1267
        %v4066 = vunpack.c.h.b16 %v1267
        %v4067 = vunpack.c.l.b16 %v1268
        %v4068 = vunpack.c.h.b16 %v1268
        %v4069 = vunpack.c.l.b16 %v1269
        %v4070 = vunpack.c.h.b16 %v1269
        %v4071 = vunpack.c.l.b16 %v1270
        %v4072 = vunpack.c.h.b16 %v1270
        %v4073 = vunpack.c.l.b16 %v1271
        %v4074 = vunpack.c.h.b16 %v1271
        %v4075 = vunpack.c.l.b16 %v1272
        %v4076 = vunpack.c.h.b16 %v1272
        %v4077 = vunpack.c.l.b16 %v1273
        %v4078 = vunpack.c.h.b16 %v1273
        %v4079 = vunpack.c.l.b16 %v1274
        %v4080 = vunpack.c.h.b16 %v1274
        %v4081 = vunpack.c.l.b16 %v1275
        %v4082 = vunpack.c.h.b16 %v1275
        %v4083 = vunpack.c.l.b16 %v1276
        %v4084 = vunpack.c.h.b16 %v1276
        %v4085 = vunpack.c.l.b16 %v1277
        %v4086 = vunpack.c.h.b16 %v1277
        %v4087 = vunpack.c.l.b16 %v1278
        %v4088 = vunpack.c.h.b16 %v1278
        %v4089 = vunpack.c.l.b16 %v1279
        %v4090 = vunpack.c.h.b16 %v1279
        %v4091 = vunpack.c.l.b16 %v1280
        %v4092 = vunpack.c.h.b16 %v1280
        %v4093 = vunpack.c.l.b16 %v1281
        %v4094 = vunpack.c.h.b16 %v1281
        %v4095 = vunpack.c.l.b16 %v1282
        %v4096 = vunpack.c.h.b16 %v1282
        %v4097 = vunpack.c.l.b16 %v1283
        %v4098 = vunpack.c.h.b16 %v1283
        %v4099 = vunpack.c.l.b16 %v1284
        %v4100 = vunpack.c.h.b16 %v1284
        %v4101 = vunpack.c.l.b16 %v1285
        %v4102 = vunpack.c.h.b16 %v1285
        %v4103 = vunpack.c.l.b16 %v1286
        %v4104 = vunpack.c.h.b16 %v1286
        %v4105 = vunpack.c.l.b16 %v1287
        %v4106 = vunpack.c.h.b16 %v1287
        %v4107 = vunpack.c.l.b16 %v1288
        %v4108 = vunpack.c.h.b16 %v1288
        %v4109 = vunpack.c.l.b16 %v1289
        %v4110 = vunpack.c.h.b16 %v1289
        %v4111 = vunpack.c.l.b16 %v1290
        %v4112 = vunpack.c.h.b16 %v1290
        %v4113 = vunpack.c.l.b16 %v1291
        %v4114 = vunpack.c.h.b16 %v1291
        %v4115 = vunpack.c.l.b16 %v1292
        %v4116 = vunpack.c.h.b16 %v1292
        %v4117 = vunpack.c.l.b16 %v1293
        %v4118 = vunpack.c.h.b16 %v1293
        %v4119 = vunpack.c.l.b16 %v1294
        %v4120 = vunpack.c.h.b16 %v1294
        %v4121 = vunpack.c.l.b16 %v1295
        %v4122 = vunpack.c.h.b16 %v1295
        %v4123 = vunpack.c.l.b16 %v1296
        %v4124 = vunpack.c.h.b16 %v1296
        %v4125 = vunpack.c.l.b16 %v1297
        %v4126 = vunpack.c.h.b16 %v1297
        %v4127 = vunpack.c.l.b16 %v1298
        %v4128 = vunpack.c.h.b16 %v1298
        %v4129 = vunpack.c.l.b16 %v1299
        %v4130 = vunpack.c.h.b16 %v1299
        %v4131 = vunpack.c.l.b16 %v1300
        %v4132 = vunpack.c.h.b16 %v1300
        %v4133 = vunpack.c.l.b16 %v1301
        %v4134 = vunpack.c.h.b16 %v1301
        %v4135 = vunpack.c.l.b16 %v1302
        %v4136 = vunpack.c.h.b16 %v1302
        %v4137 = vunpack.c.l.b16 %v1303
        %v4138 = vunpack.c.h.b16 %v1303
        %v4139 = vunpack.c.l.b16 %v1304
        %v4140 = vunpack.c.h.b16 %v1304
        %v4141 = vunpack.c.l.b16 %v1305
        %v4142 = vunpack.c.h.b16 %v1305
        %v4143 = vunpack.c.l.b16 %v1306
        %v4144 = vunpack.c.h.b16 %v1306
        %v4145 = vunpack.c.l.b16 %v1307
        %v4146 = vunpack.c.h.b16 %v1307
        %v4147 = vunpack.c.l.b16 %v1308
        %v4148 = vunpack.c.h.b16 %v1308
        %v4149 = vunpack.c.l.b16 %v1309
        %v4150 = vunpack.c.h.b16 %v1309
        %v4151 = vunpack.c.l.b16 %v1310
        %v4152 = vunpack.c.h.b16 %v1310
        %v4153 = vunpack.c.l.b16 %v1311
        %v4154 = vunpack.c.h.b16 %v1311
        %v4155 = vunpack.c.l.b16 %v1312
        %v4156 = vunpack.c.h.b16 %v1312
        %v4157 = vunpack.c.l.b16 %v1313
        %v4158 = vunpack.c.h.b16 %v1313
        %v4159 = vunpack.c.l.b16 %v1314
        %v4160 = vunpack.c.h.b16 %v1314
        %v4161 = vunpack.c.l.b16 %v1315
        %v4162 = vunpack.c.h.b16 %v1315
        %v4163 = vunpack.c.l.b16 %v1316
        %v4164 = vunpack.c.h.b16 %v1316
        %v4165 = vunpack.c.l.b16 %v1317
        %v4166 = vunpack.c.h.b16 %v1317
        %v4167 = vunpack.c.l.b16 %v1318
        %v4168 = vunpack.c.h.b16 %v1318
        %v4169 = vunpack.c.l.b16 %v1319
        %v4170 = vunpack.c.h.b16 %v1319
        %v4171 = vunpack.c.l.b16 %v1320
        %v4172 = vunpack.c.h.b16 %v1320
        %v4173 = vunpack.c.l.b16 %v1321
        %v4174 = vunpack.c.h.b16 %v1321
        %v4175 = vunpack.c.l.b16 %v1322
        %v4176 = vunpack.c.h.b16 %v1322
        %v4177 = vunpack.c.l.b16 %v1323
        %v4178 = vunpack.c.h.b16 %v1323
        %v4179 = vunpack.c.l.b16 %v1324
        %v4180 = vunpack.c.h.b16 %v1324
        %v4181 = vunpack.c.l.b16 %v1325
        %v4182 = vunpack.c.h.b16 %v1325
        %v4183 = vunpack.c.l.b16 %v1326
        %v4184 = vunpack.c.h.b16 %v1326
        %v4185 = vunpack.c.l.b16 %v1327
        %v4186 = vunpack.c.h.b16 %v1327
        %v4187 = vunpack.c.l.b16 %v1328
        %v4188 = vunpack.c.h.b16 %v1328
        %v4189 = vunpack.c.l.b16 %v1329
        %v4190 = vunpack.c.h.b16 %v1329
        %v4191 = vunpack.c.l.b16 %v1330
        %v4192 = vunpack.c.h.b16 %v1330
        %v4193 = vunpack.c.l.b16 %v1331
        %v4194 = vunpack.c.h.b16 %v1331
        %v4195 = vunpack.c.l.b16 %v1332
        %v4196 = vunpack.c.h.b16 %v1332
        %v4197 = vunpack.c.l.b16 %v1333
        %v4198 = vunpack.c.h.b16 %v1333
        %v4199 = vunpack.c.l.b16 %v1334
        %v4200 = vunpack.c.h.b16 %v1334
        %v4201 = vunpack.c.l.b16 %v1335
        %v4202 = vunpack.c.h.b16 %v1335
        %v4203 = vunpack.c.l.b16 %v1336
        %v4204 = vunpack.c.h.b16 %v1336
        %v4205 = vunpack.c.l.b16 %v1337
        %v4206 = vunpack.c.h.b16 %v1337
        %v4207 = vunpack.c.l.b16 %v1338
        %v4208 = vunpack.c.h.b16 %v1338
        %v4209 = vunpack.c.l.b16 %v1339
        %v4210 = vunpack.c.h.b16 %v1339
        %v4211 = vunpack.c.l.b16 %v1340
        %v4212 = vunpack.c.h.b16 %v1340
        %v4213 = vunpack.c.l.b16 %v1341
        %v4214 = vunpack.c.h.b16 %v1341
        %v4215 = vunpack.c.l.b16 %v1342
        %v4216 = vunpack.c.h.b16 %v1342
        %v4217 = vunpack.c.l.b16 %v1343
        %v4218 = vunpack.c.h.b16 %v1343
        %v4219 = vunpack.c.l.b16 %v1344
        %v4220 = vunpack.c.h.b16 %v1344
        %v4221 = vunpack.c.l.b16 %v1345
        %v4222 = vunpack.c.h.b16 %v1345
        %v4223 = vunpack.c.l.b16 %v1346
        %v4224 = vunpack.c.h.b16 %v1346
        %v4225 = vunpack.c.l.b16 %v1347
        %v4226 = vunpack.c.h.b16 %v1347
        %v4227 = vunpack.c.l.b16 %v1348
        %v4228 = vunpack.c.h.b16 %v1348
        %v4229 = vunpack.c.l.b16 %v1349
        %v4230 = vunpack.c.h.b16 %v1349
        %v4231 = vunpack.c.l.b16 %v1350
        %v4232 = vunpack.c.h.b16 %v1350
        %v4233 = vunpack.c.l.b16 %v1351
        %v4234 = vunpack.c.h.b16 %v1351
        %v4235 = vunpack.c.l.b16 %v1352
        %v4236 = vunpack.c.h.b16 %v1352
        %v4237 = vunpack.c.l.b16 %v1353
        %v4238 = vunpack.c.h.b16 %v1353
        %v4239 = vunpack.c.l.b16 %v1354
        %v4240 = vunpack.c.h.b16 %v1354
        %v4241 = vunpack.c.l.b16 %v1355
        %v4242 = vunpack.c.h.b16 %v1355
        %v4243 = vunpack.c.l.b16 %v1356
        %v4244 = vunpack.c.h.b16 %v1356
        %v4245 = vunpack.c.l.b16 %v1357
        %v4246 = vunpack.c.h.b16 %v1357
        %v4247 = vunpack.c.l.b16 %v1358
        %v4248 = vunpack.c.h.b16 %v1358
        %v4249 = vunpack.c.l.b16 %v1359
        %v4250 = vunpack.c.h.b16 %v1359
        %v4251 = vunpack.c.l.b16 %v1360
        %v4252 = vunpack.c.h.b16 %v1360
        %v4253 = vunpack.c.l.b16 %v1361
        %v4254 = vunpack.c.h.b16 %v1361
        %v4255 = vunpack.c.l.b16 %v1362
        %v4256 = vunpack.c.h.b16 %v1362
        %v4257 = vunpack.c.l.b16 %v1363
        %v4258 = vunpack.c.h.b16 %v1363
        %v4259 = vunpack.c.l.b16 %v1364
        %v4260 = vunpack.c.h.b16 %v1364
        %v4261 = vunpack.c.l.b16 %v1365
        %v4262 = vunpack.c.h.b16 %v1365
        %v4263 = vunpack.c.l.b16 %v1366
        %v4264 = vunpack.c.h.b16 %v1366
        %v4265 = vunpack.c.l.b16 %v1367
        %v4266 = vunpack.c.h.b16 %v1367
        %v4267 = vunpack.c.l.b16 %v1368
        %v4268 = vunpack.c.h.b16 %v1368
        %v4269 = vunpack.c.l.b16 %v1369
        %v4270 = vunpack.c.h.b16 %v1369
        %v4271 = vunpack.c.l.b16 %v1370
        %v4272 = vunpack.c.h.b16 %v1370
        %v4273 = vunpack.c.l.b16 %v1371
        %v4274 = vunpack.c.h.b16 %v1371
        %v4275 = vunpack.c.l.b16 %v1372
        %v4276 = vunpack.c.h.b16 %v1372
        %v4277 = vunpack.c.l.b16 %v1373
        %v4278 = vunpack.c.h.b16 %v1373
        %v4279 = vunpack.c.l.b16 %v1374
        %v4280 = vunpack.c.h.b16 %v1374
        %v4281 = vunpack.c.l.b16 %v1375
        %v4282 = vunpack.c.h.b16 %v1375
        %v4283 = vunpack.c.l.b16 %v1376
        %v4284 = vunpack.c.h.b16 %v1376
        %v4285 = vunpack.c.l.b16 %v1377
        %v4286 = vunpack.c.h.b16 %v1377
        %v4287 = vunpack.c.l.b16 %v1378
        %v4288 = vunpack.c.h.b16 %v1378
        %v4289 = vunpack.c.l.b16 %v1379
        %v4290 = vunpack.c.h.b16 %v1379
        %v4291 = vunpack.c.l.b16 %v1380
        %v4292 = vunpack.c.h.b16 %v1380
        %v4293 = vunpack.c.l.b16 %v1381
        %v4294 = vunpack.c.h.b16 %v1381
        %v4295 = vunpack.c.l.b16 %v1382
        %v4296 = vunpack.c.h.b16 %v1382
        %v4297 = vunpack.c.l.b16 %v1383
        %v4298 = vunpack.c.h.b16 %v1383
        %v4299 = vunpack.c.l.b16 %v1384
        %v4300 = vunpack.c.h.b16 %v1384
        %v4301 = vunpack.c.l.b16 %v1385
        %v4302 = vunpack.c.h.b16 %v1385
        %v4303 = vunpack.c.l.b16 %v1386
        %v4304 = vunpack.c.h.b16 %v1386
        %v4305 = vunpack.c.l.b16 %v1387
        %v4306 = vunpack.c.h.b16 %v1387
        %v4307 = vunpack.c.l.b16 %v1388
        %v4308 = vunpack.c.h.b16 %v1388
        %v4309 = vunpack.c.l.b16 %v1389
        %v4310 = vunpack.c.h.b16 %v1389
        %v4311 = vunpack.c.l.b16 %v1390
        %v4312 = vunpack.c.h.b16 %v1390
        %v4313 = vunpack.c.l.b16 %v1391
        %v4314 = vunpack.c.h.b16 %v1391
        %v4315 = vunpack.c.l.b16 %v1392
        %v4316 = vunpack.c.h.b16 %v1392
        %v4317 = vunpack.c.l.b16 %v1393
        %v4318 = vunpack.c.h.b16 %v1393
        %v4319 = vunpack.c.l.b16 %v1394
        %v4320 = vunpack.c.h.b16 %v1394
        %v4321 = vunpack.c.l.b16 %v1395
        %v4322 = vunpack.c.h.b16 %v1395
        %v4323 = vunpack.c.l.b16 %v1396
        %v4324 = vunpack.c.h.b16 %v1396
        %v4325 = vunpack.c.l.b16 %v1397
        %v4326 = vunpack.c.h.b16 %v1397
        %v4327 = vunpack.c.l.b16 %v1398
        %v4328 = vunpack.c.h.b16 %v1398
        %v4329 = vunpack.c.l.b16 %v1399
        %v4330 = vunpack.c.h.b16 %v1399
        %v4331 = vunpack.c.l.b16 %v1400
        %v4332 = vunpack.c.h.b16 %v1400
        %v4333 = vunpack.c.l.b16 %v1401
        %v4334 = vunpack.c.h.b16 %v1401
        %v4335 = vunpack.c.l.b16 %v1402
        %v4336 = vunpack.c.h.b16 %v1402
        %v4337 = vunpack.c.l.b16 %v1403
        %v4338 = vunpack.c.h.b16 %v1403
        %v4339 = vunpack.c.l.b16 %v1404
        %v4340 = vunpack.c.h.b16 %v1404
        %v4341 = vunpack.c.l.b16 %v1405
        %v4342 = vunpack.c.h.b16 %v1405
        %v4343 = vunpack.c.l.b16 %v1406
        %v4344 = vunpack.c.h.b16 %v1406
        %v4345 = vunpack.c.l.b16 %v1407
        %v4346 = vunpack.c.h.b16 %v1407
        %v4347 = vunpack.c.l.b16 %v1408
        %v4348 = vunpack.c.h.b16 %v1408
        %v4349 = vunpack.c.l.b16 %v1409
        %v4350 = vunpack.c.h.b16 %v1409
        %v4351 = vunpack.c.l.b16 %v1410
        %v4352 = vunpack.c.h.b16 %v1410
        %v4353 = vunpack.c.l.b16 %v1411
        %v4354 = vunpack.c.h.b16 %v1411
        %v4355 = vunpack.c.l.b16 %v1412
        %v4356 = vunpack.c.h.b16 %v1412
        %v4357 = vunpack.c.l.b16 %v1413
        %v4358 = vunpack.c.h.b16 %v1413
        %v4359 = vunpack.c.l.b16 %v1414
        %v4360 = vunpack.c.h.b16 %v1414
        %v4361 = vunpack.c.l.b16 %v1415
        %v4362 = vunpack.c.h.b16 %v1415
        %v4363 = vunpack.c.l.b16 %v1416
        %v4364 = vunpack.c.h.b16 %v1416
        %v4365 = vunpack.c.l.b16 %v1417
        %v4366 = vunpack.c.h.b16 %v1417
        %v4367 = vunpack.c.l.b16 %v1418
        %v4368 = vunpack.c.h.b16 %v1418
        %v4369 = vunpack.c.l.b16 %v1419
        %v4370 = vunpack.c.h.b16 %v1419
        %v4371 = vunpack.c.l.b16 %v1420
        %v4372 = vunpack.c.h.b16 %v1420
        %v4373 = vunpack.c.l.b16 %v1421
        %v4374 = vunpack.c.h.b16 %v1421
        %v4375 = vunpack.c.l.b16 %v1422
        %v4376 = vunpack.c.h.b16 %v1422
        %v4377 = vunpack.c.l.b16 %v1423
        %v4378 = vunpack.c.h.b16 %v1423
        %v4379 = vunpack.c.l.b16 %v1424
        %v4380 = vunpack.c.h.b16 %v1424
        %v4381 = vunpack.c.l.b16 %v1425
        %v4382 = vunpack.c.h.b16 %v1425
        %v4383 = vunpack.c.l.b16 %v1426
        %v4384 = vunpack.c.h.b16 %v1426
        %v4385 = vunpack.c.l.b16 %v1427
        %v4386 = vunpack.c.h.b16 %v1427
        %v4387 = vunpack.c.l.b16 %v1428
        %v4388 = vunpack.c.h.b16 %v1428
        %v4389 = vunpack.c.l.b16 %v1429
        %v4390 = vunpack.c.h.b16 %v1429
        %v4391 = vunpack.c.l.b16 %v1430
        %v4392 = vunpack.c.h.b16 %v1430
        %v4393 = vunpack.c.l.b16 %v1431
        %v4394 = vunpack.c.h.b16 %v1431
        %v4395 = vunpack.c.l.b16 %v1432
        %v4396 = vunpack.c.h.b16 %v1432
        %v4397 = vunpack.c.l.b16 %v1433
        %v4398 = vunpack.c.h.b16 %v1433
        %v4399 = vunpack.c.l.b16 %v1434
        %v4400 = vunpack.c.h.b16 %v1434
        %v4401 = vunpack.c.l.b16 %v1435
        %v4402 = vunpack.c.h.b16 %v1435
        %v4403 = vunpack.c.l.b16 %v1436
        %v4404 = vunpack.c.h.b16 %v1436
        %v4405 = vunpack.c.l.b16 %v1437
        %v4406 = vunpack.c.h.b16 %v1437
        %v4407 = vunpack.c.l.b16 %v1438
        %v4408 = vunpack.c.h.b16 %v1438
        %v4409 = vunpack.c.l.b16 %v1439
        %v4410 = vunpack.c.h.b16 %v1439
        %v4411 = vunpack.c.l.b16 %v1440
        %v4412 = vunpack.c.h.b16 %v1440
        %v4413 = vunpack.c.l.b16 %v1441
        %v4414 = vunpack.c.h.b16 %v1441
        %v4415 = vunpack.c.l.b16 %v1442
        %v4416 = vunpack.c.h.b16 %v1442
        %v4417 = vunpack.c.l.b16 %v1443
        %v4418 = vunpack.c.h.b16 %v1443
        %v4419 = vunpack.c.l.b16 %v1444
        %v4420 = vunpack.c.h.b16 %v1444
        %v4421 = vunpack.c.l.b16 %v1445
        %v4422 = vunpack.c.h.b16 %v1445
        %v4423 = vunpack.c.l.b16 %v1446
        %v4424 = vunpack.c.h.b16 %v1446
        %v4425 = vunpack.c.l.b16 %v1447
        %v4426 = vunpack.c.h.b16 %v1447
        %v4427 = vunpack.c.l.b16 %v1448
        %v4428 = vunpack.c.h.b16 %v1448
        %v4429 = vunpack.c.l.b16 %v1449
        %v4430 = vunpack.c.h.b16 %v1449
        %v4431 = vunpack.c.l.b16 %v1450
        %v4432 = vunpack.c.h.b16 %v1450
        %v4433 = vunpack.c.l.b16 %v1451
        %v4434 = vunpack.c.h.b16 %v1451
        %v4435 = vunpack.c.l.b16 %v1452
        %v4436 = vunpack.c.h.b16 %v1452
        %v4437 = vunpack.c.l.b16 %v1453
        %v4438 = vunpack.c.h.b16 %v1453
        %v4439 = vunpack.c.l.b16 %v1454
        %v4440 = vunpack.c.h.b16 %v1454
        %v4441 = vunpack.c.l.b16 %v1455
        %v4442 = vunpack.c.h.b16 %v1455
        %v4443 = vunpack.c.l.b16 %v1456
        %v4444 = vunpack.c.h.b16 %v1456
        %v4445 = vunpack.c.l.b16 %v1457
        %v4446 = vunpack.c.h.b16 %v1457
        %v4447 = vunpack.c.l.b16 %v1458
        %v4448 = vunpack.c.h.b16 %v1458
        %v4449 = vunpack.c.l.b16 %v1459
        %v4450 = vunpack.c.h.b16 %v1459
        %v4451 = vunpack.c.l.b16 %v1460
        %v4452 = vunpack.c.h.b16 %v1460
        %v4453 = vunpack.c.l.b16 %v1461
        %v4454 = vunpack.c.h.b16 %v1461
        %v4455 = vunpack.c.l.b16 %v1462
        %v4456 = vunpack.c.h.b16 %v1462
        %v4457 = vunpack.c.l.b16 %v1463
        %v4458 = vunpack.c.h.b16 %v1463
        %v4459 = vunpack.c.l.b16 %v1464
        %v4460 = vunpack.c.h.b16 %v1464
        %v4461 = vunpack.c.l.b16 %v1465
        %v4462 = vunpack.c.h.b16 %v1465
        %v4463 = vunpack.c.l.b16 %v1466
        %v4464 = vunpack.c.h.b16 %v1466
        %v4465 = vunpack.c.l.b16 %v1467
        %v4466 = vunpack.c.h.b16 %v1467
        %v4467 = vunpack.c.l.b16 %v1468
        %v4468 = vunpack.c.h.b16 %v1468
        %v4469 = vunpack.c.l.b16 %v1469
        %v4470 = vunpack.c.h.b16 %v1469
        %v4471 = vunpack.c.l.b16 %v1470
        %v4472 = vunpack.c.h.b16 %v1470
        %v4473 = vunpack.c.l.b16 %v1471
        %v4474 = vunpack.c.h.b16 %v1471
        %v4475 = vunpack.c.l.b16 %v1472
        %v4476 = vunpack.c.h.b16 %v1472
        %v4477 = vunpack.c.l.b16 %v1473
        %v4478 = vunpack.c.h.b16 %v1473
        %v4479 = vunpack.c.l.b16 %v1474
        %v4480 = vunpack.c.h.b16 %v1474
        %v4481 = vunpack.c.l.b16 %v1475
        %v4482 = vunpack.c.h.b16 %v1475
        %v4483 = vunpack.c.l.b16 %v1476
        %v4484 = vunpack.c.h.b16 %v1476
        %v4485 = vunpack.c.l.b16 %v1477
        %v4486 = vunpack.c.h.b16 %v1477
        %v4487 = vunpack.c.l.b16 %v1478
        %v4488 = vunpack.c.h.b16 %v1478
        %v4489 = vunpack.c.l.b16 %v1479
        %v4490 = vunpack.c.h.b16 %v1479
        %v4491 = vunpack.c.l.b16 %v1480
        %v4492 = vunpack.c.h.b16 %v1480
        %v4493 = vunpack.c.l.b16 %v1481
        %v4494 = vunpack.c.h.b16 %v1481
        %v4495 = vunpack.c.l.b16 %v1482
        %v4496 = vunpack.c.h.b16 %v1482
        %v4497 = vunpack.c.l.b16 %v1483
        %v4498 = vunpack.c.h.b16 %v1483
        %v4499 = vunpack.c.l.b16 %v1484
        %v4500 = vunpack.c.h.b16 %v1484
        %v4501 = vunpack.c.l.b16 %v1485
        %v4502 = vunpack.c.h.b16 %v1485
        %v4503 = vunpack.c.l.b16 %v1486
        %v4504 = vunpack.c.h.b16 %v1486
        %v4505 = vunpack.c.l.b16 %v1487
        %v4506 = vunpack.c.h.b16 %v1487
        %v4507 = vunpack.c.l.b16 %v1488
        %v4508 = vunpack.c.h.b16 %v1488
        %v4509 = vunpack.c.l.b16 %v1489
        %v4510 = vunpack.c.h.b16 %v1489
        %v4511 = vunpack.c.l.b16 %v1490
        %v4512 = vunpack.c.h.b16 %v1490
        %v4513 = vunpack.c.l.b16 %v1491
        %v4514 = vunpack.c.h.b16 %v1491
        %v4515 = vunpack.c.l.b16 %v1492
        %v4516 = vunpack.c.h.b16 %v1492
        %v4517 = vunpack.c.l.b16 %v1493
        %v4518 = vunpack.c.h.b16 %v1493
        %v4519 = vunpack.c.l.b16 %v1494
        %v4520 = vunpack.c.h.b16 %v1494
        %v4521 = vunpack.c.l.b16 %v1495
        %v4522 = vunpack.c.h.b16 %v1495
        %v4523 = vunpack.c.l.b16 %v1496
        %v4524 = vunpack.c.h.b16 %v1496
        %v4525 = vunpack.c.l.b16 %v1497
        %v4526 = vunpack.c.h.b16 %v1497
        %v4527 = vunpack.c.l.b16 %v1498
        %v4528 = vunpack.c.h.b16 %v1498
        %v4529 = vunpack.c.l.b16 %v1499
        %v4530 = vunpack.c.h.b16 %v1499
        %v4531 = vunpack.c.l.b16 %v1500
        %v4532 = vunpack.c.h.b16 %v1500
        %v4533 = vunpack.c.l.b16 %v1501
        %v4534 = vunpack.c.h.b16 %v1501
        %v4535 = vunpack.c.l.b16 %v1502
        %v4536 = vunpack.c.h.b16 %v1502
        %v4537 = vunpack.c.l.b16 %v1503
        %v4538 = vunpack.c.h.b16 %v1503
        %v4539 = vunpack.c.l.b16 %v1504
        %v4540 = vunpack.c.h.b16 %v1504
        %v4541 = vunpack.c.l.b16 %v1505
        %v4542 = vunpack.c.h.b16 %v1505
        %v4543 = vunpack.c.l.b16 %v1506
        %v4544 = vunpack.c.h.b16 %v1506
        %v4545 = vunpack.c.l.b16 %v1507
        %v4546 = vunpack.c.h.b16 %v1507
        %v4547 = vunpack.c.l.b16 %v1508
        %v4548 = vunpack.c.h.b16 %v1508
        %v4549 = vunpack.c.l.b16 %v1509
        %v4550 = vunpack.c.h.b16 %v1509
        %v4551 = vunpack.c.l.b16 %v1510
        %v4552 = vunpack.c.h.b16 %v1510
        %v4553 = vunpack.c.l.b16 %v1511
        %v4554 = vunpack.c.h.b16 %v1511
        %v4555 = vunpack.c.l.b16 %v1512
        %v4556 = vunpack.c.h.b16 %v1512
        %v4557 = vunpack.c.l.b16 %v1513
        %v4558 = vunpack.c.h.b16 %v1513
        %v4559 = vunpack.c.l.b16 %v1514
        %v4560 = vunpack.c.h.b16 %v1514
        %v4561 = vunpack.c.l.b16 %v1515
        %v4562 = vunpack.c.h.b16 %v1515
        %v4563 = vunpack.c.l.b16 %v1516
        %v4564 = vunpack.c.h.b16 %v1516
        %v4565 = vunpack.c.l.b16 %v1517
        %v4566 = vunpack.c.h.b16 %v1517
        %v4567 = vunpack.c.l.b16 %v1518
        %v4568 = vunpack.c.h.b16 %v1518
        %v4569 = vunpack.c.l.b16 %v1519
        %v4570 = vunpack.c.h.b16 %v1519
        %v4571 = vunpack.c.l.b16 %v1520
        %v4572 = vunpack.c.h.b16 %v1520
        %v4573 = vunpack.c.l.b16 %v1521
        %v4574 = vunpack.c.h.b16 %v1521
        %v4575 = vunpack.c.l.b16 %v1522
        %v4576 = vunpack.c.h.b16 %v1522
        %v4577 = vunpack.c.l.b16 %v1523
        %v4578 = vunpack.c.h.b16 %v1523
        %v4579 = vunpack.c.l.b16 %v1524
        %v4580 = vunpack.c.h.b16 %v1524
        %v4581 = vunpack.c.l.b16 %v1525
        %v4582 = vunpack.c.h.b16 %v1525
        %v4583 = vunpack.c.l.b16 %v1526
        %v4584 = vunpack.c.h.b16 %v1526
        %v4585 = vunpack.c.l.b16 %v1527
        %v4586 = vunpack.c.h.b16 %v1527
        %v4587 = vunpack.c.l.b16 %v1528
        %v4588 = vunpack.c.h.b16 %v1528
        %v4589 = vunpack.c.l.b16 %v1529
        %v4590 = vunpack.c.h.b16 %v1529
        %v4591 = vunpack.c.l.b16 %v1530
        %v4592 = vunpack.c.h.b16 %v1530
        %v4593 = vunpack.c.l.b16 %v1531
        %v4594 = vunpack.c.h.b16 %v1531
        %v4595 = vunpack.c.l.b16 %v1532
        %v4596 = vunpack.c.h.b16 %v1532
        %v4597 = vunpack.c.l.b16 %v1533
        %v4598 = vunpack.c.h.b16 %v1533
        %v4599 = vunpack.c.l.b16 %v1534
        %v4600 = vunpack.c.h.b16 %v1534
        %v4601 = vunpack.c.l.b16 %v1535
        %v4602 = vunpack.c.h.b16 %v1535
        %v4603 = vunpack.c.l.b16 %v1536
        %v4604 = vunpack.c.h.b16 %v1536
        %v4605 = vunpack.c.l.b16 %v1537
        %v4606 = vunpack.c.h.b16 %v1537
        %v4607 = vunpack.c.l.b16 %v1538
        %v4608 = vunpack.c.h.b16 %v1538
        %v4609 = vunpack.c.l.b16 %v1539
        %v4610 = vunpack.c.h.b16 %v1539
        %v4611 = vunpack.c.l.b16 %v1540
        %v4612 = vunpack.c.h.b16 %v1540
        %v4613 = vunpack.c.l.b16 %v1541
        %v4614 = vunpack.c.h.b16 %v1541
        %v4615 = vunpack.c.l.b16 %v1542
        %v4616 = vunpack.c.h.b16 %v1542
        %v4617 = vunpack.c.l.b16 %v1543
        %v4618 = vunpack.c.h.b16 %v1543
        %v4619 = vunpack.c.l.b16 %v1544
        %v4620 = vunpack.c.h.b16 %v1544
        %v4621 = vunpack.c.l.b16 %v1545
        %v4622 = vunpack.c.h.b16 %v1545
        %v4623 = vunpack.c.l.b16 %v1546
        %v4624 = vunpack.c.h.b16 %v1546
        %v4625 = vunpack.c.l.b16 %v1547
        %v4626 = vunpack.c.h.b16 %v1547
        %v4627 = vunpack.c.l.b16 %v1548
        %v4628 = vunpack.c.h.b16 %v1548
        %v4629 = vunpack.c.l.b16 %v1549
        %v4630 = vunpack.c.h.b16 %v1549
        %v4631 = vunpack.c.l.b16 %v1550
        %v4632 = vunpack.c.h.b16 %v1550
        %v4633 = vunpack.c.l.b16 %v1551
        %v4634 = vunpack.c.h.b16 %v1551
        %v4635 = vunpack.c.l.b16 %v1552
        %v4636 = vunpack.c.h.b16 %v1552
        %v4637 = vunpack.c.l.b16 %v1553
        %v4638 = vunpack.c.h.b16 %v1553
        %v4639 = vunpack.c.l.b16 %v1554
        %v4640 = vunpack.c.h.b16 %v1554
        %v4641 = vunpack.c.l.b16 %v1555
        %v4642 = vunpack.c.h.b16 %v1555
        %v4643 = vunpack.c.l.b16 %v1556
        %v4644 = vunpack.c.h.b16 %v1556
        %v4645 = vunpack.c.l.b16 %v1557
        %v4646 = vunpack.c.h.b16 %v1557
        %v4647 = vunpack.c.l.b16 %v1558
        %v4648 = vunpack.c.h.b16 %v1558
        %v4649 = vunpack.c.l.b16 %v1559
        %v4650 = vunpack.c.h.b16 %v1559
        %v4651 = vunpack.c.l.b16 %v1560
        %v4652 = vunpack.c.h.b16 %v1560
        %v4653 = vunpack.c.l.b16 %v1561
        %v4654 = vunpack.c.h.b16 %v1561
        %v4655 = vunpack.c.l.b16 %v1562
        %v4656 = vunpack.c.h.b16 %v1562
        %v4657 = vunpack.c.l.b16 %v1563
        %v4658 = vunpack.c.h.b16 %v1563
        %v4659 = vunpack.c.l.b16 %v1564
        %v4660 = vunpack.c.h.b16 %v1564
        %v4661 = vunpack.c.l.b16 %v1565
        %v4662 = vunpack.c.h.b16 %v1565
        %v4663 = vunpack.c.l.b16 %v1566
        %v4664 = vunpack.c.h.b16 %v1566
        %v4665 = vunpack.c.l.b16 %v1567
        %v4666 = vunpack.c.h.b16 %v1567
        %v4667 = vunpack.c.l.b16 %v1568
        %v4668 = vunpack.c.h.b16 %v1568
        %v4669 = vunpack.c.l.b16 %v1569
        %v4670 = vunpack.c.h.b16 %v1569
        %v4671 = vunpack.c.l.b16 %v1570
        %v4672 = vunpack.c.h.b16 %v1570
        %v4673 = vunpack.c.l.b16 %v1571
        %v4674 = vunpack.c.h.b16 %v1571
        %v4675 = vunpack.c.l.b16 %v1572
        %v4676 = vunpack.c.h.b16 %v1572
        %v4677 = vunpack.c.l.b16 %v1573
        %v4678 = vunpack.c.h.b16 %v1573
        %v4679 = vunpack.c.l.b16 %v1574
        %v4680 = vunpack.c.h.b16 %v1574
        %v4681 = vunpack.c.l.b16 %v1575
        %v4682 = vunpack.c.h.b16 %v1575
        %v4683 = vunpack.c.l.b16 %v1576
        %v4684 = vunpack.c.h.b16 %v1576
        %v4685 = vunpack.c.l.b16 %v1577
        %v4686 = vunpack.c.h.b16 %v1577
        %v4687 = vunpack.c.l.b16 %v1578
        %v4688 = vunpack.c.h.b16 %v1578
        %v4689 = vunpack.c.l.b16 %v1579
        %v4690 = vunpack.c.h.b16 %v1579
        %v4691 = vunpack.c.l.b16 %v1580
        %v4692 = vunpack.c.h.b16 %v1580
        %v4693 = vunpack.c.l.b16 %v1581
        %v4694 = vunpack.c.h.b16 %v1581
        %v4695 = vunpack.c.l.b16 %v1582
        %v4696 = vunpack.c.h.b16 %v1582
        %v4697 = vpack.c.b16 %v2657, %v2649
        %v4698 = vpack.c.b16 %v2658, %v2650
        %v4699 = vpack.c.b16 %v2659, %v2651
        %v4700 = vpack.c.b16 %v2660, %v2652
        %v4701 = vpack.c.b16 %v2661, %v2653
        %v4702 = vpack.c.b16 %v2662, %v2654
        %v4703 = vpack.c.b16 %v2663, %v2655
        %v4704 = vpack.c.b16 %v2664, %v2656
        %v4705 = vpack.c.b16 %v2673, %v2665
        %v4706 = vpack.c.b16 %v2674, %v2666
        %v4707 = vpack.c.b16 %v2675, %v2667
        %v4708 = vpack.c.b16 %v2676, %v2668
        %v4709 = vpack.c.b16 %v2677, %v2669
        %v4710 = vpack.c.b16 %v2678, %v2670
        %v4711 = vpack.c.b16 %v2679, %v2671
        %v4712 = vpack.c.b16 %v2680, %v2672
        %v4713 = vpack.c.b16 %v2689, %v2681
        %v4714 = vpack.c.b16 %v2690, %v2682
        %v4715 = vpack.c.b16 %v2691, %v2683
        %v4716 = vpack.c.b16 %v2692, %v2684
        %v4717 = vpack.c.b16 %v2693, %v2685
        %v4718 = vpack.c.b16 %v2694, %v2686
        %v4719 = vpack.c.b16 %v2695, %v2687
        %v4720 = vpack.c.b16 %v2696, %v2688
        %v4721 = vpack.c.b16 %v2705, %v2697
        %v4722 = vpack.c.b16 %v2706, %v2698
        %v4723 = vpack.c.b16 %v2707, %v2699
        %v4724 = vpack.c.b16 %v2708, %v2700
        %v4725 = vpack.c.b16 %v2709, %v2701
        %v4726 = vpack.c.b16 %v2710, %v2702
        %v4727 = vpack.c.b16 %v2711, %v2703
        %v4728 = vpack.c.b16 %v2712, %v2704
        %v4729 = vpack.c.b16 %v2721, %v2713
        %v4730 = vpack.c.b16 %v2722, %v2714
        %v4731 = vpack.c.b16 %v2723, %v2715
        %v4732 = vpack.c.b16 %v2724, %v2716
        %v4733 = vpack.c.b16 %v2725, %v2717
        %v4734 = vpack.c.b16 %v2726, %v2718
        %v4735 = vpack.c.b16 %v2727, %v2719
        %v4736 = vpack.c.b16 %v2728, %v2720
        %v4737 = vpack.c.b16 %v2737, %v2729
        %v4738 = vpack.c.b16 %v2738, %v2730
        %v4739 = vpack.c.b16 %v2739, %v2731
        %v4740 = vpack.c.b16 %v2740, %v2732
        %v4741 = vpack.c.b16 %v2741, %v2733
        %v4742 = vpack.c.b16 %v2742, %v2734
        %v4743 = vpack.c.b16 %v2743, %v2735
        %v4744 = vpack.c.b16 %v2744, %v2736
        %v4745 = vpack.c.b16 %v2753, %v2745
        %v4746 = vpack.c.b16 %v2754, %v2746
        %v4747 = vpack.c.b16 %v2755, %v2747
        %v4748 = vpack.c.b16 %v2756, %v2748
        %v4749 = vpack.c.b16 %v2757, %v2749
        %v4750 = vpack.c.b16 %v2758, %v2750
        %v4751 = vpack.c.b16 %v2759, %v2751
        %v4752 = vpack.c.b16 %v2760, %v2752
        %v4753 = vpack.c.b16 %v2769, %v2761
        %v4754 = vpack.c.b16 %v2770, %v2762
        %v4755 = vpack.c.b16 %v2771, %v2763
        %v4756 = vpack.c.b16 %v2772, %v2764
        %v4757 = vpack.c.b16 %v2773, %v2765
        %v4758 = vpack.c.b16 %v2774, %v2766
        %v4759 = vpack.c.b16 %v2775, %v2767
        %v4760 = vpack.c.b16 %v2776, %v2768
        %v4761 = vpack.c.b16 %v2785, %v2777
        %v4762 = vpack.c.b16 %v2786, %v2778
        %v4763 = vpack.c.b16 %v2787, %v2779
        %v4764 = vpack.c.b16 %v2788, %v2780
        %v4765 = vpack.c.b16 %v2789, %v2781
        %v4766 = vpack.c.b16 %v2790, %v2782
        %v4767 = vpack.c.b16 %v2791, %v2783
        %v4768 = vpack.c.b16 %v2792, %v2784
        %v4769 = vpack.c.b16 %v2801, %v2793
        %v4770 = vpack.c.b16 %v2802, %v2794
        %v4771 = vpack.c.b16 %v2803, %v2795
        %v4772 = vpack.c.b16 %v2804, %v2796
        %v4773 = vpack.c.b16 %v2805, %v2797
        %v4774 = vpack.c.b16 %v2806, %v2798
        %v4775 = vpack.c.b16 %v2807, %v2799
        %v4776 = vpack.c.b16 %v2808, %v2800
        %v4777 = vpack.c.b16 %v2817, %v2809
        %v4778 = vpack.c.b16 %v2818, %v2810
        %v4779 = vpack.c.b16 %v2819, %v2811
        %v4780 = vpack.c.b16 %v2820, %v2812
        %v4781 = vpack.c.b16 %v2821, %v2813
        %v4782 = vpack.c.b16 %v2822, %v2814
        %v4783 = vpack.c.b16 %v2823, %v2815
        %v4784 = vpack.c.b16 %v2824, %v2816
        %v4785 = vpack.c.b16 %v2833, %v2825
        %v4786 = vpack.c.b16 %v2834, %v2826
        %v4787 = vpack.c.b16 %v2835, %v2827
        %v4788 = vpack.c.b16 %v2836, %v2828
        %v4789 = vpack.c.b16 %v2837, %v2829
        %v4790 = vpack.c.b16 %v2838, %v2830
        %v4791 = vpack.c.b16 %v2839, %v2831
        %v4792 = vpack.c.b16 %v2840, %v2832
        %v4793 = vpack.c.b16 %v2849, %v2841
        %v4794 = vpack.c.b16 %v2850, %v2842
        %v4795 = vpack.c.b16 %v2851, %v2843
        %v4796 = vpack.c.b16 %v2852, %v2844
        %v4797 = vpack.c.b16 %v2853, %v2845
        %v4798 = vpack.c.b16 %v2854, %v2846
        %v4799 = vpack.c.b16 %v2855, %v2847
        %v4800 = vpack.c.b16 %v2856, %v2848
        %v4801 = vpack.c.b16 %v2865, %v2857
        %v4802 = vpack.c.b16 %v2866, %v2858
        %v4803 = vpack.c.b16 %v2867, %v2859
        %v4804 = vpack.c.b16 %v2868, %v2860
        %v4805 = vpack.c.b16 %v2869, %v2861
        %v4806 = vpack.c.b16 %v2870, %v2862
        %v4807 = vpack.c.b16 %v2871, %v2863
        %v4808 = vpack.c.b16 %v2872, %v2864
        %v4809 = vpack.c.b16 %v2881, %v2873
        %v4810 = vpack.c.b16 %v2882, %v2874
        %v4811 = vpack.c.b16 %v2883, %v2875
        %v4812 = vpack.c.b16 %v2884, %v2876
        %v4813 = vpack.c.b16 %v2885, %v2877
        %v4814 = vpack.c.b16 %v2886, %v2878
        %v4815 = vpack.c.b16 %v2887, %v2879
        %v4816 = vpack.c.b16 %v2888, %v2880
        %v4817 = vpack.c.b16 %v2897, %v2889
        %v4818 = vpack.c.b16 %v2898, %v2890
        %v4819 = vpack.c.b16 %v2899, %v2891
        %v4820 = vpack.c.b16 %v2900, %v2892
        %v4821 = vpack.c.b16 %v2901, %v2893
        %v4822 = vpack.c.b16 %v2902, %v2894
        %v4823 = vpack.c.b16 %v2903, %v2895
        %v4824 = vpack.c.b16 %v2904, %v2896
        %v4825 = vpack.c.b16 %v2913, %v2905
        %v4826 = vpack.c.b16 %v2914, %v2906
        %v4827 = vpack.c.b16 %v2915, %v2907
        %v4828 = vpack.c.b16 %v2916, %v2908
        %v4829 = vpack.c.b16 %v2917, %v2909
        %v4830 = vpack.c.b16 %v2918, %v2910
        %v4831 = vpack.c.b16 %v2919, %v2911
        %v4832 = vpack.c.b16 %v2920, %v2912
        %v4833 = vpack.c.b16 %v2929, %v2921
        %v4834 = vpack.c.b16 %v2930, %v2922
        %v4835 = vpack.c.b16 %v2931, %v2923
        %v4836 = vpack.c.b16 %v2932, %v2924
        %v4837 = vpack.c.b16 %v2933, %v2925
        %v4838 = vpack.c.b16 %v2934, %v2926
        %v4839 = vpack.c.b16 %v2935, %v2927
        %v4840 = vpack.c.b16 %v2936, %v2928
        %v4841 = vpack.c.b16 %v2945, %v2937
        %v4842 = vpack.c.b16 %v2946, %v2938
        %v4843 = vpack.c.b16 %v2947, %v2939
        %v4844 = vpack.c.b16 %v2948, %v2940
        %v4845 = vpack.c.b16 %v2949, %v2941
        %v4846 = vpack.c.b16 %v2950, %v2942
        %v4847 = vpack.c.b16 %v2951, %v2943
        %v4848 = vpack.c.b16 %v2952, %v2944
        %v4849 = vpack.c.b16 %v2961, %v2953
        %v4850 = vpack.c.b16 %v2962, %v2954
        %v4851 = vpack.c.b16 %v2963, %v2955
        %v4852 = vpack.c.b16 %v2964, %v2956
        %v4853 = vpack.c.b16 %v2965, %v2957
        %v4854 = vpack.c.b16 %v2966, %v2958
        %v4855 = vpack.c.b16 %v2967, %v2959
        %v4856 = vpack.c.b16 %v2968, %v2960
        %v4857 = vpack.c.b16 %v2977, %v2969
        %v4858 = vpack.c.b16 %v2978, %v2970
        %v4859 = vpack.c.b16 %v2979, %v2971
        %v4860 = vpack.c.b16 %v2980, %v2972
        %v4861 = vpack.c.b16 %v2981, %v2973
        %v4862 = vpack.c.b16 %v2982, %v2974
        %v4863 = vpack.c.b16 %v2983, %v2975
        %v4864 = vpack.c.b16 %v2984, %v2976
        %v4865 = vpack.c.b16 %v2993, %v2985
        %v4866 = vpack.c.b16 %v2994, %v2986
        %v4867 = vpack.c.b16 %v2995, %v2987
        %v4868 = vpack.c.b16 %v2996, %v2988
        %v4869 = vpack.c.b16 %v2997, %v2989
        %v4870 = vpack.c.b16 %v2998, %v2990
        %v4871 = vpack.c.b16 %v2999, %v2991
        %v4872 = vpack.c.b16 %v3000, %v2992
        %v4873 = vpack.c.b16 %v3009, %v3001
        %v4874 = vpack.c.b16 %v3010, %v3002
        %v4875 = vpack.c.b16 %v3011, %v3003
        %v4876 = vpack.c.b16 %v3012, %v3004
        %v4877 = vpack.c.b16 %v3013, %v3005
        %v4878 = vpack.c.b16 %v3014, %v3006
        %v4879 = vpack.c.b16 %v3015, %v3007
        %v4880 = vpack.c.b16 %v3016, %v3008
        %v4881 = vpack.c.b16 %v3025, %v3017
        %v4882 = vpack.c.b16 %v3026, %v3018
        %v4883 = vpack.c.b16 %v3027, %v3019
        %v4884 = vpack.c.b16 %v3028, %v3020
        %v4885 = vpack.c.b16 %v3029, %v3021
        %v4886 = vpack.c.b16 %v3030, %v3022
        %v4887 = vpack.c.b16 %v3031, %v3023
        %v4888 = vpack.c.b16 %v3032, %v3024
        %v4889 = vpack.c.b16 %v3041, %v3033
        %v4890 = vpack.c.b16 %v3042, %v3034
        %v4891 = vpack.c.b16 %v3043, %v3035
        %v4892 = vpack.c.b16 %v3044, %v3036
        %v4893 = vpack.c.b16 %v3045, %v3037
        %v4894 = vpack.c.b16 %v3046, %v3038
        %v4895 = vpack.c.b16 %v3047, %v3039
        %v4896 = vpack.c.b16 %v3048, %v3040
        %v4897 = vpack.c.b16 %v3057, %v3049
        %v4898 = vpack.c.b16 %v3058, %v3050
        %v4899 = vpack.c.b16 %v3059, %v3051
        %v4900 = vpack.c.b16 %v3060, %v3052
        %v4901 = vpack.c.b16 %v3061, %v3053
        %v4902 = vpack.c.b16 %v3062, %v3054
        %v4903 = vpack.c.b16 %v3063, %v3055
        %v4904 = vpack.c.b16 %v3064, %v3056
        %v4905 = vpack.c.b16 %v3073, %v3065
        %v4906 = vpack.c.b16 %v3074, %v3066
        %v4907 = vpack.c.b16 %v3075, %v3067
        %v4908 = vpack.c.b16 %v3076, %v3068
        %v4909 = vpack.c.b16 %v3077, %v3069
        %v4910 = vpack.c.b16 %v3078, %v3070
        %v4911 = vpack.c.b16 %v3079, %v3071
        %v4912 = vpack.c.b16 %v3080, %v3072
        %v4913 = vpack.c.b16 %v3089, %v3081
        %v4914 = vpack.c.b16 %v3090, %v3082
        %v4915 = vpack.c.b16 %v3091, %v3083
        %v4916 = vpack.c.b16 %v3092, %v3084
        %v4917 = vpack.c.b16 %v3093, %v3085
        %v4918 = vpack.c.b16 %v3094, %v3086
        %v4919 = vpack.c.b16 %v3095, %v3087
        %v4920 = vpack.c.b16 %v3096, %v3088
        %v4921 = vpack.c.b16 %v3105, %v3097
        %v4922 = vpack.c.b16 %v3106, %v3098
        %v4923 = vpack.c.b16 %v3107, %v3099
        %v4924 = vpack.c.b16 %v3108, %v3100
        %v4925 = vpack.c.b16 %v3109, %v3101
        %v4926 = vpack.c.b16 %v3110, %v3102
        %v4927 = vpack.c.b16 %v3111, %v3103
        %v4928 = vpack.c.b16 %v3112, %v3104
        %v4929 = vpack.c.b16 %v3121, %v3113
        %v4930 = vpack.c.b16 %v3122, %v3114
        %v4931 = vpack.c.b16 %v3123, %v3115
        %v4932 = vpack.c.b16 %v3124, %v3116
        %v4933 = vpack.c.b16 %v3125, %v3117
        %v4934 = vpack.c.b16 %v3126, %v3118
        %v4935 = vpack.c.b16 %v3127, %v3119
        %v4936 = vpack.c.b16 %v3128, %v3120
        %v4937 = vpack.c.b16 %v3137, %v3129
        %v4938 = vpack.c.b16 %v3138, %v3130
        %v4939 = vpack.c.b16 %v3139, %v3131
        %v4940 = vpack.c.b16 %v3140, %v3132
        %v4941 = vpack.c.b16 %v3141, %v3133
        %v4942 = vpack.c.b16 %v3142, %v3134
        %v4943 = vpack.c.b16 %v3143, %v3135
        %v4944 = vpack.c.b16 %v3144, %v3136
        %v4945 = vpack.c.b16 %v3153, %v3145
        %v4946 = vpack.c.b16 %v3154, %v3146
        %v4947 = vpack.c.b16 %v3155, %v3147
        %v4948 = vpack.c.b16 %v3156, %v3148
        %v4949 = vpack.c.b16 %v3157, %v3149
        %v4950 = vpack.c.b16 %v3158, %v3150
        %v4951 = vpack.c.b16 %v3159, %v3151
        %v4952 = vpack.c.b16 %v3160, %v3152
        %v4953 = vpack.c.b16 %v3169, %v3161
        %v4954 = vpack.c.b16 %v3170, %v3162
        %v4955 = vpack.c.b16 %v3171, %v3163
        %v4956 = vpack.c.b16 %v3172, %v3164
        %v4957 = vpack.c.b16 %v3173, %v3165
        %v4958 = vpack.c.b16 %v3174, %v3166
        %v4959 = vpack.c.b16 %v3175, %v3167
        %v4960 = vpack.c.b16 %v3176, %v3168
        %v4961 = vpack.c.b16 %v3185, %v3177
        %v4962 = vpack.c.b16 %v3186, %v3178
        %v4963 = vpack.c.b16 %v3187, %v3179
        %v4964 = vpack.c.b16 %v3188, %v3180
        %v4965 = vpack.c.b16 %v3189, %v3181
        %v4966 = vpack.c.b16 %v3190, %v3182
        %v4967 = vpack.c.b16 %v3191, %v3183
        %v4968 = vpack.c.b16 %v3192, %v3184
        %v4969 = vpack.c.b16 %v3201, %v3193
        %v4970 = vpack.c.b16 %v3202, %v3194
        %v4971 = vpack.c.b16 %v3203, %v3195
        %v4972 = vpack.c.b16 %v3204, %v3196
        %v4973 = vpack.c.b16 %v3205, %v3197
        %v4974 = vpack.c.b16 %v3206, %v3198
        %v4975 = vpack.c.b16 %v3207, %v3199
        %v4976 = vpack.c.b16 %v3208, %v3200
        %v4977 = vpack.c.b16 %v3217, %v3209
        %v4978 = vpack.c.b16 %v3218, %v3210
        %v4979 = vpack.c.b16 %v3219, %v3211
        %v4980 = vpack.c.b16 %v3220, %v3212
        %v4981 = vpack.c.b16 %v3221, %v3213
        %v4982 = vpack.c.b16 %v3222, %v3214
        %v4983 = vpack.c.b16 %v3223, %v3215
        %v4984 = vpack.c.b16 %v3224, %v3216
        %v4985 = vpack.c.b16 %v3233, %v3225
        %v4986 = vpack.c.b16 %v3234, %v3226
        %v4987 = vpack.c.b16 %v3235, %v3227
        %v4988 = vpack.c.b16 %v3236, %v3228
        %v4989 = vpack.c.b16 %v3237, %v3229
        %v4990 = vpack.c.b16 %v3238, %v3230
        %v4991 = vpack.c.b16 %v3239, %v3231
        %v4992 = vpack.c.b16 %v3240, %v3232
        %v4993 = vpack.c.b16 %v3249, %v3241
        %v4994 = vpack.c.b16 %v3250, %v3242
        %v4995 = vpack.c.b16 %v3251, %v3243
        %v4996 = vpack.c.b16 %v3252, %v3244
        %v4997 = vpack.c.b16 %v3253, %v3245
        %v4998 = vpack.c.b16 %v3254, %v3246
        %v4999 = vpack.c.b16 %v3255, %v3247
        %v5000 = vpack.c.b16 %v3256, %v3248
        %v5001 = vpack.c.b16 %v3265, %v3257
        %v5002 = vpack.c.b16 %v3266, %v3258
        %v5003 = vpack.c.b16 %v3267, %v3259
        %v5004 = vpack.c.b16 %v3268, %v3260
        %v5005 = vpack.c.b16 %v3269, %v3261
        %v5006 = vpack.c.b16 %v3270, %v3262
        %v5007 = vpack.c.b16 %v3271, %v3263
        %v5008 = vpack.c.b16 %v3272, %v3264
        %v5009 = vpack.c.b16 %v3281, %v3273
        %v5010 = vpack.c.b16 %v3282, %v3274
        %v5011 = vpack.c.b16 %v3283, %v3275
        %v5012 = vpack.c.b16 %v3284, %v3276
        %v5013 = vpack.c.b16 %v3285, %v3277
        %v5014 = vpack.c.b16 %v3286, %v3278
        %v5015 = vpack.c.b16 %v3287, %v3279
        %v5016 = vpack.c.b16 %v3288, %v3280
        %v5017 = vpack.c.b16 %v3297, %v3289
        %v5018 = vpack.c.b16 %v3298, %v3290
        %v5019 = vpack.c.b16 %v3299, %v3291
        %v5020 = vpack.c.b16 %v3300, %v3292
        %v5021 = vpack.c.b16 %v3301, %v3293
        %v5022 = vpack.c.b16 %v3302, %v3294
        %v5023 = vpack.c.b16 %v3303, %v3295
        %v5024 = vpack.c.b16 %v3304, %v3296
        %v5025 = vpack.c.b16 %v3313, %v3305
        %v5026 = vpack.c.b16 %v3314, %v3306
        %v5027 = vpack.c.b16 %v3315, %v3307
        %v5028 = vpack.c.b16 %v3316, %v3308
        %v5029 = vpack.c.b16 %v3317, %v3309
        %v5030 = vpack.c.b16 %v3318, %v3310
        %v5031 = vpack.c.b16 %v3319, %v3311
        %v5032 = vpack.c.b16 %v3320, %v3312
        %v5033 = vpack.c.b16 %v3329, %v3321
        %v5034 = vpack.c.b16 %v3330, %v3322
        %v5035 = vpack.c.b16 %v3331, %v3323
        %v5036 = vpack.c.b16 %v3332, %v3324
        %v5037 = vpack.c.b16 %v3333, %v3325
        %v5038 = vpack.c.b16 %v3334, %v3326
        %v5039 = vpack.c.b16 %v3335, %v3327
        %v5040 = vpack.c.b16 %v3336, %v3328
        %v5041 = vpack.c.b16 %v3345, %v3337
        %v5042 = vpack.c.b16 %v3346, %v3338
        %v5043 = vpack.c.b16 %v3347, %v3339
        %v5044 = vpack.c.b16 %v3348, %v3340
        %v5045 = vpack.c.b16 %v3349, %v3341
        %v5046 = vpack.c.b16 %v3350, %v3342
        %v5047 = vpack.c.b16 %v3351, %v3343
        %v5048 = vpack.c.b16 %v3352, %v3344
        %v5049 = vpack.c.b16 %v3361, %v3353
        %v5050 = vpack.c.b16 %v3362, %v3354
        %v5051 = vpack.c.b16 %v3363, %v3355
        %v5052 = vpack.c.b16 %v3364, %v3356
        %v5053 = vpack.c.b16 %v3365, %v3357
        %v5054 = vpack.c.b16 %v3366, %v3358
        %v5055 = vpack.c.b16 %v3367, %v3359
        %v5056 = vpack.c.b16 %v3368, %v3360
        %v5057 = vpack.c.b16 %v3377, %v3369
        %v5058 = vpack.c.b16 %v3378, %v3370
        %v5059 = vpack.c.b16 %v3379, %v3371
        %v5060 = vpack.c.b16 %v3380, %v3372
        %v5061 = vpack.c.b16 %v3381, %v3373
        %v5062 = vpack.c.b16 %v3382, %v3374
        %v5063 = vpack.c.b16 %v3383, %v3375
        %v5064 = vpack.c.b16 %v3384, %v3376
        %v5065 = vpack.c.b16 %v3393, %v3385
        %v5066 = vpack.c.b16 %v3394, %v3386
        %v5067 = vpack.c.b16 %v3395, %v3387
        %v5068 = vpack.c.b16 %v3396, %v3388
        %v5069 = vpack.c.b16 %v3397, %v3389
        %v5070 = vpack.c.b16 %v3398, %v3390
        %v5071 = vpack.c.b16 %v3399, %v3391
        %v5072 = vpack.c.b16 %v3400, %v3392
        %v5073 = vpack.c.b16 %v3409, %v3401
        %v5074 = vpack.c.b16 %v3410, %v3402
        %v5075 = vpack.c.b16 %v3411, %v3403
        %v5076 = vpack.c.b16 %v3412, %v3404
        %v5077 = vpack.c.b16 %v3413, %v3405
        %v5078 = vpack.c.b16 %v3414, %v3406
        %v5079 = vpack.c.b16 %v3415, %v3407
        %v5080 = vpack.c.b16 %v3416, %v3408
        %v5081 = vpack.c.b16 %v3425, %v3417
        %v5082 = vpack.c.b16 %v3426, %v3418
        %v5083 = vpack.c.b16 %v3427, %v3419
        %v5084 = vpack.c.b16 %v3428, %v3420
        %v5085 = vpack.c.b16 %v3429, %v3421
        %v5086 = vpack.c.b16 %v3430, %v3422
        %v5087 = vpack.c.b16 %v3431, %v3423
        %v5088 = vpack.c.b16 %v3432, %v3424
        %v5089 = vpack.c.b16 %v3441, %v3433
        %v5090 = vpack.c.b16 %v3442, %v3434
        %v5091 = vpack.c.b16 %v3443, %v3435
        %v5092 = vpack.c.b16 %v3444, %v3436
        %v5093 = vpack.c.b16 %v3445, %v3437
        %v5094 = vpack.c.b16 %v3446, %v3438
        %v5095 = vpack.c.b16 %v3447, %v3439
        %v5096 = vpack.c.b16 %v3448, %v3440
        %v5097 = vpack.c.b16 %v3457, %v3449
        %v5098 = vpack.c.b16 %v3458, %v3450
        %v5099 = vpack.c.b16 %v3459, %v3451
        %v5100 = vpack.c.b16 %v3460, %v3452
        %v5101 = vpack.c.b16 %v3461, %v3453
        %v5102 = vpack.c.b16 %v3462, %v3454
        %v5103 = vpack.c.b16 %v3463, %v3455
        %v5104 = vpack.c.b16 %v3464, %v3456
        %v5105 = vpack.c.b16 %v3473, %v3465
        %v5106 = vpack.c.b16 %v3474, %v3466
        %v5107 = vpack.c.b16 %v3475, %v3467
        %v5108 = vpack.c.b16 %v3476, %v3468
        %v5109 = vpack.c.b16 %v3477, %v3469
        %v5110 = vpack.c.b16 %v3478, %v3470
        %v5111 = vpack.c.b16 %v3479, %v3471
        %v5112 = vpack.c.b16 %v3480, %v3472
        %v5113 = vpack.c.b16 %v3489, %v3481
        %v5114 = vpack.c.b16 %v3490, %v3482
        %v5115 = vpack.c.b16 %v3491, %v3483
        %v5116 = vpack.c.b16 %v3492, %v3484
        %v5117 = vpack.c.b16 %v3493, %v3485
        %v5118 = vpack.c.b16 %v3494, %v3486
        %v5119 = vpack.c.b16 %v3495, %v3487
        %v5120 = vpack.c.b16 %v3496, %v3488
        %v5121 = vpack.c.b16 %v3505, %v3497
        %v5122 = vpack.c.b16 %v3506, %v3498
        %v5123 = vpack.c.b16 %v3507, %v3499
        %v5124 = vpack.c.b16 %v3508, %v3500
        %v5125 = vpack.c.b16 %v3509, %v3501
        %v5126 = vpack.c.b16 %v3510, %v3502
        %v5127 = vpack.c.b16 %v3511, %v3503
        %v5128 = vpack.c.b16 %v3512, %v3504
        %v5129 = vpack.c.b16 %v3521, %v3513
        %v5130 = vpack.c.b16 %v3522, %v3514
        %v5131 = vpack.c.b16 %v3523, %v3515
        %v5132 = vpack.c.b16 %v3524, %v3516
        %v5133 = vpack.c.b16 %v3525, %v3517
        %v5134 = vpack.c.b16 %v3526, %v3518
        %v5135 = vpack.c.b16 %v3527, %v3519
        %v5136 = vpack.c.b16 %v3528, %v3520
        %v5137 = vpack.c.b16 %v3537, %v3529
        %v5138 = vpack.c.b16 %v3538, %v3530
        %v5139 = vpack.c.b16 %v3539, %v3531
        %v5140 = vpack.c.b16 %v3540, %v3532
        %v5141 = vpack.c.b16 %v3541, %v3533
        %v5142 = vpack.c.b16 %v3542, %v3534
        %v5143 = vpack.c.b16 %v3543, %v3535
        %v5144 = vpack.c.b16 %v3544, %v3536
        %v5145 = vpack.c.b16 %v3553, %v3545
        %v5146 = vpack.c.b16 %v3554, %v3546
        %v5147 = vpack.c.b16 %v3555, %v3547
        %v5148 = vpack.c.b16 %v3556, %v3548
        %v5149 = vpack.c.b16 %v3557, %v3549
        %v5150 = vpack.c.b16 %v3558, %v3550
        %v5151 = vpack.c.b16 %v3559, %v3551
        %v5152 = vpack.c.b16 %v3560, %v3552
        %v5153 = vpack.c.b16 %v3569, %v3561
        %v5154 = vpack.c.b16 %v3570, %v3562
        %v5155 = vpack.c.b16 %v3571, %v3563
        %v5156 = vpack.c.b16 %v3572, %v3564
        %v5157 = vpack.c.b16 %v3573, %v3565
        %v5158 = vpack.c.b16 %v3574, %v3566
        %v5159 = vpack.c.b16 %v3575, %v3567
        %v5160 = vpack.c.b16 %v3576, %v3568
        %v5161 = vpack.c.b16 %v3585, %v3577
        %v5162 = vpack.c.b16 %v3586, %v3578
        %v5163 = vpack.c.b16 %v3587, %v3579
        %v5164 = vpack.c.b16 %v3588, %v3580
        %v5165 = vpack.c.b16 %v3589, %v3581
        %v5166 = vpack.c.b16 %v3590, %v3582
        %v5167 = vpack.c.b16 %v3591, %v3583
        %v5168 = vpack.c.b16 %v3592, %v3584
        %v5169 = vpack.c.b16 %v3601, %v3593
        %v5170 = vpack.c.b16 %v3602, %v3594
        %v5171 = vpack.c.b16 %v3603, %v3595
        %v5172 = vpack.c.b16 %v3604, %v3596
        %v5173 = vpack.c.b16 %v3605, %v3597
        %v5174 = vpack.c.b16 %v3606, %v3598
        %v5175 = vpack.c.b16 %v3607, %v3599
        %v5176 = vpack.c.b16 %v3608, %v3600
        %v5177 = vpack.c.b16 %v3617, %v3609
        %v5178 = vpack.c.b16 %v3618, %v3610
        %v5179 = vpack.c.b16 %v3619, %v3611
        %v5180 = vpack.c.b16 %v3620, %v3612
        %v5181 = vpack.c.b16 %v3621, %v3613
        %v5182 = vpack.c.b16 %v3622, %v3614
        %v5183 = vpack.c.b16 %v3623, %v3615
        %v5184 = vpack.c.b16 %v3624, %v3616
        %v5185 = vpack.c.b16 %v3633, %v3625
        %v5186 = vpack.c.b16 %v3634, %v3626
        %v5187 = vpack.c.b16 %v3635, %v3627
        %v5188 = vpack.c.b16 %v3636, %v3628
        %v5189 = vpack.c.b16 %v3637, %v3629
        %v5190 = vpack.c.b16 %v3638, %v3630
        %v5191 = vpack.c.b16 %v3639, %v3631
        %v5192 = vpack.c.b16 %v3640, %v3632
        %v5193 = vpack.c.b16 %v3649, %v3641
        %v5194 = vpack.c.b16 %v3650, %v3642
        %v5195 = vpack.c.b16 %v3651, %v3643
        %v5196 = vpack.c.b16 %v3652, %v3644
        %v5197 = vpack.c.b16 %v3653, %v3645
        %v5198 = vpack.c.b16 %v3654, %v3646
        %v5199 = vpack.c.b16 %v3655, %v3647
        %v5200 = vpack.c.b16 %v3656, %v3648
        %v5201 = vpack.c.b16 %v3665, %v3657
        %v5202 = vpack.c.b16 %v3666, %v3658
        %v5203 = vpack.c.b16 %v3667, %v3659
        %v5204 = vpack.c.b16 %v3668, %v3660
        %v5205 = vpack.c.b16 %v3669, %v3661
        %v5206 = vpack.c.b16 %v3670, %v3662
        %v5207 = vpack.c.b16 %v3671, %v3663
        %v5208 = vpack.c.b16 %v3672, %v3664
        %v5209 = vpack.c.b16 %v3681, %v3673
        %v5210 = vpack.c.b16 %v3682, %v3674
        %v5211 = vpack.c.b16 %v3683, %v3675
        %v5212 = vpack.c.b16 %v3684, %v3676
        %v5213 = vpack.c.b16 %v3685, %v3677
        %v5214 = vpack.c.b16 %v3686, %v3678
        %v5215 = vpack.c.b16 %v3687, %v3679
        %v5216 = vpack.c.b16 %v3688, %v3680
        %v5217 = vpack.c.b16 %v3697, %v3689
        %v5218 = vpack.c.b16 %v3698, %v3690
        %v5219 = vpack.c.b16 %v3699, %v3691
        %v5220 = vpack.c.b16 %v3700, %v3692
        %v5221 = vpack.c.b16 %v3701, %v3693
        %v5222 = vpack.c.b16 %v3702, %v3694
        %v5223 = vpack.c.b16 %v3703, %v3695
        %v5224 = vpack.c.b16 %v3704, %v3696
        %v5225 = vpack.c.b16 %v3713, %v3705
        %v5226 = vpack.c.b16 %v3714, %v3706
        %v5227 = vpack.c.b16 %v3715, %v3707
        %v5228 = vpack.c.b16 %v3716, %v3708
        %v5229 = vpack.c.b16 %v3717, %v3709
        %v5230 = vpack.c.b16 %v3718, %v3710
        %v5231 = vpack.c.b16 %v3719, %v3711
        %v5232 = vpack.c.b16 %v3720, %v3712
        %v5233 = vpack.c.b16 %v3729, %v3721
        %v5234 = vpack.c.b16 %v3730, %v3722
        %v5235 = vpack.c.b16 %v3731, %v3723
        %v5236 = vpack.c.b16 %v3732, %v3724
        %v5237 = vpack.c.b16 %v3733, %v3725
        %v5238 = vpack.c.b16 %v3734, %v3726
        %v5239 = vpack.c.b16 %v3735, %v3727
        %v5240 = vpack.c.b16 %v3736, %v3728
        %v5241 = vpack.c.b16 %v3745, %v3737
        %v5242 = vpack.c.b16 %v3746, %v3738
        %v5243 = vpack.c.b16 %v3747, %v3739
        %v5244 = vpack.c.b16 %v3748, %v3740
        %v5245 = vpack.c.b16 %v3749, %v3741
        %v5246 = vpack.c.b16 %v3750, %v3742
        %v5247 = vpack.c.b16 %v3751, %v3743
        %v5248 = vpack.c.b16 %v3752, %v3744
        %v5249 = vpack.c.b16 %v3761, %v3753
        %v5250 = vpack.c.b16 %v3762, %v3754
        %v5251 = vpack.c.b16 %v3763, %v3755
        %v5252 = vpack.c.b16 %v3764, %v3756
        %v5253 = vpack.c.b16 %v3765, %v3757
        %v5254 = vpack.c.b16 %v3766, %v3758
        %v5255 = vpack.c.b16 %v3767, %v3759
        %v5256 = vpack.c.b16 %v3768, %v3760
        %v5257 = vpack.c.b16 %v3777, %v3769
        %v5258 = vpack.c.b16 %v3778, %v3770
        %v5259 = vpack.c.b16 %v3779, %v3771
        %v5260 = vpack.c.b16 %v3780, %v3772
        %v5261 = vpack.c.b16 %v3781, %v3773
        %v5262 = vpack.c.b16 %v3782, %v3774
        %v5263 = vpack.c.b16 %v3783, %v3775
        %v5264 = vpack.c.b16 %v3784, %v3776
        %v5265 = vpack.c.b16 %v3793, %v3785
        %v5266 = vpack.c.b16 %v3794, %v3786
        %v5267 = vpack.c.b16 %v3795, %v3787
        %v5268 = vpack.c.b16 %v3796, %v3788
        %v5269 = vpack.c.b16 %v3797, %v3789
        %v5270 = vpack.c.b16 %v3798, %v3790
        %v5271 = vpack.c.b16 %v3799, %v3791
        %v5272 = vpack.c.b16 %v3800, %v3792
        %v5273 = vpack.c.b16 %v3809, %v3801
        %v5274 = vpack.c.b16 %v3810, %v3802
        %v5275 = vpack.c.b16 %v3811, %v3803
        %v5276 = vpack.c.b16 %v3812, %v3804
        %v5277 = vpack.c.b16 %v3813, %v3805
        %v5278 = vpack.c.b16 %v3814, %v3806
        %v5279 = vpack.c.b16 %v3815, %v3807
        %v5280 = vpack.c.b16 %v3816, %v3808
        %v5281 = vpack.c.b16 %v3825, %v3817
        %v5282 = vpack.c.b16 %v3826, %v3818
        %v5283 = vpack.c.b16 %v3827, %v3819
        %v5284 = vpack.c.b16 %v3828, %v3820
        %v5285 = vpack.c.b16 %v3829, %v3821
        %v5286 = vpack.c.b16 %v3830, %v3822
        %v5287 = vpack.c.b16 %v3831, %v3823
        %v5288 = vpack.c.b16 %v3832, %v3824
        %v5289 = vpack.c.b16 %v3841, %v3833
        %v5290 = vpack.c.b16 %v3842, %v3834
        %v5291 = vpack.c.b16 %v3843, %v3835
        %v5292 = vpack.c.b16 %v3844, %v3836
        %v5293 = vpack.c.b16 %v3845, %v3837
        %v5294 = vpack.c.b16 %v3846, %v3838
        %v5295 = vpack.c.b16 %v3847, %v3839
        %v5296 = vpack.c.b16 %v3848, %v3840
        %v5297 = vpack.c.b16 %v3857, %v3849
        %v5298 = vpack.c.b16 %v3858, %v3850
        %v5299 = vpack.c.b16 %v3859, %v3851
        %v5300 = vpack.c.b16 %v3860, %v3852
        %v5301 = vpack.c.b16 %v3861, %v3853
        %v5302 = vpack.c.b16 %v3862, %v3854
        %v5303 = vpack.c.b16 %v3863, %v3855
        %v5304 = vpack.c.b16 %v3864, %v3856
        %v5305 = vpack.c.b16 %v3873, %v3865
        %v5306 = vpack.c.b16 %v3874, %v3866
        %v5307 = vpack.c.b16 %v3875, %v3867
        %v5308 = vpack.c.b16 %v3876, %v3868
        %v5309 = vpack.c.b16 %v3877, %v3869
        %v5310 = vpack.c.b16 %v3878, %v3870
        %v5311 = vpack.c.b16 %v3879, %v3871
        %v5312 = vpack.c.b16 %v3880, %v3872
        %v5313 = vpack.c.b16 %v3889, %v3881
        %v5314 = vpack.c.b16 %v3890, %v3882
        %v5315 = vpack.c.b16 %v3891, %v3883
        %v5316 = vpack.c.b16 %v3892, %v3884
        %v5317 = vpack.c.b16 %v3893, %v3885
        %v5318 = vpack.c.b16 %v3894, %v3886
        %v5319 = vpack.c.b16 %v3895, %v3887
        %v5320 = vpack.c.b16 %v3896, %v3888
        %v5321 = vpack.c.b16 %v3905, %v3897
        %v5322 = vpack.c.b16 %v3906, %v3898
        %v5323 = vpack.c.b16 %v3907, %v3899
        %v5324 = vpack.c.b16 %v3908, %v3900
        %v5325 = vpack.c.b16 %v3909, %v3901
        %v5326 = vpack.c.b16 %v3910, %v3902
        %v5327 = vpack.c.b16 %v3911, %v3903
        %v5328 = vpack.c.b16 %v3912, %v3904
        %v5329 = vpack.c.b16 %v3921, %v3913
        %v5330 = vpack.c.b16 %v3922, %v3914
        %v5331 = vpack.c.b16 %v3923, %v3915
        %v5332 = vpack.c.b16 %v3924, %v3916
        %v5333 = vpack.c.b16 %v3925, %v3917
        %v5334 = vpack.c.b16 %v3926, %v3918
        %v5335 = vpack.c.b16 %v3927, %v3919
        %v5336 = vpack.c.b16 %v3928, %v3920
        %v5337 = vpack.c.b16 %v3937, %v3929
        %v5338 = vpack.c.b16 %v3938, %v3930
        %v5339 = vpack.c.b16 %v3939, %v3931
        %v5340 = vpack.c.b16 %v3940, %v3932
        %v5341 = vpack.c.b16 %v3941, %v3933
        %v5342 = vpack.c.b16 %v3942, %v3934
        %v5343 = vpack.c.b16 %v3943, %v3935
        %v5344 = vpack.c.b16 %v3944, %v3936
        %v5345 = vpack.c.b16 %v3953, %v3945
        %v5346 = vpack.c.b16 %v3954, %v3946
        %v5347 = vpack.c.b16 %v3955, %v3947
        %v5348 = vpack.c.b16 %v3956, %v3948
        %v5349 = vpack.c.b16 %v3957, %v3949
        %v5350 = vpack.c.b16 %v3958, %v3950
        %v5351 = vpack.c.b16 %v3959, %v3951
        %v5352 = vpack.c.b16 %v3960, %v3952
        %v5353 = vpack.c.b16 %v3969, %v3961
        %v5354 = vpack.c.b16 %v3970, %v3962
        %v5355 = vpack.c.b16 %v3971, %v3963
        %v5356 = vpack.c.b16 %v3972, %v3964
        %v5357 = vpack.c.b16 %v3973, %v3965
        %v5358 = vpack.c.b16 %v3974, %v3966
        %v5359 = vpack.c.b16 %v3975, %v3967
        %v5360 = vpack.c.b16 %v3976, %v3968
        %v5361 = vpack.c.b16 %v3985, %v3977
        %v5362 = vpack.c.b16 %v3986, %v3978
        %v5363 = vpack.c.b16 %v3987, %v3979
        %v5364 = vpack.c.b16 %v3988, %v3980
        %v5365 = vpack.c.b16 %v3989, %v3981
        %v5366 = vpack.c.b16 %v3990, %v3982
        %v5367 = vpack.c.b16 %v3991, %v3983
        %v5368 = vpack.c.b16 %v3992, %v3984
        %v5369 = vpack.c.b16 %v4001, %v3993
        %v5370 = vpack.c.b16 %v4002, %v3994
        %v5371 = vpack.c.b16 %v4003, %v3995
        %v5372 = vpack.c.b16 %v4004, %v3996
        %v5373 = vpack.c.b16 %v4005, %v3997
        %v5374 = vpack.c.b16 %v4006, %v3998
        %v5375 = vpack.c.b16 %v4007, %v3999
        %v5376 = vpack.c.b16 %v4008, %v4000
        %v5377 = vpack.c.b16 %v4017, %v4009
        %v5378 = vpack.c.b16 %v4018, %v4010
        %v5379 = vpack.c.b16 %v4019, %v4011
        %v5380 = vpack.c.b16 %v4020, %v4012
        %v5381 = vpack.c.b16 %v4021, %v4013
        %v5382 = vpack.c.b16 %v4022, %v4014
        %v5383 = vpack.c.b16 %v4023, %v4015
        %v5384 = vpack.c.b16 %v4024, %v4016
        %v5385 = vpack.c.b16 %v4033, %v4025
        %v5386 = vpack.c.b16 %v4034, %v4026
        %v5387 = vpack.c.b16 %v4035, %v4027
        %v5388 = vpack.c.b16 %v4036, %v4028
        %v5389 = vpack.c.b16 %v4037, %v4029
        %v5390 = vpack.c.b16 %v4038, %v4030
        %v5391 = vpack.c.b16 %v4039, %v4031
        %v5392 = vpack.c.b16 %v4040, %v4032
        %v5393 = vpack.c.b16 %v4049, %v4041
        %v5394 = vpack.c.b16 %v4050, %v4042
        %v5395 = vpack.c.b16 %v4051, %v4043
        %v5396 = vpack.c.b16 %v4052, %v4044
        %v5397 = vpack.c.b16 %v4053, %v4045
        %v5398 = vpack.c.b16 %v4054, %v4046
        %v5399 = vpack.c.b16 %v4055, %v4047
        %v5400 = vpack.c.b16 %v4056, %v4048
        %v5401 = vpack.c.b16 %v4065, %v4057
        %v5402 = vpack.c.b16 %v4066, %v4058
        %v5403 = vpack.c.b16 %v4067, %v4059
        %v5404 = vpack.c.b16 %v4068, %v4060
        %v5405 = vpack.c.b16 %v4069, %v4061
        %v5406 = vpack.c.b16 %v4070, %v4062
        %v5407 = vpack.c.b16 %v4071, %v4063
        %v5408 = vpack.c.b16 %v4072, %v4064
        %v5409 = vpack.c.b16 %v4081, %v4073
        %v5410 = vpack.c.b16 %v4082, %v4074
        %v5411 = vpack.c.b16 %v4083, %v4075
        %v5412 = vpack.c.b16 %v4084, %v4076
        %v5413 = vpack.c.b16 %v4085, %v4077
        %v5414 = vpack.c.b16 %v4086, %v4078
        %v5415 = vpack.c.b16 %v4087, %v4079
        %v5416 = vpack.c.b16 %v4088, %v4080
        %v5417 = vpack.c.b16 %v4097, %v4089
        %v5418 = vpack.c.b16 %v4098, %v4090
        %v5419 = vpack.c.b16 %v4099, %v4091
        %v5420 = vpack.c.b16 %v4100, %v4092
        %v5421 = vpack.c.b16 %v4101, %v4093
        %v5422 = vpack.c.b16 %v4102, %v4094
        %v5423 = vpack.c.b16 %v4103, %v4095
        %v5424 = vpack.c.b16 %v4104, %v4096
        %v5425 = vpack.c.b16 %v4113, %v4105
        %v5426 = vpack.c.b16 %v4114, %v4106
        %v5427 = vpack.c.b16 %v4115, %v4107
        %v5428 = vpack.c.b16 %v4116, %v4108
        %v5429 = vpack.c.b16 %v4117, %v4109
        %v5430 = vpack.c.b16 %v4118, %v4110
        %v5431 = vpack.c.b16 %v4119, %v4111
        %v5432 = vpack.c.b16 %v4120, %v4112
        %v5433 = vpack.c.b16 %v4129, %v4121
        %v5434 = vpack.c.b16 %v4130, %v4122
        %v5435 = vpack.c.b16 %v4131, %v4123
        %v5436 = vpack.c.b16 %v4132, %v4124
        %v5437 = vpack.c.b16 %v4133, %v4125
        %v5438 = vpack.c.b16 %v4134, %v4126
        %v5439 = vpack.c.b16 %v4135, %v4127
        %v5440 = vpack.c.b16 %v4136, %v4128
        %v5441 = vpack.c.b16 %v4145, %v4137
        %v5442 = vpack.c.b16 %v4146, %v4138
        %v5443 = vpack.c.b16 %v4147, %v4139
        %v5444 = vpack.c.b16 %v4148, %v4140
        %v5445 = vpack.c.b16 %v4149, %v4141
        %v5446 = vpack.c.b16 %v4150, %v4142
        %v5447 = vpack.c.b16 %v4151, %v4143
        %v5448 = vpack.c.b16 %v4152, %v4144
        %v5449 = vpack.c.b16 %v4161, %v4153
        %v5450 = vpack.c.b16 %v4162, %v4154
        %v5451 = vpack.c.b16 %v4163, %v4155
        %v5452 = vpack.c.b16 %v4164, %v4156
        %v5453 = vpack.c.b16 %v4165, %v4157
        %v5454 = vpack.c.b16 %v4166, %v4158
        %v5455 = vpack.c.b16 %v4167, %v4159
        %v5456 = vpack.c.b16 %v4168, %v4160
        %v5457 = vpack.c.b16 %v4177, %v4169
        %v5458 = vpack.c.b16 %v4178, %v4170
        %v5459 = vpack.c.b16 %v4179, %v4171
        %v5460 = vpack.c.b16 %v4180, %v4172
        %v5461 = vpack.c.b16 %v4181, %v4173
        %v5462 = vpack.c.b16 %v4182, %v4174
        %v5463 = vpack.c.b16 %v4183, %v4175
        %v5464 = vpack.c.b16 %v4184, %v4176
        %v5465 = vpack.c.b16 %v4193, %v4185
        %v5466 = vpack.c.b16 %v4194, %v4186
        %v5467 = vpack.c.b16 %v4195, %v4187
        %v5468 = vpack.c.b16 %v4196, %v4188
        %v5469 = vpack.c.b16 %v4197, %v4189
        %v5470 = vpack.c.b16 %v4198, %v4190
        %v5471 = vpack.c.b16 %v4199, %v4191
        %v5472 = vpack.c.b16 %v4200, %v4192
        %v5473 = vpack.c.b16 %v4209, %v4201
        %v5474 = vpack.c.b16 %v4210, %v4202
        %v5475 = vpack.c.b16 %v4211, %v4203
        %v5476 = vpack.c.b16 %v4212, %v4204
        %v5477 = vpack.c.b16 %v4213, %v4205
        %v5478 = vpack.c.b16 %v4214, %v4206
        %v5479 = vpack.c.b16 %v4215, %v4207
        %v5480 = vpack.c.b16 %v4216, %v4208
        %v5481 = vpack.c.b16 %v4225, %v4217
        %v5482 = vpack.c.b16 %v4226, %v4218
        %v5483 = vpack.c.b16 %v4227, %v4219
        %v5484 = vpack.c.b16 %v4228, %v4220
        %v5485 = vpack.c.b16 %v4229, %v4221
        %v5486 = vpack.c.b16 %v4230, %v4222
        %v5487 = vpack.c.b16 %v4231, %v4223
        %v5488 = vpack.c.b16 %v4232, %v4224
        %v5489 = vpack.c.b16 %v4241, %v4233
        %v5490 = vpack.c.b16 %v4242, %v4234
        %v5491 = vpack.c.b16 %v4243, %v4235
        %v5492 = vpack.c.b16 %v4244, %v4236
        %v5493 = vpack.c.b16 %v4245, %v4237
        %v5494 = vpack.c.b16 %v4246, %v4238
        %v5495 = vpack.c.b16 %v4247, %v4239
        %v5496 = vpack.c.b16 %v4248, %v4240
        %v5497 = vpack.c.b16 %v4257, %v4249
        %v5498 = vpack.c.b16 %v4258, %v4250
        %v5499 = vpack.c.b16 %v4259, %v4251
        %v5500 = vpack.c.b16 %v4260, %v4252
        %v5501 = vpack.c.b16 %v4261, %v4253
        %v5502 = vpack.c.b16 %v4262, %v4254
        %v5503 = vpack.c.b16 %v4263, %v4255
        %v5504 = vpack.c.b16 %v4264, %v4256
        %v5505 = vpack.c.b16 %v4273, %v4265
        %v5506 = vpack.c.b16 %v4274, %v4266
        %v5507 = vpack.c.b16 %v4275, %v4267
        %v5508 = vpack.c.b16 %v4276, %v4268
        %v5509 = vpack.c.b16 %v4277, %v4269
        %v5510 = vpack.c.b16 %v4278, %v4270
        %v5511 = vpack.c.b16 %v4279, %v4271
        %v5512 = vpack.c.b16 %v4280, %v4272
        %v5513 = vpack.c.b16 %v4289, %v4281
        %v5514 = vpack.c.b16 %v4290, %v4282
        %v5515 = vpack.c.b16 %v4291, %v4283
        %v5516 = vpack.c.b16 %v4292, %v4284
        %v5517 = vpack.c.b16 %v4293, %v4285
        %v5518 = vpack.c.b16 %v4294, %v4286
        %v5519 = vpack.c.b16 %v4295, %v4287
        %v5520 = vpack.c.b16 %v4296, %v4288
        %v5521 = vpack.c.b16 %v4305, %v4297
        %v5522 = vpack.c.b16 %v4306, %v4298
        %v5523 = vpack.c.b16 %v4307, %v4299
        %v5524 = vpack.c.b16 %v4308, %v4300
        %v5525 = vpack.c.b16 %v4309, %v4301
        %v5526 = vpack.c.b16 %v4310, %v4302
        %v5527 = vpack.c.b16 %v4311, %v4303
        %v5528 = vpack.c.b16 %v4312, %v4304
        %v5529 = vpack.c.b16 %v4321, %v4313
        %v5530 = vpack.c.b16 %v4322, %v4314
        %v5531 = vpack.c.b16 %v4323, %v4315
        %v5532 = vpack.c.b16 %v4324, %v4316
        %v5533 = vpack.c.b16 %v4325, %v4317
        %v5534 = vpack.c.b16 %v4326, %v4318
        %v5535 = vpack.c.b16 %v4327, %v4319
        %v5536 = vpack.c.b16 %v4328, %v4320
        %v5537 = vpack.c.b16 %v4337, %v4329
        %v5538 = vpack.c.b16 %v4338, %v4330
        %v5539 = vpack.c.b16 %v4339, %v4331
        %v5540 = vpack.c.b16 %v4340, %v4332
        %v5541 = vpack.c.b16 %v4341, %v4333
        %v5542 = vpack.c.b16 %v4342, %v4334
        %v5543 = vpack.c.b16 %v4343, %v4335
        %v5544 = vpack.c.b16 %v4344, %v4336
        %v5545 = vpack.c.b16 %v4353, %v4345
        %v5546 = vpack.c.b16 %v4354, %v4346
        %v5547 = vpack.c.b16 %v4355, %v4347
        %v5548 = vpack.c.b16 %v4356, %v4348
        %v5549 = vpack.c.b16 %v4357, %v4349
        %v5550 = vpack.c.b16 %v4358, %v4350
        %v5551 = vpack.c.b16 %v4359, %v4351
        %v5552 = vpack.c.b16 %v4360, %v4352
        %v5553 = vpack.c.b16 %v4369, %v4361
        %v5554 = vpack.c.b16 %v4370, %v4362
        %v5555 = vpack.c.b16 %v4371, %v4363
        %v5556 = vpack.c.b16 %v4372, %v4364
        %v5557 = vpack.c.b16 %v4373, %v4365
        %v5558 = vpack.c.b16 %v4374, %v4366
        %v5559 = vpack.c.b16 %v4375, %v4367
        %v5560 = vpack.c.b16 %v4376, %v4368
        %v5561 = vpack.c.b16 %v4385, %v4377
        %v5562 = vpack.c.b16 %v4386, %v4378
        %v5563 = vpack.c.b16 %v4387, %v4379
        %v5564 = vpack.c.b16 %v4388, %v4380
        %v5565 = vpack.c.b16 %v4389, %v4381
        %v5566 = vpack.c.b16 %v4390, %v4382
        %v5567 = vpack.c.b16 %v4391, %v4383
        %v5568 = vpack.c.b16 %v4392, %v4384
        %v5569 = vpack.c.b16 %v4401, %v4393
        %v5570 = vpack.c.b16 %v4402, %v4394
        %v5571 = vpack.c.b16 %v4403, %v4395
        %v5572 = vpack.c.b16 %v4404, %v4396
        %v5573 = vpack.c.b16 %v4405, %v4397
        %v5574 = vpack.c.b16 %v4406, %v4398
        %v5575 = vpack.c.b16 %v4407, %v4399
        %v5576 = vpack.c.b16 %v4408, %v4400
        %v5577 = vpack.c.b16 %v4417, %v4409
        %v5578 = vpack.c.b16 %v4418, %v4410
        %v5579 = vpack.c.b16 %v4419, %v4411
        %v5580 = vpack.c.b16 %v4420, %v4412
        %v5581 = vpack.c.b16 %v4421, %v4413
        %v5582 = vpack.c.b16 %v4422, %v4414
        %v5583 = vpack.c.b16 %v4423, %v4415
        %v5584 = vpack.c.b16 %v4424, %v4416
        %v5585 = vpack.c.b16 %v4433, %v4425
        %v5586 = vpack.c.b16 %v4434, %v4426
        %v5587 = vpack.c.b16 %v4435, %v4427
        %v5588 = vpack.c.b16 %v4436, %v4428
        %v5589 = vpack.c.b16 %v4437, %v4429
        %v5590 = vpack.c.b16 %v4438, %v4430
        %v5591 = vpack.c.b16 %v4439, %v4431
        %v5592 = vpack.c.b16 %v4440, %v4432
        %v5593 = vpack.c.b16 %v4449, %v4441
        %v5594 = vpack.c.b16 %v4450, %v4442
        %v5595 = vpack.c.b16 %v4451, %v4443
        %v5596 = vpack.c.b16 %v4452, %v4444
        %v5597 = vpack.c.b16 %v4453, %v4445
        %v5598 = vpack.c.b16 %v4454, %v4446
        %v5599 = vpack.c.b16 %v4455, %v4447
        %v5600 = vpack.c.b16 %v4456, %v4448
        %v5601 = vpack.c.b16 %v4465, %v4457
        %v5602 = vpack.c.b16 %v4466, %v4458
        %v5603 = vpack.c.b16 %v4467, %v4459
        %v5604 = vpack.c.b16 %v4468, %v4460
        %v5605 = vpack.c.b16 %v4469, %v4461
        %v5606 = vpack.c.b16 %v4470, %v4462
        %v5607 = vpack.c.b16 %v4471, %v4463
        %v5608 = vpack.c.b16 %v4472, %v4464
        %v5609 = vpack.c.b16 %v4481, %v4473
        %v5610 = vpack.c.b16 %v4482, %v4474
        %v5611 = vpack.c.b16 %v4483, %v4475
        %v5612 = vpack.c.b16 %v4484, %v4476
        %v5613 = vpack.c.b16 %v4485, %v4477
        %v5614 = vpack.c.b16 %v4486, %v4478
        %v5615 = vpack.c.b16 %v4487, %v4479
        %v5616 = vpack.c.b16 %v4488, %v4480
        %v5617 = vpack.c.b16 %v4497, %v4489
        %v5618 = vpack.c.b16 %v4498, %v4490
        %v5619 = vpack.c.b16 %v4499, %v4491
        %v5620 = vpack.c.b16 %v4500, %v4492
        %v5621 = vpack.c.b16 %v4501, %v4493
        %v5622 = vpack.c.b16 %v4502, %v4494
        %v5623 = vpack.c.b16 %v4503, %v4495
        %v5624 = vpack.c.b16 %v4504, %v4496
        %v5625 = vpack.c.b16 %v4513, %v4505
        %v5626 = vpack.c.b16 %v4514, %v4506
        %v5627 = vpack.c.b16 %v4515, %v4507
        %v5628 = vpack.c.b16 %v4516, %v4508
        %v5629 = vpack.c.b16 %v4517, %v4509
        %v5630 = vpack.c.b16 %v4518, %v4510
        %v5631 = vpack.c.b16 %v4519, %v4511
        %v5632 = vpack.c.b16 %v4520, %v4512
        %v5633 = vpack.c.b16 %v4529, %v4521
        %v5634 = vpack.c.b16 %v4530, %v4522
        %v5635 = vpack.c.b16 %v4531, %v4523
        %v5636 = vpack.c.b16 %v4532, %v4524
        %v5637 = vpack.c.b16 %v4533, %v4525
        %v5638 = vpack.c.b16 %v4534, %v4526
        %v5639 = vpack.c.b16 %v4535, %v4527
        %v5640 = vpack.c.b16 %v4536, %v4528
        %v5641 = vpack.c.b16 %v4545, %v4537
        %v5642 = vpack.c.b16 %v4546, %v4538
        %v5643 = vpack.c.b16 %v4547, %v4539
        %v5644 = vpack.c.b16 %v4548, %v4540
        %v5645 = vpack.c.b16 %v4549, %v4541
        %v5646 = vpack.c.b16 %v4550, %v4542
        %v5647 = vpack.c.b16 %v4551, %v4543
        %v5648 = vpack.c.b16 %v4552, %v4544
        %v5649 = vpack.c.b16 %v4561, %v4553
        %v5650 = vpack.c.b16 %v4562, %v4554
        %v5651 = vpack.c.b16 %v4563, %v4555
        %v5652 = vpack.c.b16 %v4564, %v4556
        %v5653 = vpack.c.b16 %v4565, %v4557
        %v5654 = vpack.c.b16 %v4566, %v4558
        %v5655 = vpack.c.b16 %v4567, %v4559
        %v5656 = vpack.c.b16 %v4568, %v4560
        %v5657 = vpack.c.b16 %v4577, %v4569
        %v5658 = vpack.c.b16 %v4578, %v4570
        %v5659 = vpack.c.b16 %v4579, %v4571
        %v5660 = vpack.c.b16 %v4580, %v4572
        %v5661 = vpack.c.b16 %v4581, %v4573
        %v5662 = vpack.c.b16 %v4582, %v4574
        %v5663 = vpack.c.b16 %v4583, %v4575
        %v5664 = vpack.c.b16 %v4584, %v4576
        %v5665 = vpack.c.b16 %v4593, %v4585
        %v5666 = vpack.c.b16 %v4594, %v4586
        %v5667 = vpack.c.b16 %v4595, %v4587
        %v5668 = vpack.c.b16 %v4596, %v4588
        %v5669 = vpack.c.b16 %v4597, %v4589
        %v5670 = vpack.c.b16 %v4598, %v4590
        %v5671 = vpack.c.b16 %v4599, %v4591
        %v5672 = vpack.c.b16 %v4600, %v4592
        %v5673 = vpack.c.b16 %v4609, %v4601
        %v5674 = vpack.c.b16 %v4610, %v4602
        %v5675 = vpack.c.b16 %v4611, %v4603
        %v5676 = vpack.c.b16 %v4612, %v4604
        %v5677 = vpack.c.b16 %v4613, %v4605
        %v5678 = vpack.c.b16 %v4614, %v4606
        %v5679 = vpack.c.b16 %v4615, %v4607
        %v5680 = vpack.c.b16 %v4616, %v4608
        %v5681 = vpack.c.b16 %v4625, %v4617
        %v5682 = vpack.c.b16 %v4626, %v4618
        %v5683 = vpack.c.b16 %v4627, %v4619
        %v5684 = vpack.c.b16 %v4628, %v4620
        %v5685 = vpack.c.b16 %v4629, %v4621
        %v5686 = vpack.c.b16 %v4630, %v4622
        %v5687 = vpack.c.b16 %v4631, %v4623
        %v5688 = vpack.c.b16 %v4632, %v4624
        %v5689 = vpack.c.b16 %v4641, %v4633
        %v5690 = vpack.c.b16 %v4642, %v4634
        %v5691 = vpack.c.b16 %v4643, %v4635
        %v5692 = vpack.c.b16 %v4644, %v4636
        %v5693 = vpack.c.b16 %v4645, %v4637
        %v5694 = vpack.c.b16 %v4646, %v4638
        %v5695 = vpack.c.b16 %v4647, %v4639
        %v5696 = vpack.c.b16 %v4648, %v4640
        %v5697 = vpack.c.b16 %v4657, %v4649
        %v5698 = vpack.c.b16 %v4658, %v4650
        %v5699 = vpack.c.b16 %v4659, %v4651
        %v5700 = vpack.c.b16 %v4660, %v4652
        %v5701 = vpack.c.b16 %v4661, %v4653
        %v5702 = vpack.c.b16 %v4662, %v4654
        %v5703 = vpack.c.b16 %v4663, %v4655
        %v5704 = vpack.c.b16 %v4664, %v4656
        %v5705 = vpack.c.b16 %v4673, %v4665
        %v5706 = vpack.c.b16 %v4674, %v4666
        %v5707 = vpack.c.b16 %v4675, %v4667
        %v5708 = vpack.c.b16 %v4676, %v4668
        %v5709 = vpack.c.b16 %v4677, %v4669
        %v5710 = vpack.c.b16 %v4678, %v4670
        %v5711 = vpack.c.b16 %v4679, %v4671
        %v5712 = vpack.c.b16 %v4680, %v4672
        %v5713 = vpack.c.b16 %v4689, %v4681
        %v5714 = vpack.c.b16 %v4690, %v4682
        %v5715 = vpack.c.b16 %v4691, %v4683
        %v5716 = vpack.c.b16 %v4692, %v4684
        %v5717 = vpack.c.b16 %v4693, %v4685
        %v5718 = vpack.c.b16 %v4694, %v4686
        %v5719 = vpack.c.b16 %v4695, %v4687
        %v5720 = vpack.c.b16 %v4696, %v4688
        %6745 = vmatprep.subr.bf16.mxu0 %v4754
        %6746 = vmatpush1.bf16.msra.mxu0 %v4753
        %6747 = vmatprep.subr.bf16.mxu0 %v4746
        %6748 = vmatpush1.bf16.msra.mxu0 %v4745
        %6749 = vmatprep.subr.bf16.mxu0 %v4738
        %6750 = vmatpush1.bf16.msra.mxu0 %v4737
        %6751 = vmatprep.subr.bf16.mxu0 %v4730
        %6752 = vmatpush1.bf16.msra.mxu0 %v4729
        %6753 = vmatprep.subr.bf16.mxu0 %v4722
        %6754 = vmatpush1.bf16.msra.mxu0 %v4721
        %6755 = vmatprep.subr.bf16.mxu0 %v4714
        %6756 = vmatpush1.bf16.msra.mxu0 %v4713
        %6757 = vmatprep.subr.bf16.mxu0 %v4706
        %6758 = vmatpush1.bf16.msra.mxu0 %v4705
        %6759 = vmatprep.subr.bf16.mxu0 %v4698
        %6760 = vmatpush1.bf16.msra.mxu0 %v4697
        %6761 = vmatprep.subr.bf16.mxu0 %v4818
        %6762 = vmatpush2.bf16.msra.mxu0 %v4817
        %6763 = vmatprep.subr.bf16.mxu0 %v4810
        %6764 = vmatpush2.bf16.msra.mxu0 %v4809
        %6765 = vmatprep.subr.bf16.mxu0 %v4802
        %6766 = vmatpush2.bf16.msra.mxu0 %v4801
        %6767 = vmatprep.subr.bf16.mxu0 %v4794
        %6768 = vmatpush2.bf16.msra.mxu0 %v4793
        %6769 = vmatprep.subr.bf16.mxu0 %v4786
        %6770 = vmatpush2.bf16.msra.mxu0 %v4785
        %6771 = vmatprep.subr.bf16.mxu0 %v4778
        %6772 = vmatpush2.bf16.msra.mxu0 %v4777
        %6773 = vmatprep.subr.bf16.mxu0 %v4770
        %6774 = vmatpush2.bf16.msra.mxu0 %v4769
        %6775 = vmatprep.subr.bf16.mxu0 %v4762
        %6776 = vmatpush2.bf16.msra.mxu0 %v4761
        %6777 = vmatprep.mubr.bf16.mxu0 %v528
        %6778 = vmatmul.mubr.bf16.gmra.mxu0 %v527
        %v6779 = vpop.f32.mrf.mxu0
        %v6780 = vadd.f32 %v1588, %v6779
        %v6781 = vpop.f32.mrf.mxu0
        %v6782 = vadd.f32 %v1592, %v6781
        %v6783 = vpop.f32.mrf.mxu0
        %v6784 = vadd.f32 %v1588, %v6783
        %v6785 = vpop.f32.mrf.mxu0
        %v6786 = vadd.f32 %v1592, %v6785
        %6787 = vmatprep.mubr.bf16.mxu0 %v544
        %6788 = vmatmul.mubr.bf16.gmra.mxu0 %v543
        %v6789 = vpop.f32.mrf.mxu0
        %v6790 = vadd.f32 %v1588, %v6789
        %v6791 = vpop.f32.mrf.mxu0
        %v6792 = vadd.f32 %v1592, %v6791
        %v6793 = vpop.f32.mrf.mxu0
        %v6794 = vadd.f32 %v1588, %v6793
        %v6795 = vpop.f32.mrf.mxu0
        %v6796 = vadd.f32 %v1592, %v6795
        %6797 = vdwg.mxu0
        %6798 = vmatprep.subr.bf16.mxu0 %v4882
        %6799 = vmatpush1.bf16.msra.mxu0 %v4881
        %6800 = vmatprep.subr.bf16.mxu0 %v4874
        %6801 = vmatpush1.bf16.msra.mxu0 %v4873
        %6802 = vmatprep.subr.bf16.mxu0 %v4866
        %6803 = vmatpush1.bf16.msra.mxu0 %v4865
        %6804 = vmatprep.subr.bf16.mxu0 %v4858
        %6805 = vmatpush1.bf16.msra.mxu0 %v4857
        %6806 = vmatprep.subr.bf16.mxu0 %v4850
        %6807 = vmatpush1.bf16.msra.mxu0 %v4849
        %6808 = vmatprep.subr.bf16.mxu0 %v4842
        %6809 = vmatpush1.bf16.msra.mxu0 %v4841
        %6810 = vmatprep.subr.bf16.mxu0 %v4834
        %6811 = vmatpush1.bf16.msra.mxu0 %v4833
        %6812 = vmatprep.subr.bf16.mxu0 %v4826
        %6813 = vmatpush1.bf16.msra.mxu0 %v4825
        %6814 = vmatprep.subr.bf16.mxu0 %v4946
        %6815 = vmatpush2.bf16.msra.mxu0 %v4945
        %6816 = vmatprep.subr.bf16.mxu0 %v4938
        %6817 = vmatpush2.bf16.msra.mxu0 %v4937
        %6818 = vmatprep.subr.bf16.mxu0 %v4930
        %6819 = vmatpush2.bf16.msra.mxu0 %v4929
        %6820 = vmatprep.subr.bf16.mxu0 %v4922
        %6821 = vmatpush2.bf16.msra.mxu0 %v4921
        %6822 = vmatprep.subr.bf16.mxu0 %v4914
        %6823 = vmatpush2.bf16.msra.mxu0 %v4913
        %6824 = vmatprep.subr.bf16.mxu0 %v4906
        %6825 = vmatpush2.bf16.msra.mxu0 %v4905
        %6826 = vmatprep.subr.bf16.mxu0 %v4898
        %6827 = vmatpush2.bf16.msra.mxu0 %v4897
        %6828 = vmatprep.subr.bf16.mxu0 %v4890
        %6829 = vmatpush2.bf16.msra.mxu0 %v4889
        %6830 = vmatprep.mubr.bf16.mxu0 %v530
        %6831 = vmatmul.mubr.bf16.gmra.mxu0 %v529
        %v6832 = vpop.f32.mrf.mxu0
        %v6833 = vadd.f32 %v6780, %v6832
        %v6834 = vpop.f32.mrf.mxu0
        %v6835 = vadd.f32 %v6782, %v6834
        %v6836 = vpop.f32.mrf.mxu0
        %v6837 = vadd.f32 %v6784, %v6836
        %v6838 = vpop.f32.mrf.mxu0
        %v6839 = vadd.f32 %v6786, %v6838
        %6840 = vmatprep.mubr.bf16.mxu0 %v546
        %6841 = vmatmul.mubr.bf16.gmra.mxu0 %v545
        %v6842 = vpop.f32.mrf.mxu0
        %v6843 = vadd.f32 %v6790, %v6842
        %v6844 = vpop.f32.mrf.mxu0
        %v6845 = vadd.f32 %v6792, %v6844
        %v6846 = vpop.f32.mrf.mxu0
        %v6847 = vadd.f32 %v6794, %v6846
        %v6848 = vpop.f32.mrf.mxu0
        %v6849 = vadd.f32 %v6796, %v6848
        %6850 = vdwg.mxu0
        %6851 = vmatprep.subr.bf16.mxu0 %v5010
        %6852 = vmatpush1.bf16.msra.mxu0 %v5009
        %6853 = vmatprep.subr.bf16.mxu0 %v5002
        %6854 = vmatpush1.bf16.msra.mxu0 %v5001
        %6855 = vmatprep.subr.bf16.mxu0 %v4994
        %6856 = vmatpush1.bf16.msra.mxu0 %v4993
        %6857 = vmatprep.subr.bf16.mxu0 %v4986
        %6858 = vmatpush1.bf16.msra.mxu0 %v4985
        %6859 = vmatprep.subr.bf16.mxu0 %v4978
        %6860 = vmatpush1.bf16.msra.mxu0 %v4977
        %6861 = vmatprep.subr.bf16.mxu0 %v4970
        %6862 = vmatpush1.bf16.msra.mxu0 %v4969
        %6863 = vmatprep.subr.bf16.mxu0 %v4962
        %6864 = vmatpush1.bf16.msra.mxu0 %v4961
        %6865 = vmatprep.subr.bf16.mxu0 %v4954
        %6866 = vmatpush1.bf16.msra.mxu0 %v4953
        %6867 = vmatprep.subr.bf16.mxu0 %v5074
        %6868 = vmatpush2.bf16.msra.mxu0 %v5073
        %6869 = vmatprep.subr.bf16.mxu0 %v5066
        %6870 = vmatpush2.bf16.msra.mxu0 %v5065
        %6871 = vmatprep.subr.bf16.mxu0 %v5058
        %6872 = vmatpush2.bf16.msra.mxu0 %v5057
        %6873 = vmatprep.subr.bf16.mxu0 %v5050
        %6874 = vmatpush2.bf16.msra.mxu0 %v5049
        %6875 = vmatprep.subr.bf16.mxu0 %v5042
        %6876 = vmatpush2.bf16.msra.mxu0 %v5041
        %6877 = vmatprep.subr.bf16.mxu0 %v5034
        %6878 = vmatpush2.bf16.msra.mxu0 %v5033
        %6879 = vmatprep.subr.bf16.mxu0 %v5026
        %6880 = vmatpush2.bf16.msra.mxu0 %v5025
        %6881 = vmatprep.subr.bf16.mxu0 %v5018
        %6882 = vmatpush2.bf16.msra.mxu0 %v5017
        %6883 = vmatprep.mubr.bf16.mxu0 %v532
        %6884 = vmatmul.mubr.bf16.gmra.mxu0 %v531
        %v6885 = vpop.f32.mrf.mxu0
        %v6886 = vadd.f32 %v6833, %v6885
        %v6887 = vpop.f32.mrf.mxu0
        %v6888 = vadd.f32 %v6835, %v6887
        %v6889 = vpop.f32.mrf.mxu0
        %v6890 = vadd.f32 %v6837, %v6889
        %v6891 = vpop.f32.mrf.mxu0
        %v6892 = vadd.f32 %v6839, %v6891
        %6893 = vmatprep.mubr.bf16.mxu0 %v548
        %6894 = vmatmul.mubr.bf16.gmra.mxu0 %v547
        %v6895 = vpop.f32.mrf.mxu0
        %v6896 = vadd.f32 %v6843, %v6895
        %v6897 = vpop.f32.mrf.mxu0
        %v6898 = vadd.f32 %v6845, %v6897
        %v6899 = vpop.f32.mrf.mxu0
        %v6900 = vadd.f32 %v6847, %v6899
        %v6901 = vpop.f32.mrf.mxu0
        %v6902 = vadd.f32 %v6849, %v6901
        %6903 = vdwg.mxu0
        %6904 = vmatprep.subr.bf16.mxu0 %v5138
        %6905 = vmatpush1.bf16.msra.mxu0 %v5137
        %6906 = vmatprep.subr.bf16.mxu0 %v5130
        %6907 = vmatpush1.bf16.msra.mxu0 %v5129
        %6908 = vmatprep.subr.bf16.mxu0 %v5122
        %6909 = vmatpush1.bf16.msra.mxu0 %v5121
        %6910 = vmatprep.subr.bf16.mxu0 %v5114
        %6911 = vmatpush1.bf16.msra.mxu0 %v5113
        %6912 = vmatprep.subr.bf16.mxu0 %v5106
        %6913 = vmatpush1.bf16.msra.mxu0 %v5105
        %6914 = vmatprep.subr.bf16.mxu0 %v5098
        %6915 = vmatpush1.bf16.msra.mxu0 %v5097
        %6916 = vmatprep.subr.bf16.mxu0 %v5090
        %6917 = vmatpush1.bf16.msra.mxu0 %v5089
        %6918 = vmatprep.subr.bf16.mxu0 %v5082
        %6919 = vmatpush1.bf16.msra.mxu0 %v5081
        %6920 = vmatprep.subr.bf16.mxu0 %v5202
        %6921 = vmatpush2.bf16.msra.mxu0 %v5201
        %6922 = vmatprep.subr.bf16.mxu0 %v5194
        %6923 = vmatpush2.bf16.msra.mxu0 %v5193
        %6924 = vmatprep.subr.bf16.mxu0 %v5186
        %6925 = vmatpush2.bf16.msra.mxu0 %v5185
        %6926 = vmatprep.subr.bf16.mxu0 %v5178
        %6927 = vmatpush2.bf16.msra.mxu0 %v5177
        %6928 = vmatprep.subr.bf16.mxu0 %v5170
        %6929 = vmatpush2.bf16.msra.mxu0 %v5169
        %6930 = vmatprep.subr.bf16.mxu0 %v5162
        %6931 = vmatpush2.bf16.msra.mxu0 %v5161
        %6932 = vmatprep.subr.bf16.mxu0 %v5154
        %6933 = vmatpush2.bf16.msra.mxu0 %v5153
        %6934 = vmatprep.subr.bf16.mxu0 %v5146
        %6935 = vmatpush2.bf16.msra.mxu0 %v5145
        %6936 = vmatprep.mubr.bf16.mxu0 %v534
        %6937 = vmatmul.mubr.bf16.gmra.mxu0 %v533
        %v6938 = vpop.f32.mrf.mxu0
        %v6939 = vadd.f32 %v6886, %v6938
        %v6940 = vpop.f32.mrf.mxu0
        %v6941 = vadd.f32 %v6888, %v6940
        %v6942 = vpop.f32.mrf.mxu0
        %v6943 = vadd.f32 %v6890, %v6942
        %v6944 = vpop.f32.mrf.mxu0
        %v6945 = vadd.f32 %v6892, %v6944
        %6946 = vmatprep.mubr.bf16.mxu0 %v550
        %6947 = vmatmul.mubr.bf16.gmra.mxu0 %v549
        %v6948 = vpop.f32.mrf.mxu0
        %v6949 = vadd.f32 %v6896, %v6948
        %v6950 = vpop.f32.mrf.mxu0
        %v6951 = vadd.f32 %v6898, %v6950
        %v6952 = vpop.f32.mrf.mxu0
        %v6953 = vadd.f32 %v6900, %v6952
        %v6954 = vpop.f32.mrf.mxu0
        %v6955 = vadd.f32 %v6902, %v6954
        %6956 = vdwg.mxu0
        %6957 = vmatprep.subr.bf16.mxu0 %v5266
        %6958 = vmatpush1.bf16.msra.mxu0 %v5265
        %6959 = vmatprep.subr.bf16.mxu0 %v5258
        %6960 = vmatpush1.bf16.msra.mxu0 %v5257
        %6961 = vmatprep.subr.bf16.mxu0 %v5250
        %6962 = vmatpush1.bf16.msra.mxu0 %v5249
        %6963 = vmatprep.subr.bf16.mxu0 %v5242
        %6964 = vmatpush1.bf16.msra.mxu0 %v5241
        %6965 = vmatprep.subr.bf16.mxu0 %v5234
        %6966 = vmatpush1.bf16.msra.mxu0 %v5233
        %6967 = vmatprep.subr.bf16.mxu0 %v5226
        %6968 = vmatpush1.bf16.msra.mxu0 %v5225
        %6969 = vmatprep.subr.bf16.mxu0 %v5218
        %6970 = vmatpush1.bf16.msra.mxu0 %v5217
        %6971 = vmatprep.subr.bf16.mxu0 %v5210
        %6972 = vmatpush1.bf16.msra.mxu0 %v5209
        %6973 = vmatprep.subr.bf16.mxu0 %v5330
        %6974 = vmatpush2.bf16.msra.mxu0 %v5329
        %6975 = vmatprep.subr.bf16.mxu0 %v5322
        %6976 = vmatpush2.bf16.msra.mxu0 %v5321
        %6977 = vmatprep.subr.bf16.mxu0 %v5314
        %6978 = vmatpush2.bf16.msra.mxu0 %v5313
        %6979 = vmatprep.subr.bf16.mxu0 %v5306
        %6980 = vmatpush2.bf16.msra.mxu0 %v5305
        %6981 = vmatprep.subr.bf16.mxu0 %v5298
        %6982 = vmatpush2.bf16.msra.mxu0 %v5297
        %6983 = vmatprep.subr.bf16.mxu0 %v5290
        %6984 = vmatpush2.bf16.msra.mxu0 %v5289
        %6985 = vmatprep.subr.bf16.mxu0 %v5282
        %6986 = vmatpush2.bf16.msra.mxu0 %v5281
        %6987 = vmatprep.subr.bf16.mxu0 %v5274
        %6988 = vmatpush2.bf16.msra.mxu0 %v5273
        %6989 = vmatprep.mubr.bf16.mxu0 %v536
        %6990 = vmatmul.mubr.bf16.gmra.mxu0 %v535
        %v6991 = vpop.f32.mrf.mxu0
        %v6992 = vadd.f32 %v6939, %v6991
        %v6993 = vpop.f32.mrf.mxu0
        %v6994 = vadd.f32 %v6941, %v6993
        %v6995 = vpop.f32.mrf.mxu0
        %v6996 = vadd.f32 %v6943, %v6995
        %v6997 = vpop.f32.mrf.mxu0
        %v6998 = vadd.f32 %v6945, %v6997
        %6999 = vmatprep.mubr.bf16.mxu0 %v552
        %7000 = vmatmul.mubr.bf16.gmra.mxu0 %v551
        %v7001 = vpop.f32.mrf.mxu0
        %v7002 = vadd.f32 %v6949, %v7001
        %v7003 = vpop.f32.mrf.mxu0
        %v7004 = vadd.f32 %v6951, %v7003
        %v7005 = vpop.f32.mrf.mxu0
        %v7006 = vadd.f32 %v6953, %v7005
        %v7007 = vpop.f32.mrf.mxu0
        %v7008 = vadd.f32 %v6955, %v7007
        %7009 = vdwg.mxu0
        %7010 = vmatprep.subr.bf16.mxu0 %v5394
        %7011 = vmatpush1.bf16.msra.mxu0 %v5393
        %7012 = vmatprep.subr.bf16.mxu0 %v5386
        %7013 = vmatpush1.bf16.msra.mxu0 %v5385
        %7014 = vmatprep.subr.bf16.mxu0 %v5378
        %7015 = vmatpush1.bf16.msra.mxu0 %v5377
        %7016 = vmatprep.subr.bf16.mxu0 %v5370
        %7017 = vmatpush1.bf16.msra.mxu0 %v5369
        %7018 = vmatprep.subr.bf16.mxu0 %v5362
        %7019 = vmatpush1.bf16.msra.mxu0 %v5361
        %7020 = vmatprep.subr.bf16.mxu0 %v5354
        %7021 = vmatpush1.bf16.msra.mxu0 %v5353
        %7022 = vmatprep.subr.bf16.mxu0 %v5346
        %7023 = vmatpush1.bf16.msra.mxu0 %v5345
        %7024 = vmatprep.subr.bf16.mxu0 %v5338
        %7025 = vmatpush1.bf16.msra.mxu0 %v5337
        %7026 = vmatprep.subr.bf16.mxu0 %v5458
        %7027 = vmatpush2.bf16.msra.mxu0 %v5457
        %7028 = vmatprep.subr.bf16.mxu0 %v5450
        %7029 = vmatpush2.bf16.msra.mxu0 %v5449
        %7030 = vmatprep.subr.bf16.mxu0 %v5442
        %7031 = vmatpush2.bf16.msra.mxu0 %v5441
        %7032 = vmatprep.subr.bf16.mxu0 %v5434
        %7033 = vmatpush2.bf16.msra.mxu0 %v5433
        %7034 = vmatprep.subr.bf16.mxu0 %v5426
        %7035 = vmatpush2.bf16.msra.mxu0 %v5425
        %7036 = vmatprep.subr.bf16.mxu0 %v5418
        %7037 = vmatpush2.bf16.msra.mxu0 %v5417
        %7038 = vmatprep.subr.bf16.mxu0 %v5410
        %7039 = vmatpush2.bf16.msra.mxu0 %v5409
        %7040 = vmatprep.subr.bf16.mxu0 %v5402
        %7041 = vmatpush2.bf16.msra.mxu0 %v5401
        %7042 = vmatprep.mubr.bf16.mxu0 %v538
        %7043 = vmatmul.mubr.bf16.gmra.mxu0 %v537
        %v7044 = vpop.f32.mrf.mxu0
        %v7045 = vadd.f32 %v6992, %v7044
        %v7046 = vpop.f32.mrf.mxu0
        %v7047 = vadd.f32 %v6994, %v7046
        %v7048 = vpop.f32.mrf.mxu0
        %v7049 = vadd.f32 %v6996, %v7048
        %v7050 = vpop.f32.mrf.mxu0
        %v7051 = vadd.f32 %v6998, %v7050
        %7052 = vmatprep.mubr.bf16.mxu0 %v554
        %7053 = vmatmul.mubr.bf16.gmra.mxu0 %v553
        %v7054 = vpop.f32.mrf.mxu0
        %v7055 = vadd.f32 %v7002, %v7054
        %v7056 = vpop.f32.mrf.mxu0
        %v7057 = vadd.f32 %v7004, %v7056
        %v7058 = vpop.f32.mrf.mxu0
        %v7059 = vadd.f32 %v7006, %v7058
        %v7060 = vpop.f32.mrf.mxu0
        %v7061 = vadd.f32 %v7008, %v7060
        %7062 = vdwg.mxu0
        %7063 = vmatprep.subr.bf16.mxu0 %v5522
        %7064 = vmatpush1.bf16.msra.mxu0 %v5521
        %7065 = vmatprep.subr.bf16.mxu0 %v5514
        %7066 = vmatpush1.bf16.msra.mxu0 %v5513
        %7067 = vmatprep.subr.bf16.mxu0 %v5506
        %7068 = vmatpush1.bf16.msra.mxu0 %v5505
        %7069 = vmatprep.subr.bf16.mxu0 %v5498
        %7070 = vmatpush1.bf16.msra.mxu0 %v5497
        %7071 = vmatprep.subr.bf16.mxu0 %v5490
        %7072 = vmatpush1.bf16.msra.mxu0 %v5489
        %7073 = vmatprep.subr.bf16.mxu0 %v5482
        %7074 = vmatpush1.bf16.msra.mxu0 %v5481
        %7075 = vmatprep.subr.bf16.mxu0 %v5474
        %7076 = vmatpush1.bf16.msra.mxu0 %v5473
        %7077 = vmatprep.subr.bf16.mxu0 %v5466
        %7078 = vmatpush1.bf16.msra.mxu0 %v5465
        %7079 = vmatprep.subr.bf16.mxu0 %v5586
        %7080 = vmatpush2.bf16.msra.mxu0 %v5585
        %7081 = vmatprep.subr.bf16.mxu0 %v5578
        %7082 = vmatpush2.bf16.msra.mxu0 %v5577
        %7083 = vmatprep.subr.bf16.mxu0 %v5570
        %7084 = vmatpush2.bf16.msra.mxu0 %v5569
        %7085 = vmatprep.subr.bf16.mxu0 %v5562
        %7086 = vmatpush2.bf16.msra.mxu0 %v5561
        %7087 = vmatprep.subr.bf16.mxu0 %v5554
        %7088 = vmatpush2.bf16.msra.mxu0 %v5553
        %7089 = vmatprep.subr.bf16.mxu0 %v5546
        %7090 = vmatpush2.bf16.msra.mxu0 %v5545
        %7091 = vmatprep.subr.bf16.mxu0 %v5538
        %7092 = vmatpush2.bf16.msra.mxu0 %v5537
        %7093 = vmatprep.subr.bf16.mxu0 %v5530
        %7094 = vmatpush2.bf16.msra.mxu0 %v5529
        %7095 = vmatprep.mubr.bf16.mxu0 %v540
        %7096 = vmatmul.mubr.bf16.gmra.mxu0 %v539
        %v7097 = vpop.f32.mrf.mxu0
        %v7098 = vadd.f32 %v7045, %v7097
        %v7099 = vpop.f32.mrf.mxu0
        %v7100 = vadd.f32 %v7047, %v7099
        %v7101 = vpop.f32.mrf.mxu0
        %v7102 = vadd.f32 %v7049, %v7101
        %v7103 = vpop.f32.mrf.mxu0
        %v7104 = vadd.f32 %v7051, %v7103
        %7105 = vmatprep.mubr.bf16.mxu0 %v556
        %7106 = vmatmul.mubr.bf16.gmra.mxu0 %v555
        %v7107 = vpop.f32.mrf.mxu0
        %v7108 = vadd.f32 %v7055, %v7107
        %v7109 = vpop.f32.mrf.mxu0
        %v7110 = vadd.f32 %v7057, %v7109
        %v7111 = vpop.f32.mrf.mxu0
        %v7112 = vadd.f32 %v7059, %v7111
        %v7113 = vpop.f32.mrf.mxu0
        %v7114 = vadd.f32 %v7061, %v7113
        %7115 = vdwg.mxu0
        %7116 = vmatprep.subr.bf16.mxu0 %v5650
        %7117 = vmatpush1.bf16.msra.mxu0 %v5649
        %7118 = vmatprep.subr.bf16.mxu0 %v5642
        %7119 = vmatpush1.bf16.msra.mxu0 %v5641
        %7120 = vmatprep.subr.bf16.mxu0 %v5634
        %7121 = vmatpush1.bf16.msra.mxu0 %v5633
        %7122 = vmatprep.subr.bf16.mxu0 %v5626
        %7123 = vmatpush1.bf16.msra.mxu0 %v5625
        %7124 = vmatprep.subr.bf16.mxu0 %v5618
        %7125 = vmatpush1.bf16.msra.mxu0 %v5617
        %7126 = vmatprep.subr.bf16.mxu0 %v5610
        %7127 = vmatpush1.bf16.msra.mxu0 %v5609
        %7128 = vmatprep.subr.bf16.mxu0 %v5602
        %7129 = vmatpush1.bf16.msra.mxu0 %v5601
        %7130 = vmatprep.subr.bf16.mxu0 %v5594
        %7131 = vmatpush1.bf16.msra.mxu0 %v5593
        %7132 = vmatprep.subr.bf16.mxu0 %v5714
        %7133 = vmatpush2.bf16.msra.mxu0 %v5713
        %7134 = vmatprep.subr.bf16.mxu0 %v5706
        %7135 = vmatpush2.bf16.msra.mxu0 %v5705
        %7136 = vmatprep.subr.bf16.mxu0 %v5698
        %7137 = vmatpush2.bf16.msra.mxu0 %v5697
        %7138 = vmatprep.subr.bf16.mxu0 %v5690
        %7139 = vmatpush2.bf16.msra.mxu0 %v5689
        %7140 = vmatprep.subr.bf16.mxu0 %v5682
        %7141 = vmatpush2.bf16.msra.mxu0 %v5681
        %7142 = vmatprep.subr.bf16.mxu0 %v5674
        %7143 = vmatpush2.bf16.msra.mxu0 %v5673
        %7144 = vmatprep.subr.bf16.mxu0 %v5666
        %7145 = vmatpush2.bf16.msra.mxu0 %v5665
        %7146 = vmatprep.subr.bf16.mxu0 %v5658
        %7147 = vmatpush2.bf16.msra.mxu0 %v5657
        %7148 = vmatprep.mubr.bf16.mxu0 %v542
        %7149 = vmatmul.mubr.bf16.gmra.mxu0 %v541
        %v7150 = vpop.f32.mrf.mxu0
        %v7151 = vadd.f32 %v7098, %v7150
        %v7152 = vpop.f32.mrf.mxu0
        %v7153 = vadd.f32 %v7100, %v7152
        %v7154 = vpop.f32.mrf.mxu0
        %v7155 = vadd.f32 %v7102, %v7154
        %v7156 = vpop.f32.mrf.mxu0
        %v7157 = vadd.f32 %v7104, %v7156
        %7158 = vmatprep.mubr.bf16.mxu0 %v558
        %7159 = vmatmul.mubr.bf16.gmra.mxu0 %v557
        %v7160 = vpop.f32.mrf.mxu0
        %v7161 = vadd.f32 %v7108, %v7160
        %v7162 = vpop.f32.mrf.mxu0
        %v7163 = vadd.f32 %v7110, %v7162
        %v7164 = vpop.f32.mrf.mxu0
        %v7165 = vadd.f32 %v7112, %v7164
        %v7166 = vpop.f32.mrf.mxu0
        %v7167 = vadd.f32 %v7114, %v7166
        %7168 = vdwg.mxu0
        %7169 = vmatprep.subr.bf16.mxu0 %v4756
        %7170 = vmatpush1.bf16.msra.mxu0 %v4755
        %7171 = vmatprep.subr.bf16.mxu0 %v4748
        %7172 = vmatpush1.bf16.msra.mxu0 %v4747
        %7173 = vmatprep.subr.bf16.mxu0 %v4740
        %7174 = vmatpush1.bf16.msra.mxu0 %v4739
        %7175 = vmatprep.subr.bf16.mxu0 %v4732
        %7176 = vmatpush1.bf16.msra.mxu0 %v4731
        %7177 = vmatprep.subr.bf16.mxu0 %v4724
        %7178 = vmatpush1.bf16.msra.mxu0 %v4723
        %7179 = vmatprep.subr.bf16.mxu0 %v4716
        %7180 = vmatpush1.bf16.msra.mxu0 %v4715
        %7181 = vmatprep.subr.bf16.mxu0 %v4708
        %7182 = vmatpush1.bf16.msra.mxu0 %v4707
        %7183 = vmatprep.subr.bf16.mxu0 %v4700
        %7184 = vmatpush1.bf16.msra.mxu0 %v4699
        %7185 = vmatprep.subr.bf16.mxu0 %v4820
        %7186 = vmatpush2.bf16.msra.mxu0 %v4819
        %7187 = vmatprep.subr.bf16.mxu0 %v4812
        %7188 = vmatpush2.bf16.msra.mxu0 %v4811
        %7189 = vmatprep.subr.bf16.mxu0 %v4804
        %7190 = vmatpush2.bf16.msra.mxu0 %v4803
        %7191 = vmatprep.subr.bf16.mxu0 %v4796
        %7192 = vmatpush2.bf16.msra.mxu0 %v4795
        %7193 = vmatprep.subr.bf16.mxu0 %v4788
        %7194 = vmatpush2.bf16.msra.mxu0 %v4787
        %7195 = vmatprep.subr.bf16.mxu0 %v4780
        %7196 = vmatpush2.bf16.msra.mxu0 %v4779
        %7197 = vmatprep.subr.bf16.mxu0 %v4772
        %7198 = vmatpush2.bf16.msra.mxu0 %v4771
        %7199 = vmatprep.subr.bf16.mxu0 %v4764
        %7200 = vmatpush2.bf16.msra.mxu0 %v4763
        %7201 = vmatprep.mubr.bf16.mxu0 %v528
        %7202 = vmatmul.mubr.bf16.gmra.mxu0 %v527
        %v7203 = vpop.f32.mrf.mxu0
        %v7204 = vadd.f32 %v1596, %v7203
        %v7205 = vpop.f32.mrf.mxu0
        %v7206 = vadd.f32 %v1600, %v7205
        %v7207 = vpop.f32.mrf.mxu0
        %v7208 = vadd.f32 %v1596, %v7207
        %v7209 = vpop.f32.mrf.mxu0
        %v7210 = vadd.f32 %v1600, %v7209
        %7211 = vmatprep.mubr.bf16.mxu0 %v544
        %7212 = vmatmul.mubr.bf16.gmra.mxu0 %v543
        %v7213 = vpop.f32.mrf.mxu0
        %v7214 = vadd.f32 %v1596, %v7213
        %v7215 = vpop.f32.mrf.mxu0
        %v7216 = vadd.f32 %v1600, %v7215
        %v7217 = vpop.f32.mrf.mxu0
        %v7218 = vadd.f32 %v1596, %v7217
        %v7219 = vpop.f32.mrf.mxu0
        %v7220 = vadd.f32 %v1600, %v7219
        %7221 = vdwg.mxu0
        %7222 = vmatprep.subr.bf16.mxu0 %v4884
        %7223 = vmatpush1.bf16.msra.mxu0 %v4883
        %7224 = vmatprep.subr.bf16.mxu0 %v4876
        %7225 = vmatpush1.bf16.msra.mxu0 %v4875
        %7226 = vmatprep.subr.bf16.mxu0 %v4868
        %7227 = vmatpush1.bf16.msra.mxu0 %v4867
        %7228 = vmatprep.subr.bf16.mxu0 %v4860
        %7229 = vmatpush1.bf16.msra.mxu0 %v4859
        %7230 = vmatprep.subr.bf16.mxu0 %v4852
        %7231 = vmatpush1.bf16.msra.mxu0 %v4851
        %7232 = vmatprep.subr.bf16.mxu0 %v4844
        %7233 = vmatpush1.bf16.msra.mxu0 %v4843
        %7234 = vmatprep.subr.bf16.mxu0 %v4836
        %7235 = vmatpush1.bf16.msra.mxu0 %v4835
        %7236 = vmatprep.subr.bf16.mxu0 %v4828
        %7237 = vmatpush1.bf16.msra.mxu0 %v4827
        %7238 = vmatprep.subr.bf16.mxu0 %v4948
        %7239 = vmatpush2.bf16.msra.mxu0 %v4947
        %7240 = vmatprep.subr.bf16.mxu0 %v4940
        %7241 = vmatpush2.bf16.msra.mxu0 %v4939
        %7242 = vmatprep.subr.bf16.mxu0 %v4932
        %7243 = vmatpush2.bf16.msra.mxu0 %v4931
        %7244 = vmatprep.subr.bf16.mxu0 %v4924
        %7245 = vmatpush2.bf16.msra.mxu0 %v4923
        %7246 = vmatprep.subr.bf16.mxu0 %v4916
        %7247 = vmatpush2.bf16.msra.mxu0 %v4915
        %7248 = vmatprep.subr.bf16.mxu0 %v4908
        %7249 = vmatpush2.bf16.msra.mxu0 %v4907
        %7250 = vmatprep.subr.bf16.mxu0 %v4900
        %7251 = vmatpush2.bf16.msra.mxu0 %v4899
        %7252 = vmatprep.subr.bf16.mxu0 %v4892
        %7253 = vmatpush2.bf16.msra.mxu0 %v4891
        %7254 = vmatprep.mubr.bf16.mxu0 %v530
        %7255 = vmatmul.mubr.bf16.gmra.mxu0 %v529
        %v7256 = vpop.f32.mrf.mxu0
        %v7257 = vadd.f32 %v7204, %v7256
        %v7258 = vpop.f32.mrf.mxu0
        %v7259 = vadd.f32 %v7206, %v7258
        %v7260 = vpop.f32.mrf.mxu0
        %v7261 = vadd.f32 %v7208, %v7260
        %v7262 = vpop.f32.mrf.mxu0
        %v7263 = vadd.f32 %v7210, %v7262
        %7264 = vmatprep.mubr.bf16.mxu0 %v546
        %7265 = vmatmul.mubr.bf16.gmra.mxu0 %v545
        %v7266 = vpop.f32.mrf.mxu0
        %v7267 = vadd.f32 %v7214, %v7266
        %v7268 = vpop.f32.mrf.mxu0
        %v7269 = vadd.f32 %v7216, %v7268
        %v7270 = vpop.f32.mrf.mxu0
        %v7271 = vadd.f32 %v7218, %v7270
        %v7272 = vpop.f32.mrf.mxu0
        %v7273 = vadd.f32 %v7220, %v7272
        %7274 = vdwg.mxu0
        %7275 = vmatprep.subr.bf16.mxu0 %v5012
        %7276 = vmatpush1.bf16.msra.mxu0 %v5011
        %7277 = vmatprep.subr.bf16.mxu0 %v5004
        %7278 = vmatpush1.bf16.msra.mxu0 %v5003
        %7279 = vmatprep.subr.bf16.mxu0 %v4996
        %7280 = vmatpush1.bf16.msra.mxu0 %v4995
        %7281 = vmatprep.subr.bf16.mxu0 %v4988
        %7282 = vmatpush1.bf16.msra.mxu0 %v4987
        %7283 = vmatprep.subr.bf16.mxu0 %v4980
        %7284 = vmatpush1.bf16.msra.mxu0 %v4979
        %7285 = vmatprep.subr.bf16.mxu0 %v4972
        %7286 = vmatpush1.bf16.msra.mxu0 %v4971
        %7287 = vmatprep.subr.bf16.mxu0 %v4964
        %7288 = vmatpush1.bf16.msra.mxu0 %v4963
        %7289 = vmatprep.subr.bf16.mxu0 %v4956
        %7290 = vmatpush1.bf16.msra.mxu0 %v4955
        %7291 = vmatprep.subr.bf16.mxu0 %v5076
        %7292 = vmatpush2.bf16.msra.mxu0 %v5075
        %7293 = vmatprep.subr.bf16.mxu0 %v5068
        %7294 = vmatpush2.bf16.msra.mxu0 %v5067
        %7295 = vmatprep.subr.bf16.mxu0 %v5060
        %7296 = vmatpush2.bf16.msra.mxu0 %v5059
        %7297 = vmatprep.subr.bf16.mxu0 %v5052
        %7298 = vmatpush2.bf16.msra.mxu0 %v5051
        %7299 = vmatprep.subr.bf16.mxu0 %v5044
        %7300 = vmatpush2.bf16.msra.mxu0 %v5043
        %7301 = vmatprep.subr.bf16.mxu0 %v5036
        %7302 = vmatpush2.bf16.msra.mxu0 %v5035
        %7303 = vmatprep.subr.bf16.mxu0 %v5028
        %7304 = vmatpush2.bf16.msra.mxu0 %v5027
        %7305 = vmatprep.subr.bf16.mxu0 %v5020
        %7306 = vmatpush2.bf16.msra.mxu0 %v5019
        %7307 = vmatprep.mubr.bf16.mxu0 %v532
        %7308 = vmatmul.mubr.bf16.gmra.mxu0 %v531
        %v7309 = vpop.f32.mrf.mxu0
        %v7310 = vadd.f32 %v7257, %v7309
        %v7311 = vpop.f32.mrf.mxu0
        %v7312 = vadd.f32 %v7259, %v7311
        %v7313 = vpop.f32.mrf.mxu0
        %v7314 = vadd.f32 %v7261, %v7313
        %v7315 = vpop.f32.mrf.mxu0
        %v7316 = vadd.f32 %v7263, %v7315
        %7317 = vmatprep.mubr.bf16.mxu0 %v548
        %7318 = vmatmul.mubr.bf16.gmra.mxu0 %v547
        %v7319 = vpop.f32.mrf.mxu0
        %v7320 = vadd.f32 %v7267, %v7319
        %v7321 = vpop.f32.mrf.mxu0
        %v7322 = vadd.f32 %v7269, %v7321
        %v7323 = vpop.f32.mrf.mxu0
        %v7324 = vadd.f32 %v7271, %v7323
        %v7325 = vpop.f32.mrf.mxu0
        %v7326 = vadd.f32 %v7273, %v7325
        %7327 = vdwg.mxu0
        %7328 = vmatprep.subr.bf16.mxu0 %v5140
        %7329 = vmatpush1.bf16.msra.mxu0 %v5139
        %7330 = vmatprep.subr.bf16.mxu0 %v5132
        %7331 = vmatpush1.bf16.msra.mxu0 %v5131
        %7332 = vmatprep.subr.bf16.mxu0 %v5124
        %7333 = vmatpush1.bf16.msra.mxu0 %v5123
        %7334 = vmatprep.subr.bf16.mxu0 %v5116
        %7335 = vmatpush1.bf16.msra.mxu0 %v5115
        %7336 = vmatprep.subr.bf16.mxu0 %v5108
        %7337 = vmatpush1.bf16.msra.mxu0 %v5107
        %7338 = vmatprep.subr.bf16.mxu0 %v5100
        %7339 = vmatpush1.bf16.msra.mxu0 %v5099
        %7340 = vmatprep.subr.bf16.mxu0 %v5092
        %7341 = vmatpush1.bf16.msra.mxu0 %v5091
        %7342 = vmatprep.subr.bf16.mxu0 %v5084
        %7343 = vmatpush1.bf16.msra.mxu0 %v5083
        %7344 = vmatprep.subr.bf16.mxu0 %v5204
        %7345 = vmatpush2.bf16.msra.mxu0 %v5203
        %7346 = vmatprep.subr.bf16.mxu0 %v5196
        %7347 = vmatpush2.bf16.msra.mxu0 %v5195
        %7348 = vmatprep.subr.bf16.mxu0 %v5188
        %7349 = vmatpush2.bf16.msra.mxu0 %v5187
        %7350 = vmatprep.subr.bf16.mxu0 %v5180
        %7351 = vmatpush2.bf16.msra.mxu0 %v5179
        %7352 = vmatprep.subr.bf16.mxu0 %v5172
        %7353 = vmatpush2.bf16.msra.mxu0 %v5171
        %7354 = vmatprep.subr.bf16.mxu0 %v5164
        %7355 = vmatpush2.bf16.msra.mxu0 %v5163
        %7356 = vmatprep.subr.bf16.mxu0 %v5156
        %7357 = vmatpush2.bf16.msra.mxu0 %v5155
        %7358 = vmatprep.subr.bf16.mxu0 %v5148
        %7359 = vmatpush2.bf16.msra.mxu0 %v5147
        %7360 = vmatprep.mubr.bf16.mxu0 %v534
        %7361 = vmatmul.mubr.bf16.gmra.mxu0 %v533
        %v7362 = vpop.f32.mrf.mxu0
        %v7363 = vadd.f32 %v7310, %v7362
        %v7364 = vpop.f32.mrf.mxu0
        %v7365 = vadd.f32 %v7312, %v7364
        %v7366 = vpop.f32.mrf.mxu0
        %v7367 = vadd.f32 %v7314, %v7366
        %v7368 = vpop.f32.mrf.mxu0
        %v7369 = vadd.f32 %v7316, %v7368
        %7370 = vmatprep.mubr.bf16.mxu0 %v550
        %7371 = vmatmul.mubr.bf16.gmra.mxu0 %v549
        %v7372 = vpop.f32.mrf.mxu0
        %v7373 = vadd.f32 %v7320, %v7372
        %v7374 = vpop.f32.mrf.mxu0
        %v7375 = vadd.f32 %v7322, %v7374
        %v7376 = vpop.f32.mrf.mxu0
        %v7377 = vadd.f32 %v7324, %v7376
        %v7378 = vpop.f32.mrf.mxu0
        %v7379 = vadd.f32 %v7326, %v7378
        %7380 = vdwg.mxu0
        %7381 = vmatprep.subr.bf16.mxu0 %v5268
        %7382 = vmatpush1.bf16.msra.mxu0 %v5267
        %7383 = vmatprep.subr.bf16.mxu0 %v5260
        %7384 = vmatpush1.bf16.msra.mxu0 %v5259
        %7385 = vmatprep.subr.bf16.mxu0 %v5252
        %7386 = vmatpush1.bf16.msra.mxu0 %v5251
        %7387 = vmatprep.subr.bf16.mxu0 %v5244
        %7388 = vmatpush1.bf16.msra.mxu0 %v5243
        %7389 = vmatprep.subr.bf16.mxu0 %v5236
        %7390 = vmatpush1.bf16.msra.mxu0 %v5235
        %7391 = vmatprep.subr.bf16.mxu0 %v5228
        %7392 = vmatpush1.bf16.msra.mxu0 %v5227
        %7393 = vmatprep.subr.bf16.mxu0 %v5220
        %7394 = vmatpush1.bf16.msra.mxu0 %v5219
        %7395 = vmatprep.subr.bf16.mxu0 %v5212
        %7396 = vmatpush1.bf16.msra.mxu0 %v5211
        %7397 = vmatprep.subr.bf16.mxu0 %v5332
        %7398 = vmatpush2.bf16.msra.mxu0 %v5331
        %7399 = vmatprep.subr.bf16.mxu0 %v5324
        %7400 = vmatpush2.bf16.msra.mxu0 %v5323
        %7401 = vmatprep.subr.bf16.mxu0 %v5316
        %7402 = vmatpush2.bf16.msra.mxu0 %v5315
        %7403 = vmatprep.subr.bf16.mxu0 %v5308
        %7404 = vmatpush2.bf16.msra.mxu0 %v5307
        %7405 = vmatprep.subr.bf16.mxu0 %v5300
        %7406 = vmatpush2.bf16.msra.mxu0 %v5299
        %7407 = vmatprep.subr.bf16.mxu0 %v5292
        %7408 = vmatpush2.bf16.msra.mxu0 %v5291
        %7409 = vmatprep.subr.bf16.mxu0 %v5284
        %7410 = vmatpush2.bf16.msra.mxu0 %v5283
        %7411 = vmatprep.subr.bf16.mxu0 %v5276
        %7412 = vmatpush2.bf16.msra.mxu0 %v5275
        %7413 = vmatprep.mubr.bf16.mxu0 %v536
        %7414 = vmatmul.mubr.bf16.gmra.mxu0 %v535
        %v7415 = vpop.f32.mrf.mxu0
        %v7416 = vadd.f32 %v7363, %v7415
        %v7417 = vpop.f32.mrf.mxu0
        %v7418 = vadd.f32 %v7365, %v7417
        %v7419 = vpop.f32.mrf.mxu0
        %v7420 = vadd.f32 %v7367, %v7419
        %v7421 = vpop.f32.mrf.mxu0
        %v7422 = vadd.f32 %v7369, %v7421
        %7423 = vmatprep.mubr.bf16.mxu0 %v552
        %7424 = vmatmul.mubr.bf16.gmra.mxu0 %v551
        %v7425 = vpop.f32.mrf.mxu0
        %v7426 = vadd.f32 %v7373, %v7425
        %v7427 = vpop.f32.mrf.mxu0
        %v7428 = vadd.f32 %v7375, %v7427
        %v7429 = vpop.f32.mrf.mxu0
        %v7430 = vadd.f32 %v7377, %v7429
        %v7431 = vpop.f32.mrf.mxu0
        %v7432 = vadd.f32 %v7379, %v7431
        %7433 = vdwg.mxu0
        %7434 = vmatprep.subr.bf16.mxu0 %v5396
        %7435 = vmatpush1.bf16.msra.mxu0 %v5395
        %7436 = vmatprep.subr.bf16.mxu0 %v5388
        %7437 = vmatpush1.bf16.msra.mxu0 %v5387
        %7438 = vmatprep.subr.bf16.mxu0 %v5380
        %7439 = vmatpush1.bf16.msra.mxu0 %v5379
        %7440 = vmatprep.subr.bf16.mxu0 %v5372
        %7441 = vmatpush1.bf16.msra.mxu0 %v5371
        %7442 = vmatprep.subr.bf16.mxu0 %v5364
        %7443 = vmatpush1.bf16.msra.mxu0 %v5363
        %7444 = vmatprep.subr.bf16.mxu0 %v5356
        %7445 = vmatpush1.bf16.msra.mxu0 %v5355
        %7446 = vmatprep.subr.bf16.mxu0 %v5348
        %7447 = vmatpush1.bf16.msra.mxu0 %v5347
        %7448 = vmatprep.subr.bf16.mxu0 %v5340
        %7449 = vmatpush1.bf16.msra.mxu0 %v5339
        %7450 = vmatprep.subr.bf16.mxu0 %v5460
        %7451 = vmatpush2.bf16.msra.mxu0 %v5459
        %7452 = vmatprep.subr.bf16.mxu0 %v5452
        %7453 = vmatpush2.bf16.msra.mxu0 %v5451
        %7454 = vmatprep.subr.bf16.mxu0 %v5444
        %7455 = vmatpush2.bf16.msra.mxu0 %v5443
        %7456 = vmatprep.subr.bf16.mxu0 %v5436
        %7457 = vmatpush2.bf16.msra.mxu0 %v5435
        %7458 = vmatprep.subr.bf16.mxu0 %v5428
        %7459 = vmatpush2.bf16.msra.mxu0 %v5427
        %7460 = vmatprep.subr.bf16.mxu0 %v5420
        %7461 = vmatpush2.bf16.msra.mxu0 %v5419
        %7462 = vmatprep.subr.bf16.mxu0 %v5412
        %7463 = vmatpush2.bf16.msra.mxu0 %v5411
        %7464 = vmatprep.subr.bf16.mxu0 %v5404
        %7465 = vmatpush2.bf16.msra.mxu0 %v5403
        %7466 = vmatprep.mubr.bf16.mxu0 %v538
        %7467 = vmatmul.mubr.bf16.gmra.mxu0 %v537
        %v7468 = vpop.f32.mrf.mxu0
        %v7469 = vadd.f32 %v7416, %v7468
        %v7470 = vpop.f32.mrf.mxu0
        %v7471 = vadd.f32 %v7418, %v7470
        %v7472 = vpop.f32.mrf.mxu0
        %v7473 = vadd.f32 %v7420, %v7472
        %v7474 = vpop.f32.mrf.mxu0
        %v7475 = vadd.f32 %v7422, %v7474
        %7476 = vmatprep.mubr.bf16.mxu0 %v554
        %7477 = vmatmul.mubr.bf16.gmra.mxu0 %v553
        %v7478 = vpop.f32.mrf.mxu0
        %v7479 = vadd.f32 %v7426, %v7478
        %v7480 = vpop.f32.mrf.mxu0
        %v7481 = vadd.f32 %v7428, %v7480
        %v7482 = vpop.f32.mrf.mxu0
        %v7483 = vadd.f32 %v7430, %v7482
        %v7484 = vpop.f32.mrf.mxu0
        %v7485 = vadd.f32 %v7432, %v7484
        %7486 = vdwg.mxu0
        %7487 = vmatprep.subr.bf16.mxu0 %v5524
        %7488 = vmatpush1.bf16.msra.mxu0 %v5523
        %7489 = vmatprep.subr.bf16.mxu0 %v5516
        %7490 = vmatpush1.bf16.msra.mxu0 %v5515
        %7491 = vmatprep.subr.bf16.mxu0 %v5508
        %7492 = vmatpush1.bf16.msra.mxu0 %v5507
        %7493 = vmatprep.subr.bf16.mxu0 %v5500
        %7494 = vmatpush1.bf16.msra.mxu0 %v5499
        %7495 = vmatprep.subr.bf16.mxu0 %v5492
        %7496 = vmatpush1.bf16.msra.mxu0 %v5491
        %7497 = vmatprep.subr.bf16.mxu0 %v5484
        %7498 = vmatpush1.bf16.msra.mxu0 %v5483
        %7499 = vmatprep.subr.bf16.mxu0 %v5476
        %7500 = vmatpush1.bf16.msra.mxu0 %v5475
        %7501 = vmatprep.subr.bf16.mxu0 %v5468
        %7502 = vmatpush1.bf16.msra.mxu0 %v5467
        %7503 = vmatprep.subr.bf16.mxu0 %v5588
        %7504 = vmatpush2.bf16.msra.mxu0 %v5587
        %7505 = vmatprep.subr.bf16.mxu0 %v5580
        %7506 = vmatpush2.bf16.msra.mxu0 %v5579
        %7507 = vmatprep.subr.bf16.mxu0 %v5572
        %7508 = vmatpush2.bf16.msra.mxu0 %v5571
        %7509 = vmatprep.subr.bf16.mxu0 %v5564
        %7510 = vmatpush2.bf16.msra.mxu0 %v5563
        %7511 = vmatprep.subr.bf16.mxu0 %v5556
        %7512 = vmatpush2.bf16.msra.mxu0 %v5555
        %7513 = vmatprep.subr.bf16.mxu0 %v5548
        %7514 = vmatpush2.bf16.msra.mxu0 %v5547
        %7515 = vmatprep.subr.bf16.mxu0 %v5540
        %7516 = vmatpush2.bf16.msra.mxu0 %v5539
        %7517 = vmatprep.subr.bf16.mxu0 %v5532
        %7518 = vmatpush2.bf16.msra.mxu0 %v5531
        %7519 = vmatprep.mubr.bf16.mxu0 %v540
        %7520 = vmatmul.mubr.bf16.gmra.mxu0 %v539
        %v7521 = vpop.f32.mrf.mxu0
        %v7522 = vadd.f32 %v7469, %v7521
        %v7523 = vpop.f32.mrf.mxu0
        %v7524 = vadd.f32 %v7471, %v7523
        %v7525 = vpop.f32.mrf.mxu0
        %v7526 = vadd.f32 %v7473, %v7525
        %v7527 = vpop.f32.mrf.mxu0
        %v7528 = vadd.f32 %v7475, %v7527
        %7529 = vmatprep.mubr.bf16.mxu0 %v556
        %7530 = vmatmul.mubr.bf16.gmra.mxu0 %v555
        %v7531 = vpop.f32.mrf.mxu0
        %v7532 = vadd.f32 %v7479, %v7531
        %v7533 = vpop.f32.mrf.mxu0
        %v7534 = vadd.f32 %v7481, %v7533
        %v7535 = vpop.f32.mrf.mxu0
        %v7536 = vadd.f32 %v7483, %v7535
        %v7537 = vpop.f32.mrf.mxu0
        %v7538 = vadd.f32 %v7485, %v7537
        %7539 = vdwg.mxu0
        %7540 = vmatprep.subr.bf16.mxu0 %v5652
        %7541 = vmatpush1.bf16.msra.mxu0 %v5651
        %7542 = vmatprep.subr.bf16.mxu0 %v5644
        %7543 = vmatpush1.bf16.msra.mxu0 %v5643
        %7544 = vmatprep.subr.bf16.mxu0 %v5636
        %7545 = vmatpush1.bf16.msra.mxu0 %v5635
        %7546 = vmatprep.subr.bf16.mxu0 %v5628
        %7547 = vmatpush1.bf16.msra.mxu0 %v5627
        %7548 = vmatprep.subr.bf16.mxu0 %v5620
        %7549 = vmatpush1.bf16.msra.mxu0 %v5619
        %7550 = vmatprep.subr.bf16.mxu0 %v5612
        %7551 = vmatpush1.bf16.msra.mxu0 %v5611
        %7552 = vmatprep.subr.bf16.mxu0 %v5604
        %7553 = vmatpush1.bf16.msra.mxu0 %v5603
        %7554 = vmatprep.subr.bf16.mxu0 %v5596
        %7555 = vmatpush1.bf16.msra.mxu0 %v5595
        %7556 = vmatprep.subr.bf16.mxu0 %v5716
        %7557 = vmatpush2.bf16.msra.mxu0 %v5715
        %7558 = vmatprep.subr.bf16.mxu0 %v5708
        %7559 = vmatpush2.bf16.msra.mxu0 %v5707
        %7560 = vmatprep.subr.bf16.mxu0 %v5700
        %7561 = vmatpush2.bf16.msra.mxu0 %v5699
        %7562 = vmatprep.subr.bf16.mxu0 %v5692
        %7563 = vmatpush2.bf16.msra.mxu0 %v5691
        %7564 = vmatprep.subr.bf16.mxu0 %v5684
        %7565 = vmatpush2.bf16.msra.mxu0 %v5683
        %7566 = vmatprep.subr.bf16.mxu0 %v5676
        %7567 = vmatpush2.bf16.msra.mxu0 %v5675
        %7568 = vmatprep.subr.bf16.mxu0 %v5668
        %7569 = vmatpush2.bf16.msra.mxu0 %v5667
        %7570 = vmatprep.subr.bf16.mxu0 %v5660
        %7571 = vmatpush2.bf16.msra.mxu0 %v5659
        %7572 = vmatprep.mubr.bf16.mxu0 %v542
        %7573 = vmatmul.mubr.bf16.gmra.mxu0 %v541
        %v7574 = vpop.f32.mrf.mxu0
        %v7575 = vadd.f32 %v7522, %v7574
        %v7576 = vpop.f32.mrf.mxu0
        %v7577 = vadd.f32 %v7524, %v7576
        %v7578 = vpop.f32.mrf.mxu0
        %v7579 = vadd.f32 %v7526, %v7578
        %v7580 = vpop.f32.mrf.mxu0
        %v7581 = vadd.f32 %v7528, %v7580
        %7582 = vmatprep.mubr.bf16.mxu0 %v558
        %7583 = vmatmul.mubr.bf16.gmra.mxu0 %v557
        %v7584 = vpop.f32.mrf.mxu0
        %v7585 = vadd.f32 %v7532, %v7584
        %v7586 = vpop.f32.mrf.mxu0
        %v7587 = vadd.f32 %v7534, %v7586
        %v7588 = vpop.f32.mrf.mxu0
        %v7589 = vadd.f32 %v7536, %v7588
        %v7590 = vpop.f32.mrf.mxu0
        %v7591 = vadd.f32 %v7538, %v7590
        %7592 = vdwg.mxu0
        %7593 = vmatprep.subr.bf16.mxu0 %v4758
        %7594 = vmatpush1.bf16.msra.mxu0 %v4757
        %7595 = vmatprep.subr.bf16.mxu0 %v4750
        %7596 = vmatpush1.bf16.msra.mxu0 %v4749
        %7597 = vmatprep.subr.bf16.mxu0 %v4742
        %7598 = vmatpush1.bf16.msra.mxu0 %v4741
        %7599 = vmatprep.subr.bf16.mxu0 %v4734
        %7600 = vmatpush1.bf16.msra.mxu0 %v4733
        %7601 = vmatprep.subr.bf16.mxu0 %v4726
        %7602 = vmatpush1.bf16.msra.mxu0 %v4725
        %7603 = vmatprep.subr.bf16.mxu0 %v4718
        %7604 = vmatpush1.bf16.msra.mxu0 %v4717
        %7605 = vmatprep.subr.bf16.mxu0 %v4710
        %7606 = vmatpush1.bf16.msra.mxu0 %v4709
        %7607 = vmatprep.subr.bf16.mxu0 %v4702
        %7608 = vmatpush1.bf16.msra.mxu0 %v4701
        %7609 = vmatprep.subr.bf16.mxu0 %v4822
        %7610 = vmatpush2.bf16.msra.mxu0 %v4821
        %7611 = vmatprep.subr.bf16.mxu0 %v4814
        %7612 = vmatpush2.bf16.msra.mxu0 %v4813
        %7613 = vmatprep.subr.bf16.mxu0 %v4806
        %7614 = vmatpush2.bf16.msra.mxu0 %v4805
        %7615 = vmatprep.subr.bf16.mxu0 %v4798
        %7616 = vmatpush2.bf16.msra.mxu0 %v4797
        %7617 = vmatprep.subr.bf16.mxu0 %v4790
        %7618 = vmatpush2.bf16.msra.mxu0 %v4789
        %7619 = vmatprep.subr.bf16.mxu0 %v4782
        %7620 = vmatpush2.bf16.msra.mxu0 %v4781
        %7621 = vmatprep.subr.bf16.mxu0 %v4774
        %7622 = vmatpush2.bf16.msra.mxu0 %v4773
        %7623 = vmatprep.subr.bf16.mxu0 %v4766
        %7624 = vmatpush2.bf16.msra.mxu0 %v4765
        %7625 = vmatprep.mubr.bf16.mxu0 %v528
        %7626 = vmatmul.mubr.bf16.gmra.mxu0 %v527
        %v7627 = vpop.f32.mrf.mxu0
        %v7628 = vadd.f32 %v1604, %v7627
        %v7629 = vpop.f32.mrf.mxu0
        %v7630 = vadd.f32 %v1608, %v7629
        %v7631 = vpop.f32.mrf.mxu0
        %v7632 = vadd.f32 %v1604, %v7631
        %v7633 = vpop.f32.mrf.mxu0
        %v7634 = vadd.f32 %v1608, %v7633
        %7635 = vmatprep.mubr.bf16.mxu0 %v544
        %7636 = vmatmul.mubr.bf16.gmra.mxu0 %v543
        %v7637 = vpop.f32.mrf.mxu0
        %v7638 = vadd.f32 %v1604, %v7637
        %v7639 = vpop.f32.mrf.mxu0
        %v7640 = vadd.f32 %v1608, %v7639
        %v7641 = vpop.f32.mrf.mxu0
        %v7642 = vadd.f32 %v1604, %v7641
        %v7643 = vpop.f32.mrf.mxu0
        %v7644 = vadd.f32 %v1608, %v7643
        %7645 = vdwg.mxu0
        %7646 = vmatprep.subr.bf16.mxu0 %v4886
        %7647 = vmatpush1.bf16.msra.mxu0 %v4885
        %7648 = vmatprep.subr.bf16.mxu0 %v4878
        %7649 = vmatpush1.bf16.msra.mxu0 %v4877
        %7650 = vmatprep.subr.bf16.mxu0 %v4870
        %7651 = vmatpush1.bf16.msra.mxu0 %v4869
        %7652 = vmatprep.subr.bf16.mxu0 %v4862
        %7653 = vmatpush1.bf16.msra.mxu0 %v4861
        %7654 = vmatprep.subr.bf16.mxu0 %v4854
        %7655 = vmatpush1.bf16.msra.mxu0 %v4853
        %7656 = vmatprep.subr.bf16.mxu0 %v4846
        %7657 = vmatpush1.bf16.msra.mxu0 %v4845
        %7658 = vmatprep.subr.bf16.mxu0 %v4838
        %7659 = vmatpush1.bf16.msra.mxu0 %v4837
        %7660 = vmatprep.subr.bf16.mxu0 %v4830
        %7661 = vmatpush1.bf16.msra.mxu0 %v4829
        %7662 = vmatprep.subr.bf16.mxu0 %v4950
        %7663 = vmatpush2.bf16.msra.mxu0 %v4949
        %7664 = vmatprep.subr.bf16.mxu0 %v4942
        %7665 = vmatpush2.bf16.msra.mxu0 %v4941
        %7666 = vmatprep.subr.bf16.mxu0 %v4934
        %7667 = vmatpush2.bf16.msra.mxu0 %v4933
        %7668 = vmatprep.subr.bf16.mxu0 %v4926
        %7669 = vmatpush2.bf16.msra.mxu0 %v4925
        %7670 = vmatprep.subr.bf16.mxu0 %v4918
        %7671 = vmatpush2.bf16.msra.mxu0 %v4917
        %7672 = vmatprep.subr.bf16.mxu0 %v4910
        %7673 = vmatpush2.bf16.msra.mxu0 %v4909
        %7674 = vmatprep.subr.bf16.mxu0 %v4902
        %7675 = vmatpush2.bf16.msra.mxu0 %v4901
        %7676 = vmatprep.subr.bf16.mxu0 %v4894
        %7677 = vmatpush2.bf16.msra.mxu0 %v4893
        %7678 = vmatprep.mubr.bf16.mxu0 %v530
        %7679 = vmatmul.mubr.bf16.gmra.mxu0 %v529
        %v7680 = vpop.f32.mrf.mxu0
        %v7681 = vadd.f32 %v7628, %v7680
        %v7682 = vpop.f32.mrf.mxu0
        %v7683 = vadd.f32 %v7630, %v7682
        %v7684 = vpop.f32.mrf.mxu0
        %v7685 = vadd.f32 %v7632, %v7684
        %v7686 = vpop.f32.mrf.mxu0
        %v7687 = vadd.f32 %v7634, %v7686
        %7688 = vmatprep.mubr.bf16.mxu0 %v546
        %7689 = vmatmul.mubr.bf16.gmra.mxu0 %v545
        %v7690 = vpop.f32.mrf.mxu0
        %v7691 = vadd.f32 %v7638, %v7690
        %v7692 = vpop.f32.mrf.mxu0
        %v7693 = vadd.f32 %v7640, %v7692
        %v7694 = vpop.f32.mrf.mxu0
        %v7695 = vadd.f32 %v7642, %v7694
        %v7696 = vpop.f32.mrf.mxu0
        %v7697 = vadd.f32 %v7644, %v7696
        %7698 = vdwg.mxu0
        %7699 = vmatprep.subr.bf16.mxu0 %v5014
        %7700 = vmatpush1.bf16.msra.mxu0 %v5013
        %7701 = vmatprep.subr.bf16.mxu0 %v5006
        %7702 = vmatpush1.bf16.msra.mxu0 %v5005
        %7703 = vmatprep.subr.bf16.mxu0 %v4998
        %7704 = vmatpush1.bf16.msra.mxu0 %v4997
        %7705 = vmatprep.subr.bf16.mxu0 %v4990
        %7706 = vmatpush1.bf16.msra.mxu0 %v4989
        %7707 = vmatprep.subr.bf16.mxu0 %v4982
        %7708 = vmatpush1.bf16.msra.mxu0 %v4981
        %7709 = vmatprep.subr.bf16.mxu0 %v4974
        %7710 = vmatpush1.bf16.msra.mxu0 %v4973
        %7711 = vmatprep.subr.bf16.mxu0 %v4966
        %7712 = vmatpush1.bf16.msra.mxu0 %v4965
        %7713 = vmatprep.subr.bf16.mxu0 %v4958
        %7714 = vmatpush1.bf16.msra.mxu0 %v4957
        %7715 = vmatprep.subr.bf16.mxu0 %v5078
        %7716 = vmatpush2.bf16.msra.mxu0 %v5077
        %7717 = vmatprep.subr.bf16.mxu0 %v5070
        %7718 = vmatpush2.bf16.msra.mxu0 %v5069
        %7719 = vmatprep.subr.bf16.mxu0 %v5062
        %7720 = vmatpush2.bf16.msra.mxu0 %v5061
        %7721 = vmatprep.subr.bf16.mxu0 %v5054
        %7722 = vmatpush2.bf16.msra.mxu0 %v5053
        %7723 = vmatprep.subr.bf16.mxu0 %v5046
        %7724 = vmatpush2.bf16.msra.mxu0 %v5045
        %7725 = vmatprep.subr.bf16.mxu0 %v5038
        %7726 = vmatpush2.bf16.msra.mxu0 %v5037
        %7727 = vmatprep.subr.bf16.mxu0 %v5030
        %7728 = vmatpush2.bf16.msra.mxu0 %v5029
        %7729 = vmatprep.subr.bf16.mxu0 %v5022
        %7730 = vmatpush2.bf16.msra.mxu0 %v5021
        %7731 = vmatprep.mubr.bf16.mxu0 %v532
        %7732 = vmatmul.mubr.bf16.gmra.mxu0 %v531
        %v7733 = vpop.f32.mrf.mxu0
        %v7734 = vadd.f32 %v7681, %v7733
        %v7735 = vpop.f32.mrf.mxu0
        %v7736 = vadd.f32 %v7683, %v7735
        %v7737 = vpop.f32.mrf.mxu0
        %v7738 = vadd.f32 %v7685, %v7737
        %v7739 = vpop.f32.mrf.mxu0
        %v7740 = vadd.f32 %v7687, %v7739
        %7741 = vmatprep.mubr.bf16.mxu0 %v548
        %7742 = vmatmul.mubr.bf16.gmra.mxu0 %v547
        %v7743 = vpop.f32.mrf.mxu0
        %v7744 = vadd.f32 %v7691, %v7743
        %v7745 = vpop.f32.mrf.mxu0
        %v7746 = vadd.f32 %v7693, %v7745
        %v7747 = vpop.f32.mrf.mxu0
        %v7748 = vadd.f32 %v7695, %v7747
        %v7749 = vpop.f32.mrf.mxu0
        %v7750 = vadd.f32 %v7697, %v7749
        %7751 = vdwg.mxu0
        %7752 = vmatprep.subr.bf16.mxu0 %v5142
        %7753 = vmatpush1.bf16.msra.mxu0 %v5141
        %7754 = vmatprep.subr.bf16.mxu0 %v5134
        %7755 = vmatpush1.bf16.msra.mxu0 %v5133
        %7756 = vmatprep.subr.bf16.mxu0 %v5126
        %7757 = vmatpush1.bf16.msra.mxu0 %v5125
        %7758 = vmatprep.subr.bf16.mxu0 %v5118
        %7759 = vmatpush1.bf16.msra.mxu0 %v5117
        %7760 = vmatprep.subr.bf16.mxu0 %v5110
        %7761 = vmatpush1.bf16.msra.mxu0 %v5109
        %7762 = vmatprep.subr.bf16.mxu0 %v5102
        %7763 = vmatpush1.bf16.msra.mxu0 %v5101
        %7764 = vmatprep.subr.bf16.mxu0 %v5094
        %7765 = vmatpush1.bf16.msra.mxu0 %v5093
        %7766 = vmatprep.subr.bf16.mxu0 %v5086
        %7767 = vmatpush1.bf16.msra.mxu0 %v5085
        %7768 = vmatprep.subr.bf16.mxu0 %v5206
        %7769 = vmatpush2.bf16.msra.mxu0 %v5205
        %7770 = vmatprep.subr.bf16.mxu0 %v5198
        %7771 = vmatpush2.bf16.msra.mxu0 %v5197
        %7772 = vmatprep.subr.bf16.mxu0 %v5190
        %7773 = vmatpush2.bf16.msra.mxu0 %v5189
        %7774 = vmatprep.subr.bf16.mxu0 %v5182
        %7775 = vmatpush2.bf16.msra.mxu0 %v5181
        %7776 = vmatprep.subr.bf16.mxu0 %v5174
        %7777 = vmatpush2.bf16.msra.mxu0 %v5173
        %7778 = vmatprep.subr.bf16.mxu0 %v5166
        %7779 = vmatpush2.bf16.msra.mxu0 %v5165
        %7780 = vmatprep.subr.bf16.mxu0 %v5158
        %7781 = vmatpush2.bf16.msra.mxu0 %v5157
        %7782 = vmatprep.subr.bf16.mxu0 %v5150
        %7783 = vmatpush2.bf16.msra.mxu0 %v5149
        %7784 = vmatprep.mubr.bf16.mxu0 %v534
        %7785 = vmatmul.mubr.bf16.gmra.mxu0 %v533
        %v7786 = vpop.f32.mrf.mxu0
        %v7787 = vadd.f32 %v7734, %v7786
        %v7788 = vpop.f32.mrf.mxu0
        %v7789 = vadd.f32 %v7736, %v7788
        %v7790 = vpop.f32.mrf.mxu0
        %v7791 = vadd.f32 %v7738, %v7790
        %v7792 = vpop.f32.mrf.mxu0
        %v7793 = vadd.f32 %v7740, %v7792
        %7794 = vmatprep.mubr.bf16.mxu0 %v550
        %7795 = vmatmul.mubr.bf16.gmra.mxu0 %v549
        %v7796 = vpop.f32.mrf.mxu0
        %v7797 = vadd.f32 %v7744, %v7796
        %v7798 = vpop.f32.mrf.mxu0
        %v7799 = vadd.f32 %v7746, %v7798
        %v7800 = vpop.f32.mrf.mxu0
        %v7801 = vadd.f32 %v7748, %v7800
        %v7802 = vpop.f32.mrf.mxu0
        %v7803 = vadd.f32 %v7750, %v7802
        %7804 = vdwg.mxu0
        %7805 = vmatprep.subr.bf16.mxu0 %v5270
        %7806 = vmatpush1.bf16.msra.mxu0 %v5269
        %7807 = vmatprep.subr.bf16.mxu0 %v5262
        %7808 = vmatpush1.bf16.msra.mxu0 %v5261
        %7809 = vmatprep.subr.bf16.mxu0 %v5254
        %7810 = vmatpush1.bf16.msra.mxu0 %v5253
        %7811 = vmatprep.subr.bf16.mxu0 %v5246
        %7812 = vmatpush1.bf16.msra.mxu0 %v5245
        %7813 = vmatprep.subr.bf16.mxu0 %v5238
        %7814 = vmatpush1.bf16.msra.mxu0 %v5237
        %7815 = vmatprep.subr.bf16.mxu0 %v5230
        %7816 = vmatpush1.bf16.msra.mxu0 %v5229
        %7817 = vmatprep.subr.bf16.mxu0 %v5222
        %7818 = vmatpush1.bf16.msra.mxu0 %v5221
        %7819 = vmatprep.subr.bf16.mxu0 %v5214
        %7820 = vmatpush1.bf16.msra.mxu0 %v5213
        %7821 = vmatprep.subr.bf16.mxu0 %v5334
        %7822 = vmatpush2.bf16.msra.mxu0 %v5333
        %7823 = vmatprep.subr.bf16.mxu0 %v5326
        %7824 = vmatpush2.bf16.msra.mxu0 %v5325
        %7825 = vmatprep.subr.bf16.mxu0 %v5318
        %7826 = vmatpush2.bf16.msra.mxu0 %v5317
        %7827 = vmatprep.subr.bf16.mxu0 %v5310
        %7828 = vmatpush2.bf16.msra.mxu0 %v5309
        %7829 = vmatprep.subr.bf16.mxu0 %v5302
        %7830 = vmatpush2.bf16.msra.mxu0 %v5301
        %7831 = vmatprep.subr.bf16.mxu0 %v5294
        %7832 = vmatpush2.bf16.msra.mxu0 %v5293
        %7833 = vmatprep.subr.bf16.mxu0 %v5286
        %7834 = vmatpush2.bf16.msra.mxu0 %v5285
        %7835 = vmatprep.subr.bf16.mxu0 %v5278
        %7836 = vmatpush2.bf16.msra.mxu0 %v5277
        %7837 = vmatprep.mubr.bf16.mxu0 %v536
        %7838 = vmatmul.mubr.bf16.gmra.mxu0 %v535
        %v7839 = vpop.f32.mrf.mxu0
        %v7840 = vadd.f32 %v7787, %v7839
        %v7841 = vpop.f32.mrf.mxu0
        %v7842 = vadd.f32 %v7789, %v7841
        %v7843 = vpop.f32.mrf.mxu0
        %v7844 = vadd.f32 %v7791, %v7843
        %v7845 = vpop.f32.mrf.mxu0
        %v7846 = vadd.f32 %v7793, %v7845
        %7847 = vmatprep.mubr.bf16.mxu0 %v552
        %7848 = vmatmul.mubr.bf16.gmra.mxu0 %v551
        %v7849 = vpop.f32.mrf.mxu0
        %v7850 = vadd.f32 %v7797, %v7849
        %v7851 = vpop.f32.mrf.mxu0
        %v7852 = vadd.f32 %v7799, %v7851
        %v7853 = vpop.f32.mrf.mxu0
        %v7854 = vadd.f32 %v7801, %v7853
        %v7855 = vpop.f32.mrf.mxu0
        %v7856 = vadd.f32 %v7803, %v7855
        %7857 = vdwg.mxu0
        %7858 = vmatprep.subr.bf16.mxu0 %v5398
        %7859 = vmatpush1.bf16.msra.mxu0 %v5397
        %7860 = vmatprep.subr.bf16.mxu0 %v5390
        %7861 = vmatpush1.bf16.msra.mxu0 %v5389
        %7862 = vmatprep.subr.bf16.mxu0 %v5382
        %7863 = vmatpush1.bf16.msra.mxu0 %v5381
        %7864 = vmatprep.subr.bf16.mxu0 %v5374
        %7865 = vmatpush1.bf16.msra.mxu0 %v5373
        %7866 = vmatprep.subr.bf16.mxu0 %v5366
        %7867 = vmatpush1.bf16.msra.mxu0 %v5365
        %7868 = vmatprep.subr.bf16.mxu0 %v5358
        %7869 = vmatpush1.bf16.msra.mxu0 %v5357
        %7870 = vmatprep.subr.bf16.mxu0 %v5350
        %7871 = vmatpush1.bf16.msra.mxu0 %v5349
        %7872 = vmatprep.subr.bf16.mxu0 %v5342
        %7873 = vmatpush1.bf16.msra.mxu0 %v5341
        %7874 = vmatprep.subr.bf16.mxu0 %v5462
        %7875 = vmatpush2.bf16.msra.mxu0 %v5461
        %7876 = vmatprep.subr.bf16.mxu0 %v5454
        %7877 = vmatpush2.bf16.msra.mxu0 %v5453
        %7878 = vmatprep.subr.bf16.mxu0 %v5446
        %7879 = vmatpush2.bf16.msra.mxu0 %v5445
        %7880 = vmatprep.subr.bf16.mxu0 %v5438
        %7881 = vmatpush2.bf16.msra.mxu0 %v5437
        %7882 = vmatprep.subr.bf16.mxu0 %v5430
        %7883 = vmatpush2.bf16.msra.mxu0 %v5429
        %7884 = vmatprep.subr.bf16.mxu0 %v5422
        %7885 = vmatpush2.bf16.msra.mxu0 %v5421
        %7886 = vmatprep.subr.bf16.mxu0 %v5414
        %7887 = vmatpush2.bf16.msra.mxu0 %v5413
        %7888 = vmatprep.subr.bf16.mxu0 %v5406
        %7889 = vmatpush2.bf16.msra.mxu0 %v5405
        %7890 = vmatprep.mubr.bf16.mxu0 %v538
        %7891 = vmatmul.mubr.bf16.gmra.mxu0 %v537
        %v7892 = vpop.f32.mrf.mxu0
        %v7893 = vadd.f32 %v7840, %v7892
        %v7894 = vpop.f32.mrf.mxu0
        %v7895 = vadd.f32 %v7842, %v7894
        %v7896 = vpop.f32.mrf.mxu0
        %v7897 = vadd.f32 %v7844, %v7896
        %v7898 = vpop.f32.mrf.mxu0
        %v7899 = vadd.f32 %v7846, %v7898
        %7900 = vmatprep.mubr.bf16.mxu0 %v554
        %7901 = vmatmul.mubr.bf16.gmra.mxu0 %v553
        %v7902 = vpop.f32.mrf.mxu0
        %v7903 = vadd.f32 %v7850, %v7902
        %v7904 = vpop.f32.mrf.mxu0
        %v7905 = vadd.f32 %v7852, %v7904
        %v7906 = vpop.f32.mrf.mxu0
        %v7907 = vadd.f32 %v7854, %v7906
        %v7908 = vpop.f32.mrf.mxu0
        %v7909 = vadd.f32 %v7856, %v7908
        %7910 = vdwg.mxu0
        %7911 = vmatprep.subr.bf16.mxu0 %v5526
        %7912 = vmatpush1.bf16.msra.mxu0 %v5525
        %7913 = vmatprep.subr.bf16.mxu0 %v5518
        %7914 = vmatpush1.bf16.msra.mxu0 %v5517
        %7915 = vmatprep.subr.bf16.mxu0 %v5510
        %7916 = vmatpush1.bf16.msra.mxu0 %v5509
        %7917 = vmatprep.subr.bf16.mxu0 %v5502
        %7918 = vmatpush1.bf16.msra.mxu0 %v5501
        %7919 = vmatprep.subr.bf16.mxu0 %v5494
        %7920 = vmatpush1.bf16.msra.mxu0 %v5493
        %7921 = vmatprep.subr.bf16.mxu0 %v5486
        %7922 = vmatpush1.bf16.msra.mxu0 %v5485
        %7923 = vmatprep.subr.bf16.mxu0 %v5478
        %7924 = vmatpush1.bf16.msra.mxu0 %v5477
        %7925 = vmatprep.subr.bf16.mxu0 %v5470
        %7926 = vmatpush1.bf16.msra.mxu0 %v5469
        %7927 = vmatprep.subr.bf16.mxu0 %v5590
        %7928 = vmatpush2.bf16.msra.mxu0 %v5589
        %7929 = vmatprep.subr.bf16.mxu0 %v5582
        %7930 = vmatpush2.bf16.msra.mxu0 %v5581
        %7931 = vmatprep.subr.bf16.mxu0 %v5574
        %7932 = vmatpush2.bf16.msra.mxu0 %v5573
        %7933 = vmatprep.subr.bf16.mxu0 %v5566
        %7934 = vmatpush2.bf16.msra.mxu0 %v5565
        %7935 = vmatprep.subr.bf16.mxu0 %v5558
        %7936 = vmatpush2.bf16.msra.mxu0 %v5557
        %7937 = vmatprep.subr.bf16.mxu0 %v5550
        %7938 = vmatpush2.bf16.msra.mxu0 %v5549
        %7939 = vmatprep.subr.bf16.mxu0 %v5542
        %7940 = vmatpush2.bf16.msra.mxu0 %v5541
        %7941 = vmatprep.subr.bf16.mxu0 %v5534
        %7942 = vmatpush2.bf16.msra.mxu0 %v5533
        %7943 = vmatprep.mubr.bf16.mxu0 %v540
        %7944 = vmatmul.mubr.bf16.gmra.mxu0 %v539
        %v7945 = vpop.f32.mrf.mxu0
        %v7946 = vadd.f32 %v7893, %v7945
        %v7947 = vpop.f32.mrf.mxu0
        %v7948 = vadd.f32 %v7895, %v7947
        %v7949 = vpop.f32.mrf.mxu0
        %v7950 = vadd.f32 %v7897, %v7949
        %v7951 = vpop.f32.mrf.mxu0
        %v7952 = vadd.f32 %v7899, %v7951
        %7953 = vmatprep.mubr.bf16.mxu0 %v556
        %7954 = vmatmul.mubr.bf16.gmra.mxu0 %v555
        %v7955 = vpop.f32.mrf.mxu0
        %v7956 = vadd.f32 %v7903, %v7955
        %v7957 = vpop.f32.mrf.mxu0
        %v7958 = vadd.f32 %v7905, %v7957
        %v7959 = vpop.f32.mrf.mxu0
        %v7960 = vadd.f32 %v7907, %v7959
        %v7961 = vpop.f32.mrf.mxu0
        %v7962 = vadd.f32 %v7909, %v7961
        %7963 = vdwg.mxu0
        %7964 = vmatprep.subr.bf16.mxu0 %v5654
        %7965 = vmatpush1.bf16.msra.mxu0 %v5653
        %7966 = vmatprep.subr.bf16.mxu0 %v5646
        %7967 = vmatpush1.bf16.msra.mxu0 %v5645
        %7968 = vmatprep.subr.bf16.mxu0 %v5638
        %7969 = vmatpush1.bf16.msra.mxu0 %v5637
        %7970 = vmatprep.subr.bf16.mxu0 %v5630
        %7971 = vmatpush1.bf16.msra.mxu0 %v5629
        %7972 = vmatprep.subr.bf16.mxu0 %v5622
        %7973 = vmatpush1.bf16.msra.mxu0 %v5621
        %7974 = vmatprep.subr.bf16.mxu0 %v5614
        %7975 = vmatpush1.bf16.msra.mxu0 %v5613
        %7976 = vmatprep.subr.bf16.mxu0 %v5606
        %7977 = vmatpush1.bf16.msra.mxu0 %v5605
        %7978 = vmatprep.subr.bf16.mxu0 %v5598
        %7979 = vmatpush1.bf16.msra.mxu0 %v5597
        %7980 = vmatprep.subr.bf16.mxu0 %v5718
        %7981 = vmatpush2.bf16.msra.mxu0 %v5717
        %7982 = vmatprep.subr.bf16.mxu0 %v5710
        %7983 = vmatpush2.bf16.msra.mxu0 %v5709
        %7984 = vmatprep.subr.bf16.mxu0 %v5702
        %7985 = vmatpush2.bf16.msra.mxu0 %v5701
        %7986 = vmatprep.subr.bf16.mxu0 %v5694
        %7987 = vmatpush2.bf16.msra.mxu0 %v5693
        %7988 = vmatprep.subr.bf16.mxu0 %v5686
        %7989 = vmatpush2.bf16.msra.mxu0 %v5685
        %7990 = vmatprep.subr.bf16.mxu0 %v5678
        %7991 = vmatpush2.bf16.msra.mxu0 %v5677
        %7992 = vmatprep.subr.bf16.mxu0 %v5670
        %7993 = vmatpush2.bf16.msra.mxu0 %v5669
        %7994 = vmatprep.subr.bf16.mxu0 %v5662
        %7995 = vmatpush2.bf16.msra.mxu0 %v5661
        %7996 = vmatprep.mubr.bf16.mxu0 %v542
        %7997 = vmatmul.mubr.bf16.gmra.mxu0 %v541
        %v7998 = vpop.f32.mrf.mxu0
        %v7999 = vadd.f32 %v7946, %v7998
        %v8000 = vpop.f32.mrf.mxu0
        %v8001 = vadd.f32 %v7948, %v8000
        %v8002 = vpop.f32.mrf.mxu0
        %v8003 = vadd.f32 %v7950, %v8002
        %v8004 = vpop.f32.mrf.mxu0
        %v8005 = vadd.f32 %v7952, %v8004
        %8006 = vmatprep.mubr.bf16.mxu0 %v558
        %8007 = vmatmul.mubr.bf16.gmra.mxu0 %v557
        %v8008 = vpop.f32.mrf.mxu0
        %v8009 = vadd.f32 %v7956, %v8008
        %v8010 = vpop.f32.mrf.mxu0
        %v8011 = vadd.f32 %v7958, %v8010
        %v8012 = vpop.f32.mrf.mxu0
        %v8013 = vadd.f32 %v7960, %v8012
        %v8014 = vpop.f32.mrf.mxu0
        %v8015 = vadd.f32 %v7962, %v8014
        %8016 = vdwg.mxu0
        %8017 = vmatprep.subr.bf16.mxu0 %v4760
        %8018 = vmatpush1.bf16.msra.mxu0 %v4759
        %8019 = vmatprep.subr.bf16.mxu0 %v4752
        %8020 = vmatpush1.bf16.msra.mxu0 %v4751
        %8021 = vmatprep.subr.bf16.mxu0 %v4744
        %8022 = vmatpush1.bf16.msra.mxu0 %v4743
        %8023 = vmatprep.subr.bf16.mxu0 %v4736
        %8024 = vmatpush1.bf16.msra.mxu0 %v4735
        %8025 = vmatprep.subr.bf16.mxu0 %v4728
        %8026 = vmatpush1.bf16.msra.mxu0 %v4727
        %8027 = vmatprep.subr.bf16.mxu0 %v4720
        %8028 = vmatpush1.bf16.msra.mxu0 %v4719
        %8029 = vmatprep.subr.bf16.mxu0 %v4712
        %8030 = vmatpush1.bf16.msra.mxu0 %v4711
        %8031 = vmatprep.subr.bf16.mxu0 %v4704
        %8032 = vmatpush1.bf16.msra.mxu0 %v4703
        %8033 = vmatprep.subr.bf16.mxu0 %v4824
        %8034 = vmatpush2.bf16.msra.mxu0 %v4823
        %8035 = vmatprep.subr.bf16.mxu0 %v4816
        %8036 = vmatpush2.bf16.msra.mxu0 %v4815
        %8037 = vmatprep.subr.bf16.mxu0 %v4808
        %8038 = vmatpush2.bf16.msra.mxu0 %v4807
        %8039 = vmatprep.subr.bf16.mxu0 %v4800
        %8040 = vmatpush2.bf16.msra.mxu0 %v4799
        %8041 = vmatprep.subr.bf16.mxu0 %v4792
        %8042 = vmatpush2.bf16.msra.mxu0 %v4791
        %8043 = vmatprep.subr.bf16.mxu0 %v4784
        %8044 = vmatpush2.bf16.msra.mxu0 %v4783
        %8045 = vmatprep.subr.bf16.mxu0 %v4776
        %8046 = vmatpush2.bf16.msra.mxu0 %v4775
        %8047 = vmatprep.subr.bf16.mxu0 %v4768
        %8048 = vmatpush2.bf16.msra.mxu0 %v4767
        %8049 = vmatprep.mubr.bf16.mxu0 %v528
        %8050 = vmatmul.mubr.bf16.gmra.mxu0 %v527
        %v8051 = vpop.f32.mrf.mxu0
        %v8052 = vadd.f32 %v1612, %v8051
        %v8053 = vpop.f32.mrf.mxu0
        %v8054 = vadd.f32 %v1616, %v8053
        %v8055 = vpop.f32.mrf.mxu0
        %v8056 = vadd.f32 %v1612, %v8055
        %v8057 = vpop.f32.mrf.mxu0
        %v8058 = vadd.f32 %v1616, %v8057
        %8059 = vmatprep.mubr.bf16.mxu0 %v544
        %8060 = vmatmul.mubr.bf16.gmra.mxu0 %v543
        %v8061 = vpop.f32.mrf.mxu0
        %v8062 = vadd.f32 %v1612, %v8061
        %v8063 = vpop.f32.mrf.mxu0
        %v8064 = vadd.f32 %v1616, %v8063
        %v8065 = vpop.f32.mrf.mxu0
        %v8066 = vadd.f32 %v1612, %v8065
        %v8067 = vpop.f32.mrf.mxu0
        %v8068 = vadd.f32 %v1616, %v8067
        %8069 = vdwg.mxu0
        %8070 = vmatprep.subr.bf16.mxu0 %v4888
        %8071 = vmatpush1.bf16.msra.mxu0 %v4887
        %8072 = vmatprep.subr.bf16.mxu0 %v4880
        %8073 = vmatpush1.bf16.msra.mxu0 %v4879
        %8074 = vmatprep.subr.bf16.mxu0 %v4872
        %8075 = vmatpush1.bf16.msra.mxu0 %v4871
        %8076 = vmatprep.subr.bf16.mxu0 %v4864
        %8077 = vmatpush1.bf16.msra.mxu0 %v4863
        %8078 = vmatprep.subr.bf16.mxu0 %v4856
        %8079 = vmatpush1.bf16.msra.mxu0 %v4855
        %8080 = vmatprep.subr.bf16.mxu0 %v4848
        %8081 = vmatpush1.bf16.msra.mxu0 %v4847
        %8082 = vmatprep.subr.bf16.mxu0 %v4840
        %8083 = vmatpush1.bf16.msra.mxu0 %v4839
        %8084 = vmatprep.subr.bf16.mxu0 %v4832
        %8085 = vmatpush1.bf16.msra.mxu0 %v4831
        %8086 = vmatprep.subr.bf16.mxu0 %v4952
        %8087 = vmatpush2.bf16.msra.mxu0 %v4951
        %8088 = vmatprep.subr.bf16.mxu0 %v4944
        %8089 = vmatpush2.bf16.msra.mxu0 %v4943
        %8090 = vmatprep.subr.bf16.mxu0 %v4936
        %8091 = vmatpush2.bf16.msra.mxu0 %v4935
        %8092 = vmatprep.subr.bf16.mxu0 %v4928
        %8093 = vmatpush2.bf16.msra.mxu0 %v4927
        %8094 = vmatprep.subr.bf16.mxu0 %v4920
        %8095 = vmatpush2.bf16.msra.mxu0 %v4919
        %8096 = vmatprep.subr.bf16.mxu0 %v4912
        %8097 = vmatpush2.bf16.msra.mxu0 %v4911
        %8098 = vmatprep.subr.bf16.mxu0 %v4904
        %8099 = vmatpush2.bf16.msra.mxu0 %v4903
        %8100 = vmatprep.subr.bf16.mxu0 %v4896
        %8101 = vmatpush2.bf16.msra.mxu0 %v4895
        %8102 = vmatprep.mubr.bf16.mxu0 %v530
        %8103 = vmatmul.mubr.bf16.gmra.mxu0 %v529
        %v8104 = vpop.f32.mrf.mxu0
        %v8105 = vadd.f32 %v8052, %v8104
        %v8106 = vpop.f32.mrf.mxu0
        %v8107 = vadd.f32 %v8054, %v8106
        %v8108 = vpop.f32.mrf.mxu0
        %v8109 = vadd.f32 %v8056, %v8108
        %v8110 = vpop.f32.mrf.mxu0
        %v8111 = vadd.f32 %v8058, %v8110
        %8112 = vmatprep.mubr.bf16.mxu0 %v546
        %8113 = vmatmul.mubr.bf16.gmra.mxu0 %v545
        %v8114 = vpop.f32.mrf.mxu0
        %v8115 = vadd.f32 %v8062, %v8114
        %v8116 = vpop.f32.mrf.mxu0
        %v8117 = vadd.f32 %v8064, %v8116
        %v8118 = vpop.f32.mrf.mxu0
        %v8119 = vadd.f32 %v8066, %v8118
        %v8120 = vpop.f32.mrf.mxu0
        %v8121 = vadd.f32 %v8068, %v8120
        %8122 = vdwg.mxu0
        %8123 = vmatprep.subr.bf16.mxu0 %v5016
        %8124 = vmatpush1.bf16.msra.mxu0 %v5015
        %8125 = vmatprep.subr.bf16.mxu0 %v5008
        %8126 = vmatpush1.bf16.msra.mxu0 %v5007
        %8127 = vmatprep.subr.bf16.mxu0 %v5000
        %8128 = vmatpush1.bf16.msra.mxu0 %v4999
        %8129 = vmatprep.subr.bf16.mxu0 %v4992
        %8130 = vmatpush1.bf16.msra.mxu0 %v4991
        %8131 = vmatprep.subr.bf16.mxu0 %v4984
        %8132 = vmatpush1.bf16.msra.mxu0 %v4983
        %8133 = vmatprep.subr.bf16.mxu0 %v4976
        %8134 = vmatpush1.bf16.msra.mxu0 %v4975
        %8135 = vmatprep.subr.bf16.mxu0 %v4968
        %8136 = vmatpush1.bf16.msra.mxu0 %v4967
        %8137 = vmatprep.subr.bf16.mxu0 %v4960
        %8138 = vmatpush1.bf16.msra.mxu0 %v4959
        %8139 = vmatprep.subr.bf16.mxu0 %v5080
        %8140 = vmatpush2.bf16.msra.mxu0 %v5079
        %8141 = vmatprep.subr.bf16.mxu0 %v5072
        %8142 = vmatpush2.bf16.msra.mxu0 %v5071
        %8143 = vmatprep.subr.bf16.mxu0 %v5064
        %8144 = vmatpush2.bf16.msra.mxu0 %v5063
        %8145 = vmatprep.subr.bf16.mxu0 %v5056
        %8146 = vmatpush2.bf16.msra.mxu0 %v5055
        %8147 = vmatprep.subr.bf16.mxu0 %v5048
        %8148 = vmatpush2.bf16.msra.mxu0 %v5047
        %8149 = vmatprep.subr.bf16.mxu0 %v5040
        %8150 = vmatpush2.bf16.msra.mxu0 %v5039
        %8151 = vmatprep.subr.bf16.mxu0 %v5032
        %8152 = vmatpush2.bf16.msra.mxu0 %v5031
        %8153 = vmatprep.subr.bf16.mxu0 %v5024
        %8154 = vmatpush2.bf16.msra.mxu0 %v5023
        %8155 = vmatprep.mubr.bf16.mxu0 %v532
        %8156 = vmatmul.mubr.bf16.gmra.mxu0 %v531
        %v8157 = vpop.f32.mrf.mxu0
        %v8158 = vadd.f32 %v8105, %v8157
        %v8159 = vpop.f32.mrf.mxu0
        %v8160 = vadd.f32 %v8107, %v8159
        %v8161 = vpop.f32.mrf.mxu0
        %v8162 = vadd.f32 %v8109, %v8161
        %v8163 = vpop.f32.mrf.mxu0
        %v8164 = vadd.f32 %v8111, %v8163
        %8165 = vmatprep.mubr.bf16.mxu0 %v548
        %8166 = vmatmul.mubr.bf16.gmra.mxu0 %v547
        %v8167 = vpop.f32.mrf.mxu0
        %v8168 = vadd.f32 %v8115, %v8167
        %v8169 = vpop.f32.mrf.mxu0
        %v8170 = vadd.f32 %v8117, %v8169
        %v8171 = vpop.f32.mrf.mxu0
        %v8172 = vadd.f32 %v8119, %v8171
        %v8173 = vpop.f32.mrf.mxu0
        %v8174 = vadd.f32 %v8121, %v8173
        %8175 = vdwg.mxu0
        %8176 = vmatprep.subr.bf16.mxu0 %v5144
        %8177 = vmatpush1.bf16.msra.mxu0 %v5143
        %8178 = vmatprep.subr.bf16.mxu0 %v5136
        %8179 = vmatpush1.bf16.msra.mxu0 %v5135
        %8180 = vmatprep.subr.bf16.mxu0 %v5128
        %8181 = vmatpush1.bf16.msra.mxu0 %v5127
        %8182 = vmatprep.subr.bf16.mxu0 %v5120
        %8183 = vmatpush1.bf16.msra.mxu0 %v5119
        %8184 = vmatprep.subr.bf16.mxu0 %v5112
        %8185 = vmatpush1.bf16.msra.mxu0 %v5111
        %8186 = vmatprep.subr.bf16.mxu0 %v5104
        %8187 = vmatpush1.bf16.msra.mxu0 %v5103
        %8188 = vmatprep.subr.bf16.mxu0 %v5096
        %8189 = vmatpush1.bf16.msra.mxu0 %v5095
        %8190 = vmatprep.subr.bf16.mxu0 %v5088
        %8191 = vmatpush1.bf16.msra.mxu0 %v5087
        %8192 = vmatprep.subr.bf16.mxu0 %v5208
        %8193 = vmatpush2.bf16.msra.mxu0 %v5207
        %8194 = vmatprep.subr.bf16.mxu0 %v5200
        %8195 = vmatpush2.bf16.msra.mxu0 %v5199
        %8196 = vmatprep.subr.bf16.mxu0 %v5192
        %8197 = vmatpush2.bf16.msra.mxu0 %v5191
        %8198 = vmatprep.subr.bf16.mxu0 %v5184
        %8199 = vmatpush2.bf16.msra.mxu0 %v5183
        %8200 = vmatprep.subr.bf16.mxu0 %v5176
        %8201 = vmatpush2.bf16.msra.mxu0 %v5175
        %8202 = vmatprep.subr.bf16.mxu0 %v5168
        %8203 = vmatpush2.bf16.msra.mxu0 %v5167
        %8204 = vmatprep.subr.bf16.mxu0 %v5160
        %8205 = vmatpush2.bf16.msra.mxu0 %v5159
        %8206 = vmatprep.subr.bf16.mxu0 %v5152
        %8207 = vmatpush2.bf16.msra.mxu0 %v5151
        %8208 = vmatprep.mubr.bf16.mxu0 %v534
        %8209 = vmatmul.mubr.bf16.gmra.mxu0 %v533
        %v8210 = vpop.f32.mrf.mxu0
        %v8211 = vadd.f32 %v8158, %v8210
        %v8212 = vpop.f32.mrf.mxu0
        %v8213 = vadd.f32 %v8160, %v8212
        %v8214 = vpop.f32.mrf.mxu0
        %v8215 = vadd.f32 %v8162, %v8214
        %v8216 = vpop.f32.mrf.mxu0
        %v8217 = vadd.f32 %v8164, %v8216
        %8218 = vmatprep.mubr.bf16.mxu0 %v550
        %8219 = vmatmul.mubr.bf16.gmra.mxu0 %v549
        %v8220 = vpop.f32.mrf.mxu0
        %v8221 = vadd.f32 %v8168, %v8220
        %v8222 = vpop.f32.mrf.mxu0
        %v8223 = vadd.f32 %v8170, %v8222
        %v8224 = vpop.f32.mrf.mxu0
        %v8225 = vadd.f32 %v8172, %v8224
        %v8226 = vpop.f32.mrf.mxu0
        %v8227 = vadd.f32 %v8174, %v8226
        %8228 = vdwg.mxu0
        %8229 = vmatprep.subr.bf16.mxu0 %v5272
        %8230 = vmatpush1.bf16.msra.mxu0 %v5271
        %8231 = vmatprep.subr.bf16.mxu0 %v5264
        %8232 = vmatpush1.bf16.msra.mxu0 %v5263
        %8233 = vmatprep.subr.bf16.mxu0 %v5256
        %8234 = vmatpush1.bf16.msra.mxu0 %v5255
        %8235 = vmatprep.subr.bf16.mxu0 %v5248
        %8236 = vmatpush1.bf16.msra.mxu0 %v5247
        %8237 = vmatprep.subr.bf16.mxu0 %v5240
        %8238 = vmatpush1.bf16.msra.mxu0 %v5239
        %8239 = vmatprep.subr.bf16.mxu0 %v5232
        %8240 = vmatpush1.bf16.msra.mxu0 %v5231
        %8241 = vmatprep.subr.bf16.mxu0 %v5224
        %8242 = vmatpush1.bf16.msra.mxu0 %v5223
        %8243 = vmatprep.subr.bf16.mxu0 %v5216
        %8244 = vmatpush1.bf16.msra.mxu0 %v5215
        %8245 = vmatprep.subr.bf16.mxu0 %v5336
        %8246 = vmatpush2.bf16.msra.mxu0 %v5335
        %8247 = vmatprep.subr.bf16.mxu0 %v5328
        %8248 = vmatpush2.bf16.msra.mxu0 %v5327
        %8249 = vmatprep.subr.bf16.mxu0 %v5320
        %8250 = vmatpush2.bf16.msra.mxu0 %v5319
        %8251 = vmatprep.subr.bf16.mxu0 %v5312
        %8252 = vmatpush2.bf16.msra.mxu0 %v5311
        %8253 = vmatprep.subr.bf16.mxu0 %v5304
        %8254 = vmatpush2.bf16.msra.mxu0 %v5303
        %8255 = vmatprep.subr.bf16.mxu0 %v5296
        %8256 = vmatpush2.bf16.msra.mxu0 %v5295
        %8257 = vmatprep.subr.bf16.mxu0 %v5288
        %8258 = vmatpush2.bf16.msra.mxu0 %v5287
        %8259 = vmatprep.subr.bf16.mxu0 %v5280
        %8260 = vmatpush2.bf16.msra.mxu0 %v5279
        %8261 = vmatprep.mubr.bf16.mxu0 %v536
        %8262 = vmatmul.mubr.bf16.gmra.mxu0 %v535
        %v8263 = vpop.f32.mrf.mxu0
        %v8264 = vadd.f32 %v8211, %v8263
        %v8265 = vpop.f32.mrf.mxu0
        %v8266 = vadd.f32 %v8213, %v8265
        %v8267 = vpop.f32.mrf.mxu0
        %v8268 = vadd.f32 %v8215, %v8267
        %v8269 = vpop.f32.mrf.mxu0
        %v8270 = vadd.f32 %v8217, %v8269
        %8271 = vmatprep.mubr.bf16.mxu0 %v552
        %8272 = vmatmul.mubr.bf16.gmra.mxu0 %v551
        %v8273 = vpop.f32.mrf.mxu0
        %v8274 = vadd.f32 %v8221, %v8273
        %v8275 = vpop.f32.mrf.mxu0
        %v8276 = vadd.f32 %v8223, %v8275
        %v8277 = vpop.f32.mrf.mxu0
        %v8278 = vadd.f32 %v8225, %v8277
        %v8279 = vpop.f32.mrf.mxu0
        %v8280 = vadd.f32 %v8227, %v8279
        %8281 = vdwg.mxu0
        %8282 = vmatprep.subr.bf16.mxu0 %v5400
        %8283 = vmatpush1.bf16.msra.mxu0 %v5399
        %8284 = vmatprep.subr.bf16.mxu0 %v5392
        %8285 = vmatpush1.bf16.msra.mxu0 %v5391
        %8286 = vmatprep.subr.bf16.mxu0 %v5384
        %8287 = vmatpush1.bf16.msra.mxu0 %v5383
        %8288 = vmatprep.subr.bf16.mxu0 %v5376
        %8289 = vmatpush1.bf16.msra.mxu0 %v5375
        %8290 = vmatprep.subr.bf16.mxu0 %v5368
        %8291 = vmatpush1.bf16.msra.mxu0 %v5367
        %8292 = vmatprep.subr.bf16.mxu0 %v5360
        %8293 = vmatpush1.bf16.msra.mxu0 %v5359
        %8294 = vmatprep.subr.bf16.mxu0 %v5352
        %8295 = vmatpush1.bf16.msra.mxu0 %v5351
        %8296 = vmatprep.subr.bf16.mxu0 %v5344
        %8297 = vmatpush1.bf16.msra.mxu0 %v5343
        %8298 = vmatprep.subr.bf16.mxu0 %v5464
        %8299 = vmatpush2.bf16.msra.mxu0 %v5463
        %8300 = vmatprep.subr.bf16.mxu0 %v5456
        %8301 = vmatpush2.bf16.msra.mxu0 %v5455
        %8302 = vmatprep.subr.bf16.mxu0 %v5448
        %8303 = vmatpush2.bf16.msra.mxu0 %v5447
        %8304 = vmatprep.subr.bf16.mxu0 %v5440
        %8305 = vmatpush2.bf16.msra.mxu0 %v5439
        %8306 = vmatprep.subr.bf16.mxu0 %v5432
        %8307 = vmatpush2.bf16.msra.mxu0 %v5431
        %8308 = vmatprep.subr.bf16.mxu0 %v5424
        %8309 = vmatpush2.bf16.msra.mxu0 %v5423
        %8310 = vmatprep.subr.bf16.mxu0 %v5416
        %8311 = vmatpush2.bf16.msra.mxu0 %v5415
        %8312 = vmatprep.subr.bf16.mxu0 %v5408
        %8313 = vmatpush2.bf16.msra.mxu0 %v5407
        %8314 = vmatprep.mubr.bf16.mxu0 %v538
        %8315 = vmatmul.mubr.bf16.gmra.mxu0 %v537
        %v8316 = vpop.f32.mrf.mxu0
        %v8317 = vadd.f32 %v8264, %v8316
        %v8318 = vpop.f32.mrf.mxu0
        %v8319 = vadd.f32 %v8266, %v8318
        %v8320 = vpop.f32.mrf.mxu0
        %v8321 = vadd.f32 %v8268, %v8320
        %v8322 = vpop.f32.mrf.mxu0
        %v8323 = vadd.f32 %v8270, %v8322
        %8324 = vmatprep.mubr.bf16.mxu0 %v554
        %8325 = vmatmul.mubr.bf16.gmra.mxu0 %v553
        %v8326 = vpop.f32.mrf.mxu0
        %v8327 = vadd.f32 %v8274, %v8326
        %v8328 = vpop.f32.mrf.mxu0
        %v8329 = vadd.f32 %v8276, %v8328
        %v8330 = vpop.f32.mrf.mxu0
        %v8331 = vadd.f32 %v8278, %v8330
        %v8332 = vpop.f32.mrf.mxu0
        %v8333 = vadd.f32 %v8280, %v8332
        %8334 = vdwg.mxu0
        %8335 = vmatprep.subr.bf16.mxu0 %v5528
        %8336 = vmatpush1.bf16.msra.mxu0 %v5527
        %8337 = vmatprep.subr.bf16.mxu0 %v5520
        %8338 = vmatpush1.bf16.msra.mxu0 %v5519
        %8339 = vmatprep.subr.bf16.mxu0 %v5512
        %8340 = vmatpush1.bf16.msra.mxu0 %v5511
        %8341 = vmatprep.subr.bf16.mxu0 %v5504
        %8342 = vmatpush1.bf16.msra.mxu0 %v5503
        %8343 = vmatprep.subr.bf16.mxu0 %v5496
        %8344 = vmatpush1.bf16.msra.mxu0 %v5495
        %8345 = vmatprep.subr.bf16.mxu0 %v5488
        %8346 = vmatpush1.bf16.msra.mxu0 %v5487
        %8347 = vmatprep.subr.bf16.mxu0 %v5480
        %8348 = vmatpush1.bf16.msra.mxu0 %v5479
        %8349 = vmatprep.subr.bf16.mxu0 %v5472
        %8350 = vmatpush1.bf16.msra.mxu0 %v5471
        %8351 = vmatprep.subr.bf16.mxu0 %v5592
        %8352 = vmatpush2.bf16.msra.mxu0 %v5591
        %8353 = vmatprep.subr.bf16.mxu0 %v5584
        %8354 = vmatpush2.bf16.msra.mxu0 %v5583
        %8355 = vmatprep.subr.bf16.mxu0 %v5576
        %8356 = vmatpush2.bf16.msra.mxu0 %v5575
        %8357 = vmatprep.subr.bf16.mxu0 %v5568
        %8358 = vmatpush2.bf16.msra.mxu0 %v5567
        %8359 = vmatprep.subr.bf16.mxu0 %v5560
        %8360 = vmatpush2.bf16.msra.mxu0 %v5559
        %8361 = vmatprep.subr.bf16.mxu0 %v5552
        %8362 = vmatpush2.bf16.msra.mxu0 %v5551
        %8363 = vmatprep.subr.bf16.mxu0 %v5544
        %8364 = vmatpush2.bf16.msra.mxu0 %v5543
        %8365 = vmatprep.subr.bf16.mxu0 %v5536
        %8366 = vmatpush2.bf16.msra.mxu0 %v5535
        %8367 = vmatprep.mubr.bf16.mxu0 %v540
        %8368 = vmatmul.mubr.bf16.gmra.mxu0 %v539
        %v8369 = vpop.f32.mrf.mxu0
        %v8370 = vadd.f32 %v8317, %v8369
        %v8371 = vpop.f32.mrf.mxu0
        %v8372 = vadd.f32 %v8319, %v8371
        %v8373 = vpop.f32.mrf.mxu0
        %v8374 = vadd.f32 %v8321, %v8373
        %v8375 = vpop.f32.mrf.mxu0
        %v8376 = vadd.f32 %v8323, %v8375
        %8377 = vmatprep.mubr.bf16.mxu0 %v556
        %8378 = vmatmul.mubr.bf16.gmra.mxu0 %v555
        %v8379 = vpop.f32.mrf.mxu0
        %v8380 = vadd.f32 %v8327, %v8379
        %v8381 = vpop.f32.mrf.mxu0
        %v8382 = vadd.f32 %v8329, %v8381
        %v8383 = vpop.f32.mrf.mxu0
        %v8384 = vadd.f32 %v8331, %v8383
        %v8385 = vpop.f32.mrf.mxu0
        %v8386 = vadd.f32 %v8333, %v8385
        %8387 = vdwg.mxu0
        %8388 = vmatprep.subr.bf16.mxu0 %v5656
        %8389 = vmatpush1.bf16.msra.mxu0 %v5655
        %8390 = vmatprep.subr.bf16.mxu0 %v5648
        %8391 = vmatpush1.bf16.msra.mxu0 %v5647
        %8392 = vmatprep.subr.bf16.mxu0 %v5640
        %8393 = vmatpush1.bf16.msra.mxu0 %v5639
        %8394 = vmatprep.subr.bf16.mxu0 %v5632
        %8395 = vmatpush1.bf16.msra.mxu0 %v5631
        %8396 = vmatprep.subr.bf16.mxu0 %v5624
        %8397 = vmatpush1.bf16.msra.mxu0 %v5623
        %8398 = vmatprep.subr.bf16.mxu0 %v5616
        %8399 = vmatpush1.bf16.msra.mxu0 %v5615
        %8400 = vmatprep.subr.bf16.mxu0 %v5608
        %8401 = vmatpush1.bf16.msra.mxu0 %v5607
        %8402 = vmatprep.subr.bf16.mxu0 %v5600
        %8403 = vmatpush1.bf16.msra.mxu0 %v5599
        %8404 = vmatprep.subr.bf16.mxu0 %v5720
        %8405 = vmatpush2.bf16.msra.mxu0 %v5719
        %8406 = vmatprep.subr.bf16.mxu0 %v5712
        %8407 = vmatpush2.bf16.msra.mxu0 %v5711
        %8408 = vmatprep.subr.bf16.mxu0 %v5704
        %8409 = vmatpush2.bf16.msra.mxu0 %v5703
        %8410 = vmatprep.subr.bf16.mxu0 %v5696
        %8411 = vmatpush2.bf16.msra.mxu0 %v5695
        %8412 = vmatprep.subr.bf16.mxu0 %v5688
        %8413 = vmatpush2.bf16.msra.mxu0 %v5687
        %8414 = vmatprep.subr.bf16.mxu0 %v5680
        %8415 = vmatpush2.bf16.msra.mxu0 %v5679
        %8416 = vmatprep.subr.bf16.mxu0 %v5672
        %8417 = vmatpush2.bf16.msra.mxu0 %v5671
        %8418 = vmatprep.subr.bf16.mxu0 %v5664
        %8419 = vmatpush2.bf16.msra.mxu0 %v5663
        %8420 = vmatprep.mubr.bf16.mxu0 %v542
        %8421 = vmatmul.mubr.bf16.gmra.mxu0 %v541
        %v8422 = vpop.f32.mrf.mxu0
        %v8423 = vadd.f32 %v8370, %v8422
        %v8424 = vpop.f32.mrf.mxu0
        %v8425 = vadd.f32 %v8372, %v8424
        %v8426 = vpop.f32.mrf.mxu0
        %v8427 = vadd.f32 %v8374, %v8426
        %v8428 = vpop.f32.mrf.mxu0
        %v8429 = vadd.f32 %v8376, %v8428
        %8430 = vmatprep.mubr.bf16.mxu0 %v558
        %8431 = vmatmul.mubr.bf16.gmra.mxu0 %v557
        %v8432 = vpop.f32.mrf.mxu0
        %v8433 = vadd.f32 %v8380, %v8432
        %v8434 = vpop.f32.mrf.mxu0
        %v8435 = vadd.f32 %v8382, %v8434
        %v8436 = vpop.f32.mrf.mxu0
        %v8437 = vadd.f32 %v8384, %v8436
        %v8438 = vpop.f32.mrf.mxu0
        %v8439 = vadd.f32 %v8386, %v8438
        %8440 = vdwg.mxu0
        %v8441 = vpack.c.bf16 %v7155, %v7151
        %v8442 = vpack.c.bf16 %v7157, %v7153
        %v8443 = vpack.c.bf16 %v7579, %v7575
        %v8444 = vpack.c.bf16 %v7581, %v7577
        %v8445 = vpack.c.bf16 %v8003, %v7999
        %v8446 = vpack.c.bf16 %v8005, %v8001
        %v8447 = vpack.c.bf16 %v8427, %v8423
        %v8448 = vpack.c.bf16 %v8429, %v8425
        %v8449 = vpack.c.bf16 %v7165, %v7161
        %v8450 = vpack.c.bf16 %v7167, %v7163
        %v8451 = vpack.c.bf16 %v7589, %v7585
        %v8452 = vpack.c.bf16 %v7591, %v7587
        %v8453 = vpack.c.bf16 %v8013, %v8009
        %v8454 = vpack.c.bf16 %v8015, %v8011
        %v8455 = vpack.c.bf16 %v8437, %v8433
        %v8456 = vpack.c.bf16 %v8439, %v8435
        %v8457 = vmax.bf16 %v8441, 0
        %v8458 = vmax.bf16 %v8442, 0
        %v8459 = vmax.bf16 %v8443, 0
        %v8460 = vmax.bf16 %v8444, 0
        %v8461 = vmax.bf16 %v8445, 0
        %v8462 = vmax.bf16 %v8446, 0
        %v8463 = vmax.bf16 %v8447, 0
        %v8464 = vmax.bf16 %v8448, 0
        %v8465 = vmax.bf16 %v8449, 0
        %v8466 = vmax.bf16 %v8450, 0
        %v8467 = vmax.bf16 %v8451, 0
        %v8468 = vmax.bf16 %v8452, 0
        %v8469 = vmax.bf16 %v8453, 0
        %v8470 = vmax.bf16 %v8454, 0
        %v8471 = vmax.bf16 %v8455, 0
        %v8472 = vmax.bf16 %v8456, 0
        %v8473 = vld [vmem:[#allocation8] sm:$0xff]
        %v8474 = vld [vmem:[#allocation8 + $0x8] sm:$0xff]
        %v8475 = vld [vmem:[#allocation8 + $0x10] sm:$0xff]
        %v8476 = vld [vmem:[#allocation8 + $0x18] sm:$0xff]
        %v8477 = vld [vmem:[#allocation8 + $0x20] sm:$0xff]
        %v8478 = vld [vmem:[#allocation8 + $0x28] sm:$0xff]
        %v8479 = vld [vmem:[#allocation8 + $0x30] sm:$0xff]
        %v8480 = vld [vmem:[#allocation8 + $0x38] sm:$0xff]
        %v8481 = vld [vmem:[#allocation8 + $0x40] sm:$0xff]
        %v8482 = vld [vmem:[#allocation8 + $0x48] sm:$0xff]
        %v8483 = vld [vmem:[#allocation8 + $0x50] sm:$0xff]
        %v8484 = vld [vmem:[#allocation8 + $0x58] sm:$0xff]
        %v8485 = vld [vmem:[#allocation8 + $0x60] sm:$0xff]
        %v8486 = vld [vmem:[#allocation8 + $0x68] sm:$0xff]
        %v8487 = vld [vmem:[#allocation8 + $0x70] sm:$0xff]
        %v8488 = vld [vmem:[#allocation8 + $0x78] sm:$0xff]
        %v8489 = vld [vmem:[#allocation8 + $0x80] sm:$0xff]
        %v8490 = vld [vmem:[#allocation8 + $0x88] sm:$0xff]
        %v8491 = vld [vmem:[#allocation8 + $0x90] sm:$0xff]
        %v8492 = vld [vmem:[#allocation8 + $0x98] sm:$0xff]
        %v8493 = vld [vmem:[#allocation8 + $0xa0] sm:$0xff]
        %v8494 = vld [vmem:[#allocation8 + $0xa8] sm:$0xff]
        %v8495 = vld [vmem:[#allocation8 + $0xb0] sm:$0xff]
        %v8496 = vld [vmem:[#allocation8 + $0xb8] sm:$0xff]
        %v8497 = vld [vmem:[#allocation8 + $0xc0] sm:$0xff]
        %v8498 = vld [vmem:[#allocation8 + $0xc8] sm:$0xff]
        %v8499 = vld [vmem:[#allocation8 + $0xd0] sm:$0xff]
        %v8500 = vld [vmem:[#allocation8 + $0xd8] sm:$0xff]
        %v8501 = vld [vmem:[#allocation8 + $0xe0] sm:$0xff]
        %v8502 = vld [vmem:[#allocation8 + $0xe8] sm:$0xff]
        %v8503 = vld [vmem:[#allocation8 + $0xf0] sm:$0xff]
        %v8504 = vld [vmem:[#allocation8 + $0xf8] sm:$0xff]
        %v8505 = vld [vmem:[#allocation8 + $0x100] sm:$0xff]
        %v8506 = vld [vmem:[#allocation8 + $0x108] sm:$0xff]
        %v8507 = vld [vmem:[#allocation8 + $0x110] sm:$0xff]
        %v8508 = vld [vmem:[#allocation8 + $0x118] sm:$0xff]
        %v8509 = vld [vmem:[#allocation8 + $0x120] sm:$0xff]
        %v8510 = vld [vmem:[#allocation8 + $0x128] sm:$0xff]
        %v8511 = vld [vmem:[#allocation8 + $0x130] sm:$0xff]
        %v8512 = vld [vmem:[#allocation8 + $0x138] sm:$0xff]
        %v8513 = vld [vmem:[#allocation8 + $0x140] sm:$0xff]
        %v8514 = vld [vmem:[#allocation8 + $0x148] sm:$0xff]
        %v8515 = vld [vmem:[#allocation8 + $0x150] sm:$0xff]
        %v8516 = vld [vmem:[#allocation8 + $0x158] sm:$0xff]
        %v8517 = vld [vmem:[#allocation8 + $0x160] sm:$0xff]
        %v8518 = vld [vmem:[#allocation8 + $0x168] sm:$0xff]
        %v8519 = vld [vmem:[#allocation8 + $0x170] sm:$0xff]
        %v8520 = vld [vmem:[#allocation8 + $0x178] sm:$0xff]
        %v8521 = vld [vmem:[#allocation8 + $0x180] sm:$0xff]
        %v8522 = vld [vmem:[#allocation8 + $0x188] sm:$0xff]
        %v8523 = vld [vmem:[#allocation8 + $0x190] sm:$0xff]
        %v8524 = vld [vmem:[#allocation8 + $0x198] sm:$0xff]
        %v8525 = vld [vmem:[#allocation8 + $0x1a0] sm:$0xff]
        %v8526 = vld [vmem:[#allocation8 + $0x1a8] sm:$0xff]
        %v8527 = vld [vmem:[#allocation8 + $0x1b0] sm:$0xff]
        %v8528 = vld [vmem:[#allocation8 + $0x1b8] sm:$0xff]
        %v8529 = vld [vmem:[#allocation8 + $0x1c0] sm:$0xff]
        %v8530 = vld [vmem:[#allocation8 + $0x1c8] sm:$0xff]
        %v8531 = vld [vmem:[#allocation8 + $0x1d0] sm:$0xff]
        %v8532 = vld [vmem:[#allocation8 + $0x1d8] sm:$0xff]
        %v8533 = vld [vmem:[#allocation8 + $0x1e0] sm:$0xff]
        %v8534 = vld [vmem:[#allocation8 + $0x1e8] sm:$0xff]
        %v8535 = vld [vmem:[#allocation8 + $0x1f0] sm:$0xff]
        %v8536 = vld [vmem:[#allocation8 + $0x1f8] sm:$0xff]
        %v8537 = vld [vmem:[#allocation8 + $0x200] sm:$0xff]
        %v8538 = vld [vmem:[#allocation8 + $0x208] sm:$0xff]
        %v8539 = vld [vmem:[#allocation8 + $0x210] sm:$0xff]
        %v8540 = vld [vmem:[#allocation8 + $0x218] sm:$0xff]
        %v8541 = vld [vmem:[#allocation8 + $0x220] sm:$0xff]
        %v8542 = vld [vmem:[#allocation8 + $0x228] sm:$0xff]
        %v8543 = vld [vmem:[#allocation8 + $0x230] sm:$0xff]
        %v8544 = vld [vmem:[#allocation8 + $0x238] sm:$0xff]
        %v8545 = vld [vmem:[#allocation8 + $0x240] sm:$0xff]
        %v8546 = vld [vmem:[#allocation8 + $0x248] sm:$0xff]
        %v8547 = vld [vmem:[#allocation8 + $0x250] sm:$0xff]
        %v8548 = vld [vmem:[#allocation8 + $0x258] sm:$0xff]
        %v8549 = vld [vmem:[#allocation8 + $0x260] sm:$0xff]
        %v8550 = vld [vmem:[#allocation8 + $0x268] sm:$0xff]
        %v8551 = vld [vmem:[#allocation8 + $0x270] sm:$0xff]
        %v8552 = vld [vmem:[#allocation8 + $0x278] sm:$0xff]
        %v8553 = vld [vmem:[#allocation8 + $0x280] sm:$0xff]
        %v8554 = vld [vmem:[#allocation8 + $0x288] sm:$0xff]
        %v8555 = vld [vmem:[#allocation8 + $0x290] sm:$0xff]
        %v8556 = vld [vmem:[#allocation8 + $0x298] sm:$0xff]
        %v8557 = vld [vmem:[#allocation8 + $0x2a0] sm:$0xff]
        %v8558 = vld [vmem:[#allocation8 + $0x2a8] sm:$0xff]
        %v8559 = vld [vmem:[#allocation8 + $0x2b0] sm:$0xff]
        %v8560 = vld [vmem:[#allocation8 + $0x2b8] sm:$0xff]
        %v8561 = vld [vmem:[#allocation8 + $0x2c0] sm:$0xff]
        %v8562 = vld [vmem:[#allocation8 + $0x2c8] sm:$0xff]
        %v8563 = vld [vmem:[#allocation8 + $0x2d0] sm:$0xff]
        %v8564 = vld [vmem:[#allocation8 + $0x2d8] sm:$0xff]
        %v8565 = vld [vmem:[#allocation8 + $0x2e0] sm:$0xff]
        %v8566 = vld [vmem:[#allocation8 + $0x2e8] sm:$0xff]
        %v8567 = vld [vmem:[#allocation8 + $0x2f0] sm:$0xff]
        %v8568 = vld [vmem:[#allocation8 + $0x2f8] sm:$0xff]
        %v8569 = vld [vmem:[#allocation8 + $0x300] sm:$0xff]
        %v8570 = vld [vmem:[#allocation8 + $0x308] sm:$0xff]
        %v8571 = vld [vmem:[#allocation8 + $0x310] sm:$0xff]
        %v8572 = vld [vmem:[#allocation8 + $0x318] sm:$0xff]
        %v8573 = vld [vmem:[#allocation8 + $0x320] sm:$0xff]
        %v8574 = vld [vmem:[#allocation8 + $0x328] sm:$0xff]
        %v8575 = vld [vmem:[#allocation8 + $0x330] sm:$0xff]
        %v8576 = vld [vmem:[#allocation8 + $0x338] sm:$0xff]
        %v8577 = vld [vmem:[#allocation8 + $0x340] sm:$0xff]
        %v8578 = vld [vmem:[#allocation8 + $0x348] sm:$0xff]
        %v8579 = vld [vmem:[#allocation8 + $0x350] sm:$0xff]
        %v8580 = vld [vmem:[#allocation8 + $0x358] sm:$0xff]
        %v8581 = vld [vmem:[#allocation8 + $0x360] sm:$0xff]
        %v8582 = vld [vmem:[#allocation8 + $0x368] sm:$0xff]
        %v8583 = vld [vmem:[#allocation8 + $0x370] sm:$0xff]
        %v8584 = vld [vmem:[#allocation8 + $0x378] sm:$0xff]
        %v8585 = vld [vmem:[#allocation8 + $0x380] sm:$0xff]
        %v8586 = vld [vmem:[#allocation8 + $0x388] sm:$0xff]
        %v8587 = vld [vmem:[#allocation8 + $0x390] sm:$0xff]
        %v8588 = vld [vmem:[#allocation8 + $0x398] sm:$0xff]
        %v8589 = vld [vmem:[#allocation8 + $0x3a0] sm:$0xff]
        %v8590 = vld [vmem:[#allocation8 + $0x3a8] sm:$0xff]
        %v8591 = vld [vmem:[#allocation8 + $0x3b0] sm:$0xff]
        %v8592 = vld [vmem:[#allocation8 + $0x3b8] sm:$0xff]
        %v8593 = vld [vmem:[#allocation8 + $0x3c0] sm:$0xff]
        %v8594 = vld [vmem:[#allocation8 + $0x3c8] sm:$0xff]
        %v8595 = vld [vmem:[#allocation8 + $0x3d0] sm:$0xff]
        %v8596 = vld [vmem:[#allocation8 + $0x3d8] sm:$0xff]
        %v8597 = vld [vmem:[#allocation8 + $0x3e0] sm:$0xff]
        %v8598 = vld [vmem:[#allocation8 + $0x3e8] sm:$0xff]
        %v8599 = vld [vmem:[#allocation8 + $0x3f0] sm:$0xff]
        %v8600 = vld [vmem:[#allocation8 + $0x3f8] sm:$0xff]
        %v8601 = vld [vmem:[#allocation10] sm:$0x3]
        %v8603 = vlaneseq
        %v8604 = vshrl.u32 %v8603, 7
        %v8605 = vsub.s32 0, %v8604
        %v8606 = vrot.slane %v8601, %v8605
        %v8607 = vlaneseq
        %v8608 = vshrl.u32 %v8607, 7
        %v8609 = vsub.s32 1, %v8608
        %v8610 = vrot.slane %v8601, %v8609
        %v8741 = vunpack.c.l.b16 %v8473
        %v8742 = vunpack.c.h.b16 %v8473
        %v8743 = vunpack.c.l.b16 %v8474
        %v8744 = vunpack.c.h.b16 %v8474
        %v8745 = vunpack.c.l.b16 %v8475
        %v8746 = vunpack.c.h.b16 %v8475
        %v8747 = vunpack.c.l.b16 %v8476
        %v8748 = vunpack.c.h.b16 %v8476
        %v8749 = vunpack.c.l.b16 %v8477
        %v8750 = vunpack.c.h.b16 %v8477
        %v8751 = vunpack.c.l.b16 %v8478
        %v8752 = vunpack.c.h.b16 %v8478
        %v8753 = vunpack.c.l.b16 %v8479
        %v8754 = vunpack.c.h.b16 %v8479
        %v8755 = vunpack.c.l.b16 %v8480
        %v8756 = vunpack.c.h.b16 %v8480
        %v8757 = vunpack.c.l.b16 %v8481
        %v8758 = vunpack.c.h.b16 %v8481
        %v8759 = vunpack.c.l.b16 %v8482
        %v8760 = vunpack.c.h.b16 %v8482
        %v8761 = vunpack.c.l.b16 %v8483
        %v8762 = vunpack.c.h.b16 %v8483
        %v8763 = vunpack.c.l.b16 %v8484
        %v8764 = vunpack.c.h.b16 %v8484
        %v8765 = vunpack.c.l.b16 %v8485
        %v8766 = vunpack.c.h.b16 %v8485
        %v8767 = vunpack.c.l.b16 %v8486
        %v8768 = vunpack.c.h.b16 %v8486
        %v8769 = vunpack.c.l.b16 %v8487
        %v8770 = vunpack.c.h.b16 %v8487
        %v8771 = vunpack.c.l.b16 %v8488
        %v8772 = vunpack.c.h.b16 %v8488
        %v8773 = vunpack.c.l.b16 %v8489
        %v8774 = vunpack.c.h.b16 %v8489
        %v8775 = vunpack.c.l.b16 %v8490
        %v8776 = vunpack.c.h.b16 %v8490
        %v8777 = vunpack.c.l.b16 %v8491
        %v8778 = vunpack.c.h.b16 %v8491
        %v8779 = vunpack.c.l.b16 %v8492
        %v8780 = vunpack.c.h.b16 %v8492
        %v8781 = vunpack.c.l.b16 %v8493
        %v8782 = vunpack.c.h.b16 %v8493
        %v8783 = vunpack.c.l.b16 %v8494
        %v8784 = vunpack.c.h.b16 %v8494
        %v8785 = vunpack.c.l.b16 %v8495
        %v8786 = vunpack.c.h.b16 %v8495
        %v8787 = vunpack.c.l.b16 %v8496
        %v8788 = vunpack.c.h.b16 %v8496
        %v8789 = vunpack.c.l.b16 %v8497
        %v8790 = vunpack.c.h.b16 %v8497
        %v8791 = vunpack.c.l.b16 %v8498
        %v8792 = vunpack.c.h.b16 %v8498
        %v8793 = vunpack.c.l.b16 %v8499
        %v8794 = vunpack.c.h.b16 %v8499
        %v8795 = vunpack.c.l.b16 %v8500
        %v8796 = vunpack.c.h.b16 %v8500
        %v8797 = vunpack.c.l.b16 %v8501
        %v8798 = vunpack.c.h.b16 %v8501
        %v8799 = vunpack.c.l.b16 %v8502
        %v8800 = vunpack.c.h.b16 %v8502
        %v8801 = vunpack.c.l.b16 %v8503
        %v8802 = vunpack.c.h.b16 %v8503
        %v8803 = vunpack.c.l.b16 %v8504
        %v8804 = vunpack.c.h.b16 %v8504
        %v8805 = vunpack.c.l.b16 %v8505
        %v8806 = vunpack.c.h.b16 %v8505
        %v8807 = vunpack.c.l.b16 %v8506
        %v8808 = vunpack.c.h.b16 %v8506
        %v8809 = vunpack.c.l.b16 %v8507
        %v8810 = vunpack.c.h.b16 %v8507
        %v8811 = vunpack.c.l.b16 %v8508
        %v8812 = vunpack.c.h.b16 %v8508
        %v8813 = vunpack.c.l.b16 %v8509
        %v8814 = vunpack.c.h.b16 %v8509
        %v8815 = vunpack.c.l.b16 %v8510
        %v8816 = vunpack.c.h.b16 %v8510
        %v8817 = vunpack.c.l.b16 %v8511
        %v8818 = vunpack.c.h.b16 %v8511
        %v8819 = vunpack.c.l.b16 %v8512
        %v8820 = vunpack.c.h.b16 %v8512
        %v8821 = vunpack.c.l.b16 %v8513
        %v8822 = vunpack.c.h.b16 %v8513
        %v8823 = vunpack.c.l.b16 %v8514
        %v8824 = vunpack.c.h.b16 %v8514
        %v8825 = vunpack.c.l.b16 %v8515
        %v8826 = vunpack.c.h.b16 %v8515
        %v8827 = vunpack.c.l.b16 %v8516
        %v8828 = vunpack.c.h.b16 %v8516
        %v8829 = vunpack.c.l.b16 %v8517
        %v8830 = vunpack.c.h.b16 %v8517
        %v8831 = vunpack.c.l.b16 %v8518
        %v8832 = vunpack.c.h.b16 %v8518
        %v8833 = vunpack.c.l.b16 %v8519
        %v8834 = vunpack.c.h.b16 %v8519
        %v8835 = vunpack.c.l.b16 %v8520
        %v8836 = vunpack.c.h.b16 %v8520
        %v8837 = vunpack.c.l.b16 %v8521
        %v8838 = vunpack.c.h.b16 %v8521
        %v8839 = vunpack.c.l.b16 %v8522
        %v8840 = vunpack.c.h.b16 %v8522
        %v8841 = vunpack.c.l.b16 %v8523
        %v8842 = vunpack.c.h.b16 %v8523
        %v8843 = vunpack.c.l.b16 %v8524
        %v8844 = vunpack.c.h.b16 %v8524
        %v8845 = vunpack.c.l.b16 %v8525
        %v8846 = vunpack.c.h.b16 %v8525
        %v8847 = vunpack.c.l.b16 %v8526
        %v8848 = vunpack.c.h.b16 %v8526
        %v8849 = vunpack.c.l.b16 %v8527
        %v8850 = vunpack.c.h.b16 %v8527
        %v8851 = vunpack.c.l.b16 %v8528
        %v8852 = vunpack.c.h.b16 %v8528
        %v8853 = vunpack.c.l.b16 %v8529
        %v8854 = vunpack.c.h.b16 %v8529
        %v8855 = vunpack.c.l.b16 %v8530
        %v8856 = vunpack.c.h.b16 %v8530
        %v8857 = vunpack.c.l.b16 %v8531
        %v8858 = vunpack.c.h.b16 %v8531
        %v8859 = vunpack.c.l.b16 %v8532
        %v8860 = vunpack.c.h.b16 %v8532
        %v8861 = vunpack.c.l.b16 %v8533
        %v8862 = vunpack.c.h.b16 %v8533
        %v8863 = vunpack.c.l.b16 %v8534
        %v8864 = vunpack.c.h.b16 %v8534
        %v8865 = vunpack.c.l.b16 %v8535
        %v8866 = vunpack.c.h.b16 %v8535
        %v8867 = vunpack.c.l.b16 %v8536
        %v8868 = vunpack.c.h.b16 %v8536
        %v8869 = vunpack.c.l.b16 %v8537
        %v8870 = vunpack.c.h.b16 %v8537
        %v8871 = vunpack.c.l.b16 %v8538
        %v8872 = vunpack.c.h.b16 %v8538
        %v8873 = vunpack.c.l.b16 %v8539
        %v8874 = vunpack.c.h.b16 %v8539
        %v8875 = vunpack.c.l.b16 %v8540
        %v8876 = vunpack.c.h.b16 %v8540
        %v8877 = vunpack.c.l.b16 %v8541
        %v8878 = vunpack.c.h.b16 %v8541
        %v8879 = vunpack.c.l.b16 %v8542
        %v8880 = vunpack.c.h.b16 %v8542
        %v8881 = vunpack.c.l.b16 %v8543
        %v8882 = vunpack.c.h.b16 %v8543
        %v8883 = vunpack.c.l.b16 %v8544
        %v8884 = vunpack.c.h.b16 %v8544
        %v8885 = vunpack.c.l.b16 %v8545
        %v8886 = vunpack.c.h.b16 %v8545
        %v8887 = vunpack.c.l.b16 %v8546
        %v8888 = vunpack.c.h.b16 %v8546
        %v8889 = vunpack.c.l.b16 %v8547
        %v8890 = vunpack.c.h.b16 %v8547
        %v8891 = vunpack.c.l.b16 %v8548
        %v8892 = vunpack.c.h.b16 %v8548
        %v8893 = vunpack.c.l.b16 %v8549
        %v8894 = vunpack.c.h.b16 %v8549
        %v8895 = vunpack.c.l.b16 %v8550
        %v8896 = vunpack.c.h.b16 %v8550
        %v8897 = vunpack.c.l.b16 %v8551
        %v8898 = vunpack.c.h.b16 %v8551
        %v8899 = vunpack.c.l.b16 %v8552
        %v8900 = vunpack.c.h.b16 %v8552
        %v8901 = vunpack.c.l.b16 %v8553
        %v8902 = vunpack.c.h.b16 %v8553
        %v8903 = vunpack.c.l.b16 %v8554
        %v8904 = vunpack.c.h.b16 %v8554
        %v8905 = vunpack.c.l.b16 %v8555
        %v8906 = vunpack.c.h.b16 %v8555
        %v8907 = vunpack.c.l.b16 %v8556
        %v8908 = vunpack.c.h.b16 %v8556
        %v8909 = vunpack.c.l.b16 %v8557
        %v8910 = vunpack.c.h.b16 %v8557
        %v8911 = vunpack.c.l.b16 %v8558
        %v8912 = vunpack.c.h.b16 %v8558
        %v8913 = vunpack.c.l.b16 %v8559
        %v8914 = vunpack.c.h.b16 %v8559
        %v8915 = vunpack.c.l.b16 %v8560
        %v8916 = vunpack.c.h.b16 %v8560
        %v8917 = vunpack.c.l.b16 %v8561
        %v8918 = vunpack.c.h.b16 %v8561
        %v8919 = vunpack.c.l.b16 %v8562
        %v8920 = vunpack.c.h.b16 %v8562
        %v8921 = vunpack.c.l.b16 %v8563
        %v8922 = vunpack.c.h.b16 %v8563
        %v8923 = vunpack.c.l.b16 %v8564
        %v8924 = vunpack.c.h.b16 %v8564
        %v8925 = vunpack.c.l.b16 %v8565
        %v8926 = vunpack.c.h.b16 %v8565
        %v8927 = vunpack.c.l.b16 %v8566
        %v8928 = vunpack.c.h.b16 %v8566
        %v8929 = vunpack.c.l.b16 %v8567
        %v8930 = vunpack.c.h.b16 %v8567
        %v8931 = vunpack.c.l.b16 %v8568
        %v8932 = vunpack.c.h.b16 %v8568
        %v8933 = vunpack.c.l.b16 %v8569
        %v8934 = vunpack.c.h.b16 %v8569
        %v8935 = vunpack.c.l.b16 %v8570
        %v8936 = vunpack.c.h.b16 %v8570
        %v8937 = vunpack.c.l.b16 %v8571
        %v8938 = vunpack.c.h.b16 %v8571
        %v8939 = vunpack.c.l.b16 %v8572
        %v8940 = vunpack.c.h.b16 %v8572
        %v8941 = vunpack.c.l.b16 %v8573
        %v8942 = vunpack.c.h.b16 %v8573
        %v8943 = vunpack.c.l.b16 %v8574
        %v8944 = vunpack.c.h.b16 %v8574
        %v8945 = vunpack.c.l.b16 %v8575
        %v8946 = vunpack.c.h.b16 %v8575
        %v8947 = vunpack.c.l.b16 %v8576
        %v8948 = vunpack.c.h.b16 %v8576
        %v8949 = vunpack.c.l.b16 %v8577
        %v8950 = vunpack.c.h.b16 %v8577
        %v8951 = vunpack.c.l.b16 %v8578
        %v8952 = vunpack.c.h.b16 %v8578
        %v8953 = vunpack.c.l.b16 %v8579
        %v8954 = vunpack.c.h.b16 %v8579
        %v8955 = vunpack.c.l.b16 %v8580
        %v8956 = vunpack.c.h.b16 %v8580
        %v8957 = vunpack.c.l.b16 %v8581
        %v8958 = vunpack.c.h.b16 %v8581
        %v8959 = vunpack.c.l.b16 %v8582
        %v8960 = vunpack.c.h.b16 %v8582
        %v8961 = vunpack.c.l.b16 %v8583
        %v8962 = vunpack.c.h.b16 %v8583
        %v8963 = vunpack.c.l.b16 %v8584
        %v8964 = vunpack.c.h.b16 %v8584
        %v8965 = vunpack.c.l.b16 %v8585
        %v8966 = vunpack.c.h.b16 %v8585
        %v8967 = vunpack.c.l.b16 %v8586
        %v8968 = vunpack.c.h.b16 %v8586
        %v8969 = vunpack.c.l.b16 %v8587
        %v8970 = vunpack.c.h.b16 %v8587
        %v8971 = vunpack.c.l.b16 %v8588
        %v8972 = vunpack.c.h.b16 %v8588
        %v8973 = vunpack.c.l.b16 %v8589
        %v8974 = vunpack.c.h.b16 %v8589
        %v8975 = vunpack.c.l.b16 %v8590
        %v8976 = vunpack.c.h.b16 %v8590
        %v8977 = vunpack.c.l.b16 %v8591
        %v8978 = vunpack.c.h.b16 %v8591
        %v8979 = vunpack.c.l.b16 %v8592
        %v8980 = vunpack.c.h.b16 %v8592
        %v8981 = vunpack.c.l.b16 %v8593
        %v8982 = vunpack.c.h.b16 %v8593
        %v8983 = vunpack.c.l.b16 %v8594
        %v8984 = vunpack.c.h.b16 %v8594
        %v8985 = vunpack.c.l.b16 %v8595
        %v8986 = vunpack.c.h.b16 %v8595
        %v8987 = vunpack.c.l.b16 %v8596
        %v8988 = vunpack.c.h.b16 %v8596
        %v8989 = vunpack.c.l.b16 %v8597
        %v8990 = vunpack.c.h.b16 %v8597
        %v8991 = vunpack.c.l.b16 %v8598
        %v8992 = vunpack.c.h.b16 %v8598
        %v8993 = vunpack.c.l.b16 %v8599
        %v8994 = vunpack.c.h.b16 %v8599
        %v8995 = vunpack.c.l.b16 %v8600
        %v8996 = vunpack.c.h.b16 %v8600
        %v8997 = vpack.c.b16 %v8743, %v8741
        %v8998 = vpack.c.b16 %v8744, %v8742
        %v8999 = vpack.c.b16 %v8747, %v8745
        %v9000 = vpack.c.b16 %v8748, %v8746
        %v9001 = vpack.c.b16 %v8751, %v8749
        %v9002 = vpack.c.b16 %v8752, %v8750
        %v9003 = vpack.c.b16 %v8755, %v8753
        %v9004 = vpack.c.b16 %v8756, %v8754
        %v9005 = vpack.c.b16 %v8759, %v8757
        %v9006 = vpack.c.b16 %v8760, %v8758
        %v9007 = vpack.c.b16 %v8763, %v8761
        %v9008 = vpack.c.b16 %v8764, %v8762
        %v9009 = vpack.c.b16 %v8767, %v8765
        %v9010 = vpack.c.b16 %v8768, %v8766
        %v9011 = vpack.c.b16 %v8771, %v8769
        %v9012 = vpack.c.b16 %v8772, %v8770
        %v9013 = vpack.c.b16 %v8775, %v8773
        %v9014 = vpack.c.b16 %v8776, %v8774
        %v9015 = vpack.c.b16 %v8779, %v8777
        %v9016 = vpack.c.b16 %v8780, %v8778
        %v9017 = vpack.c.b16 %v8783, %v8781
        %v9018 = vpack.c.b16 %v8784, %v8782
        %v9019 = vpack.c.b16 %v8787, %v8785
        %v9020 = vpack.c.b16 %v8788, %v8786
        %v9021 = vpack.c.b16 %v8791, %v8789
        %v9022 = vpack.c.b16 %v8792, %v8790
        %v9023 = vpack.c.b16 %v8795, %v8793
        %v9024 = vpack.c.b16 %v8796, %v8794
        %v9025 = vpack.c.b16 %v8799, %v8797
        %v9026 = vpack.c.b16 %v8800, %v8798
        %v9027 = vpack.c.b16 %v8803, %v8801
        %v9028 = vpack.c.b16 %v8804, %v8802
        %v9029 = vpack.c.b16 %v8807, %v8805
        %v9030 = vpack.c.b16 %v8808, %v8806
        %v9031 = vpack.c.b16 %v8811, %v8809
        %v9032 = vpack.c.b16 %v8812, %v8810
        %v9033 = vpack.c.b16 %v8815, %v8813
        %v9034 = vpack.c.b16 %v8816, %v8814
        %v9035 = vpack.c.b16 %v8819, %v8817
        %v9036 = vpack.c.b16 %v8820, %v8818
        %v9037 = vpack.c.b16 %v8823, %v8821
        %v9038 = vpack.c.b16 %v8824, %v8822
        %v9039 = vpack.c.b16 %v8827, %v8825
        %v9040 = vpack.c.b16 %v8828, %v8826
        %v9041 = vpack.c.b16 %v8831, %v8829
        %v9042 = vpack.c.b16 %v8832, %v8830
        %v9043 = vpack.c.b16 %v8835, %v8833
        %v9044 = vpack.c.b16 %v8836, %v8834
        %v9045 = vpack.c.b16 %v8839, %v8837
        %v9046 = vpack.c.b16 %v8840, %v8838
        %v9047 = vpack.c.b16 %v8843, %v8841
        %v9048 = vpack.c.b16 %v8844, %v8842
        %v9049 = vpack.c.b16 %v8847, %v8845
        %v9050 = vpack.c.b16 %v8848, %v8846
        %v9051 = vpack.c.b16 %v8851, %v8849
        %v9052 = vpack.c.b16 %v8852, %v8850
        %v9053 = vpack.c.b16 %v8855, %v8853
        %v9054 = vpack.c.b16 %v8856, %v8854
        %v9055 = vpack.c.b16 %v8859, %v8857
        %v9056 = vpack.c.b16 %v8860, %v8858
        %v9057 = vpack.c.b16 %v8863, %v8861
        %v9058 = vpack.c.b16 %v8864, %v8862
        %v9059 = vpack.c.b16 %v8867, %v8865
        %v9060 = vpack.c.b16 %v8868, %v8866
        %v9061 = vpack.c.b16 %v8871, %v8869
        %v9062 = vpack.c.b16 %v8872, %v8870
        %v9063 = vpack.c.b16 %v8875, %v8873
        %v9064 = vpack.c.b16 %v8876, %v8874
        %v9065 = vpack.c.b16 %v8879, %v8877
        %v9066 = vpack.c.b16 %v8880, %v8878
        %v9067 = vpack.c.b16 %v8883, %v8881
        %v9068 = vpack.c.b16 %v8884, %v8882
        %v9069 = vpack.c.b16 %v8887, %v8885
        %v9070 = vpack.c.b16 %v8888, %v8886
        %v9071 = vpack.c.b16 %v8891, %v8889
        %v9072 = vpack.c.b16 %v8892, %v8890
        %v9073 = vpack.c.b16 %v8895, %v8893
        %v9074 = vpack.c.b16 %v8896, %v8894
        %v9075 = vpack.c.b16 %v8899, %v8897
        %v9076 = vpack.c.b16 %v8900, %v8898
        %v9077 = vpack.c.b16 %v8903, %v8901
        %v9078 = vpack.c.b16 %v8904, %v8902
        %v9079 = vpack.c.b16 %v8907, %v8905
        %v9080 = vpack.c.b16 %v8908, %v8906
        %v9081 = vpack.c.b16 %v8911, %v8909
        %v9082 = vpack.c.b16 %v8912, %v8910
        %v9083 = vpack.c.b16 %v8915, %v8913
        %v9084 = vpack.c.b16 %v8916, %v8914
        %v9085 = vpack.c.b16 %v8919, %v8917
        %v9086 = vpack.c.b16 %v8920, %v8918
        %v9087 = vpack.c.b16 %v8923, %v8921
        %v9088 = vpack.c.b16 %v8924, %v8922
        %v9089 = vpack.c.b16 %v8927, %v8925
        %v9090 = vpack.c.b16 %v8928, %v8926
        %v9091 = vpack.c.b16 %v8931, %v8929
        %v9092 = vpack.c.b16 %v8932, %v8930
        %v9093 = vpack.c.b16 %v8935, %v8933
        %v9094 = vpack.c.b16 %v8936, %v8934
        %v9095 = vpack.c.b16 %v8939, %v8937
        %v9096 = vpack.c.b16 %v8940, %v8938
        %v9097 = vpack.c.b16 %v8943, %v8941
        %v9098 = vpack.c.b16 %v8944, %v8942
        %v9099 = vpack.c.b16 %v8947, %v8945
        %v9100 = vpack.c.b16 %v8948, %v8946
        %v9101 = vpack.c.b16 %v8951, %v8949
        %v9102 = vpack.c.b16 %v8952, %v8950
        %v9103 = vpack.c.b16 %v8955, %v8953
        %v9104 = vpack.c.b16 %v8956, %v8954
        %v9105 = vpack.c.b16 %v8959, %v8957
        %v9106 = vpack.c.b16 %v8960, %v8958
        %v9107 = vpack.c.b16 %v8963, %v8961
        %v9108 = vpack.c.b16 %v8964, %v8962
        %v9109 = vpack.c.b16 %v8967, %v8965
        %v9110 = vpack.c.b16 %v8968, %v8966
        %v9111 = vpack.c.b16 %v8971, %v8969
        %v9112 = vpack.c.b16 %v8972, %v8970
        %v9113 = vpack.c.b16 %v8975, %v8973
        %v9114 = vpack.c.b16 %v8976, %v8974
        %v9115 = vpack.c.b16 %v8979, %v8977
        %v9116 = vpack.c.b16 %v8980, %v8978
        %v9117 = vpack.c.b16 %v8983, %v8981
        %v9118 = vpack.c.b16 %v8984, %v8982
        %v9119 = vpack.c.b16 %v8987, %v8985
        %v9120 = vpack.c.b16 %v8988, %v8986
        %v9121 = vpack.c.b16 %v8991, %v8989
        %v9122 = vpack.c.b16 %v8992, %v8990
        %v9123 = vpack.c.b16 %v8995, %v8993
        %v9124 = vpack.c.b16 %v8996, %v8994
        %9253 = vmatprep.subr.bf16.mxu0 %v9012
        %9254 = vmatpush1.bf16.msra.mxu0 %v9011
        %9255 = vmatprep.subr.bf16.mxu0 %v9010
        %9256 = vmatpush1.bf16.msra.mxu0 %v9009
        %9257 = vmatprep.subr.bf16.mxu0 %v9008
        %9258 = vmatpush1.bf16.msra.mxu0 %v9007
        %9259 = vmatprep.subr.bf16.mxu0 %v9006
        %9260 = vmatpush1.bf16.msra.mxu0 %v9005
        %9261 = vmatprep.subr.bf16.mxu0 %v9004
        %9262 = vmatpush1.bf16.msra.mxu0 %v9003
        %9263 = vmatprep.subr.bf16.mxu0 %v9002
        %9264 = vmatpush1.bf16.msra.mxu0 %v9001
        %9265 = vmatprep.subr.bf16.mxu0 %v9000
        %9266 = vmatpush1.bf16.msra.mxu0 %v8999
        %9267 = vmatprep.subr.bf16.mxu0 %v8998
        %9268 = vmatpush1.bf16.msra.mxu0 %v8997
        %9269 = vmatprep.subr.bf16.mxu0 %v9028
        %9270 = vmatpush2.bf16.msra.mxu0 %v9027
        %9271 = vmatprep.subr.bf16.mxu0 %v9026
        %9272 = vmatpush2.bf16.msra.mxu0 %v9025
        %9273 = vmatprep.subr.bf16.mxu0 %v9024
        %9274 = vmatpush2.bf16.msra.mxu0 %v9023
        %9275 = vmatprep.subr.bf16.mxu0 %v9022
        %9276 = vmatpush2.bf16.msra.mxu0 %v9021
        %9277 = vmatprep.subr.bf16.mxu0 %v9020
        %9278 = vmatpush2.bf16.msra.mxu0 %v9019
        %9279 = vmatprep.subr.bf16.mxu0 %v9018
        %9280 = vmatpush2.bf16.msra.mxu0 %v9017
        %9281 = vmatprep.subr.bf16.mxu0 %v9016
        %9282 = vmatpush2.bf16.msra.mxu0 %v9015
        %9283 = vmatprep.subr.bf16.mxu0 %v9014
        %9284 = vmatpush2.bf16.msra.mxu0 %v9013
        %9285 = vmatprep.mubr.bf16.mxu0 %v8458
        %9286 = vmatmul.mubr.bf16.gmra.mxu0 %v8457
        %v9287 = vpop.f32.mrf.mxu0
        %v9288 = vadd.f32 %v8606, %v9287
        %v9289 = vpop.f32.mrf.mxu0
        %v9290 = vadd.f32 %v8610, %v9289
        %v9291 = vpop.f32.mrf.mxu0
        %v9292 = vadd.f32 %v8606, %v9291
        %v9293 = vpop.f32.mrf.mxu0
        %v9294 = vadd.f32 %v8610, %v9293
        %9295 = vmatprep.mubr.bf16.mxu0 %v8466
        %9296 = vmatmul.mubr.bf16.gmra.mxu0 %v8465
        %v9297 = vpop.f32.mrf.mxu0
        %v9298 = vadd.f32 %v8606, %v9297
        %v9299 = vpop.f32.mrf.mxu0
        %v9300 = vadd.f32 %v8610, %v9299
        %v9301 = vpop.f32.mrf.mxu0
        %v9302 = vadd.f32 %v8606, %v9301
        %v9303 = vpop.f32.mrf.mxu0
        %v9304 = vadd.f32 %v8610, %v9303
        %9305 = vdwg.mxu0
        %9306 = vmatprep.subr.bf16.mxu0 %v9044
        %9307 = vmatpush1.bf16.msra.mxu0 %v9043
        %9308 = vmatprep.subr.bf16.mxu0 %v9042
        %9309 = vmatpush1.bf16.msra.mxu0 %v9041
        %9310 = vmatprep.subr.bf16.mxu0 %v9040
        %9311 = vmatpush1.bf16.msra.mxu0 %v9039
        %9312 = vmatprep.subr.bf16.mxu0 %v9038
        %9313 = vmatpush1.bf16.msra.mxu0 %v9037
        %9314 = vmatprep.subr.bf16.mxu0 %v9036
        %9315 = vmatpush1.bf16.msra.mxu0 %v9035
        %9316 = vmatprep.subr.bf16.mxu0 %v9034
        %9317 = vmatpush1.bf16.msra.mxu0 %v9033
        %9318 = vmatprep.subr.bf16.mxu0 %v9032
        %9319 = vmatpush1.bf16.msra.mxu0 %v9031
        %9320 = vmatprep.subr.bf16.mxu0 %v9030
        %9321 = vmatpush1.bf16.msra.mxu0 %v9029
        %9322 = vmatprep.subr.bf16.mxu0 %v9060
        %9323 = vmatpush2.bf16.msra.mxu0 %v9059
        %9324 = vmatprep.subr.bf16.mxu0 %v9058
        %9325 = vmatpush2.bf16.msra.mxu0 %v9057
        %9326 = vmatprep.subr.bf16.mxu0 %v9056
        %9327 = vmatpush2.bf16.msra.mxu0 %v9055
        %9328 = vmatprep.subr.bf16.mxu0 %v9054
        %9329 = vmatpush2.bf16.msra.mxu0 %v9053
        %9330 = vmatprep.subr.bf16.mxu0 %v9052
        %9331 = vmatpush2.bf16.msra.mxu0 %v9051
        %9332 = vmatprep.subr.bf16.mxu0 %v9050
        %9333 = vmatpush2.bf16.msra.mxu0 %v9049
        %9334 = vmatprep.subr.bf16.mxu0 %v9048
        %9335 = vmatpush2.bf16.msra.mxu0 %v9047
        %9336 = vmatprep.subr.bf16.mxu0 %v9046
        %9337 = vmatpush2.bf16.msra.mxu0 %v9045
        %9338 = vmatprep.mubr.bf16.mxu0 %v8460
        %9339 = vmatmul.mubr.bf16.gmra.mxu0 %v8459
        %v9340 = vpop.f32.mrf.mxu0
        %v9341 = vadd.f32 %v9288, %v9340
        %v9342 = vpop.f32.mrf.mxu0
        %v9343 = vadd.f32 %v9290, %v9342
        %v9344 = vpop.f32.mrf.mxu0
        %v9345 = vadd.f32 %v9292, %v9344
        %v9346 = vpop.f32.mrf.mxu0
        %v9347 = vadd.f32 %v9294, %v9346
        %9348 = vmatprep.mubr.bf16.mxu0 %v8468
        %9349 = vmatmul.mubr.bf16.gmra.mxu0 %v8467
        %v9350 = vpop.f32.mrf.mxu0
        %v9351 = vadd.f32 %v9298, %v9350
        %v9352 = vpop.f32.mrf.mxu0
        %v9353 = vadd.f32 %v9300, %v9352
        %v9354 = vpop.f32.mrf.mxu0
        %v9355 = vadd.f32 %v9302, %v9354
        %v9356 = vpop.f32.mrf.mxu0
        %v9357 = vadd.f32 %v9304, %v9356
        %9358 = vdwg.mxu0
        %9359 = vmatprep.subr.bf16.mxu0 %v9076
        %9360 = vmatpush1.bf16.msra.mxu0 %v9075
        %9361 = vmatprep.subr.bf16.mxu0 %v9074
        %9362 = vmatpush1.bf16.msra.mxu0 %v9073
        %9363 = vmatprep.subr.bf16.mxu0 %v9072
        %9364 = vmatpush1.bf16.msra.mxu0 %v9071
        %9365 = vmatprep.subr.bf16.mxu0 %v9070
        %9366 = vmatpush1.bf16.msra.mxu0 %v9069
        %9367 = vmatprep.subr.bf16.mxu0 %v9068
        %9368 = vmatpush1.bf16.msra.mxu0 %v9067
        %9369 = vmatprep.subr.bf16.mxu0 %v9066
        %9370 = vmatpush1.bf16.msra.mxu0 %v9065
        %9371 = vmatprep.subr.bf16.mxu0 %v9064
        %9372 = vmatpush1.bf16.msra.mxu0 %v9063
        %9373 = vmatprep.subr.bf16.mxu0 %v9062
        %9374 = vmatpush1.bf16.msra.mxu0 %v9061
        %9375 = vmatprep.subr.bf16.mxu0 %v9092
        %9376 = vmatpush2.bf16.msra.mxu0 %v9091
        %9377 = vmatprep.subr.bf16.mxu0 %v9090
        %9378 = vmatpush2.bf16.msra.mxu0 %v9089
        %9379 = vmatprep.subr.bf16.mxu0 %v9088
        %9380 = vmatpush2.bf16.msra.mxu0 %v9087
        %9381 = vmatprep.subr.bf16.mxu0 %v9086
        %9382 = vmatpush2.bf16.msra.mxu0 %v9085
        %9383 = vmatprep.subr.bf16.mxu0 %v9084
        %9384 = vmatpush2.bf16.msra.mxu0 %v9083
        %9385 = vmatprep.subr.bf16.mxu0 %v9082
        %9386 = vmatpush2.bf16.msra.mxu0 %v9081
        %9387 = vmatprep.subr.bf16.mxu0 %v9080
        %9388 = vmatpush2.bf16.msra.mxu0 %v9079
        %9389 = vmatprep.subr.bf16.mxu0 %v9078
        %9390 = vmatpush2.bf16.msra.mxu0 %v9077
        %9391 = vmatprep.mubr.bf16.mxu0 %v8462
        %9392 = vmatmul.mubr.bf16.gmra.mxu0 %v8461
        %v9393 = vpop.f32.mrf.mxu0
        %v9394 = vadd.f32 %v9341, %v9393
        %v9395 = vpop.f32.mrf.mxu0
        %v9396 = vadd.f32 %v9343, %v9395
        %v9397 = vpop.f32.mrf.mxu0
        %v9398 = vadd.f32 %v9345, %v9397
        %v9399 = vpop.f32.mrf.mxu0
        %v9400 = vadd.f32 %v9347, %v9399
        %9401 = vmatprep.mubr.bf16.mxu0 %v8470
        %9402 = vmatmul.mubr.bf16.gmra.mxu0 %v8469
        %v9403 = vpop.f32.mrf.mxu0
        %v9404 = vadd.f32 %v9351, %v9403
        %v9405 = vpop.f32.mrf.mxu0
        %v9406 = vadd.f32 %v9353, %v9405
        %v9407 = vpop.f32.mrf.mxu0
        %v9408 = vadd.f32 %v9355, %v9407
        %v9409 = vpop.f32.mrf.mxu0
        %v9410 = vadd.f32 %v9357, %v9409
        %9411 = vdwg.mxu0
        %9412 = vmatprep.subr.bf16.mxu0 %v9108
        %9413 = vmatpush1.bf16.msra.mxu0 %v9107
        %9414 = vmatprep.subr.bf16.mxu0 %v9106
        %9415 = vmatpush1.bf16.msra.mxu0 %v9105
        %9416 = vmatprep.subr.bf16.mxu0 %v9104
        %9417 = vmatpush1.bf16.msra.mxu0 %v9103
        %9418 = vmatprep.subr.bf16.mxu0 %v9102
        %9419 = vmatpush1.bf16.msra.mxu0 %v9101
        %9420 = vmatprep.subr.bf16.mxu0 %v9100
        %9421 = vmatpush1.bf16.msra.mxu0 %v9099
        %9422 = vmatprep.subr.bf16.mxu0 %v9098
        %9423 = vmatpush1.bf16.msra.mxu0 %v9097
        %9424 = vmatprep.subr.bf16.mxu0 %v9096
        %9425 = vmatpush1.bf16.msra.mxu0 %v9095
        %9426 = vmatprep.subr.bf16.mxu0 %v9094
        %9427 = vmatpush1.bf16.msra.mxu0 %v9093
        %9428 = vmatprep.subr.bf16.mxu0 %v9124
        %9429 = vmatpush2.bf16.msra.mxu0 %v9123
        %9430 = vmatprep.subr.bf16.mxu0 %v9122
        %9431 = vmatpush2.bf16.msra.mxu0 %v9121
        %9432 = vmatprep.subr.bf16.mxu0 %v9120
        %9433 = vmatpush2.bf16.msra.mxu0 %v9119
        %9434 = vmatprep.subr.bf16.mxu0 %v9118
        %9435 = vmatpush2.bf16.msra.mxu0 %v9117
        %9436 = vmatprep.subr.bf16.mxu0 %v9116
        %9437 = vmatpush2.bf16.msra.mxu0 %v9115
        %9438 = vmatprep.subr.bf16.mxu0 %v9114
        %9439 = vmatpush2.bf16.msra.mxu0 %v9113
        %9440 = vmatprep.subr.bf16.mxu0 %v9112
        %9441 = vmatpush2.bf16.msra.mxu0 %v9111
        %9442 = vmatprep.subr.bf16.mxu0 %v9110
        %9443 = vmatpush2.bf16.msra.mxu0 %v9109
        %9444 = vmatprep.mubr.bf16.mxu0 %v8464
        %9445 = vmatmul.mubr.bf16.gmra.mxu0 %v8463
        %v9446 = vpop.f32.mrf.mxu0
        %v9447 = vadd.f32 %v9394, %v9446
        %v9448 = vpop.f32.mrf.mxu0
        %v9449 = vadd.f32 %v9396, %v9448
        %v9450 = vpop.f32.mrf.mxu0
        %v9451 = vadd.f32 %v9398, %v9450
        %v9452 = vpop.f32.mrf.mxu0
        %v9453 = vadd.f32 %v9400, %v9452
        %9454 = vmatprep.mubr.bf16.mxu0 %v8472
        %9455 = vmatmul.mubr.bf16.gmra.mxu0 %v8471
        %v9456 = vpop.f32.mrf.mxu0
        %v9457 = vadd.f32 %v9404, %v9456
        %v9458 = vpop.f32.mrf.mxu0
        %v9459 = vadd.f32 %v9406, %v9458
        %v9460 = vpop.f32.mrf.mxu0
        %v9461 = vadd.f32 %v9408, %v9460
        %v9462 = vpop.f32.mrf.mxu0
        %v9463 = vadd.f32 %v9410, %v9462
        %9464 = vdwg.mxu0
        %v9465 = vpack.c.bf16 %v9451, %v9447
        %v9466 = vpack.c.bf16 %v9453, %v9449
        %v9467 = vpack.c.bf16 %v9461, %v9457
        %v9468 = vpack.c.bf16 %v9463, %v9459
        %v9469 = vmax.bf16 %v9465, 0
        %v9470 = vmax.bf16 %v9466, 0
        %v9471 = vmax.bf16 %v9467, 0
        %v9472 = vmax.bf16 %v9468, 0
        %v9473 = vld [vmem:[#allocation11] sm:$0xf]
        %v9474 = vld [vmem:[#allocation11 + $0x4] sm:$0xf]
        %v9475 = vld [vmem:[#allocation11 + $0x8] sm:$0xf]
        %v9476 = vld [vmem:[#allocation11 + $0xc] sm:$0xf]
        %v9477 = vld [vmem:[#allocation11 + $0x10] sm:$0xf]
        %v9478 = vld [vmem:[#allocation11 + $0x14] sm:$0xf]
        %v9479 = vld [vmem:[#allocation11 + $0x18] sm:$0xf]
        %v9480 = vld [vmem:[#allocation11 + $0x1c] sm:$0xf]
        %v9481 = vld [vmem:[#allocation11 + $0x20] sm:$0xf]
        %v9482 = vld [vmem:[#allocation11 + $0x24] sm:$0xf]
        %v9483 = vld [vmem:[#allocation11 + $0x28] sm:$0xf]
        %v9484 = vld [vmem:[#allocation11 + $0x2c] sm:$0xf]
        %v9485 = vld [vmem:[#allocation11 + $0x30] sm:$0xf]
        %v9486 = vld [vmem:[#allocation11 + $0x34] sm:$0xf]
        %v9487 = vld [vmem:[#allocation11 + $0x38] sm:$0xf]
        %v9488 = vld [vmem:[#allocation11 + $0x3c] sm:$0xf]
        %v9489 = vld [vmem:[#allocation11 + $0x40] sm:$0xf]
        %v9490 = vld [vmem:[#allocation11 + $0x44] sm:$0xf]
        %v9491 = vld [vmem:[#allocation11 + $0x48] sm:$0xf]
        %v9492 = vld [vmem:[#allocation11 + $0x4c] sm:$0xf]
        %v9493 = vld [vmem:[#allocation11 + $0x50] sm:$0xf]
        %v9494 = vld [vmem:[#allocation11 + $0x54] sm:$0xf]
        %v9495 = vld [vmem:[#allocation11 + $0x58] sm:$0xf]
        %v9496 = vld [vmem:[#allocation11 + $0x5c] sm:$0xf]
        %v9497 = vld [vmem:[#allocation11 + $0x60] sm:$0xf]
        %v9498 = vld [vmem:[#allocation11 + $0x64] sm:$0xf]
        %v9499 = vld [vmem:[#allocation11 + $0x68] sm:$0xf]
        %v9500 = vld [vmem:[#allocation11 + $0x6c] sm:$0xf]
        %v9501 = vld [vmem:[#allocation11 + $0x70] sm:$0xf]
        %v9502 = vld [vmem:[#allocation11 + $0x74] sm:$0xf]
        %v9503 = vld [vmem:[#allocation11 + $0x78] sm:$0xf]
        %v9504 = vld [vmem:[#allocation11 + $0x7c] sm:$0xf]
        %v9505 = vld [vmem:[#allocation13] sm:$0x1]
        %v9507 = vlaneseq
        %v9508 = vshrl.u32 %v9507, 7
        %v9509 = vsub.s32 0, %v9508
        %v9510 = vrot.slane %v9505, %v9509
        %v9544 = vunpack.c.l.b16 %v9473
        %v9545 = vunpack.c.l.b16 %v9474
        %v9546 = vunpack.c.l.b16 %v9475
        %v9547 = vunpack.c.l.b16 %v9476
        %v9548 = vunpack.c.l.b16 %v9477
        %v9549 = vunpack.c.l.b16 %v9478
        %v9550 = vunpack.c.l.b16 %v9479
        %v9551 = vunpack.c.l.b16 %v9480
        %v9552 = vunpack.c.l.b16 %v9481
        %v9553 = vunpack.c.l.b16 %v9482
        %v9554 = vunpack.c.l.b16 %v9483
        %v9555 = vunpack.c.l.b16 %v9484
        %v9556 = vunpack.c.l.b16 %v9485
        %v9557 = vunpack.c.l.b16 %v9486
        %v9558 = vunpack.c.l.b16 %v9487
        %v9559 = vunpack.c.l.b16 %v9488
        %v9560 = vunpack.c.l.b16 %v9489
        %v9561 = vunpack.c.l.b16 %v9490
        %v9562 = vunpack.c.l.b16 %v9491
        %v9563 = vunpack.c.l.b16 %v9492
        %v9564 = vunpack.c.l.b16 %v9493
        %v9565 = vunpack.c.l.b16 %v9494
        %v9566 = vunpack.c.l.b16 %v9495
        %v9567 = vunpack.c.l.b16 %v9496
        %v9568 = vunpack.c.l.b16 %v9497
        %v9569 = vunpack.c.l.b16 %v9498
        %v9570 = vunpack.c.l.b16 %v9499
        %v9571 = vunpack.c.l.b16 %v9500
        %v9572 = vunpack.c.l.b16 %v9501
        %v9573 = vunpack.c.l.b16 %v9502
        %v9574 = vunpack.c.l.b16 %v9503
        %v9575 = vunpack.c.l.b16 %v9504
        %v9576 = vpack.c.b16 %v9545, %v9544
        %v9577 = vpack.c.b16 %v9547, %v9546
        %v9578 = vpack.c.b16 %v9549, %v9548
        %v9579 = vpack.c.b16 %v9551, %v9550
        %v9580 = vpack.c.b16 %v9553, %v9552
        %v9581 = vpack.c.b16 %v9555, %v9554
        %v9582 = vpack.c.b16 %v9557, %v9556
        %v9583 = vpack.c.b16 %v9559, %v9558
        %v9584 = vpack.c.b16 %v9561, %v9560
        %v9585 = vpack.c.b16 %v9563, %v9562
        %v9586 = vpack.c.b16 %v9565, %v9564
        %v9587 = vpack.c.b16 %v9567, %v9566
        %v9588 = vpack.c.b16 %v9569, %v9568
        %v9589 = vpack.c.b16 %v9571, %v9570
        %v9590 = vpack.c.b16 %v9573, %v9572
        %v9591 = vpack.c.b16 %v9575, %v9574
        %9608 = vmatprep.subr.bf16.mxu0 0
        %9609 = vmatpush1.bf16.msra.mxu0 %v9583
        %9610 = vmatprep.subr.bf16.mxu0 0
        %9611 = vmatpush1.bf16.msra.mxu0 %v9582
        %9612 = vmatprep.subr.bf16.mxu0 0
        %9613 = vmatpush1.bf16.msra.mxu0 %v9581
        %9614 = vmatprep.subr.bf16.mxu0 0
        %9615 = vmatpush1.bf16.msra.mxu0 %v9580
        %9616 = vmatprep.subr.bf16.mxu0 0
        %9617 = vmatpush1.bf16.msra.mxu0 %v9579
        %9618 = vmatprep.subr.bf16.mxu0 0
        %9619 = vmatpush1.bf16.msra.mxu0 %v9578
        %9620 = vmatprep.subr.bf16.mxu0 0
        %9621 = vmatpush1.bf16.msra.mxu0 %v9577
        %9622 = vmatprep.subr.bf16.mxu0 0
        %9623 = vmatpush1.bf16.msra.mxu0 %v9576
        %9624 = vmatprep.subr.bf16.mxu0 0
        %9625 = vmatpush2.bf16.msra.mxu0 %v9591
        %9626 = vmatprep.subr.bf16.mxu0 0
        %9627 = vmatpush2.bf16.msra.mxu0 %v9590
        %9628 = vmatprep.subr.bf16.mxu0 0
        %9629 = vmatpush2.bf16.msra.mxu0 %v9589
        %9630 = vmatprep.subr.bf16.mxu0 0
        %9631 = vmatpush2.bf16.msra.mxu0 %v9588
        %9632 = vmatprep.subr.bf16.mxu0 0
        %9633 = vmatpush2.bf16.msra.mxu0 %v9587
        %9634 = vmatprep.subr.bf16.mxu0 0
        %9635 = vmatpush2.bf16.msra.mxu0 %v9586
        %9636 = vmatprep.subr.bf16.mxu0 0
        %9637 = vmatpush2.bf16.msra.mxu0 %v9585
        %9638 = vmatprep.subr.bf16.mxu0 0
        %9639 = vmatpush2.bf16.msra.mxu0 %v9584
        %9640 = vmatprep.mubr.bf16.mxu0 %v9470
        %9641 = vmatmul.mubr.bf16.gmra.mxu0 %v9469
        %v9642 = vpop.f32.mrf.mxu0
        %v9643 = vadd.f32 %v9510, %v9642
        %v9644 = vpop.f32.mrf.mxu0
        %v9645 = vpop.f32.mrf.mxu0
        %v9646 = vadd.f32 %v9510, %v9645
        %v9647 = vpop.f32.mrf.mxu0
        %9648 = vmatprep.mubr.bf16.mxu0 %v9472
        %9649 = vmatmul.mubr.bf16.gmra.mxu0 %v9471
        %v9650 = vpop.f32.mrf.mxu0
        %v9651 = vadd.f32 %v9510, %v9650
        %v9652 = vpop.f32.mrf.mxu0
        %v9653 = vpop.f32.mrf.mxu0
        %v9654 = vadd.f32 %v9510, %v9653
        %v9655 = vpop.f32.mrf.mxu0
        %9656 = vdwg.mxu0
        %v9657 = vpack.c.bf16 %v9646, %v9643
        %v9658 = vpack.c.bf16 %v9654, %v9651
        %v9659 = vmax.bf16 %v9657, 0
        %v9660 = vmax.bf16 %v9658, 0
        %v9661 = vld [vmem:[#allocation14] sm:$0xf]
        %v9662 = vld [vmem:[#allocation14 + $0x4] sm:$0xf]
        %v9663 = vld [vmem:[#allocation14 + $0x8] sm:$0xf]
        %v9664 = vld [vmem:[#allocation14 + $0xc] sm:$0xf]
        %v9665 = vld [vmem:[#allocation14 + $0x10] sm:$0xf]
        %v9666 = vld [vmem:[#allocation14 + $0x14] sm:$0xf]
        %v9667 = vld [vmem:[#allocation14 + $0x18] sm:$0xf]
        %v9668 = vld [vmem:[#allocation14 + $0x1c] sm:$0xf]
        %v9669 = vld [vmem:[#allocation14 + $0x20] sm:$0xf]
        %v9670 = vld [vmem:[#allocation14 + $0x24] sm:$0xf]
        %v9671 = vld [vmem:[#allocation14 + $0x28] sm:$0xf]
        %v9672 = vld [vmem:[#allocation14 + $0x2c] sm:$0xf]
        %v9673 = vld [vmem:[#allocation14 + $0x30] sm:$0xf]
        %v9674 = vld [vmem:[#allocation14 + $0x34] sm:$0xf]
        %v9675 = vld [vmem:[#allocation14 + $0x38] sm:$0xf]
        %v9676 = vld [vmem:[#allocation14 + $0x3c] sm:$0xf]
        %v9677 = vld [vmem:[#allocation16] sm:$0x1]
        %v9679 = vlaneseq
        %v9680 = vshrl.u32 %v9679, 7
        %v9681 = vsub.s32 0, %v9680
        %v9682 = vrot.slane %v9677, %v9681
        %v9700 = vunpack.c.l.b16 %v9661
        %v9701 = vunpack.c.l.b16 %v9662
        %v9702 = vunpack.c.l.b16 %v9663
        %v9703 = vunpack.c.l.b16 %v9664
        %v9704 = vunpack.c.l.b16 %v9665
        %v9705 = vunpack.c.l.b16 %v9666
        %v9706 = vunpack.c.l.b16 %v9667
        %v9707 = vunpack.c.l.b16 %v9668
        %v9708 = vunpack.c.l.b16 %v9669
        %v9709 = vunpack.c.l.b16 %v9670
        %v9710 = vunpack.c.l.b16 %v9671
        %v9711 = vunpack.c.l.b16 %v9672
        %v9712 = vunpack.c.l.b16 %v9673
        %v9713 = vunpack.c.l.b16 %v9674
        %v9714 = vunpack.c.l.b16 %v9675
        %v9715 = vunpack.c.l.b16 %v9676
        %v9716 = vpack.c.b16 %v9701, %v9700
        %v9717 = vpack.c.b16 %v9703, %v9702
        %v9718 = vpack.c.b16 %v9705, %v9704
        %v9719 = vpack.c.b16 %v9707, %v9706
        %v9720 = vpack.c.b16 %v9709, %v9708
        %v9721 = vpack.c.b16 %v9711, %v9710
        %v9722 = vpack.c.b16 %v9713, %v9712
        %v9723 = vpack.c.b16 %v9715, %v9714
        %9732 = vmatprep.subr.bf16.mxu0 0
        %9733 = vmatpush1.bf16.msra.mxu0 %v9723
        %9734 = vmatprep.subr.bf16.mxu0 0
        %9735 = vmatpush1.bf16.msra.mxu0 %v9722
        %9736 = vmatprep.subr.bf16.mxu0 0
        %9737 = vmatpush1.bf16.msra.mxu0 %v9721
        %9738 = vmatprep.subr.bf16.mxu0 0
        %9739 = vmatpush1.bf16.msra.mxu0 %v9720
        %9740 = vmatprep.subr.bf16.mxu0 0
        %9741 = vmatpush1.bf16.msra.mxu0 %v9719
        %9742 = vmatprep.subr.bf16.mxu0 0
        %9743 = vmatpush1.bf16.msra.mxu0 %v9718
        %9744 = vmatprep.subr.bf16.mxu0 0
        %9745 = vmatpush1.bf16.msra.mxu0 %v9717
        %9746 = vmatprep.subr.bf16.mxu0 0
        %9747 = vmatpush1.bf16.msra.mxu0 %v9716
        %9748 = vmatprep.subr.bf16.mxu0 0
        %9749 = vmatpush2.bf16.msra.mxu0 0
        %9750 = vmatprep.subr.bf16.mxu0 0
        %9751 = vmatpush2.bf16.msra.mxu0 0
        %9752 = vmatprep.subr.bf16.mxu0 0
        %9753 = vmatpush2.bf16.msra.mxu0 0
        %9754 = vmatprep.subr.bf16.mxu0 0
        %9755 = vmatpush2.bf16.msra.mxu0 0
        %9756 = vmatprep.subr.bf16.mxu0 0
        %9757 = vmatpush2.bf16.msra.mxu0 0
        %9758 = vmatprep.subr.bf16.mxu0 0
        %9759 = vmatpush2.bf16.msra.mxu0 0
        %9760 = vmatprep.subr.bf16.mxu0 0
        %9761 = vmatpush2.bf16.msra.mxu0 0
        %9762 = vmatprep.subr.bf16.mxu0 0
        %9763 = vmatpush2.bf16.msra.mxu0 0
        %9764 = vmatprep.mubr.bf16.mxu0 0
        %9765 = vmatmul.mubr.bf16.gmra.mxu0 %v9659
        %v9766 = vpop.f32.mrf.mxu0
        %v9767 = vadd.f32 %v9682, %v9766
        %v9768 = vpop.f32.mrf.mxu0
        %v9769 = vpop.f32.mrf.mxu0
        %v9770 = vadd.f32 %v9682, %v9769
        %v9771 = vpop.f32.mrf.mxu0
        %9772 = vmatprep.mubr.bf16.mxu0 0
        %9773 = vmatmul.mubr.bf16.gmra.mxu0 %v9660
        %v9774 = vpop.f32.mrf.mxu0
        %v9775 = vadd.f32 %v9682, %v9774
        %v9776 = vpop.f32.mrf.mxu0
        %v9777 = vpop.f32.mrf.mxu0
        %v9778 = vadd.f32 %v9682, %v9777
        %v9779 = vpop.f32.mrf.mxu0
        %9780 = vdwg.mxu0
        %v9781 = vpack.c.bf16 %v9770, %v9767
        %v9782 = vpack.c.bf16 %v9778, %v9775
        %v9785 = vunpack.c.l.b16 %v9781
        %v9786 = vunpack.c.h.b16 %v9781
        %v9787 = vunpack.c.l.b16 %v9782
        %v9788 = vunpack.c.h.b16 %v9782
        %v9789 = vpack.c.b16 %v9785, %v9785
        %v9790 = vpack.c.b16 %v9786, %v9786
        %v9791 = vpack.c.b16 %v9787, %v9787
        %v9792 = vpack.c.b16 %v9788, %v9788
        %9797 = vst [vmem:[%s459] sm:$0xf] %v9789
        %9798 = vst [vmem:[%s459 + $0x4] sm:$0xf] %v9790
        %9799 = vst [vmem:[%s459 + $0x8] sm:$0xf] %v9791
        %9800 = vst [vmem:[%s459 + $0xc] sm:$0xf] %v9792
        %s9801 = sand.u32 %s232, 1
        %s9802 = scalar_lea.sflag [#allocation4], %s9801
        %s9803 = sand.u32 %s232, 1
        %s9804 = smul.addr %s9803, 16
        %s9805 = scalar_lea.vmem [#allocation17], %s9804
        // Predicated region
        $region93: #{tpu_custom_call.1} parent=55 // pred_check
          %p9806 = pneg %p242
        $region94: #{tpu_custom_call.1} parent=55 // pred_check_branch
          %9808 = sbr.rel (%p9806) target = $region96
        $region95: #{tpu_custom_call.1} parent=55 // pred_region
          %s9809 = smul.u32 4, %s30
          %s9811 = ssub.s32 256, 256
          %9812 = vsyncadd %s9802, %s9811
          %s9813 = smul.addr %s9809, 64
          %s9814 = scalar_lea.hbm %s9, %s9813
          %s9815 = sshll.u32 %s9805, 4
          %s9816 = int_to_ptr.vmem [resolvable:$true] %s9815
          %9821 = dma.vmem_to_hbm [thread:$0]  %s9816, 256, %s9814, %s9802, 64, 64, 4
        $region96: #{tpu_custom_call.1} parent=55 // pred_fallthru
          _
      $region56: #{tpu_custom_call.1} parent=5 // pred_fallthru
        _
      %p9822 = scmp.le.s32.totalorder 2, %s25
      // Predicated region
      $region97: #{tpu_custom_call.1} parent=5 // pred_check
        %p9823 = pneg %p9822
      $region98: #{tpu_custom_call.1} parent=5 // pred_check_branch
        %9825 = sbr.rel (%p9823) target = $region100
      $region99: #{tpu_custom_call.1} parent=5 // pred_region
        %s9826 = ssub.s32 %s25, 2
        // Predicated region
        $region101: #{tpu_custom_call.1} parent=99 // pred_check
          %p9827 = pneg %p248
        $region102: #{tpu_custom_call.1} parent=99 // pred_check_branch
          %9829 = sbr.rel (%p9827) target = $region104
        $region103: #{tpu_custom_call.1} parent=99 // pred_region
          %s9830 = sand.u32 %s233, 1
          %s9831 = scalar_lea.sflag [#allocation4], %s9830
          %s9832 = sand.u32 %s233, 1
          %s9833 = smul.addr %s9832, 16
          %s9834 = scalar_lea.vmem [#allocation17], %s9833
          %9835 = dma.done %s9831, 256
        $region104: #{tpu_custom_call.1} parent=99 // pred_fallthru
          _
      $region100: #{tpu_custom_call.1} parent=5 // pred_fallthru
        _
    $region6: #{tpu_custom_call.1} parent=1 // loop_footer
      %s29 = sadd.s32 1, %s25
    $region7: #{tpu_custom_call.1} parent=1 // loop_footer_branch
      %24 = sbr.rel target = $region3
    $region8: #{tpu_custom_call.1} parent=1 // loop_exit
      _
    %9836 = vsyncpa [#allocation3], 1
    %s9837 = scalar_lea.sflag [#allocation3], 1
    %9838 = vsyncpa %s9837, 1
    %9839 = vsyncpa [#allocation6], 1
    %9840 = vsyncpa [#allocation9], 1
    %9841 = vsyncpa [#allocation12], 1
    %9842 = vsyncpa [#allocation15], 1
    %9843 = vsyncpa [#allocation4], 1
    %s9844 = scalar_lea.sflag [#allocation4], 1
    %9845 = vsyncpa %s9844, 1

</llo_original>
